<compile_context>
chip_gen: v7x
topology: tpu7x:2x2x1
jax: 0.10.0
libtpu: 0.0.40
codegen_flags: <defaults>
</compile_context>

<pallas_src>
import functools

import jax
import jax.numpy as jnp
from jax import lax
from jax.experimental import pallas as pl
from jax.experimental.pallas import tpu as pltpu


def _round_up(a, b):
    return -(-a // b) * b


def _downsample_kernel(w0_ref, w1_ref, bias_ref, x_ref, o_ref, *, w, r):
    """One (n, h-tile) grid step, row-folded layout.

    w0_ref/w1_ref: (Cout, Cin) f32 SMEM -- BN-scaled conv taps for kh=0 / kh=1
    bias_ref:      (Cout,)     f32 SMEM -- folded conv bias + BN affine
    x_ref: (Cin, THg, 2*r*w) VMEM -- r output rows folded into lanes; for fold
           chunk j the even input row sits at lanes [2j*w, 2j*w+w) and the odd
           input row at [(2j+1)*w, (2j+2)*w).
    o_ref: (Cout, THg, r*w)  VMEM -- output row j of the fold at lanes [j*w, (j+1)*w).
    """
    cin = x_ref.shape[0]
    cout = o_ref.shape[0]

    # NOTE: fully unrolled Python loops (static slices only) -- intended for the
    # small channel counts of this module.  For large Cin*Cout an MXU matmul
    # with a channel-to-lane layout would be preferable.
    for j in range(r):
        e0 = 2 * j * w          # even-row lane offset for this fold chunk
        o0 = e0 + w             # odd-row lane offset
        # ci outer / co inner: each input slice is read exactly once and
        # streamed into Cout persistent accumulators (VPU scalar-broadcast FMAs).
        acc = [None] * cout
        for ci in range(cin):
            xe = x_ref[ci, :, e0:e0 + w].astype(jnp.float32)
            xo = x_ref[ci, :, o0:o0 + w].astype(jnp.float32)
            for co in range(cout):
                t = w0_ref[co, ci] * xe + w1_ref[co, ci] * xo
                acc[co] = t if acc[co] is None else acc[co] + t
        for co in range(cout):
            o_ref[co, :, j * w:(j + 1) * w] = (
                acc[co] + bias_ref[co]).astype(o_ref.dtype)


def _pick_fold(hout, w):
    """Fold factor r (divides hout): fold r output rows into lanes so that the
    output block's lane dim r*w is 128-aligned (or at least >= 128)."""
    if w % 128 == 0 or hout == 1:
        return 1
    for r in range(1, hout + 1):                 # smallest 128-aligned fold
        if hout % r == 0 and (r * w) % 128 == 0:
            return r
    for r in range(1, hout + 1):                 # fallback: lane dim >= 128
        if hout % r == 0 and r * w >= 128:
            return r
    return 1


def _vmem_budget():
    """(per-block budget, vmem_limit_bytes), derived per chip generation."""
    try:
        cap = int(pltpu.get_tpu_info().vmem_capacity_bytes)
    except Exception:
        cap = 64 << 20                           # assume the tightest chip
    if cap >= (100 << 20):                       # v5e / v6e: 128 MiB physical
        return 16 << 20, 64 << 20
    return 10 << 20, 40 << 20                    # v7x: 64 MiB physical


def _pick_h_tile(hg, cin, cout, w, r, itemsize, budget_bytes):
    """Largest THg s.t. THg | Hg, the block obeys the (8,128) rule, and the
    double-buffered in/out blocks PLUS the live f32 temporaries fit the budget."""
    lane_x = _round_up(2 * r * w, 128)
    lane_o = _round_up(r * w, 128)
    lane_t = _round_up(w, 128)

    def fits(thg):
        sub = _round_up(thg, 8)
        x_blk = cin * sub * lane_x * itemsize
        o_blk = cout * sub * lane_o * itemsize
        temps = (2 + cout) * sub * lane_t * 4    # live f32 accumulators / slices
        return 2 * (x_blk + o_blk) + temps <= budget_bytes   # x2: double buffer

    cands = sorted({t for t in range(8, hg + 1, 8) if hg % t == 0} | {hg})
    best = cands[0]
    for t in cands:
        if fits(t):
            best = t
    # TODO(synk): for extremely wide W where even the smallest THg exceeds the
    # budget, add a W grid axis (tile W in multiples of 128) instead of relying
    # on the raised vmem_limit.
    return best


@functools.partial(jax.jit, static_argnames=("eps",))
def downsample_forward(x_nchw, conv_w, conv_b, gamma, beta, run_mean, run_var,
                       eps=1e-5):
    """Conv2d((2,1), stride=(2,1)) + BatchNorm2d (eval mode); NCHW in / NCHW out."""
    N, Cin, H, W = x_nchw.shape
    Cout = conv_w.shape[0]
    if H % 2 != 0:                     # PyTorch conv drops the last row for odd H
        x_nchw = x_nchw[:, :, :H - 1, :]
        H -= 1
    Hout = H // 2

    # Fold eval-mode BN into the conv: the scale goes into the weights so the
    # kernel epilogue is only a bias add.
    inv = (gamma / jnp.sqrt(run_var + eps)).astype(jnp.float32)            # (Cout,)
    w0 = conv_w[:, :, 0, 0].astype(jnp.float32) * inv[:, None]              # (Cout, Cin)
    w1 = conv_w[:, :, 1, 0].astype(jnp.float32) * inv[:, None]              # (Cout, Cin)
    bias = ((conv_b.astype(jnp.float32) - run_mean.astype(jnp.float32)) * inv
            + beta.astype(jnp.float32))                                     # (Cout,)

    r = _pick_fold(Hout, W)
    Hg = Hout // r
    itemsize = x_nchw.dtype.itemsize
    budget, vmem_limit = _vmem_budget()
    THg = _pick_h_tile(Hg, Cin, Cout, W, r, itemsize, budget)
    grid = (N, Hg // THg)

    # FREE row-major metadata reshape: (H, W) -> (Hg, 2*r*W).  Chunk j of a
    # folded row holds [even | odd] input rows of output row j of the fold.
    x_folded = x_nchw.reshape(N, Cin, Hg, 2 * r * W)

    flops = 4 * N * Cout * Cin * Hout * W
    bytes_accessed = (x_nchw.size * itemsize
                      + N * Cout * Hout * W * itemsize
                      + (w0.size + w1.size + bias.size) * 4)

    kernel = functools.partial(_downsample_kernel, w=W, r=r)

    out = pl.pallas_call(
        kernel,
        out_shape=jax.ShapeDtypeStruct((N, Cout, Hg, r * W), x_nchw.dtype),
        grid_spec=pltpu.PrefetchScalarGridSpec(
            num_scalar_prefetch=0,
            grid=grid,
            in_specs=[
                # Small per-channel parameters live whole in SMEM (scalar reads).
                pl.BlockSpec(memory_space=pltpu.MemorySpace.SMEM),   # w0
                pl.BlockSpec(memory_space=pltpu.MemorySpace.SMEM),   # w1
                pl.BlockSpec(memory_space=pltpu.MemorySpace.SMEM),   # bias
                # Row-folded NCHW view: lane dim = 2*r*W, sublanes = folded rows.
                pl.BlockSpec((None, Cin, THg, 2 * r * W),
                             lambda n, h: (n, 0, h, 0)),
            ],
            out_specs=pl.BlockSpec((None, Cout, THg, r * W),
                                   lambda n, h: (n, 0, h, 0)),
        ),
        compiler_params=pltpu.CompilerParams(
            dimension_semantics=("parallel", "parallel"),
            vmem_limit_bytes=vmem_limit),
        cost_estimate=pl.CostEstimate(flops=flops, transcendentals=0,
                                      bytes_accessed=bytes_accessed),
    )(w0, w1, bias, x_folded)

    # FREE metadata reshape back to NCHW: (Hg, r*W) -> (Hout, W).
    return out.reshape(N, Cout, Hout, W)


def _reference_forward(x, conv_w, conv_b, gamma, beta, run_mean, run_var, eps=1e-5):
    """Plain-JAX reference: lax conv + eval-mode BN, NCHW."""
    y = lax.conv_general_dilated(
        x, conv_w, window_strides=(2, 1), padding="VALID",
        dimension_numbers=("NCHW", "OIHW", "NCHW"))
    y = y + conv_b.reshape(1, -1, 1, 1)
    inv = gamma / jnp.sqrt(run_var + eps)
    return (y - run_mean.reshape(1, -1, 1, 1)) * inv.reshape(1, -1, 1, 1) \
        + beta.reshape(1, -1, 1, 1)


if __name__ == "__main__":
    key = jax.random.PRNGKey(0)
    k_x, k_w, k_b, k_g, k_bt, k_m, k_v = jax.random.split(key, 7)

    N, Cin, H, W = 2, 4, 16, 16
    Cout = 8

    x = jax.random.normal(k_x, (N, Cin, H, W), dtype=jnp.float32)

    # Deterministic synthetic parameters (Conv2d(in=4, out=8, k=(2,1)) + BN(8)).
    conv_w = 0.1 * jax.random.normal(k_w, (Cout, Cin, 2, 1), dtype=jnp.float32)
    conv_b = 0.1 * jax.random.normal(k_b, (Cout,), dtype=jnp.float32)
    gamma = 1.0 + 0.1 * jax.random.normal(k_g, (Cout,), dtype=jnp.float32)
    beta = 0.1 * jax.random.normal(k_bt, (Cout,), dtype=jnp.float32)
    run_mean = 0.1 * jax.random.normal(k_m, (Cout,), dtype=jnp.float32)
    run_var = jnp.abs(1.0 + 0.1 * jax.random.normal(k_v, (Cout,), dtype=jnp.float32))

    out = downsample_forward(x, conv_w, conv_b, gamma, beta, run_mean, run_var)
    out = jax.block_until_ready(out)

    ref = _reference_forward(x, conv_w, conv_b, gamma, beta, run_mean, run_var)
    assert out.shape == (N, Cout, H // 2, W)
    assert jnp.allclose(out, ref, atol=1e-4, rtol=1e-4), "mismatch vs reference"

    # TODO(synk): training-mode BatchNorm (batch statistics + running-stat
    # updates) is not implemented; this kernel is eval/inference BN only.
    print("KERNEL_OK")
</pallas_src>

<mosaic_0001>
module attributes {stable_mosaic.version = 11 : i64} {
  func.func @_downsample_kernel(%arg0: i32, %arg1: i32, %arg2: memref<8x4xf32, #tpu.memory_space<smem>>, %arg3: memref<8x4xf32, #tpu.memory_space<smem>>, %arg4: memref<8xf32, #tpu.memory_space<smem>>, %arg5: memref<1x4x1x256xf32, #tpu.memory_space<vmem>>, %arg6: memref<1x8x1x128xf32, #tpu.memory_space<vmem>>) attributes {dimension_semantics = [#tpu.dimension_semantics<parallel>, #tpu.dimension_semantics<parallel>], iteration_bounds = array<i64: 2, 1>, scalar_prefetch = 0 : i64, scratch_operands = 0 : i64, tpu.core_type = #tpu.core_type<tc>, window_params = [{transform_indices = @transform_0, window_bounds = array<i64: 8, 4>}, {transform_indices = @transform_1, window_bounds = array<i64: 8, 4>}, {transform_indices = @transform_2, window_bounds = array<i64: 8>}, {transform_indices = @transform_3, window_bounds = array<i64: 1, 4, 1, 256>}, {transform_indices = @transform_4, window_bounds = array<i64: 1, 8, 1, 128>}]} {
    %c0 = arith.constant 0 : index
    %c0_0 = arith.constant 0 : index
    %c0_1 = arith.constant 0 : index
    %c0_2 = arith.constant 0 : index
    %0 = vector.load %arg5[%c0, %c0_0, %c0_1, %c0_2] : memref<1x4x1x256xf32, #tpu.memory_space<vmem>>, vector<1x1x1x16xf32>
    %1 = vector.shape_cast %0 : vector<1x1x1x16xf32> to vector<1x16xf32>
    %c0_3 = arith.constant 0 : index
    %c0_4 = arith.constant 0 : index
    %c0_5 = arith.constant 0 : index
    %c16 = arith.constant 16 : index
    %2 = vector.load %arg5[%c0_3, %c0_4, %c0_5, %c16] : memref<1x4x1x256xf32, #tpu.memory_space<vmem>>, vector<1x1x1x16xf32>
    %3 = vector.shape_cast %2 : vector<1x1x1x16xf32> to vector<1x16xf32>
    %c0_6 = arith.constant 0 : index
    %c0_7 = arith.constant 0 : index
    %4 = memref.load %arg2[%c0_6, %c0_7] : memref<8x4xf32, #tpu.memory_space<smem>>
    %5 = vector.broadcast %4 : f32 to vector<1x16xf32>
    %6 = arith.mulf %5, %1 : vector<1x16xf32>
    %c0_8 = arith.constant 0 : index
    %c0_9 = arith.constant 0 : index
    %7 = memref.load %arg3[%c0_8, %c0_9] : memref<8x4xf32, #tpu.memory_space<smem>>
    %8 = vector.broadcast %7 : f32 to vector<1x16xf32>
    %9 = arith.mulf %8, %3 : vector<1x16xf32>
    %10 = arith.addf %6, %9 : vector<1x16xf32>
    %c1 = arith.constant 1 : index
    %c0_10 = arith.constant 0 : index
    %11 = memref.load %arg2[%c1, %c0_10] : memref<8x4xf32, #tpu.memory_space<smem>>
    %12 = vector.broadcast %11 : f32 to vector<1x16xf32>
    %13 = arith.mulf %12, %1 : vector<1x16xf32>
    %c1_11 = arith.constant 1 : index
    %c0_12 = arith.constant 0 : index
    %14 = memref.load %arg3[%c1_11, %c0_12] : memref<8x4xf32, #tpu.memory_space<smem>>
    %15 = vector.broadcast %14 : f32 to vector<1x16xf32>
    %16 = arith.mulf %15, %3 : vector<1x16xf32>
    %17 = arith.addf %13, %16 : vector<1x16xf32>
    %c2 = arith.constant 2 : index
    %c0_13 = arith.constant 0 : index
    %18 = memref.load %arg2[%c2, %c0_13] : memref<8x4xf32, #tpu.memory_space<smem>>
    %19 = vector.broadcast %18 : f32 to vector<1x16xf32>
    %20 = arith.mulf %19, %1 : vector<1x16xf32>
    %c2_14 = arith.constant 2 : index
    %c0_15 = arith.constant 0 : index
    %21 = memref.load %arg3[%c2_14, %c0_15] : memref<8x4xf32, #tpu.memory_space<smem>>
    %22 = vector.broadcast %21 : f32 to vector<1x16xf32>
    %23 = arith.mulf %22, %3 : vector<1x16xf32>
    %24 = arith.addf %20, %23 : vector<1x16xf32>
    %c3 = arith.constant 3 : index
    %c0_16 = arith.constant 0 : index
    %25 = memref.load %arg2[%c3, %c0_16] : memref<8x4xf32, #tpu.memory_space<smem>>
    %26 = vector.broadcast %25 : f32 to vector<1x16xf32>
    %27 = arith.mulf %26, %1 : vector<1x16xf32>
    %c3_17 = arith.constant 3 : index
    %c0_18 = arith.constant 0 : index
    %28 = memref.load %arg3[%c3_17, %c0_18] : memref<8x4xf32, #tpu.memory_space<smem>>
    %29 = vector.broadcast %28 : f32 to vector<1x16xf32>
    %30 = arith.mulf %29, %3 : vector<1x16xf32>
    %31 = arith.addf %27, %30 : vector<1x16xf32>
    %c4 = arith.constant 4 : index
    %c0_19 = arith.constant 0 : index
    %32 = memref.load %arg2[%c4, %c0_19] : memref<8x4xf32, #tpu.memory_space<smem>>
    %33 = vector.broadcast %32 : f32 to vector<1x16xf32>
    %34 = arith.mulf %33, %1 : vector<1x16xf32>
    %c4_20 = arith.constant 4 : index
    %c0_21 = arith.constant 0 : index
    %35 = memref.load %arg3[%c4_20, %c0_21] : memref<8x4xf32, #tpu.memory_space<smem>>
    %36 = vector.broadcast %35 : f32 to vector<1x16xf32>
    %37 = arith.mulf %36, %3 : vector<1x16xf32>
    %38 = arith.addf %34, %37 : vector<1x16xf32>
    %c5 = arith.constant 5 : index
    %c0_22 = arith.constant 0 : index
    %39 = memref.load %arg2[%c5, %c0_22] : memref<8x4xf32, #tpu.memory_space<smem>>
    %40 = vector.broadcast %39 : f32 to vector<1x16xf32>
    %41 = arith.mulf %40, %1 : vector<1x16xf32>
    %c5_23 = arith.constant 5 : index
    %c0_24 = arith.constant 0 : index
    %42 = memref.load %arg3[%c5_23, %c0_24] : memref<8x4xf32, #tpu.memory_space<smem>>
    %43 = vector.broadcast %42 : f32 to vector<1x16xf32>
    %44 = arith.mulf %43, %3 : vector<1x16xf32>
    %45 = arith.addf %41, %44 : vector<1x16xf32>
    %c6 = arith.constant 6 : index
    %c0_25 = arith.constant 0 : index
    %46 = memref.load %arg2[%c6, %c0_25] : memref<8x4xf32, #tpu.memory_space<smem>>
    %47 = vector.broadcast %46 : f32 to vector<1x16xf32>
    %48 = arith.mulf %47, %1 : vector<1x16xf32>
    %c6_26 = arith.constant 6 : index
    %c0_27 = arith.constant 0 : index
    %49 = memref.load %arg3[%c6_26, %c0_27] : memref<8x4xf32, #tpu.memory_space<smem>>
    %50 = vector.broadcast %49 : f32 to vector<1x16xf32>
    %51 = arith.mulf %50, %3 : vector<1x16xf32>
    %52 = arith.addf %48, %51 : vector<1x16xf32>
    %c7 = arith.constant 7 : index
    %c0_28 = arith.constant 0 : index
    %53 = memref.load %arg2[%c7, %c0_28] : memref<8x4xf32, #tpu.memory_space<smem>>
    %54 = vector.broadcast %53 : f32 to vector<1x16xf32>
    %55 = arith.mulf %54, %1 : vector<1x16xf32>
    %c7_29 = arith.constant 7 : index
    %c0_30 = arith.constant 0 : index
    %56 = memref.load %arg3[%c7_29, %c0_30] : memref<8x4xf32, #tpu.memory_space<smem>>
    %57 = vector.broadcast %56 : f32 to vector<1x16xf32>
    %58 = arith.mulf %57, %3 : vector<1x16xf32>
    %59 = arith.addf %55, %58 : vector<1x16xf32>
    %c0_31 = arith.constant 0 : index
    %c1_32 = arith.constant 1 : index
    %c0_33 = arith.constant 0 : index
    %c0_34 = arith.constant 0 : index
    %60 = vector.load %arg5[%c0_31, %c1_32, %c0_33, %c0_34] : memref<1x4x1x256xf32, #tpu.memory_space<vmem>>, vector<1x1x1x16xf32>
    %61 = vector.shape_cast %60 : vector<1x1x1x16xf32> to vector<1x16xf32>
    %c0_35 = arith.constant 0 : index
    %c1_36 = arith.constant 1 : index
    %c0_37 = arith.constant 0 : index
    %c16_38 = arith.constant 16 : index
    %62 = vector.load %arg5[%c0_35, %c1_36, %c0_37, %c16_38] : memref<1x4x1x256xf32, #tpu.memory_space<vmem>>, vector<1x1x1x16xf32>
    %63 = vector.shape_cast %62 : vector<1x1x1x16xf32> to vector<1x16xf32>
    %c0_39 = arith.constant 0 : index
    %c1_40 = arith.constant 1 : index
    %64 = memref.load %arg2[%c0_39, %c1_40] : memref<8x4xf32, #tpu.memory_space<smem>>
    %65 = vector.broadcast %64 : f32 to vector<1x16xf32>
    %66 = arith.mulf %65, %61 : vector<1x16xf32>
    %c0_41 = arith.constant 0 : index
    %c1_42 = arith.constant 1 : index
    %67 = memref.load %arg3[%c0_41, %c1_42] : memref<8x4xf32, #tpu.memory_space<smem>>
    %68 = vector.broadcast %67 : f32 to vector<1x16xf32>
    %69 = arith.mulf %68, %63 : vector<1x16xf32>
    %70 = arith.addf %66, %69 : vector<1x16xf32>
    %71 = arith.addf %10, %70 : vector<1x16xf32>
    %c1_43 = arith.constant 1 : index
    %c1_44 = arith.constant 1 : index
    %72 = memref.load %arg2[%c1_43, %c1_44] : memref<8x4xf32, #tpu.memory_space<smem>>
    %73 = vector.broadcast %72 : f32 to vector<1x16xf32>
    %74 = arith.mulf %73, %61 : vector<1x16xf32>
    %c1_45 = arith.constant 1 : index
    %c1_46 = arith.constant 1 : index
    %75 = memref.load %arg3[%c1_45, %c1_46] : memref<8x4xf32, #tpu.memory_space<smem>>
    %76 = vector.broadcast %75 : f32 to vector<1x16xf32>
    %77 = arith.mulf %76, %63 : vector<1x16xf32>
    %78 = arith.addf %74, %77 : vector<1x16xf32>
    %79 = arith.addf %17, %78 : vector<1x16xf32>
    %c2_47 = arith.constant 2 : index
    %c1_48 = arith.constant 1 : index
    %80 = memref.load %arg2[%c2_47, %c1_48] : memref<8x4xf32, #tpu.memory_space<smem>>
    %81 = vector.broadcast %80 : f32 to vector<1x16xf32>
    %82 = arith.mulf %81, %61 : vector<1x16xf32>
    %c2_49 = arith.constant 2 : index
    %c1_50 = arith.constant 1 : index
    %83 = memref.load %arg3[%c2_49, %c1_50] : memref<8x4xf32, #tpu.memory_space<smem>>
    %84 = vector.broadcast %83 : f32 to vector<1x16xf32>
    %85 = arith.mulf %84, %63 : vector<1x16xf32>
    %86 = arith.addf %82, %85 : vector<1x16xf32>
    %87 = arith.addf %24, %86 : vector<1x16xf32>
    %c3_51 = arith.constant 3 : index
    %c1_52 = arith.constant 1 : index
    %88 = memref.load %arg2[%c3_51, %c1_52] : memref<8x4xf32, #tpu.memory_space<smem>>
    %89 = vector.broadcast %88 : f32 to vector<1x16xf32>
    %90 = arith.mulf %89, %61 : vector<1x16xf32>
    %c3_53 = arith.constant 3 : index
    %c1_54 = arith.constant 1 : index
    %91 = memref.load %arg3[%c3_53, %c1_54] : memref<8x4xf32, #tpu.memory_space<smem>>
    %92 = vector.broadcast %91 : f32 to vector<1x16xf32>
    %93 = arith.mulf %92, %63 : vector<1x16xf32>
    %94 = arith.addf %90, %93 : vector<1x16xf32>
    %95 = arith.addf %31, %94 : vector<1x16xf32>
    %c4_55 = arith.constant 4 : index
    %c1_56 = arith.constant 1 : index
    %96 = memref.load %arg2[%c4_55, %c1_56] : memref<8x4xf32, #tpu.memory_space<smem>>
    %97 = vector.broadcast %96 : f32 to vector<1x16xf32>
    %98 = arith.mulf %97, %61 : vector<1x16xf32>
    %c4_57 = arith.constant 4 : index
    %c1_58 = arith.constant 1 : index
    %99 = memref.load %arg3[%c4_57, %c1_58] : memref<8x4xf32, #tpu.memory_space<smem>>
    %100 = vector.broadcast %99 : f32 to vector<1x16xf32>
    %101 = arith.mulf %100, %63 : vector<1x16xf32>
    %102 = arith.addf %98, %101 : vector<1x16xf32>
    %103 = arith.addf %38, %102 : vector<1x16xf32>
    %c5_59 = arith.constant 5 : index
    %c1_60 = arith.constant 1 : index
    %104 = memref.load %arg2[%c5_59, %c1_60] : memref<8x4xf32, #tpu.memory_space<smem>>
    %105 = vector.broadcast %104 : f32 to vector<1x16xf32>
    %106 = arith.mulf %105, %61 : vector<1x16xf32>
    %c5_61 = arith.constant 5 : index
    %c1_62 = arith.constant 1 : index
    %107 = memref.load %arg3[%c5_61, %c1_62] : memref<8x4xf32, #tpu.memory_space<smem>>
    %108 = vector.broadcast %107 : f32 to vector<1x16xf32>
    %109 = arith.mulf %108, %63 : vector<1x16xf32>
    %110 = arith.addf %106, %109 : vector<1x16xf32>
    %111 = arith.addf %45, %110 : vector<1x16xf32>
    %c6_63 = arith.constant 6 : index
    %c1_64 = arith.constant 1 : index
    %112 = memref.load %arg2[%c6_63, %c1_64] : memref<8x4xf32, #tpu.memory_space<smem>>
    %113 = vector.broadcast %112 : f32 to vector<1x16xf32>
    %114 = arith.mulf %113, %61 : vector<1x16xf32>
    %c6_65 = arith.constant 6 : index
    %c1_66 = arith.constant 1 : index
    %115 = memref.load %arg3[%c6_65, %c1_66] : memref<8x4xf32, #tpu.memory_space<smem>>
    %116 = vector.broadcast %115 : f32 to vector<1x16xf32>
    %117 = arith.mulf %116, %63 : vector<1x16xf32>
    %118 = arith.addf %114, %117 : vector<1x16xf32>
    %119 = arith.addf %52, %118 : vector<1x16xf32>
    %c7_67 = arith.constant 7 : index
    %c1_68 = arith.constant 1 : index
    %120 = memref.load %arg2[%c7_67, %c1_68] : memref<8x4xf32, #tpu.memory_space<smem>>
    %121 = vector.broadcast %120 : f32 to vector<1x16xf32>
    %122 = arith.mulf %121, %61 : vector<1x16xf32>
    %c7_69 = arith.constant 7 : index
    %c1_70 = arith.constant 1 : index
    %123 = memref.load %arg3[%c7_69, %c1_70] : memref<8x4xf32, #tpu.memory_space<smem>>
    %124 = vector.broadcast %123 : f32 to vector<1x16xf32>
    %125 = arith.mulf %124, %63 : vector<1x16xf32>
    %126 = arith.addf %122, %125 : vector<1x16xf32>
    %127 = arith.addf %59, %126 : vector<1x16xf32>
    %c0_71 = arith.constant 0 : index
    %c2_72 = arith.constant 2 : index
    %c0_73 = arith.constant 0 : index
    %c0_74 = arith.constant 0 : index
    %128 = vector.load %arg5[%c0_71, %c2_72, %c0_73, %c0_74] : memref<1x4x1x256xf32, #tpu.memory_space<vmem>>, vector<1x1x1x16xf32>
    %129 = vector.shape_cast %128 : vector<1x1x1x16xf32> to vector<1x16xf32>
    %c0_75 = arith.constant 0 : index
    %c2_76 = arith.constant 2 : index
    %c0_77 = arith.constant 0 : index
    %c16_78 = arith.constant 16 : index
    %130 = vector.load %arg5[%c0_75, %c2_76, %c0_77, %c16_78] : memref<1x4x1x256xf32, #tpu.memory_space<vmem>>, vector<1x1x1x16xf32>
    %131 = vector.shape_cast %130 : vector<1x1x1x16xf32> to vector<1x16xf32>
    %c0_79 = arith.constant 0 : index
    %c2_80 = arith.constant 2 : index
    %132 = memref.load %arg2[%c0_79, %c2_80] : memref<8x4xf32, #tpu.memory_space<smem>>
    %133 = vector.broadcast %132 : f32 to vector<1x16xf32>
    %134 = arith.mulf %133, %129 : vector<1x16xf32>
    %c0_81 = arith.constant 0 : index
    %c2_82 = arith.constant 2 : index
    %135 = memref.load %arg3[%c0_81, %c2_82] : memref<8x4xf32, #tpu.memory_space<smem>>
    %136 = vector.broadcast %135 : f32 to vector<1x16xf32>
    %137 = arith.mulf %136, %131 : vector<1x16xf32>
    %138 = arith.addf %134, %137 : vector<1x16xf32>
    %139 = arith.addf %71, %138 : vector<1x16xf32>
    %c1_83 = arith.constant 1 : index
    %c2_84 = arith.constant 2 : index
    %140 = memref.load %arg2[%c1_83, %c2_84] : memref<8x4xf32, #tpu.memory_space<smem>>
    %141 = vector.broadcast %140 : f32 to vector<1x16xf32>
    %142 = arith.mulf %141, %129 : vector<1x16xf32>
    %c1_85 = arith.constant 1 : index
    %c2_86 = arith.constant 2 : index
    %143 = memref.load %arg3[%c1_85, %c2_86] : memref<8x4xf32, #tpu.memory_space<smem>>
    %144 = vector.broadcast %143 : f32 to vector<1x16xf32>
    %145 = arith.mulf %144, %131 : vector<1x16xf32>
    %146 = arith.addf %142, %145 : vector<1x16xf32>
    %147 = arith.addf %79, %146 : vector<1x16xf32>
    %c2_87 = arith.constant 2 : index
    %c2_88 = arith.constant 2 : index
    %148 = memref.load %arg2[%c2_87, %c2_88] : memref<8x4xf32, #tpu.memory_space<smem>>
    %149 = vector.broadcast %148 : f32 to vector<1x16xf32>
    %150 = arith.mulf %149, %129 : vector<1x16xf32>
    %c2_89 = arith.constant 2 : index
    %c2_90 = arith.constant 2 : index
    %151 = memref.load %arg3[%c2_89, %c2_90] : memref<8x4xf32, #tpu.memory_space<smem>>
    %152 = vector.broadcast %151 : f32 to vector<1x16xf32>
    %153 = arith.mulf %152, %131 : vector<1x16xf32>
    %154 = arith.addf %150, %153 : vector<1x16xf32>
    %155 = arith.addf %87, %154 : vector<1x16xf32>
    %c3_91 = arith.constant 3 : index
    %c2_92 = arith.constant 2 : index
    %156 = memref.load %arg2[%c3_91, %c2_92] : memref<8x4xf32, #tpu.memory_space<smem>>
    %157 = vector.broadcast %156 : f32 to vector<1x16xf32>
    %158 = arith.mulf %157, %129 : vector<1x16xf32>
    %c3_93 = arith.constant 3 : index
    %c2_94 = arith.constant 2 : index
    %159 = memref.load %arg3[%c3_93, %c2_94] : memref<8x4xf32, #tpu.memory_space<smem>>
    %160 = vector.broadcast %159 : f32 to vector<1x16xf32>
    %161 = arith.mulf %160, %131 : vector<1x16xf32>
    %162 = arith.addf %158, %161 : vector<1x16xf32>
    %163 = arith.addf %95, %162 : vector<1x16xf32>
    %c4_95 = arith.constant 4 : index
    %c2_96 = arith.constant 2 : index
    %164 = memref.load %arg2[%c4_95, %c2_96] : memref<8x4xf32, #tpu.memory_space<smem>>
    %165 = vector.broadcast %164 : f32 to vector<1x16xf32>
    %166 = arith.mulf %165, %129 : vector<1x16xf32>
    %c4_97 = arith.constant 4 : index
    %c2_98 = arith.constant 2 : index
    %167 = memref.load %arg3[%c4_97, %c2_98] : memref<8x4xf32, #tpu.memory_space<smem>>
    %168 = vector.broadcast %167 : f32 to vector<1x16xf32>
    %169 = arith.mulf %168, %131 : vector<1x16xf32>
    %170 = arith.addf %166, %169 : vector<1x16xf32>
    %171 = arith.addf %103, %170 : vector<1x16xf32>
    %c5_99 = arith.constant 5 : index
    %c2_100 = arith.constant 2 : index
    %172 = memref.load %arg2[%c5_99, %c2_100] : memref<8x4xf32, #tpu.memory_space<smem>>
    %173 = vector.broadcast %172 : f32 to vector<1x16xf32>
    %174 = arith.mulf %173, %129 : vector<1x16xf32>
    %c5_101 = arith.constant 5 : index
    %c2_102 = arith.constant 2 : index
    %175 = memref.load %arg3[%c5_101, %c2_102] : memref<8x4xf32, #tpu.memory_space<smem>>
    %176 = vector.broadcast %175 : f32 to vector<1x16xf32>
    %177 = arith.mulf %176, %131 : vector<1x16xf32>
    %178 = arith.addf %174, %177 : vector<1x16xf32>
    %179 = arith.addf %111, %178 : vector<1x16xf32>
    %c6_103 = arith.constant 6 : index
    %c2_104 = arith.constant 2 : index
    %180 = memref.load %arg2[%c6_103, %c2_104] : memref<8x4xf32, #tpu.memory_space<smem>>
    %181 = vector.broadcast %180 : f32 to vector<1x16xf32>
    %182 = arith.mulf %181, %129 : vector<1x16xf32>
    %c6_105 = arith.constant 6 : index
    %c2_106 = arith.constant 2 : index
    %183 = memref.load %arg3[%c6_105, %c2_106] : memref<8x4xf32, #tpu.memory_space<smem>>
    %184 = vector.broadcast %183 : f32 to vector<1x16xf32>
    %185 = arith.mulf %184, %131 : vector<1x16xf32>
    %186 = arith.addf %182, %185 : vector<1x16xf32>
    %187 = arith.addf %119, %186 : vector<1x16xf32>
    %c7_107 = arith.constant 7 : index
    %c2_108 = arith.constant 2 : index
    %188 = memref.load %arg2[%c7_107, %c2_108] : memref<8x4xf32, #tpu.memory_space<smem>>
    %189 = vector.broadcast %188 : f32 to vector<1x16xf32>
    %190 = arith.mulf %189, %129 : vector<1x16xf32>
    %c7_109 = arith.constant 7 : index
    %c2_110 = arith.constant 2 : index
    %191 = memref.load %arg3[%c7_109, %c2_110] : memref<8x4xf32, #tpu.memory_space<smem>>
    %192 = vector.broadcast %191 : f32 to vector<1x16xf32>
    %193 = arith.mulf %192, %131 : vector<1x16xf32>
    %194 = arith.addf %190, %193 : vector<1x16xf32>
    %195 = arith.addf %127, %194 : vector<1x16xf32>
    %c0_111 = arith.constant 0 : index
    %c3_112 = arith.constant 3 : index
    %c0_113 = arith.constant 0 : index
    %c0_114 = arith.constant 0 : index
    %196 = vector.load %arg5[%c0_111, %c3_112, %c0_113, %c0_114] : memref<1x4x1x256xf32, #tpu.memory_space<vmem>>, vector<1x1x1x16xf32>
    %197 = vector.shape_cast %196 : vector<1x1x1x16xf32> to vector<1x16xf32>
    %c0_115 = arith.constant 0 : index
    %c3_116 = arith.constant 3 : index
    %c0_117 = arith.constant 0 : index
    %c16_118 = arith.constant 16 : index
    %198 = vector.load %arg5[%c0_115, %c3_116, %c0_117, %c16_118] : memref<1x4x1x256xf32, #tpu.memory_space<vmem>>, vector<1x1x1x16xf32>
    %199 = vector.shape_cast %198 : vector<1x1x1x16xf32> to vector<1x16xf32>
    %c0_119 = arith.constant 0 : index
    %c3_120 = arith.constant 3 : index
    %200 = memref.load %arg2[%c0_119, %c3_120] : memref<8x4xf32, #tpu.memory_space<smem>>
    %201 = vector.broadcast %200 : f32 to vector<1x16xf32>
    %202 = arith.mulf %201, %197 : vector<1x16xf32>
    %c0_121 = arith.constant 0 : index
    %c3_122 = arith.constant 3 : index
    %203 = memref.load %arg3[%c0_121, %c3_122] : memref<8x4xf32, #tpu.memory_space<smem>>
    %204 = vector.broadcast %203 : f32 to vector<1x16xf32>
    %205 = arith.mulf %204, %199 : vector<1x16xf32>
    %206 = arith.addf %202, %205 : vector<1x16xf32>
    %207 = arith.addf %139, %206 : vector<1x16xf32>
    %c1_123 = arith.constant 1 : index
    %c3_124 = arith.constant 3 : index
    %208 = memref.load %arg2[%c1_123, %c3_124] : memref<8x4xf32, #tpu.memory_space<smem>>
    %209 = vector.broadcast %208 : f32 to vector<1x16xf32>
    %210 = arith.mulf %209, %197 : vector<1x16xf32>
    %c1_125 = arith.constant 1 : index
    %c3_126 = arith.constant 3 : index
    %211 = memref.load %arg3[%c1_125, %c3_126] : memref<8x4xf32, #tpu.memory_space<smem>>
    %212 = vector.broadcast %211 : f32 to vector<1x16xf32>
    %213 = arith.mulf %212, %199 : vector<1x16xf32>
    %214 = arith.addf %210, %213 : vector<1x16xf32>
    %215 = arith.addf %147, %214 : vector<1x16xf32>
    %c2_127 = arith.constant 2 : index
    %c3_128 = arith.constant 3 : index
    %216 = memref.load %arg2[%c2_127, %c3_128] : memref<8x4xf32, #tpu.memory_space<smem>>
    %217 = vector.broadcast %216 : f32 to vector<1x16xf32>
    %218 = arith.mulf %217, %197 : vector<1x16xf32>
    %c2_129 = arith.constant 2 : index
    %c3_130 = arith.constant 3 : index
    %219 = memref.load %arg3[%c2_129, %c3_130] : memref<8x4xf32, #tpu.memory_space<smem>>
    %220 = vector.broadcast %219 : f32 to vector<1x16xf32>
    %221 = arith.mulf %220, %199 : vector<1x16xf32>
    %222 = arith.addf %218, %221 : vector<1x16xf32>
    %223 = arith.addf %155, %222 : vector<1x16xf32>
    %c3_131 = arith.constant 3 : index
    %c3_132 = arith.constant 3 : index
    %224 = memref.load %arg2[%c3_131, %c3_132] : memref<8x4xf32, #tpu.memory_space<smem>>
    %225 = vector.broadcast %224 : f32 to vector<1x16xf32>
    %226 = arith.mulf %225, %197 : vector<1x16xf32>
    %c3_133 = arith.constant 3 : index
    %c3_134 = arith.constant 3 : index
    %227 = memref.load %arg3[%c3_133, %c3_134] : memref<8x4xf32, #tpu.memory_space<smem>>
    %228 = vector.broadcast %227 : f32 to vector<1x16xf32>
    %229 = arith.mulf %228, %199 : vector<1x16xf32>
    %230 = arith.addf %226, %229 : vector<1x16xf32>
    %231 = arith.addf %163, %230 : vector<1x16xf32>
    %c4_135 = arith.constant 4 : index
    %c3_136 = arith.constant 3 : index
    %232 = memref.load %arg2[%c4_135, %c3_136] : memref<8x4xf32, #tpu.memory_space<smem>>
    %233 = vector.broadcast %232 : f32 to vector<1x16xf32>
    %234 = arith.mulf %233, %197 : vector<1x16xf32>
    %c4_137 = arith.constant 4 : index
    %c3_138 = arith.constant 3 : index
    %235 = memref.load %arg3[%c4_137, %c3_138] : memref<8x4xf32, #tpu.memory_space<smem>>
    %236 = vector.broadcast %235 : f32 to vector<1x16xf32>
    %237 = arith.mulf %236, %199 : vector<1x16xf32>
    %238 = arith.addf %234, %237 : vector<1x16xf32>
    %239 = arith.addf %171, %238 : vector<1x16xf32>
    %c5_139 = arith.constant 5 : index
    %c3_140 = arith.constant 3 : index
    %240 = memref.load %arg2[%c5_139, %c3_140] : memref<8x4xf32, #tpu.memory_space<smem>>
    %241 = vector.broadcast %240 : f32 to vector<1x16xf32>
    %242 = arith.mulf %241, %197 : vector<1x16xf32>
    %c5_141 = arith.constant 5 : index
    %c3_142 = arith.constant 3 : index
    %243 = memref.load %arg3[%c5_141, %c3_142] : memref<8x4xf32, #tpu.memory_space<smem>>
    %244 = vector.broadcast %243 : f32 to vector<1x16xf32>
    %245 = arith.mulf %244, %199 : vector<1x16xf32>
    %246 = arith.addf %242, %245 : vector<1x16xf32>
    %247 = arith.addf %179, %246 : vector<1x16xf32>
    %c6_143 = arith.constant 6 : index
    %c3_144 = arith.constant 3 : index
    %248 = memref.load %arg2[%c6_143, %c3_144] : memref<8x4xf32, #tpu.memory_space<smem>>
    %249 = vector.broadcast %248 : f32 to vector<1x16xf32>
    %250 = arith.mulf %249, %197 : vector<1x16xf32>
    %c6_145 = arith.constant 6 : index
    %c3_146 = arith.constant 3 : index
    %251 = memref.load %arg3[%c6_145, %c3_146] : memref<8x4xf32, #tpu.memory_space<smem>>
    %252 = vector.broadcast %251 : f32 to vector<1x16xf32>
    %253 = arith.mulf %252, %199 : vector<1x16xf32>
    %254 = arith.addf %250, %253 : vector<1x16xf32>
    %255 = arith.addf %187, %254 : vector<1x16xf32>
    %c7_147 = arith.constant 7 : index
    %c3_148 = arith.constant 3 : index
    %256 = memref.load %arg2[%c7_147, %c3_148] : memref<8x4xf32, #tpu.memory_space<smem>>
    %257 = vector.broadcast %256 : f32 to vector<1x16xf32>
    %258 = arith.mulf %257, %197 : vector<1x16xf32>
    %c7_149 = arith.constant 7 : index
    %c3_150 = arith.constant 3 : index
    %259 = memref.load %arg3[%c7_149, %c3_150] : memref<8x4xf32, #tpu.memory_space<smem>>
    %260 = vector.broadcast %259 : f32 to vector<1x16xf32>
    %261 = arith.mulf %260, %199 : vector<1x16xf32>
    %262 = arith.addf %258, %261 : vector<1x16xf32>
    %263 = arith.addf %195, %262 : vector<1x16xf32>
    %c0_151 = arith.constant 0 : index
    %264 = memref.load %arg4[%c0_151] : memref<8xf32, #tpu.memory_space<smem>>
    %265 = vector.broadcast %264 : f32 to vector<1x16xf32>
    %266 = arith.addf %207, %265 : vector<1x16xf32>
    %c0_152 = arith.constant 0 : index
    %c0_153 = arith.constant 0 : index
    %c0_154 = arith.constant 0 : index
    %c0_155 = arith.constant 0 : index
    %267 = vector.load %arg6[%c0_152, %c0_153, %c0_154, %c0_155] : memref<1x8x1x128xf32, #tpu.memory_space<vmem>>, vector<1x1x1x16xf32>
    %268 = vector.shape_cast %267 : vector<1x1x1x16xf32> to vector<1x16xf32>
    %269 = vector.shape_cast %266 : vector<1x16xf32> to vector<1x1x1x16xf32>
    tpu.vector_store %arg6[%c0_152, %c0_153, %c0_154, %c0_155], %269 {strides = array<i32>} : memref<1x8x1x128xf32, #tpu.memory_space<vmem>>, vector<1x1x1x16xf32>,
    %c1_156 = arith.constant 1 : index
    %270 = memref.load %arg4[%c1_156] : memref<8xf32, #tpu.memory_space<smem>>
    %271 = vector.broadcast %270 : f32 to vector<1x16xf32>
    %272 = arith.addf %215, %271 : vector<1x16xf32>
    %c0_157 = arith.constant 0 : index
    %c1_158 = arith.constant 1 : index
    %c0_159 = arith.constant 0 : index
    %c0_160 = arith.constant 0 : index
    %273 = vector.load %arg6[%c0_157, %c1_158, %c0_159, %c0_160] : memref<1x8x1x128xf32, #tpu.memory_space<vmem>>, vector<1x1x1x16xf32>
    %274 = vector.shape_cast %273 : vector<1x1x1x16xf32> to vector<1x16xf32>
    %275 = vector.shape_cast %272 : vector<1x16xf32> to vector<1x1x1x16xf32>
    tpu.vector_store %arg6[%c0_157, %c1_158, %c0_159, %c0_160], %275 {strides = array<i32>} : memref<1x8x1x128xf32, #tpu.memory_space<vmem>>, vector<1x1x1x16xf32>,
    %c2_161 = arith.constant 2 : index
    %276 = memref.load %arg4[%c2_161] : memref<8xf32, #tpu.memory_space<smem>>
    %277 = vector.broadcast %276 : f32 to vector<1x16xf32>
    %278 = arith.addf %223, %277 : vector<1x16xf32>
    %c0_162 = arith.constant 0 : index
    %c2_163 = arith.constant 2 : index
    %c0_164 = arith.constant 0 : index
    %c0_165 = arith.constant 0 : index
    %279 = vector.load %arg6[%c0_162, %c2_163, %c0_164, %c0_165] : memref<1x8x1x128xf32, #tpu.memory_space<vmem>>, vector<1x1x1x16xf32>
    %280 = vector.shape_cast %279 : vector<1x1x1x16xf32> to vector<1x16xf32>
    %281 = vector.shape_cast %278 : vector<1x16xf32> to vector<1x1x1x16xf32>
    tpu.vector_store %arg6[%c0_162, %c2_163, %c0_164, %c0_165], %281 {strides = array<i32>} : memref<1x8x1x128xf32, #tpu.memory_space<vmem>>, vector<1x1x1x16xf32>,
    %c3_166 = arith.constant 3 : index
    %282 = memref.load %arg4[%c3_166] : memref<8xf32, #tpu.memory_space<smem>>
    %283 = vector.broadcast %282 : f32 to vector<1x16xf32>
    %284 = arith.addf %231, %283 : vector<1x16xf32>
    %c0_167 = arith.constant 0 : index
    %c3_168 = arith.constant 3 : index
    %c0_169 = arith.constant 0 : index
    %c0_170 = arith.constant 0 : index
    %285 = vector.load %arg6[%c0_167, %c3_168, %c0_169, %c0_170] : memref<1x8x1x128xf32, #tpu.memory_space<vmem>>, vector<1x1x1x16xf32>
    %286 = vector.shape_cast %285 : vector<1x1x1x16xf32> to vector<1x16xf32>
    %287 = vector.shape_cast %284 : vector<1x16xf32> to vector<1x1x1x16xf32>
    tpu.vector_store %arg6[%c0_167, %c3_168, %c0_169, %c0_170], %287 {strides = array<i32>} : memref<1x8x1x128xf32, #tpu.memory_space<vmem>>, vector<1x1x1x16xf32>,
    %c4_171 = arith.constant 4 : index
    %288 = memref.load %arg4[%c4_171] : memref<8xf32, #tpu.memory_space<smem>>
    %289 = vector.broadcast %288 : f32 to vector<1x16xf32>
    %290 = arith.addf %239, %289 : vector<1x16xf32>
    %c0_172 = arith.constant 0 : index
    %c4_173 = arith.constant 4 : index
    %c0_174 = arith.constant 0 : index
    %c0_175 = arith.constant 0 : index
    %291 = vector.load %arg6[%c0_172, %c4_173, %c0_174, %c0_175] : memref<1x8x1x128xf32, #tpu.memory_space<vmem>>, vector<1x1x1x16xf32>
    %292 = vector.shape_cast %291 : vector<1x1x1x16xf32> to vector<1x16xf32>
    %293 = vector.shape_cast %290 : vector<1x16xf32> to vector<1x1x1x16xf32>
    tpu.vector_store %arg6[%c0_172, %c4_173, %c0_174, %c0_175], %293 {strides = array<i32>} : memref<1x8x1x128xf32, #tpu.memory_space<vmem>>, vector<1x1x1x16xf32>,
    %c5_176 = arith.constant 5 : index
    %294 = memref.load %arg4[%c5_176] : memref<8xf32, #tpu.memory_space<smem>>
    %295 = vector.broadcast %294 : f32 to vector<1x16xf32>
    %296 = arith.addf %247, %295 : vector<1x16xf32>
    %c0_177 = arith.constant 0 : index
    %c5_178 = arith.constant 5 : index
    %c0_179 = arith.constant 0 : index
    %c0_180 = arith.constant 0 : index
    %297 = vector.load %arg6[%c0_177, %c5_178, %c0_179, %c0_180] : memref<1x8x1x128xf32, #tpu.memory_space<vmem>>, vector<1x1x1x16xf32>
    %298 = vector.shape_cast %297 : vector<1x1x1x16xf32> to vector<1x16xf32>
    %299 = vector.shape_cast %296 : vector<1x16xf32> to vector<1x1x1x16xf32>
    tpu.vector_store %arg6[%c0_177, %c5_178, %c0_179, %c0_180], %299 {strides = array<i32>} : memref<1x8x1x128xf32, #tpu.memory_space<vmem>>, vector<1x1x1x16xf32>,
    %c6_181 = arith.constant 6 : index
    %300 = memref.load %arg4[%c6_181] : memref<8xf32, #tpu.memory_space<smem>>
    %301 = vector.broadcast %300 : f32 to vector<1x16xf32>
    %302 = arith.addf %255, %301 : vector<1x16xf32>
    %c0_182 = arith.constant 0 : index
    %c6_183 = arith.constant 6 : index
    %c0_184 = arith.constant 0 : index
    %c0_185 = arith.constant 0 : index
    %303 = vector.load %arg6[%c0_182, %c6_183, %c0_184, %c0_185] : memref<1x8x1x128xf32, #tpu.memory_space<vmem>>, vector<1x1x1x16xf32>
    %304 = vector.shape_cast %303 : vector<1x1x1x16xf32> to vector<1x16xf32>
    %305 = vector.shape_cast %302 : vector<1x16xf32> to vector<1x1x1x16xf32>
    tpu.vector_store %arg6[%c0_182, %c6_183, %c0_184, %c0_185], %305 {strides = array<i32>} : memref<1x8x1x128xf32, #tpu.memory_space<vmem>>, vector<1x1x1x16xf32>,
    %c7_186 = arith.constant 7 : index
    %306 = memref.load %arg4[%c7_186] : memref<8xf32, #tpu.memory_space<smem>>
    %307 = vector.broadcast %306 : f32 to vector<1x16xf32>
    %308 = arith.addf %263, %307 : vector<1x16xf32>
    %c0_187 = arith.constant 0 : index
    %c7_188 = arith.constant 7 : index
    %c0_189 = arith.constant 0 : index
    %c0_190 = arith.constant 0 : index
    %309 = vector.load %arg6[%c0_187, %c7_188, %c0_189, %c0_190] : memref<1x8x1x128xf32, #tpu.memory_space<vmem>>, vector<1x1x1x16xf32>
    %310 = vector.shape_cast %309 : vector<1x1x1x16xf32> to vector<1x16xf32>
    %311 = vector.shape_cast %308 : vector<1x16xf32> to vector<1x1x1x16xf32>
    tpu.vector_store %arg6[%c0_187, %c7_188, %c0_189, %c0_190], %311 {strides = array<i32>} : memref<1x8x1x128xf32, #tpu.memory_space<vmem>>, vector<1x1x1x16xf32>,
    %c0_191 = arith.constant 0 : index
    %c0_192 = arith.constant 0 : index
    %c0_193 = arith.constant 0 : index
    %c32 = arith.constant 32 : index
    %312 = vector.load %arg5[%c0_191, %c0_192, %c0_193, %c32] : memref<1x4x1x256xf32, #tpu.memory_space<vmem>>, vector<1x1x1x16xf32>
    %313 = vector.shape_cast %312 : vector<1x1x1x16xf32> to vector<1x16xf32>
    %c0_194 = arith.constant 0 : index
    %c0_195 = arith.constant 0 : index
    %c0_196 = arith.constant 0 : index
    %c48 = arith.constant 48 : index
    %314 = vector.load %arg5[%c0_194, %c0_195, %c0_196, %c48] : memref<1x4x1x256xf32, #tpu.memory_space<vmem>>, vector<1x1x1x16xf32>
    %315 = vector.shape_cast %314 : vector<1x1x1x16xf32> to vector<1x16xf32>
    %c0_197 = arith.constant 0 : index
    %c0_198 = arith.constant 0 : index
    %316 = memref.load %arg2[%c0_197, %c0_198] : memref<8x4xf32, #tpu.memory_space<smem>>
    %317 = vector.broadcast %316 : f32 to vector<1x16xf32>
    %318 = arith.mulf %317, %313 : vector<1x16xf32>
    %c0_199 = arith.constant 0 : index
    %c0_200 = arith.constant 0 : index
    %319 = memref.load %arg3[%c0_199, %c0_200] : memref<8x4xf32, #tpu.memory_space<smem>>
    %320 = vector.broadcast %319 : f32 to vector<1x16xf32>
    %321 = arith.mulf %320, %315 : vector<1x16xf32>
    %322 = arith.addf %318, %321 : vector<1x16xf32>
    %c1_201 = arith.constant 1 : index
    %c0_202 = arith.constant 0 : index
    %323 = memref.load %arg2[%c1_201, %c0_202] : memref<8x4xf32, #tpu.memory_space<smem>>
    %324 = vector.broadcast %323 : f32 to vector<1x16xf32>
    %325 = arith.mulf %324, %313 : vector<1x16xf32>
    %c1_203 = arith.constant 1 : index
    %c0_204 = arith.constant 0 : index
    %326 = memref.load %arg3[%c1_203, %c0_204] : memref<8x4xf32, #tpu.memory_space<smem>>
    %327 = vector.broadcast %326 : f32 to vector<1x16xf32>
    %328 = arith.mulf %327, %315 : vector<1x16xf32>
    %329 = arith.addf %325, %328 : vector<1x16xf32>
    %c2_205 = arith.constant 2 : index
    %c0_206 = arith.constant 0 : index
    %330 = memref.load %arg2[%c2_205, %c0_206] : memref<8x4xf32, #tpu.memory_space<smem>>
    %331 = vector.broadcast %330 : f32 to vector<1x16xf32>
    %332 = arith.mulf %331, %313 : vector<1x16xf32>
    %c2_207 = arith.constant 2 : index
    %c0_208 = arith.constant 0 : index
    %333 = memref.load %arg3[%c2_207, %c0_208] : memref<8x4xf32, #tpu.memory_space<smem>>
    %334 = vector.broadcast %333 : f32 to vector<1x16xf32>
    %335 = arith.mulf %334, %315 : vector<1x16xf32>
    %336 = arith.addf %332, %335 : vector<1x16xf32>
    %c3_209 = arith.constant 3 : index
    %c0_210 = arith.constant 0 : index
    %337 = memref.load %arg2[%c3_209, %c0_210] : memref<8x4xf32, #tpu.memory_space<smem>>
    %338 = vector.broadcast %337 : f32 to vector<1x16xf32>
    %339 = arith.mulf %338, %313 : vector<1x16xf32>
    %c3_211 = arith.constant 3 : index
    %c0_212 = arith.constant 0 : index
    %340 = memref.load %arg3[%c3_211, %c0_212] : memref<8x4xf32, #tpu.memory_space<smem>>
    %341 = vector.broadcast %340 : f32 to vector<1x16xf32>
    %342 = arith.mulf %341, %315 : vector<1x16xf32>
    %343 = arith.addf %339, %342 : vector<1x16xf32>
    %c4_213 = arith.constant 4 : index
    %c0_214 = arith.constant 0 : index
    %344 = memref.load %arg2[%c4_213, %c0_214] : memref<8x4xf32, #tpu.memory_space<smem>>
    %345 = vector.broadcast %344 : f32 to vector<1x16xf32>
    %346 = arith.mulf %345, %313 : vector<1x16xf32>
    %c4_215 = arith.constant 4 : index
    %c0_216 = arith.constant 0 : index
    %347 = memref.load %arg3[%c4_215, %c0_216] : memref<8x4xf32, #tpu.memory_space<smem>>
    %348 = vector.broadcast %347 : f32 to vector<1x16xf32>
    %349 = arith.mulf %348, %315 : vector<1x16xf32>
    %350 = arith.addf %346, %349 : vector<1x16xf32>
    %c5_217 = arith.constant 5 : index
    %c0_218 = arith.constant 0 : index
    %351 = memref.load %arg2[%c5_217, %c0_218] : memref<8x4xf32, #tpu.memory_space<smem>>
    %352 = vector.broadcast %351 : f32 to vector<1x16xf32>
    %353 = arith.mulf %352, %313 : vector<1x16xf32>
    %c5_219 = arith.constant 5 : index
    %c0_220 = arith.constant 0 : index
    %354 = memref.load %arg3[%c5_219, %c0_220] : memref<8x4xf32, #tpu.memory_space<smem>>
    %355 = vector.broadcast %354 : f32 to vector<1x16xf32>
    %356 = arith.mulf %355, %315 : vector<1x16xf32>
    %357 = arith.addf %353, %356 : vector<1x16xf32>
    %c6_221 = arith.constant 6 : index
    %c0_222 = arith.constant 0 : index
    %358 = memref.load %arg2[%c6_221, %c0_222] : memref<8x4xf32, #tpu.memory_space<smem>>
    %359 = vector.broadcast %358 : f32 to vector<1x16xf32>
    %360 = arith.mulf %359, %313 : vector<1x16xf32>
    %c6_223 = arith.constant 6 : index
    %c0_224 = arith.constant 0 : index
    %361 = memref.load %arg3[%c6_223, %c0_224] : memref<8x4xf32, #tpu.memory_space<smem>>
    %362 = vector.broadcast %361 : f32 to vector<1x16xf32>
    %363 = arith.mulf %362, %315 : vector<1x16xf32>
    %364 = arith.addf %360, %363 : vector<1x16xf32>
    %c7_225 = arith.constant 7 : index
    %c0_226 = arith.constant 0 : index
    %365 = memref.load %arg2[%c7_225, %c0_226] : memref<8x4xf32, #tpu.memory_space<smem>>
    %366 = vector.broadcast %365 : f32 to vector<1x16xf32>
    %367 = arith.mulf %366, %313 : vector<1x16xf32>
    %c7_227 = arith.constant 7 : index
    %c0_228 = arith.constant 0 : index
    %368 = memref.load %arg3[%c7_227, %c0_228] : memref<8x4xf32, #tpu.memory_space<smem>>
    %369 = vector.broadcast %368 : f32 to vector<1x16xf32>
    %370 = arith.mulf %369, %315 : vector<1x16xf32>
    %371 = arith.addf %367, %370 : vector<1x16xf32>
    %c0_229 = arith.constant 0 : index
    %c1_230 = arith.constant 1 : index
    %c0_231 = arith.constant 0 : index
    %c32_232 = arith.constant 32 : index
    %372 = vector.load %arg5[%c0_229, %c1_230, %c0_231, %c32_232] : memref<1x4x1x256xf32, #tpu.memory_space<vmem>>, vector<1x1x1x16xf32>
    %373 = vector.shape_cast %372 : vector<1x1x1x16xf32> to vector<1x16xf32>
    %c0_233 = arith.constant 0 : index
    %c1_234 = arith.constant 1 : index
    %c0_235 = arith.constant 0 : index
    %c48_236 = arith.constant 48 : index
    %374 = vector.load %arg5[%c0_233, %c1_234, %c0_235, %c48_236] : memref<1x4x1x256xf32, #tpu.memory_space<vmem>>, vector<1x1x1x16xf32>
    %375 = vector.shape_cast %374 : vector<1x1x1x16xf32> to vector<1x16xf32>
    %c0_237 = arith.constant 0 : index
    %c1_238 = arith.constant 1 : index
    %376 = memref.load %arg2[%c0_237, %c1_238] : memref<8x4xf32, #tpu.memory_space<smem>>
    %377 = vector.broadcast %376 : f32 to vector<1x16xf32>
    %378 = arith.mulf %377, %373 : vector<1x16xf32>
    %c0_239 = arith.constant 0 : index
    %c1_240 = arith.constant 1 : index
    %379 = memref.load %arg3[%c0_239, %c1_240] : memref<8x4xf32, #tpu.memory_space<smem>>
    %380 = vector.broadcast %379 : f32 to vector<1x16xf32>
    %381 = arith.mulf %380, %375 : vector<1x16xf32>
    %382 = arith.addf %378, %381 : vector<1x16xf32>
    %383 = arith.addf %322, %382 : vector<1x16xf32>
    %c1_241 = arith.constant 1 : index
    %c1_242 = arith.constant 1 : index
    %384 = memref.load %arg2[%c1_241, %c1_242] : memref<8x4xf32, #tpu.memory_space<smem>>
    %385 = vector.broadcast %384 : f32 to vector<1x16xf32>
    %386 = arith.mulf %385, %373 : vector<1x16xf32>
    %c1_243 = arith.constant 1 : index
    %c1_244 = arith.constant 1 : index
    %387 = memref.load %arg3[%c1_243, %c1_244] : memref<8x4xf32, #tpu.memory_space<smem>>
    %388 = vector.broadcast %387 : f32 to vector<1x16xf32>
    %389 = arith.mulf %388, %375 : vector<1x16xf32>
    %390 = arith.addf %386, %389 : vector<1x16xf32>
    %391 = arith.addf %329, %390 : vector<1x16xf32>
    %c2_245 = arith.constant 2 : index
    %c1_246 = arith.constant 1 : index
    %392 = memref.load %arg2[%c2_245, %c1_246] : memref<8x4xf32, #tpu.memory_space<smem>>
    %393 = vector.broadcast %392 : f32 to vector<1x16xf32>
    %394 = arith.mulf %393, %373 : vector<1x16xf32>
    %c2_247 = arith.constant 2 : index
    %c1_248 = arith.constant 1 : index
    %395 = memref.load %arg3[%c2_247, %c1_248] : memref<8x4xf32, #tpu.memory_space<smem>>
    %396 = vector.broadcast %395 : f32 to vector<1x16xf32>
    %397 = arith.mulf %396, %375 : vector<1x16xf32>
    %398 = arith.addf %394, %397 : vector<1x16xf32>
    %399 = arith.addf %336, %398 : vector<1x16xf32>
    %c3_249 = arith.constant 3 : index
    %c1_250 = arith.constant 1 : index
    %400 = memref.load %arg2[%c3_249, %c1_250] : memref<8x4xf32, #tpu.memory_space<smem>>
    %401 = vector.broadcast %400 : f32 to vector<1x16xf32>
    %402 = arith.mulf %401, %373 : vector<1x16xf32>
    %c3_251 = arith.constant 3 : index
    %c1_252 = arith.constant 1 : index
    %403 = memref.load %arg3[%c3_251, %c1_252] : memref<8x4xf32, #tpu.memory_space<smem>>
    %404 = vector.broadcast %403 : f32 to vector<1x16xf32>
    %405 = arith.mulf %404, %375 : vector<1x16xf32>
    %406 = arith.addf %402, %405 : vector<1x16xf32>
    %407 = arith.addf %343, %406 : vector<1x16xf32>
    %c4_253 = arith.constant 4 : index
    %c1_254 = arith.constant 1 : index
    %408 = memref.load %arg2[%c4_253, %c1_254] : memref<8x4xf32, #tpu.memory_space<smem>>
    %409 = vector.broadcast %408 : f32 to vector<1x16xf32>
    %410 = arith.mulf %409, %373 : vector<1x16xf32>
    %c4_255 = arith.constant 4 : index
    %c1_256 = arith.constant 1 : index
    %411 = memref.load %arg3[%c4_255, %c1_256] : memref<8x4xf32, #tpu.memory_space<smem>>
    %412 = vector.broadcast %411 : f32 to vector<1x16xf32>
    %413 = arith.mulf %412, %375 : vector<1x16xf32>
    %414 = arith.addf %410, %413 : vector<1x16xf32>
    %415 = arith.addf %350, %414 : vector<1x16xf32>
    %c5_257 = arith.constant 5 : index
    %c1_258 = arith.constant 1 : index
    %416 = memref.load %arg2[%c5_257, %c1_258] : memref<8x4xf32, #tpu.memory_space<smem>>
    %417 = vector.broadcast %416 : f32 to vector<1x16xf32>
    %418 = arith.mulf %417, %373 : vector<1x16xf32>
    %c5_259 = arith.constant 5 : index
    %c1_260 = arith.constant 1 : index
    %419 = memref.load %arg3[%c5_259, %c1_260] : memref<8x4xf32, #tpu.memory_space<smem>>
    %420 = vector.broadcast %419 : f32 to vector<1x16xf32>
    %421 = arith.mulf %420, %375 : vector<1x16xf32>
    %422 = arith.addf %418, %421 : vector<1x16xf32>
    %423 = arith.addf %357, %422 : vector<1x16xf32>
    %c6_261 = arith.constant 6 : index
    %c1_262 = arith.constant 1 : index
    %424 = memref.load %arg2[%c6_261, %c1_262] : memref<8x4xf32, #tpu.memory_space<smem>>
    %425 = vector.broadcast %424 : f32 to vector<1x16xf32>
    %426 = arith.mulf %425, %373 : vector<1x16xf32>
    %c6_263 = arith.constant 6 : index
    %c1_264 = arith.constant 1 : index
    %427 = memref.load %arg3[%c6_263, %c1_264] : memref<8x4xf32, #tpu.memory_space<smem>>
    %428 = vector.broadcast %427 : f32 to vector<1x16xf32>
    %429 = arith.mulf %428, %375 : vector<1x16xf32>
    %430 = arith.addf %426, %429 : vector<1x16xf32>
    %431 = arith.addf %364, %430 : vector<1x16xf32>
    %c7_265 = arith.constant 7 : index
    %c1_266 = arith.constant 1 : index
    %432 = memref.load %arg2[%c7_265, %c1_266] : memref<8x4xf32, #tpu.memory_space<smem>>
    %433 = vector.broadcast %432 : f32 to vector<1x16xf32>
    %434 = arith.mulf %433, %373 : vector<1x16xf32>
    %c7_267 = arith.constant 7 : index
    %c1_268 = arith.constant 1 : index
    %435 = memref.load %arg3[%c7_267, %c1_268] : memref<8x4xf32, #tpu.memory_space<smem>>
    %436 = vector.broadcast %435 : f32 to vector<1x16xf32>
    %437 = arith.mulf %436, %375 : vector<1x16xf32>
    %438 = arith.addf %434, %437 : vector<1x16xf32>
    %439 = arith.addf %371, %438 : vector<1x16xf32>
    %c0_269 = arith.constant 0 : index
    %c2_270 = arith.constant 2 : index
    %c0_271 = arith.constant 0 : index
    %c32_272 = arith.constant 32 : index
    %440 = vector.load %arg5[%c0_269, %c2_270, %c0_271, %c32_272] : memref<1x4x1x256xf32, #tpu.memory_space<vmem>>, vector<1x1x1x16xf32>
    %441 = vector.shape_cast %440 : vector<1x1x1x16xf32> to vector<1x16xf32>
    %c0_273 = arith.constant 0 : index
    %c2_274 = arith.constant 2 : index
    %c0_275 = arith.constant 0 : index
    %c48_276 = arith.constant 48 : index
    %442 = vector.load %arg5[%c0_273, %c2_274, %c0_275, %c48_276] : memref<1x4x1x256xf32, #tpu.memory_space<vmem>>, vector<1x1x1x16xf32>
    %443 = vector.shape_cast %442 : vector<1x1x1x16xf32> to vector<1x16xf32>
    %c0_277 = arith.constant 0 : index
    %c2_278 = arith.constant 2 : index
    %444 = memref.load %arg2[%c0_277, %c2_278] : memref<8x4xf32, #tpu.memory_space<smem>>
    %445 = vector.broadcast %444 : f32 to vector<1x16xf32>
    %446 = arith.mulf %445, %441 : vector<1x16xf32>
    %c0_279 = arith.constant 0 : index
    %c2_280 = arith.constant 2 : index
    %447 = memref.load %arg3[%c0_279, %c2_280] : memref<8x4xf32, #tpu.memory_space<smem>>
    %448 = vector.broadcast %447 : f32 to vector<1x16xf32>
    %449 = arith.mulf %448, %443 : vector<1x16xf32>
    %450 = arith.addf %446, %449 : vector<1x16xf32>
    %451 = arith.addf %383, %450 : vector<1x16xf32>
    %c1_281 = arith.constant 1 : index
    %c2_282 = arith.constant 2 : index
    %452 = memref.load %arg2[%c1_281, %c2_282] : memref<8x4xf32, #tpu.memory_space<smem>>
    %453 = vector.broadcast %452 : f32 to vector<1x16xf32>
    %454 = arith.mulf %453, %441 : vector<1x16xf32>
    %c1_283 = arith.constant 1 : index
    %c2_284 = arith.constant 2 : index
    %455 = memref.load %arg3[%c1_283, %c2_284] : memref<8x4xf32, #tpu.memory_space<smem>>
    %456 = vector.broadcast %455 : f32 to vector<1x16xf32>
    %457 = arith.mulf %456, %443 : vector<1x16xf32>
    %458 = arith.addf %454, %457 : vector<1x16xf32>
    %459 = arith.addf %391, %458 : vector<1x16xf32>
    %c2_285 = arith.constant 2 : index
    %c2_286 = arith.constant 2 : index
    %460 = memref.load %arg2[%c2_285, %c2_286] : memref<8x4xf32, #tpu.memory_space<smem>>
    %461 = vector.broadcast %460 : f32 to vector<1x16xf32>
    %462 = arith.mulf %461, %441 : vector<1x16xf32>
    %c2_287 = arith.constant 2 : index
    %c2_288 = arith.constant 2 : index
    %463 = memref.load %arg3[%c2_287, %c2_288] : memref<8x4xf32, #tpu.memory_space<smem>>
    %464 = vector.broadcast %463 : f32 to vector<1x16xf32>
    %465 = arith.mulf %464, %443 : vector<1x16xf32>
    %466 = arith.addf %462, %465 : vector<1x16xf32>
    %467 = arith.addf %399, %466 : vector<1x16xf32>
    %c3_289 = arith.constant 3 : index
    %c2_290 = arith.constant 2 : index
    %468 = memref.load %arg2[%c3_289, %c2_290] : memref<8x4xf32, #tpu.memory_space<smem>>
    %469 = vector.broadcast %468 : f32 to vector<1x16xf32>
    %470 = arith.mulf %469, %441 : vector<1x16xf32>
    %c3_291 = arith.constant 3 : index
    %c2_292 = arith.constant 2 : index
    %471 = memref.load %arg3[%c3_291, %c2_292] : memref<8x4xf32, #tpu.memory_space<smem>>
    %472 = vector.broadcast %471 : f32 to vector<1x16xf32>
    %473 = arith.mulf %472, %443 : vector<1x16xf32>
    %474 = arith.addf %470, %473 : vector<1x16xf32>
    %475 = arith.addf %407, %474 : vector<1x16xf32>
    %c4_293 = arith.constant 4 : index
    %c2_294 = arith.constant 2 : index
    %476 = memref.load %arg2[%c4_293, %c2_294] : memref<8x4xf32, #tpu.memory_space<smem>>
    %477 = vector.broadcast %476 : f32 to vector<1x16xf32>
    %478 = arith.mulf %477, %441 : vector<1x16xf32>
    %c4_295 = arith.constant 4 : index
    %c2_296 = arith.constant 2 : index
    %479 = memref.load %arg3[%c4_295, %c2_296] : memref<8x4xf32, #tpu.memory_space<smem>>
    %480 = vector.broadcast %479 : f32 to vector<1x16xf32>
    %481 = arith.mulf %480, %443 : vector<1x16xf32>
    %482 = arith.addf %478, %481 : vector<1x16xf32>
    %483 = arith.addf %415, %482 : vector<1x16xf32>
    %c5_297 = arith.constant 5 : index
    %c2_298 = arith.constant 2 : index
    %484 = memref.load %arg2[%c5_297, %c2_298] : memref<8x4xf32, #tpu.memory_space<smem>>
    %485 = vector.broadcast %484 : f32 to vector<1x16xf32>
    %486 = arith.mulf %485, %441 : vector<1x16xf32>
    %c5_299 = arith.constant 5 : index
    %c2_300 = arith.constant 2 : index
    %487 = memref.load %arg3[%c5_299, %c2_300] : memref<8x4xf32, #tpu.memory_space<smem>>
    %488 = vector.broadcast %487 : f32 to vector<1x16xf32>
    %489 = arith.mulf %488, %443 : vector<1x16xf32>
    %490 = arith.addf %486, %489 : vector<1x16xf32>
    %491 = arith.addf %423, %490 : vector<1x16xf32>
    %c6_301 = arith.constant 6 : index
    %c2_302 = arith.constant 2 : index
    %492 = memref.load %arg2[%c6_301, %c2_302] : memref<8x4xf32, #tpu.memory_space<smem>>
    %493 = vector.broadcast %492 : f32 to vector<1x16xf32>
    %494 = arith.mulf %493, %441 : vector<1x16xf32>
    %c6_303 = arith.constant 6 : index
    %c2_304 = arith.constant 2 : index
    %495 = memref.load %arg3[%c6_303, %c2_304] : memref<8x4xf32, #tpu.memory_space<smem>>
    %496 = vector.broadcast %495 : f32 to vector<1x16xf32>
    %497 = arith.mulf %496, %443 : vector<1x16xf32>
    %498 = arith.addf %494, %497 : vector<1x16xf32>
    %499 = arith.addf %431, %498 : vector<1x16xf32>
    %c7_305 = arith.constant 7 : index
    %c2_306 = arith.constant 2 : index
    %500 = memref.load %arg2[%c7_305, %c2_306] : memref<8x4xf32, #tpu.memory_space<smem>>
    %501 = vector.broadcast %500 : f32 to vector<1x16xf32>
    %502 = arith.mulf %501, %441 : vector<1x16xf32>
    %c7_307 = arith.constant 7 : index
    %c2_308 = arith.constant 2 : index
    %503 = memref.load %arg3[%c7_307, %c2_308] : memref<8x4xf32, #tpu.memory_space<smem>>
    %504 = vector.broadcast %503 : f32 to vector<1x16xf32>
    %505 = arith.mulf %504, %443 : vector<1x16xf32>
    %506 = arith.addf %502, %505 : vector<1x16xf32>
    %507 = arith.addf %439, %506 : vector<1x16xf32>
    %c0_309 = arith.constant 0 : index
    %c3_310 = arith.constant 3 : index
    %c0_311 = arith.constant 0 : index
    %c32_312 = arith.constant 32 : index
    %508 = vector.load %arg5[%c0_309, %c3_310, %c0_311, %c32_312] : memref<1x4x1x256xf32, #tpu.memory_space<vmem>>, vector<1x1x1x16xf32>
    %509 = vector.shape_cast %508 : vector<1x1x1x16xf32> to vector<1x16xf32>
    %c0_313 = arith.constant 0 : index
    %c3_314 = arith.constant 3 : index
    %c0_315 = arith.constant 0 : index
    %c48_316 = arith.constant 48 : index
    %510 = vector.load %arg5[%c0_313, %c3_314, %c0_315, %c48_316] : memref<1x4x1x256xf32, #tpu.memory_space<vmem>>, vector<1x1x1x16xf32>
    %511 = vector.shape_cast %510 : vector<1x1x1x16xf32> to vector<1x16xf32>
    %c0_317 = arith.constant 0 : index
    %c3_318 = arith.constant 3 : index
    %512 = memref.load %arg2[%c0_317, %c3_318] : memref<8x4xf32, #tpu.memory_space<smem>>
    %513 = vector.broadcast %512 : f32 to vector<1x16xf32>
    %514 = arith.mulf %513, %509 : vector<1x16xf32>
    %c0_319 = arith.constant 0 : index
    %c3_320 = arith.constant 3 : index
    %515 = memref.load %arg3[%c0_319, %c3_320] : memref<8x4xf32, #tpu.memory_space<smem>>
    %516 = vector.broadcast %515 : f32 to vector<1x16xf32>
    %517 = arith.mulf %516, %511 : vector<1x16xf32>
    %518 = arith.addf %514, %517 : vector<1x16xf32>
    %519 = arith.addf %451, %518 : vector<1x16xf32>
    %c1_321 = arith.constant 1 : index
    %c3_322 = arith.constant 3 : index
    %520 = memref.load %arg2[%c1_321, %c3_322] : memref<8x4xf32, #tpu.memory_space<smem>>
    %521 = vector.broadcast %520 : f32 to vector<1x16xf32>
    %522 = arith.mulf %521, %509 : vector<1x16xf32>
    %c1_323 = arith.constant 1 : index
    %c3_324 = arith.constant 3 : index
    %523 = memref.load %arg3[%c1_323, %c3_324] : memref<8x4xf32, #tpu.memory_space<smem>>
    %524 = vector.broadcast %523 : f32 to vector<1x16xf32>
    %525 = arith.mulf %524, %511 : vector<1x16xf32>
    %526 = arith.addf %522, %525 : vector<1x16xf32>
    %527 = arith.addf %459, %526 : vector<1x16xf32>
    %c2_325 = arith.constant 2 : index
    %c3_326 = arith.constant 3 : index
    %528 = memref.load %arg2[%c2_325, %c3_326] : memref<8x4xf32, #tpu.memory_space<smem>>
    %529 = vector.broadcast %528 : f32 to vector<1x16xf32>
    %530 = arith.mulf %529, %509 : vector<1x16xf32>
    %c2_327 = arith.constant 2 : index
    %c3_328 = arith.constant 3 : index
    %531 = memref.load %arg3[%c2_327, %c3_328] : memref<8x4xf32, #tpu.memory_space<smem>>
    %532 = vector.broadcast %531 : f32 to vector<1x16xf32>
    %533 = arith.mulf %532, %511 : vector<1x16xf32>
    %534 = arith.addf %530, %533 : vector<1x16xf32>
    %535 = arith.addf %467, %534 : vector<1x16xf32>
    %c3_329 = arith.constant 3 : index
    %c3_330 = arith.constant 3 : index
    %536 = memref.load %arg2[%c3_329, %c3_330] : memref<8x4xf32, #tpu.memory_space<smem>>
    %537 = vector.broadcast %536 : f32 to vector<1x16xf32>
    %538 = arith.mulf %537, %509 : vector<1x16xf32>
    %c3_331 = arith.constant 3 : index
    %c3_332 = arith.constant 3 : index
    %539 = memref.load %arg3[%c3_331, %c3_332] : memref<8x4xf32, #tpu.memory_space<smem>>
    %540 = vector.broadcast %539 : f32 to vector<1x16xf32>
    %541 = arith.mulf %540, %511 : vector<1x16xf32>
    %542 = arith.addf %538, %541 : vector<1x16xf32>
    %543 = arith.addf %475, %542 : vector<1x16xf32>
    %c4_333 = arith.constant 4 : index
    %c3_334 = arith.constant 3 : index
    %544 = memref.load %arg2[%c4_333, %c3_334] : memref<8x4xf32, #tpu.memory_space<smem>>
    %545 = vector.broadcast %544 : f32 to vector<1x16xf32>
    %546 = arith.mulf %545, %509 : vector<1x16xf32>
    %c4_335 = arith.constant 4 : index
    %c3_336 = arith.constant 3 : index
    %547 = memref.load %arg3[%c4_335, %c3_336] : memref<8x4xf32, #tpu.memory_space<smem>>
    %548 = vector.broadcast %547 : f32 to vector<1x16xf32>
    %549 = arith.mulf %548, %511 : vector<1x16xf32>
    %550 = arith.addf %546, %549 : vector<1x16xf32>
    %551 = arith.addf %483, %550 : vector<1x16xf32>
    %c5_337 = arith.constant 5 : index
    %c3_338 = arith.constant 3 : index
    %552 = memref.load %arg2[%c5_337, %c3_338] : memref<8x4xf32, #tpu.memory_space<smem>>
    %553 = vector.broadcast %552 : f32 to vector<1x16xf32>
    %554 = arith.mulf %553, %509 : vector<1x16xf32>
    %c5_339 = arith.constant 5 : index
    %c3_340 = arith.constant 3 : index
    %555 = memref.load %arg3[%c5_339, %c3_340] : memref<8x4xf32, #tpu.memory_space<smem>>
    %556 = vector.broadcast %555 : f32 to vector<1x16xf32>
    %557 = arith.mulf %556, %511 : vector<1x16xf32>
    %558 = arith.addf %554, %557 : vector<1x16xf32>
    %559 = arith.addf %491, %558 : vector<1x16xf32>
    %c6_341 = arith.constant 6 : index
    %c3_342 = arith.constant 3 : index
    %560 = memref.load %arg2[%c6_341, %c3_342] : memref<8x4xf32, #tpu.memory_space<smem>>
    %561 = vector.broadcast %560 : f32 to vector<1x16xf32>
    %562 = arith.mulf %561, %509 : vector<1x16xf32>
    %c6_343 = arith.constant 6 : index
    %c3_344 = arith.constant 3 : index
    %563 = memref.load %arg3[%c6_343, %c3_344] : memref<8x4xf32, #tpu.memory_space<smem>>
    %564 = vector.broadcast %563 : f32 to vector<1x16xf32>
    %565 = arith.mulf %564, %511 : vector<1x16xf32>
    %566 = arith.addf %562, %565 : vector<1x16xf32>
    %567 = arith.addf %499, %566 : vector<1x16xf32>
    %c7_345 = arith.constant 7 : index
    %c3_346 = arith.constant 3 : index
    %568 = memref.load %arg2[%c7_345, %c3_346] : memref<8x4xf32, #tpu.memory_space<smem>>
    %569 = vector.broadcast %568 : f32 to vector<1x16xf32>
    %570 = arith.mulf %569, %509 : vector<1x16xf32>
    %c7_347 = arith.constant 7 : index
    %c3_348 = arith.constant 3 : index
    %571 = memref.load %arg3[%c7_347, %c3_348] : memref<8x4xf32, #tpu.memory_space<smem>>
    %572 = vector.broadcast %571 : f32 to vector<1x16xf32>
    %573 = arith.mulf %572, %511 : vector<1x16xf32>
    %574 = arith.addf %570, %573 : vector<1x16xf32>
    %575 = arith.addf %507, %574 : vector<1x16xf32>
    %c0_349 = arith.constant 0 : index
    %576 = memref.load %arg4[%c0_349] : memref<8xf32, #tpu.memory_space<smem>>
    %577 = vector.broadcast %576 : f32 to vector<1x16xf32>
    %578 = arith.addf %519, %577 : vector<1x16xf32>
    %c0_350 = arith.constant 0 : index
    %c0_351 = arith.constant 0 : index
    %c0_352 = arith.constant 0 : index
    %c16_353 = arith.constant 16 : index
    %579 = vector.load %arg6[%c0_350, %c0_351, %c0_352, %c16_353] : memref<1x8x1x128xf32, #tpu.memory_space<vmem>>, vector<1x1x1x16xf32>
    %580 = vector.shape_cast %579 : vector<1x1x1x16xf32> to vector<1x16xf32>
    %581 = vector.shape_cast %578 : vector<1x16xf32> to vector<1x1x1x16xf32>
    tpu.vector_store %arg6[%c0_350, %c0_351, %c0_352, %c16_353], %581 {strides = array<i32>} : memref<1x8x1x128xf32, #tpu.memory_space<vmem>>, vector<1x1x1x16xf32>,
    %c1_354 = arith.constant 1 : index
    %582 = memref.load %arg4[%c1_354] : memref<8xf32, #tpu.memory_space<smem>>
    %583 = vector.broadcast %582 : f32 to vector<1x16xf32>
    %584 = arith.addf %527, %583 : vector<1x16xf32>
    %c0_355 = arith.constant 0 : index
    %c1_356 = arith.constant 1 : index
    %c0_357 = arith.constant 0 : index
    %c16_358 = arith.constant 16 : index
    %585 = vector.load %arg6[%c0_355, %c1_356, %c0_357, %c16_358] : memref<1x8x1x128xf32, #tpu.memory_space<vmem>>, vector<1x1x1x16xf32>
    %586 = vector.shape_cast %585 : vector<1x1x1x16xf32> to vector<1x16xf32>
    %587 = vector.shape_cast %584 : vector<1x16xf32> to vector<1x1x1x16xf32>
    tpu.vector_store %arg6[%c0_355, %c1_356, %c0_357, %c16_358], %587 {strides = array<i32>} : memref<1x8x1x128xf32, #tpu.memory_space<vmem>>, vector<1x1x1x16xf32>,
    %c2_359 = arith.constant 2 : index
    %588 = memref.load %arg4[%c2_359] : memref<8xf32, #tpu.memory_space<smem>>
    %589 = vector.broadcast %588 : f32 to vector<1x16xf32>
    %590 = arith.addf %535, %589 : vector<1x16xf32>
    %c0_360 = arith.constant 0 : index
    %c2_361 = arith.constant 2 : index
    %c0_362 = arith.constant 0 : index
    %c16_363 = arith.constant 16 : index
    %591 = vector.load %arg6[%c0_360, %c2_361, %c0_362, %c16_363] : memref<1x8x1x128xf32, #tpu.memory_space<vmem>>, vector<1x1x1x16xf32>
    %592 = vector.shape_cast %591 : vector<1x1x1x16xf32> to vector<1x16xf32>
    %593 = vector.shape_cast %590 : vector<1x16xf32> to vector<1x1x1x16xf32>
    tpu.vector_store %arg6[%c0_360, %c2_361, %c0_362, %c16_363], %593 {strides = array<i32>} : memref<1x8x1x128xf32, #tpu.memory_space<vmem>>, vector<1x1x1x16xf32>,
    %c3_364 = arith.constant 3 : index
    %594 = memref.load %arg4[%c3_364] : memref<8xf32, #tpu.memory_space<smem>>
    %595 = vector.broadcast %594 : f32 to vector<1x16xf32>
    %596 = arith.addf %543, %595 : vector<1x16xf32>
    %c0_365 = arith.constant 0 : index
    %c3_366 = arith.constant 3 : index
    %c0_367 = arith.constant 0 : index
    %c16_368 = arith.constant 16 : index
    %597 = vector.load %arg6[%c0_365, %c3_366, %c0_367, %c16_368] : memref<1x8x1x128xf32, #tpu.memory_space<vmem>>, vector<1x1x1x16xf32>
    %598 = vector.shape_cast %597 : vector<1x1x1x16xf32> to vector<1x16xf32>
    %599 = vector.shape_cast %596 : vector<1x16xf32> to vector<1x1x1x16xf32>
    tpu.vector_store %arg6[%c0_365, %c3_366, %c0_367, %c16_368], %599 {strides = array<i32>} : memref<1x8x1x128xf32, #tpu.memory_space<vmem>>, vector<1x1x1x16xf32>,
    %c4_369 = arith.constant 4 : index
    %600 = memref.load %arg4[%c4_369] : memref<8xf32, #tpu.memory_space<smem>>
    %601 = vector.broadcast %600 : f32 to vector<1x16xf32>
    %602 = arith.addf %551, %601 : vector<1x16xf32>
    %c0_370 = arith.constant 0 : index
    %c4_371 = arith.constant 4 : index
    %c0_372 = arith.constant 0 : index
    %c16_373 = arith.constant 16 : index
    %603 = vector.load %arg6[%c0_370, %c4_371, %c0_372, %c16_373] : memref<1x8x1x128xf32, #tpu.memory_space<vmem>>, vector<1x1x1x16xf32>
    %604 = vector.shape_cast %603 : vector<1x1x1x16xf32> to vector<1x16xf32>
    %605 = vector.shape_cast %602 : vector<1x16xf32> to vector<1x1x1x16xf32>
    tpu.vector_store %arg6[%c0_370, %c4_371, %c0_372, %c16_373], %605 {strides = array<i32>} : memref<1x8x1x128xf32, #tpu.memory_space<vmem>>, vector<1x1x1x16xf32>,
    %c5_374 = arith.constant 5 : index
    %606 = memref.load %arg4[%c5_374] : memref<8xf32, #tpu.memory_space<smem>>
    %607 = vector.broadcast %606 : f32 to vector<1x16xf32>
    %608 = arith.addf %559, %607 : vector<1x16xf32>
    %c0_375 = arith.constant 0 : index
    %c5_376 = arith.constant 5 : index
    %c0_377 = arith.constant 0 : index
    %c16_378 = arith.constant 16 : index
    %609 = vector.load %arg6[%c0_375, %c5_376, %c0_377, %c16_378] : memref<1x8x1x128xf32, #tpu.memory_space<vmem>>, vector<1x1x1x16xf32>
    %610 = vector.shape_cast %609 : vector<1x1x1x16xf32> to vector<1x16xf32>
    %611 = vector.shape_cast %608 : vector<1x16xf32> to vector<1x1x1x16xf32>
    tpu.vector_store %arg6[%c0_375, %c5_376, %c0_377, %c16_378], %611 {strides = array<i32>} : memref<1x8x1x128xf32, #tpu.memory_space<vmem>>, vector<1x1x1x16xf32>,
    %c6_379 = arith.constant 6 : index
    %612 = memref.load %arg4[%c6_379] : memref<8xf32, #tpu.memory_space<smem>>
    %613 = vector.broadcast %612 : f32 to vector<1x16xf32>
    %614 = arith.addf %567, %613 : vector<1x16xf32>
    %c0_380 = arith.constant 0 : index
    %c6_381 = arith.constant 6 : index
    %c0_382 = arith.constant 0 : index
    %c16_383 = arith.constant 16 : index
    %615 = vector.load %arg6[%c0_380, %c6_381, %c0_382, %c16_383] : memref<1x8x1x128xf32, #tpu.memory_space<vmem>>, vector<1x1x1x16xf32>
    %616 = vector.shape_cast %615 : vector<1x1x1x16xf32> to vector<1x16xf32>
    %617 = vector.shape_cast %614 : vector<1x16xf32> to vector<1x1x1x16xf32>
    tpu.vector_store %arg6[%c0_380, %c6_381, %c0_382, %c16_383], %617 {strides = array<i32>} : memref<1x8x1x128xf32, #tpu.memory_space<vmem>>, vector<1x1x1x16xf32>,
    %c7_384 = arith.constant 7 : index
    %618 = memref.load %arg4[%c7_384] : memref<8xf32, #tpu.memory_space<smem>>
    %619 = vector.broadcast %618 : f32 to vector<1x16xf32>
    %620 = arith.addf %575, %619 : vector<1x16xf32>
    %c0_385 = arith.constant 0 : index
    %c7_386 = arith.constant 7 : index
    %c0_387 = arith.constant 0 : index
    %c16_388 = arith.constant 16 : index
    %621 = vector.load %arg6[%c0_385, %c7_386, %c0_387, %c16_388] : memref<1x8x1x128xf32, #tpu.memory_space<vmem>>, vector<1x1x1x16xf32>
    %622 = vector.shape_cast %621 : vector<1x1x1x16xf32> to vector<1x16xf32>
    %623 = vector.shape_cast %620 : vector<1x16xf32> to vector<1x1x1x16xf32>
    tpu.vector_store %arg6[%c0_385, %c7_386, %c0_387, %c16_388], %623 {strides = array<i32>} : memref<1x8x1x128xf32, #tpu.memory_space<vmem>>, vector<1x1x1x16xf32>,
    %c0_389 = arith.constant 0 : index
    %c0_390 = arith.constant 0 : index
    %c0_391 = arith.constant 0 : index
    %c64 = arith.constant 64 : index
    %624 = vector.load %arg5[%c0_389, %c0_390, %c0_391, %c64] : memref<1x4x1x256xf32, #tpu.memory_space<vmem>>, vector<1x1x1x16xf32>
    %625 = vector.shape_cast %624 : vector<1x1x1x16xf32> to vector<1x16xf32>
    %c0_392 = arith.constant 0 : index
    %c0_393 = arith.constant 0 : index
    %c0_394 = arith.constant 0 : index
    %c80 = arith.constant 80 : index
    %626 = vector.load %arg5[%c0_392, %c0_393, %c0_394, %c80] : memref<1x4x1x256xf32, #tpu.memory_space<vmem>>, vector<1x1x1x16xf32>
    %627 = vector.shape_cast %626 : vector<1x1x1x16xf32> to vector<1x16xf32>
    %c0_395 = arith.constant 0 : index
    %c0_396 = arith.constant 0 : index
    %628 = memref.load %arg2[%c0_395, %c0_396] : memref<8x4xf32, #tpu.memory_space<smem>>
    %629 = vector.broadcast %628 : f32 to vector<1x16xf32>
    %630 = arith.mulf %629, %625 : vector<1x16xf32>
    %c0_397 = arith.constant 0 : index
    %c0_398 = arith.constant 0 : index
    %631 = memref.load %arg3[%c0_397, %c0_398] : memref<8x4xf32, #tpu.memory_space<smem>>
    %632 = vector.broadcast %631 : f32 to vector<1x16xf32>
    %633 = arith.mulf %632, %627 : vector<1x16xf32>
    %634 = arith.addf %630, %633 : vector<1x16xf32>
    %c1_399 = arith.constant 1 : index
    %c0_400 = arith.constant 0 : index
    %635 = memref.load %arg2[%c1_399, %c0_400] : memref<8x4xf32, #tpu.memory_space<smem>>
    %636 = vector.broadcast %635 : f32 to vector<1x16xf32>
    %637 = arith.mulf %636, %625 : vector<1x16xf32>
    %c1_401 = arith.constant 1 : index
    %c0_402 = arith.constant 0 : index
    %638 = memref.load %arg3[%c1_401, %c0_402] : memref<8x4xf32, #tpu.memory_space<smem>>
    %639 = vector.broadcast %638 : f32 to vector<1x16xf32>
    %640 = arith.mulf %639, %627 : vector<1x16xf32>
    %641 = arith.addf %637, %640 : vector<1x16xf32>
    %c2_403 = arith.constant 2 : index
    %c0_404 = arith.constant 0 : index
    %642 = memref.load %arg2[%c2_403, %c0_404] : memref<8x4xf32, #tpu.memory_space<smem>>
    %643 = vector.broadcast %642 : f32 to vector<1x16xf32>
    %644 = arith.mulf %643, %625 : vector<1x16xf32>
    %c2_405 = arith.constant 2 : index
    %c0_406 = arith.constant 0 : index
    %645 = memref.load %arg3[%c2_405, %c0_406] : memref<8x4xf32, #tpu.memory_space<smem>>
    %646 = vector.broadcast %645 : f32 to vector<1x16xf32>
    %647 = arith.mulf %646, %627 : vector<1x16xf32>
    %648 = arith.addf %644, %647 : vector<1x16xf32>
    %c3_407 = arith.constant 3 : index
    %c0_408 = arith.constant 0 : index
    %649 = memref.load %arg2[%c3_407, %c0_408] : memref<8x4xf32, #tpu.memory_space<smem>>
    %650 = vector.broadcast %649 : f32 to vector<1x16xf32>
    %651 = arith.mulf %650, %625 : vector<1x16xf32>
    %c3_409 = arith.constant 3 : index
    %c0_410 = arith.constant 0 : index
    %652 = memref.load %arg3[%c3_409, %c0_410] : memref<8x4xf32, #tpu.memory_space<smem>>
    %653 = vector.broadcast %652 : f32 to vector<1x16xf32>
    %654 = arith.mulf %653, %627 : vector<1x16xf32>
    %655 = arith.addf %651, %654 : vector<1x16xf32>
    %c4_411 = arith.constant 4 : index
    %c0_412 = arith.constant 0 : index
    %656 = memref.load %arg2[%c4_411, %c0_412] : memref<8x4xf32, #tpu.memory_space<smem>>
    %657 = vector.broadcast %656 : f32 to vector<1x16xf32>
    %658 = arith.mulf %657, %625 : vector<1x16xf32>
    %c4_413 = arith.constant 4 : index
    %c0_414 = arith.constant 0 : index
    %659 = memref.load %arg3[%c4_413, %c0_414] : memref<8x4xf32, #tpu.memory_space<smem>>
    %660 = vector.broadcast %659 : f32 to vector<1x16xf32>
    %661 = arith.mulf %660, %627 : vector<1x16xf32>
    %662 = arith.addf %658, %661 : vector<1x16xf32>
    %c5_415 = arith.constant 5 : index
    %c0_416 = arith.constant 0 : index
    %663 = memref.load %arg2[%c5_415, %c0_416] : memref<8x4xf32, #tpu.memory_space<smem>>
    %664 = vector.broadcast %663 : f32 to vector<1x16xf32>
    %665 = arith.mulf %664, %625 : vector<1x16xf32>
    %c5_417 = arith.constant 5 : index
    %c0_418 = arith.constant 0 : index
    %666 = memref.load %arg3[%c5_417, %c0_418] : memref<8x4xf32, #tpu.memory_space<smem>>
    %667 = vector.broadcast %666 : f32 to vector<1x16xf32>
    %668 = arith.mulf %667, %627 : vector<1x16xf32>
    %669 = arith.addf %665, %668 : vector<1x16xf32>
    %c6_419 = arith.constant 6 : index
    %c0_420 = arith.constant 0 : index
    %670 = memref.load %arg2[%c6_419, %c0_420] : memref<8x4xf32, #tpu.memory_space<smem>>
    %671 = vector.broadcast %670 : f32 to vector<1x16xf32>
    %672 = arith.mulf %671, %625 : vector<1x16xf32>
    %c6_421 = arith.constant 6 : index
    %c0_422 = arith.constant 0 : index
    %673 = memref.load %arg3[%c6_421, %c0_422] : memref<8x4xf32, #tpu.memory_space<smem>>
    %674 = vector.broadcast %673 : f32 to vector<1x16xf32>
    %675 = arith.mulf %674, %627 : vector<1x16xf32>
    %676 = arith.addf %672, %675 : vector<1x16xf32>
    %c7_423 = arith.constant 7 : index
    %c0_424 = arith.constant 0 : index
    %677 = memref.load %arg2[%c7_423, %c0_424] : memref<8x4xf32, #tpu.memory_space<smem>>
    %678 = vector.broadcast %677 : f32 to vector<1x16xf32>
    %679 = arith.mulf %678, %625 : vector<1x16xf32>
    %c7_425 = arith.constant 7 : index
    %c0_426 = arith.constant 0 : index
    %680 = memref.load %arg3[%c7_425, %c0_426] : memref<8x4xf32, #tpu.memory_space<smem>>
    %681 = vector.broadcast %680 : f32 to vector<1x16xf32>
    %682 = arith.mulf %681, %627 : vector<1x16xf32>
    %683 = arith.addf %679, %682 : vector<1x16xf32>
    %c0_427 = arith.constant 0 : index
    %c1_428 = arith.constant 1 : index
    %c0_429 = arith.constant 0 : index
    %c64_430 = arith.constant 64 : index
    %684 = vector.load %arg5[%c0_427, %c1_428, %c0_429, %c64_430] : memref<1x4x1x256xf32, #tpu.memory_space<vmem>>, vector<1x1x1x16xf32>
    %685 = vector.shape_cast %684 : vector<1x1x1x16xf32> to vector<1x16xf32>
    %c0_431 = arith.constant 0 : index
    %c1_432 = arith.constant 1 : index
    %c0_433 = arith.constant 0 : index
    %c80_434 = arith.constant 80 : index
    %686 = vector.load %arg5[%c0_431, %c1_432, %c0_433, %c80_434] : memref<1x4x1x256xf32, #tpu.memory_space<vmem>>, vector<1x1x1x16xf32>
    %687 = vector.shape_cast %686 : vector<1x1x1x16xf32> to vector<1x16xf32>
    %c0_435 = arith.constant 0 : index
    %c1_436 = arith.constant 1 : index
    %688 = memref.load %arg2[%c0_435, %c1_436] : memref<8x4xf32, #tpu.memory_space<smem>>
    %689 = vector.broadcast %688 : f32 to vector<1x16xf32>
    %690 = arith.mulf %689, %685 : vector<1x16xf32>
    %c0_437 = arith.constant 0 : index
    %c1_438 = arith.constant 1 : index
    %691 = memref.load %arg3[%c0_437, %c1_438] : memref<8x4xf32, #tpu.memory_space<smem>>
    %692 = vector.broadcast %691 : f32 to vector<1x16xf32>
    %693 = arith.mulf %692, %687 : vector<1x16xf32>
    %694 = arith.addf %690, %693 : vector<1x16xf32>
    %695 = arith.addf %634, %694 : vector<1x16xf32>
    %c1_439 = arith.constant 1 : index
    %c1_440 = arith.constant 1 : index
    %696 = memref.load %arg2[%c1_439, %c1_440] : memref<8x4xf32, #tpu.memory_space<smem>>
    %697 = vector.broadcast %696 : f32 to vector<1x16xf32>
    %698 = arith.mulf %697, %685 : vector<1x16xf32>
    %c1_441 = arith.constant 1 : index
    %c1_442 = arith.constant 1 : index
    %699 = memref.load %arg3[%c1_441, %c1_442] : memref<8x4xf32, #tpu.memory_space<smem>>
    %700 = vector.broadcast %699 : f32 to vector<1x16xf32>
    %701 = arith.mulf %700, %687 : vector<1x16xf32>
    %702 = arith.addf %698, %701 : vector<1x16xf32>
    %703 = arith.addf %641, %702 : vector<1x16xf32>
    %c2_443 = arith.constant 2 : index
    %c1_444 = arith.constant 1 : index
    %704 = memref.load %arg2[%c2_443, %c1_444] : memref<8x4xf32, #tpu.memory_space<smem>>
    %705 = vector.broadcast %704 : f32 to vector<1x16xf32>
    %706 = arith.mulf %705, %685 : vector<1x16xf32>
    %c2_445 = arith.constant 2 : index
    %c1_446 = arith.constant 1 : index
    %707 = memref.load %arg3[%c2_445, %c1_446] : memref<8x4xf32, #tpu.memory_space<smem>>
    %708 = vector.broadcast %707 : f32 to vector<1x16xf32>
    %709 = arith.mulf %708, %687 : vector<1x16xf32>
    %710 = arith.addf %706, %709 : vector<1x16xf32>
    %711 = arith.addf %648, %710 : vector<1x16xf32>
    %c3_447 = arith.constant 3 : index
    %c1_448 = arith.constant 1 : index
    %712 = memref.load %arg2[%c3_447, %c1_448] : memref<8x4xf32, #tpu.memory_space<smem>>
    %713 = vector.broadcast %712 : f32 to vector<1x16xf32>
    %714 = arith.mulf %713, %685 : vector<1x16xf32>
    %c3_449 = arith.constant 3 : index
    %c1_450 = arith.constant 1 : index
    %715 = memref.load %arg3[%c3_449, %c1_450] : memref<8x4xf32, #tpu.memory_space<smem>>
    %716 = vector.broadcast %715 : f32 to vector<1x16xf32>
    %717 = arith.mulf %716, %687 : vector<1x16xf32>
    %718 = arith.addf %714, %717 : vector<1x16xf32>
    %719 = arith.addf %655, %718 : vector<1x16xf32>
    %c4_451 = arith.constant 4 : index
    %c1_452 = arith.constant 1 : index
    %720 = memref.load %arg2[%c4_451, %c1_452] : memref<8x4xf32, #tpu.memory_space<smem>>
    %721 = vector.broadcast %720 : f32 to vector<1x16xf32>
    %722 = arith.mulf %721, %685 : vector<1x16xf32>
    %c4_453 = arith.constant 4 : index
    %c1_454 = arith.constant 1 : index
    %723 = memref.load %arg3[%c4_453, %c1_454] : memref<8x4xf32, #tpu.memory_space<smem>>
    %724 = vector.broadcast %723 : f32 to vector<1x16xf32>
    %725 = arith.mulf %724, %687 : vector<1x16xf32>
    %726 = arith.addf %722, %725 : vector<1x16xf32>
    %727 = arith.addf %662, %726 : vector<1x16xf32>
    %c5_455 = arith.constant 5 : index
    %c1_456 = arith.constant 1 : index
    %728 = memref.load %arg2[%c5_455, %c1_456] : memref<8x4xf32, #tpu.memory_space<smem>>
    %729 = vector.broadcast %728 : f32 to vector<1x16xf32>
    %730 = arith.mulf %729, %685 : vector<1x16xf32>
    %c5_457 = arith.constant 5 : index
    %c1_458 = arith.constant 1 : index
    %731 = memref.load %arg3[%c5_457, %c1_458] : memref<8x4xf32, #tpu.memory_space<smem>>
    %732 = vector.broadcast %731 : f32 to vector<1x16xf32>
    %733 = arith.mulf %732, %687 : vector<1x16xf32>
    %734 = arith.addf %730, %733 : vector<1x16xf32>
    %735 = arith.addf %669, %734 : vector<1x16xf32>
    %c6_459 = arith.constant 6 : index
    %c1_460 = arith.constant 1 : index
    %736 = memref.load %arg2[%c6_459, %c1_460] : memref<8x4xf32, #tpu.memory_space<smem>>
    %737 = vector.broadcast %736 : f32 to vector<1x16xf32>
    %738 = arith.mulf %737, %685 : vector<1x16xf32>
    %c6_461 = arith.constant 6 : index
    %c1_462 = arith.constant 1 : index
    %739 = memref.load %arg3[%c6_461, %c1_462] : memref<8x4xf32, #tpu.memory_space<smem>>
    %740 = vector.broadcast %739 : f32 to vector<1x16xf32>
    %741 = arith.mulf %740, %687 : vector<1x16xf32>
    %742 = arith.addf %738, %741 : vector<1x16xf32>
    %743 = arith.addf %676, %742 : vector<1x16xf32>
    %c7_463 = arith.constant 7 : index
    %c1_464 = arith.constant 1 : index
    %744 = memref.load %arg2[%c7_463, %c1_464] : memref<8x4xf32, #tpu.memory_space<smem>>
    %745 = vector.broadcast %744 : f32 to vector<1x16xf32>
    %746 = arith.mulf %745, %685 : vector<1x16xf32>
    %c7_465 = arith.constant 7 : index
    %c1_466 = arith.constant 1 : index
    %747 = memref.load %arg3[%c7_465, %c1_466] : memref<8x4xf32, #tpu.memory_space<smem>>
    %748 = vector.broadcast %747 : f32 to vector<1x16xf32>
    %749 = arith.mulf %748, %687 : vector<1x16xf32>
    %750 = arith.addf %746, %749 : vector<1x16xf32>
    %751 = arith.addf %683, %750 : vector<1x16xf32>
    %c0_467 = arith.constant 0 : index
    %c2_468 = arith.constant 2 : index
    %c0_469 = arith.constant 0 : index
    %c64_470 = arith.constant 64 : index
    %752 = vector.load %arg5[%c0_467, %c2_468, %c0_469, %c64_470] : memref<1x4x1x256xf32, #tpu.memory_space<vmem>>, vector<1x1x1x16xf32>
    %753 = vector.shape_cast %752 : vector<1x1x1x16xf32> to vector<1x16xf32>
    %c0_471 = arith.constant 0 : index
    %c2_472 = arith.constant 2 : index
    %c0_473 = arith.constant 0 : index
    %c80_474 = arith.constant 80 : index
    %754 = vector.load %arg5[%c0_471, %c2_472, %c0_473, %c80_474] : memref<1x4x1x256xf32, #tpu.memory_space<vmem>>, vector<1x1x1x16xf32>
    %755 = vector.shape_cast %754 : vector<1x1x1x16xf32> to vector<1x16xf32>
    %c0_475 = arith.constant 0 : index
    %c2_476 = arith.constant 2 : index
    %756 = memref.load %arg2[%c0_475, %c2_476] : memref<8x4xf32, #tpu.memory_space<smem>>
    %757 = vector.broadcast %756 : f32 to vector<1x16xf32>
    %758 = arith.mulf %757, %753 : vector<1x16xf32>
    %c0_477 = arith.constant 0 : index
    %c2_478 = arith.constant 2 : index
    %759 = memref.load %arg3[%c0_477, %c2_478] : memref<8x4xf32, #tpu.memory_space<smem>>
    %760 = vector.broadcast %759 : f32 to vector<1x16xf32>
    %761 = arith.mulf %760, %755 : vector<1x16xf32>
    %762 = arith.addf %758, %761 : vector<1x16xf32>
    %763 = arith.addf %695, %762 : vector<1x16xf32>
    %c1_479 = arith.constant 1 : index
    %c2_480 = arith.constant 2 : index
    %764 = memref.load %arg2[%c1_479, %c2_480] : memref<8x4xf32, #tpu.memory_space<smem>>
    %765 = vector.broadcast %764 : f32 to vector<1x16xf32>
    %766 = arith.mulf %765, %753 : vector<1x16xf32>
    %c1_481 = arith.constant 1 : index
    %c2_482 = arith.constant 2 : index
    %767 = memref.load %arg3[%c1_481, %c2_482] : memref<8x4xf32, #tpu.memory_space<smem>>
    %768 = vector.broadcast %767 : f32 to vector<1x16xf32>
    %769 = arith.mulf %768, %755 : vector<1x16xf32>
    %770 = arith.addf %766, %769 : vector<1x16xf32>
    %771 = arith.addf %703, %770 : vector<1x16xf32>
    %c2_483 = arith.constant 2 : index
    %c2_484 = arith.constant 2 : index
    %772 = memref.load %arg2[%c2_483, %c2_484] : memref<8x4xf32, #tpu.memory_space<smem>>
    %773 = vector.broadcast %772 : f32 to vector<1x16xf32>
    %774 = arith.mulf %773, %753 : vector<1x16xf32>
    %c2_485 = arith.constant 2 : index
    %c2_486 = arith.constant 2 : index
    %775 = memref.load %arg3[%c2_485, %c2_486] : memref<8x4xf32, #tpu.memory_space<smem>>
    %776 = vector.broadcast %775 : f32 to vector<1x16xf32>
    %777 = arith.mulf %776, %755 : vector<1x16xf32>
    %778 = arith.addf %774, %777 : vector<1x16xf32>
    %779 = arith.addf %711, %778 : vector<1x16xf32>
    %c3_487 = arith.constant 3 : index
    %c2_488 = arith.constant 2 : index
    %780 = memref.load %arg2[%c3_487, %c2_488] : memref<8x4xf32, #tpu.memory_space<smem>>
    %781 = vector.broadcast %780 : f32 to vector<1x16xf32>
    %782 = arith.mulf %781, %753 : vector<1x16xf32>
    %c3_489 = arith.constant 3 : index
    %c2_490 = arith.constant 2 : index
    %783 = memref.load %arg3[%c3_489, %c2_490] : memref<8x4xf32, #tpu.memory_space<smem>>
    %784 = vector.broadcast %783 : f32 to vector<1x16xf32>
    %785 = arith.mulf %784, %755 : vector<1x16xf32>
    %786 = arith.addf %782, %785 : vector<1x16xf32>
    %787 = arith.addf %719, %786 : vector<1x16xf32>
    %c4_491 = arith.constant 4 : index
    %c2_492 = arith.constant 2 : index
    %788 = memref.load %arg2[%c4_491, %c2_492] : memref<8x4xf32, #tpu.memory_space<smem>>
    %789 = vector.broadcast %788 : f32 to vector<1x16xf32>
    %790 = arith.mulf %789, %753 : vector<1x16xf32>
    %c4_493 = arith.constant 4 : index
    %c2_494 = arith.constant 2 : index
    %791 = memref.load %arg3[%c4_493, %c2_494] : memref<8x4xf32, #tpu.memory_space<smem>>
    %792 = vector.broadcast %791 : f32 to vector<1x16xf32>
    %793 = arith.mulf %792, %755 : vector<1x16xf32>
    %794 = arith.addf %790, %793 : vector<1x16xf32>
    %795 = arith.addf %727, %794 : vector<1x16xf32>
    %c5_495 = arith.constant 5 : index
    %c2_496 = arith.constant 2 : index
    %796 = memref.load %arg2[%c5_495, %c2_496] : memref<8x4xf32, #tpu.memory_space<smem>>
    %797 = vector.broadcast %796 : f32 to vector<1x16xf32>
    %798 = arith.mulf %797, %753 : vector<1x16xf32>
    %c5_497 = arith.constant 5 : index
    %c2_498 = arith.constant 2 : index
    %799 = memref.load %arg3[%c5_497, %c2_498] : memref<8x4xf32, #tpu.memory_space<smem>>
    %800 = vector.broadcast %799 : f32 to vector<1x16xf32>
    %801 = arith.mulf %800, %755 : vector<1x16xf32>
    %802 = arith.addf %798, %801 : vector<1x16xf32>
    %803 = arith.addf %735, %802 : vector<1x16xf32>
    %c6_499 = arith.constant 6 : index
    %c2_500 = arith.constant 2 : index
    %804 = memref.load %arg2[%c6_499, %c2_500] : memref<8x4xf32, #tpu.memory_space<smem>>
    %805 = vector.broadcast %804 : f32 to vector<1x16xf32>
    %806 = arith.mulf %805, %753 : vector<1x16xf32>
    %c6_501 = arith.constant 6 : index
    %c2_502 = arith.constant 2 : index
    %807 = memref.load %arg3[%c6_501, %c2_502] : memref<8x4xf32, #tpu.memory_space<smem>>
    %808 = vector.broadcast %807 : f32 to vector<1x16xf32>
    %809 = arith.mulf %808, %755 : vector<1x16xf32>
    %810 = arith.addf %806, %809 : vector<1x16xf32>
    %811 = arith.addf %743, %810 : vector<1x16xf32>
    %c7_503 = arith.constant 7 : index
    %c2_504 = arith.constant 2 : index
    %812 = memref.load %arg2[%c7_503, %c2_504] : memref<8x4xf32, #tpu.memory_space<smem>>
    %813 = vector.broadcast %812 : f32 to vector<1x16xf32>
    %814 = arith.mulf %813, %753 : vector<1x16xf32>
    %c7_505 = arith.constant 7 : index
    %c2_506 = arith.constant 2 : index
    %815 = memref.load %arg3[%c7_505, %c2_506] : memref<8x4xf32, #tpu.memory_space<smem>>
    %816 = vector.broadcast %815 : f32 to vector<1x16xf32>
    %817 = arith.mulf %816, %755 : vector<1x16xf32>
    %818 = arith.addf %814, %817 : vector<1x16xf32>
    %819 = arith.addf %751, %818 : vector<1x16xf32>
    %c0_507 = arith.constant 0 : index
    %c3_508 = arith.constant 3 : index
    %c0_509 = arith.constant 0 : index
    %c64_510 = arith.constant 64 : index
    %820 = vector.load %arg5[%c0_507, %c3_508, %c0_509, %c64_510] : memref<1x4x1x256xf32, #tpu.memory_space<vmem>>, vector<1x1x1x16xf32>
    %821 = vector.shape_cast %820 : vector<1x1x1x16xf32> to vector<1x16xf32>
    %c0_511 = arith.constant 0 : index
    %c3_512 = arith.constant 3 : index
    %c0_513 = arith.constant 0 : index
    %c80_514 = arith.constant 80 : index
    %822 = vector.load %arg5[%c0_511, %c3_512, %c0_513, %c80_514] : memref<1x4x1x256xf32, #tpu.memory_space<vmem>>, vector<1x1x1x16xf32>
    %823 = vector.shape_cast %822 : vector<1x1x1x16xf32> to vector<1x16xf32>
    %c0_515 = arith.constant 0 : index
    %c3_516 = arith.constant 3 : index
    %824 = memref.load %arg2[%c0_515, %c3_516] : memref<8x4xf32, #tpu.memory_space<smem>>
    %825 = vector.broadcast %824 : f32 to vector<1x16xf32>
    %826 = arith.mulf %825, %821 : vector<1x16xf32>
    %c0_517 = arith.constant 0 : index
    %c3_518 = arith.constant 3 : index
    %827 = memref.load %arg3[%c0_517, %c3_518] : memref<8x4xf32, #tpu.memory_space<smem>>
    %828 = vector.broadcast %827 : f32 to vector<1x16xf32>
    %829 = arith.mulf %828, %823 : vector<1x16xf32>
    %830 = arith.addf %826, %829 : vector<1x16xf32>
    %831 = arith.addf %763, %830 : vector<1x16xf32>
    %c1_519 = arith.constant 1 : index
    %c3_520 = arith.constant 3 : index
    %832 = memref.load %arg2[%c1_519, %c3_520] : memref<8x4xf32, #tpu.memory_space<smem>>
    %833 = vector.broadcast %832 : f32 to vector<1x16xf32>
    %834 = arith.mulf %833, %821 : vector<1x16xf32>
    %c1_521 = arith.constant 1 : index
    %c3_522 = arith.constant 3 : index
    %835 = memref.load %arg3[%c1_521, %c3_522] : memref<8x4xf32, #tpu.memory_space<smem>>
    %836 = vector.broadcast %835 : f32 to vector<1x16xf32>
    %837 = arith.mulf %836, %823 : vector<1x16xf32>
    %838 = arith.addf %834, %837 : vector<1x16xf32>
    %839 = arith.addf %771, %838 : vector<1x16xf32>
    %c2_523 = arith.constant 2 : index
    %c3_524 = arith.constant 3 : index
    %840 = memref.load %arg2[%c2_523, %c3_524] : memref<8x4xf32, #tpu.memory_space<smem>>
    %841 = vector.broadcast %840 : f32 to vector<1x16xf32>
    %842 = arith.mulf %841, %821 : vector<1x16xf32>
    %c2_525 = arith.constant 2 : index
    %c3_526 = arith.constant 3 : index
    %843 = memref.load %arg3[%c2_525, %c3_526] : memref<8x4xf32, #tpu.memory_space<smem>>
    %844 = vector.broadcast %843 : f32 to vector<1x16xf32>
    %845 = arith.mulf %844, %823 : vector<1x16xf32>
    %846 = arith.addf %842, %845 : vector<1x16xf32>
    %847 = arith.addf %779, %846 : vector<1x16xf32>
    %c3_527 = arith.constant 3 : index
    %c3_528 = arith.constant 3 : index
    %848 = memref.load %arg2[%c3_527, %c3_528] : memref<8x4xf32, #tpu.memory_space<smem>>
    %849 = vector.broadcast %848 : f32 to vector<1x16xf32>
    %850 = arith.mulf %849, %821 : vector<1x16xf32>
    %c3_529 = arith.constant 3 : index
    %c3_530 = arith.constant 3 : index
    %851 = memref.load %arg3[%c3_529, %c3_530] : memref<8x4xf32, #tpu.memory_space<smem>>
    %852 = vector.broadcast %851 : f32 to vector<1x16xf32>
    %853 = arith.mulf %852, %823 : vector<1x16xf32>
    %854 = arith.addf %850, %853 : vector<1x16xf32>
    %855 = arith.addf %787, %854 : vector<1x16xf32>
    %c4_531 = arith.constant 4 : index
    %c3_532 = arith.constant 3 : index
    %856 = memref.load %arg2[%c4_531, %c3_532] : memref<8x4xf32, #tpu.memory_space<smem>>
    %857 = vector.broadcast %856 : f32 to vector<1x16xf32>
    %858 = arith.mulf %857, %821 : vector<1x16xf32>
    %c4_533 = arith.constant 4 : index
    %c3_534 = arith.constant 3 : index
    %859 = memref.load %arg3[%c4_533, %c3_534] : memref<8x4xf32, #tpu.memory_space<smem>>
    %860 = vector.broadcast %859 : f32 to vector<1x16xf32>
    %861 = arith.mulf %860, %823 : vector<1x16xf32>
    %862 = arith.addf %858, %861 : vector<1x16xf32>
    %863 = arith.addf %795, %862 : vector<1x16xf32>
    %c5_535 = arith.constant 5 : index
    %c3_536 = arith.constant 3 : index
    %864 = memref.load %arg2[%c5_535, %c3_536] : memref<8x4xf32, #tpu.memory_space<smem>>
    %865 = vector.broadcast %864 : f32 to vector<1x16xf32>
    %866 = arith.mulf %865, %821 : vector<1x16xf32>
    %c5_537 = arith.constant 5 : index
    %c3_538 = arith.constant 3 : index
    %867 = memref.load %arg3[%c5_537, %c3_538] : memref<8x4xf32, #tpu.memory_space<smem>>
    %868 = vector.broadcast %867 : f32 to vector<1x16xf32>
    %869 = arith.mulf %868, %823 : vector<1x16xf32>
    %870 = arith.addf %866, %869 : vector<1x16xf32>
    %871 = arith.addf %803, %870 : vector<1x16xf32>
    %c6_539 = arith.constant 6 : index
    %c3_540 = arith.constant 3 : index
    %872 = memref.load %arg2[%c6_539, %c3_540] : memref<8x4xf32, #tpu.memory_space<smem>>
    %873 = vector.broadcast %872 : f32 to vector<1x16xf32>
    %874 = arith.mulf %873, %821 : vector<1x16xf32>
    %c6_541 = arith.constant 6 : index
    %c3_542 = arith.constant 3 : index
    %875 = memref.load %arg3[%c6_541, %c3_542] : memref<8x4xf32, #tpu.memory_space<smem>>
    %876 = vector.broadcast %875 : f32 to vector<1x16xf32>
    %877 = arith.mulf %876, %823 : vector<1x16xf32>
    %878 = arith.addf %874, %877 : vector<1x16xf32>
    %879 = arith.addf %811, %878 : vector<1x16xf32>
    %c7_543 = arith.constant 7 : index
    %c3_544 = arith.constant 3 : index
    %880 = memref.load %arg2[%c7_543, %c3_544] : memref<8x4xf32, #tpu.memory_space<smem>>
    %881 = vector.broadcast %880 : f32 to vector<1x16xf32>
    %882 = arith.mulf %881, %821 : vector<1x16xf32>
    %c7_545 = arith.constant 7 : index
    %c3_546 = arith.constant 3 : index
    %883 = memref.load %arg3[%c7_545, %c3_546] : memref<8x4xf32, #tpu.memory_space<smem>>
    %884 = vector.broadcast %883 : f32 to vector<1x16xf32>
    %885 = arith.mulf %884, %823 : vector<1x16xf32>
    %886 = arith.addf %882, %885 : vector<1x16xf32>
    %887 = arith.addf %819, %886 : vector<1x16xf32>
    %c0_547 = arith.constant 0 : index
    %888 = memref.load %arg4[%c0_547] : memref<8xf32, #tpu.memory_space<smem>>
    %889 = vector.broadcast %888 : f32 to vector<1x16xf32>
    %890 = arith.addf %831, %889 : vector<1x16xf32>
    %c0_548 = arith.constant 0 : index
    %c0_549 = arith.constant 0 : index
    %c0_550 = arith.constant 0 : index
    %c32_551 = arith.constant 32 : index
    %891 = vector.load %arg6[%c0_548, %c0_549, %c0_550, %c32_551] : memref<1x8x1x128xf32, #tpu.memory_space<vmem>>, vector<1x1x1x16xf32>
    %892 = vector.shape_cast %891 : vector<1x1x1x16xf32> to vector<1x16xf32>
    %893 = vector.shape_cast %890 : vector<1x16xf32> to vector<1x1x1x16xf32>
    tpu.vector_store %arg6[%c0_548, %c0_549, %c0_550, %c32_551], %893 {strides = array<i32>} : memref<1x8x1x128xf32, #tpu.memory_space<vmem>>, vector<1x1x1x16xf32>,
    %c1_552 = arith.constant 1 : index
    %894 = memref.load %arg4[%c1_552] : memref<8xf32, #tpu.memory_space<smem>>
    %895 = vector.broadcast %894 : f32 to vector<1x16xf32>
    %896 = arith.addf %839, %895 : vector<1x16xf32>
    %c0_553 = arith.constant 0 : index
    %c1_554 = arith.constant 1 : index
    %c0_555 = arith.constant 0 : index
    %c32_556 = arith.constant 32 : index
    %897 = vector.load %arg6[%c0_553, %c1_554, %c0_555, %c32_556] : memref<1x8x1x128xf32, #tpu.memory_space<vmem>>, vector<1x1x1x16xf32>
    %898 = vector.shape_cast %897 : vector<1x1x1x16xf32> to vector<1x16xf32>
    %899 = vector.shape_cast %896 : vector<1x16xf32> to vector<1x1x1x16xf32>
    tpu.vector_store %arg6[%c0_553, %c1_554, %c0_555, %c32_556], %899 {strides = array<i32>} : memref<1x8x1x128xf32, #tpu.memory_space<vmem>>, vector<1x1x1x16xf32>,
    %c2_557 = arith.constant 2 : index
    %900 = memref.load %arg4[%c2_557] : memref<8xf32, #tpu.memory_space<smem>>
    %901 = vector.broadcast %900 : f32 to vector<1x16xf32>
    %902 = arith.addf %847, %901 : vector<1x16xf32>
    %c0_558 = arith.constant 0 : index
    %c2_559 = arith.constant 2 : index
    %c0_560 = arith.constant 0 : index
    %c32_561 = arith.constant 32 : index
    %903 = vector.load %arg6[%c0_558, %c2_559, %c0_560, %c32_561] : memref<1x8x1x128xf32, #tpu.memory_space<vmem>>, vector<1x1x1x16xf32>
    %904 = vector.shape_cast %903 : vector<1x1x1x16xf32> to vector<1x16xf32>
    %905 = vector.shape_cast %902 : vector<1x16xf32> to vector<1x1x1x16xf32>
    tpu.vector_store %arg6[%c0_558, %c2_559, %c0_560, %c32_561], %905 {strides = array<i32>} : memref<1x8x1x128xf32, #tpu.memory_space<vmem>>, vector<1x1x1x16xf32>,
    %c3_562 = arith.constant 3 : index
    %906 = memref.load %arg4[%c3_562] : memref<8xf32, #tpu.memory_space<smem>>
    %907 = vector.broadcast %906 : f32 to vector<1x16xf32>
    %908 = arith.addf %855, %907 : vector<1x16xf32>
    %c0_563 = arith.constant 0 : index
    %c3_564 = arith.constant 3 : index
    %c0_565 = arith.constant 0 : index
    %c32_566 = arith.constant 32 : index
    %909 = vector.load %arg6[%c0_563, %c3_564, %c0_565, %c32_566] : memref<1x8x1x128xf32, #tpu.memory_space<vmem>>, vector<1x1x1x16xf32>
    %910 = vector.shape_cast %909 : vector<1x1x1x16xf32> to vector<1x16xf32>
    %911 = vector.shape_cast %908 : vector<1x16xf32> to vector<1x1x1x16xf32>
    tpu.vector_store %arg6[%c0_563, %c3_564, %c0_565, %c32_566], %911 {strides = array<i32>} : memref<1x8x1x128xf32, #tpu.memory_space<vmem>>, vector<1x1x1x16xf32>,
    %c4_567 = arith.constant 4 : index
    %912 = memref.load %arg4[%c4_567] : memref<8xf32, #tpu.memory_space<smem>>
    %913 = vector.broadcast %912 : f32 to vector<1x16xf32>
    %914 = arith.addf %863, %913 : vector<1x16xf32>
    %c0_568 = arith.constant 0 : index
    %c4_569 = arith.constant 4 : index
    %c0_570 = arith.constant 0 : index
    %c32_571 = arith.constant 32 : index
    %915 = vector.load %arg6[%c0_568, %c4_569, %c0_570, %c32_571] : memref<1x8x1x128xf32, #tpu.memory_space<vmem>>, vector<1x1x1x16xf32>
    %916 = vector.shape_cast %915 : vector<1x1x1x16xf32> to vector<1x16xf32>
    %917 = vector.shape_cast %914 : vector<1x16xf32> to vector<1x1x1x16xf32>
    tpu.vector_store %arg6[%c0_568, %c4_569, %c0_570, %c32_571], %917 {strides = array<i32>} : memref<1x8x1x128xf32, #tpu.memory_space<vmem>>, vector<1x1x1x16xf32>,
    %c5_572 = arith.constant 5 : index
    %918 = memref.load %arg4[%c5_572] : memref<8xf32, #tpu.memory_space<smem>>
    %919 = vector.broadcast %918 : f32 to vector<1x16xf32>
    %920 = arith.addf %871, %919 : vector<1x16xf32>
    %c0_573 = arith.constant 0 : index
    %c5_574 = arith.constant 5 : index
    %c0_575 = arith.constant 0 : index
    %c32_576 = arith.constant 32 : index
    %921 = vector.load %arg6[%c0_573, %c5_574, %c0_575, %c32_576] : memref<1x8x1x128xf32, #tpu.memory_space<vmem>>, vector<1x1x1x16xf32>
    %922 = vector.shape_cast %921 : vector<1x1x1x16xf32> to vector<1x16xf32>
    %923 = vector.shape_cast %920 : vector<1x16xf32> to vector<1x1x1x16xf32>
    tpu.vector_store %arg6[%c0_573, %c5_574, %c0_575, %c32_576], %923 {strides = array<i32>} : memref<1x8x1x128xf32, #tpu.memory_space<vmem>>, vector<1x1x1x16xf32>,
    %c6_577 = arith.constant 6 : index
    %924 = memref.load %arg4[%c6_577] : memref<8xf32, #tpu.memory_space<smem>>
    %925 = vector.broadcast %924 : f32 to vector<1x16xf32>
    %926 = arith.addf %879, %925 : vector<1x16xf32>
    %c0_578 = arith.constant 0 : index
    %c6_579 = arith.constant 6 : index
    %c0_580 = arith.constant 0 : index
    %c32_581 = arith.constant 32 : index
    %927 = vector.load %arg6[%c0_578, %c6_579, %c0_580, %c32_581] : memref<1x8x1x128xf32, #tpu.memory_space<vmem>>, vector<1x1x1x16xf32>
    %928 = vector.shape_cast %927 : vector<1x1x1x16xf32> to vector<1x16xf32>
    %929 = vector.shape_cast %926 : vector<1x16xf32> to vector<1x1x1x16xf32>
    tpu.vector_store %arg6[%c0_578, %c6_579, %c0_580, %c32_581], %929 {strides = array<i32>} : memref<1x8x1x128xf32, #tpu.memory_space<vmem>>, vector<1x1x1x16xf32>,
    %c7_582 = arith.constant 7 : index
    %930 = memref.load %arg4[%c7_582] : memref<8xf32, #tpu.memory_space<smem>>
    %931 = vector.broadcast %930 : f32 to vector<1x16xf32>
    %932 = arith.addf %887, %931 : vector<1x16xf32>
    %c0_583 = arith.constant 0 : index
    %c7_584 = arith.constant 7 : index
    %c0_585 = arith.constant 0 : index
    %c32_586 = arith.constant 32 : index
    %933 = vector.load %arg6[%c0_583, %c7_584, %c0_585, %c32_586] : memref<1x8x1x128xf32, #tpu.memory_space<vmem>>, vector<1x1x1x16xf32>
    %934 = vector.shape_cast %933 : vector<1x1x1x16xf32> to vector<1x16xf32>
    %935 = vector.shape_cast %932 : vector<1x16xf32> to vector<1x1x1x16xf32>
    tpu.vector_store %arg6[%c0_583, %c7_584, %c0_585, %c32_586], %935 {strides = array<i32>} : memref<1x8x1x128xf32, #tpu.memory_space<vmem>>, vector<1x1x1x16xf32>,
    %c0_587 = arith.constant 0 : index
    %c0_588 = arith.constant 0 : index
    %c0_589 = arith.constant 0 : index
    %c96 = arith.constant 96 : index
    %936 = vector.load %arg5[%c0_587, %c0_588, %c0_589, %c96] : memref<1x4x1x256xf32, #tpu.memory_space<vmem>>, vector<1x1x1x16xf32>
    %937 = vector.shape_cast %936 : vector<1x1x1x16xf32> to vector<1x16xf32>
    %c0_590 = arith.constant 0 : index
    %c0_591 = arith.constant 0 : index
    %c0_592 = arith.constant 0 : index
    %c112 = arith.constant 112 : index
    %938 = vector.load %arg5[%c0_590, %c0_591, %c0_592, %c112] : memref<1x4x1x256xf32, #tpu.memory_space<vmem>>, vector<1x1x1x16xf32>
    %939 = vector.shape_cast %938 : vector<1x1x1x16xf32> to vector<1x16xf32>
    %c0_593 = arith.constant 0 : index
    %c0_594 = arith.constant 0 : index
    %940 = memref.load %arg2[%c0_593, %c0_594] : memref<8x4xf32, #tpu.memory_space<smem>>
    %941 = vector.broadcast %940 : f32 to vector<1x16xf32>
    %942 = arith.mulf %941, %937 : vector<1x16xf32>
    %c0_595 = arith.constant 0 : index
    %c0_596 = arith.constant 0 : index
    %943 = memref.load %arg3[%c0_595, %c0_596] : memref<8x4xf32, #tpu.memory_space<smem>>
    %944 = vector.broadcast %943 : f32 to vector<1x16xf32>
    %945 = arith.mulf %944, %939 : vector<1x16xf32>
    %946 = arith.addf %942, %945 : vector<1x16xf32>
    %c1_597 = arith.constant 1 : index
    %c0_598 = arith.constant 0 : index
    %947 = memref.load %arg2[%c1_597, %c0_598] : memref<8x4xf32, #tpu.memory_space<smem>>
    %948 = vector.broadcast %947 : f32 to vector<1x16xf32>
    %949 = arith.mulf %948, %937 : vector<1x16xf32>
    %c1_599 = arith.constant 1 : index
    %c0_600 = arith.constant 0 : index
    %950 = memref.load %arg3[%c1_599, %c0_600] : memref<8x4xf32, #tpu.memory_space<smem>>
    %951 = vector.broadcast %950 : f32 to vector<1x16xf32>
    %952 = arith.mulf %951, %939 : vector<1x16xf32>
    %953 = arith.addf %949, %952 : vector<1x16xf32>
    %c2_601 = arith.constant 2 : index
    %c0_602 = arith.constant 0 : index
    %954 = memref.load %arg2[%c2_601, %c0_602] : memref<8x4xf32, #tpu.memory_space<smem>>
    %955 = vector.broadcast %954 : f32 to vector<1x16xf32>
    %956 = arith.mulf %955, %937 : vector<1x16xf32>
    %c2_603 = arith.constant 2 : index
    %c0_604 = arith.constant 0 : index
    %957 = memref.load %arg3[%c2_603, %c0_604] : memref<8x4xf32, #tpu.memory_space<smem>>
    %958 = vector.broadcast %957 : f32 to vector<1x16xf32>
    %959 = arith.mulf %958, %939 : vector<1x16xf32>
    %960 = arith.addf %956, %959 : vector<1x16xf32>
    %c3_605 = arith.constant 3 : index
    %c0_606 = arith.constant 0 : index
    %961 = memref.load %arg2[%c3_605, %c0_606] : memref<8x4xf32, #tpu.memory_space<smem>>
    %962 = vector.broadcast %961 : f32 to vector<1x16xf32>
    %963 = arith.mulf %962, %937 : vector<1x16xf32>
    %c3_607 = arith.constant 3 : index
    %c0_608 = arith.constant 0 : index
    %964 = memref.load %arg3[%c3_607, %c0_608] : memref<8x4xf32, #tpu.memory_space<smem>>
    %965 = vector.broadcast %964 : f32 to vector<1x16xf32>
    %966 = arith.mulf %965, %939 : vector<1x16xf32>
    %967 = arith.addf %963, %966 : vector<1x16xf32>
    %c4_609 = arith.constant 4 : index
    %c0_610 = arith.constant 0 : index
    %968 = memref.load %arg2[%c4_609, %c0_610] : memref<8x4xf32, #tpu.memory_space<smem>>
    %969 = vector.broadcast %968 : f32 to vector<1x16xf32>
    %970 = arith.mulf %969, %937 : vector<1x16xf32>
    %c4_611 = arith.constant 4 : index
    %c0_612 = arith.constant 0 : index
    %971 = memref.load %arg3[%c4_611, %c0_612] : memref<8x4xf32, #tpu.memory_space<smem>>
    %972 = vector.broadcast %971 : f32 to vector<1x16xf32>
    %973 = arith.mulf %972, %939 : vector<1x16xf32>
    %974 = arith.addf %970, %973 : vector<1x16xf32>
    %c5_613 = arith.constant 5 : index
    %c0_614 = arith.constant 0 : index
    %975 = memref.load %arg2[%c5_613, %c0_614] : memref<8x4xf32, #tpu.memory_space<smem>>
    %976 = vector.broadcast %975 : f32 to vector<1x16xf32>
    %977 = arith.mulf %976, %937 : vector<1x16xf32>
    %c5_615 = arith.constant 5 : index
    %c0_616 = arith.constant 0 : index
    %978 = memref.load %arg3[%c5_615, %c0_616] : memref<8x4xf32, #tpu.memory_space<smem>>
    %979 = vector.broadcast %978 : f32 to vector<1x16xf32>
    %980 = arith.mulf %979, %939 : vector<1x16xf32>
    %981 = arith.addf %977, %980 : vector<1x16xf32>
    %c6_617 = arith.constant 6 : index
    %c0_618 = arith.constant 0 : index
    %982 = memref.load %arg2[%c6_617, %c0_618] : memref<8x4xf32, #tpu.memory_space<smem>>
    %983 = vector.broadcast %982 : f32 to vector<1x16xf32>
    %984 = arith.mulf %983, %937 : vector<1x16xf32>
    %c6_619 = arith.constant 6 : index
    %c0_620 = arith.constant 0 : index
    %985 = memref.load %arg3[%c6_619, %c0_620] : memref<8x4xf32, #tpu.memory_space<smem>>
    %986 = vector.broadcast %985 : f32 to vector<1x16xf32>
    %987 = arith.mulf %986, %939 : vector<1x16xf32>
    %988 = arith.addf %984, %987 : vector<1x16xf32>
    %c7_621 = arith.constant 7 : index
    %c0_622 = arith.constant 0 : index
    %989 = memref.load %arg2[%c7_621, %c0_622] : memref<8x4xf32, #tpu.memory_space<smem>>
    %990 = vector.broadcast %989 : f32 to vector<1x16xf32>
    %991 = arith.mulf %990, %937 : vector<1x16xf32>
    %c7_623 = arith.constant 7 : index
    %c0_624 = arith.constant 0 : index
    %992 = memref.load %arg3[%c7_623, %c0_624] : memref<8x4xf32, #tpu.memory_space<smem>>
    %993 = vector.broadcast %992 : f32 to vector<1x16xf32>
    %994 = arith.mulf %993, %939 : vector<1x16xf32>
    %995 = arith.addf %991, %994 : vector<1x16xf32>
    %c0_625 = arith.constant 0 : index
    %c1_626 = arith.constant 1 : index
    %c0_627 = arith.constant 0 : index
    %c96_628 = arith.constant 96 : index
    %996 = vector.load %arg5[%c0_625, %c1_626, %c0_627, %c96_628] : memref<1x4x1x256xf32, #tpu.memory_space<vmem>>, vector<1x1x1x16xf32>
    %997 = vector.shape_cast %996 : vector<1x1x1x16xf32> to vector<1x16xf32>
    %c0_629 = arith.constant 0 : index
    %c1_630 = arith.constant 1 : index
    %c0_631 = arith.constant 0 : index
    %c112_632 = arith.constant 112 : index
    %998 = vector.load %arg5[%c0_629, %c1_630, %c0_631, %c112_632] : memref<1x4x1x256xf32, #tpu.memory_space<vmem>>, vector<1x1x1x16xf32>
    %999 = vector.shape_cast %998 : vector<1x1x1x16xf32> to vector<1x16xf32>
    %c0_633 = arith.constant 0 : index
    %c1_634 = arith.constant 1 : index
    %1000 = memref.load %arg2[%c0_633, %c1_634] : memref<8x4xf32, #tpu.memory_space<smem>>
    %1001 = vector.broadcast %1000 : f32 to vector<1x16xf32>
    %1002 = arith.mulf %1001, %997 : vector<1x16xf32>
    %c0_635 = arith.constant 0 : index
    %c1_636 = arith.constant 1 : index
    %1003 = memref.load %arg3[%c0_635, %c1_636] : memref<8x4xf32, #tpu.memory_space<smem>>
    %1004 = vector.broadcast %1003 : f32 to vector<1x16xf32>
    %1005 = arith.mulf %1004, %999 : vector<1x16xf32>
    %1006 = arith.addf %1002, %1005 : vector<1x16xf32>
    %1007 = arith.addf %946, %1006 : vector<1x16xf32>
    %c1_637 = arith.constant 1 : index
    %c1_638 = arith.constant 1 : index
    %1008 = memref.load %arg2[%c1_637, %c1_638] : memref<8x4xf32, #tpu.memory_space<smem>>
    %1009 = vector.broadcast %1008 : f32 to vector<1x16xf32>
    %1010 = arith.mulf %1009, %997 : vector<1x16xf32>
    %c1_639 = arith.constant 1 : index
    %c1_640 = arith.constant 1 : index
    %1011 = memref.load %arg3[%c1_639, %c1_640] : memref<8x4xf32, #tpu.memory_space<smem>>
    %1012 = vector.broadcast %1011 : f32 to vector<1x16xf32>
    %1013 = arith.mulf %1012, %999 : vector<1x16xf32>
    %1014 = arith.addf %1010, %1013 : vector<1x16xf32>
    %1015 = arith.addf %953, %1014 : vector<1x16xf32>
    %c2_641 = arith.constant 2 : index
    %c1_642 = arith.constant 1 : index
    %1016 = memref.load %arg2[%c2_641, %c1_642] : memref<8x4xf32, #tpu.memory_space<smem>>
    %1017 = vector.broadcast %1016 : f32 to vector<1x16xf32>
    %1018 = arith.mulf %1017, %997 : vector<1x16xf32>
    %c2_643 = arith.constant 2 : index
    %c1_644 = arith.constant 1 : index
    %1019 = memref.load %arg3[%c2_643, %c1_644] : memref<8x4xf32, #tpu.memory_space<smem>>
    %1020 = vector.broadcast %1019 : f32 to vector<1x16xf32>
    %1021 = arith.mulf %1020, %999 : vector<1x16xf32>
    %1022 = arith.addf %1018, %1021 : vector<1x16xf32>
    %1023 = arith.addf %960, %1022 : vector<1x16xf32>
    %c3_645 = arith.constant 3 : index
    %c1_646 = arith.constant 1 : index
    %1024 = memref.load %arg2[%c3_645, %c1_646] : memref<8x4xf32, #tpu.memory_space<smem>>
    %1025 = vector.broadcast %1024 : f32 to vector<1x16xf32>
    %1026 = arith.mulf %1025, %997 : vector<1x16xf32>
    %c3_647 = arith.constant 3 : index
    %c1_648 = arith.constant 1 : index
    %1027 = memref.load %arg3[%c3_647, %c1_648] : memref<8x4xf32, #tpu.memory_space<smem>>
    %1028 = vector.broadcast %1027 : f32 to vector<1x16xf32>
    %1029 = arith.mulf %1028, %999 : vector<1x16xf32>
    %1030 = arith.addf %1026, %1029 : vector<1x16xf32>
    %1031 = arith.addf %967, %1030 : vector<1x16xf32>
    %c4_649 = arith.constant 4 : index
    %c1_650 = arith.constant 1 : index
    %1032 = memref.load %arg2[%c4_649, %c1_650] : memref<8x4xf32, #tpu.memory_space<smem>>
    %1033 = vector.broadcast %1032 : f32 to vector<1x16xf32>
    %1034 = arith.mulf %1033, %997 : vector<1x16xf32>
    %c4_651 = arith.constant 4 : index
    %c1_652 = arith.constant 1 : index
    %1035 = memref.load %arg3[%c4_651, %c1_652] : memref<8x4xf32, #tpu.memory_space<smem>>
    %1036 = vector.broadcast %1035 : f32 to vector<1x16xf32>
    %1037 = arith.mulf %1036, %999 : vector<1x16xf32>
    %1038 = arith.addf %1034, %1037 : vector<1x16xf32>
    %1039 = arith.addf %974, %1038 : vector<1x16xf32>
    %c5_653 = arith.constant 5 : index
    %c1_654 = arith.constant 1 : index
    %1040 = memref.load %arg2[%c5_653, %c1_654] : memref<8x4xf32, #tpu.memory_space<smem>>
    %1041 = vector.broadcast %1040 : f32 to vector<1x16xf32>
    %1042 = arith.mulf %1041, %997 : vector<1x16xf32>
    %c5_655 = arith.constant 5 : index
    %c1_656 = arith.constant 1 : index
    %1043 = memref.load %arg3[%c5_655, %c1_656] : memref<8x4xf32, #tpu.memory_space<smem>>
    %1044 = vector.broadcast %1043 : f32 to vector<1x16xf32>
    %1045 = arith.mulf %1044, %999 : vector<1x16xf32>
    %1046 = arith.addf %1042, %1045 : vector<1x16xf32>
    %1047 = arith.addf %981, %1046 : vector<1x16xf32>
    %c6_657 = arith.constant 6 : index
    %c1_658 = arith.constant 1 : index
    %1048 = memref.load %arg2[%c6_657, %c1_658] : memref<8x4xf32, #tpu.memory_space<smem>>
    %1049 = vector.broadcast %1048 : f32 to vector<1x16xf32>
    %1050 = arith.mulf %1049, %997 : vector<1x16xf32>
    %c6_659 = arith.constant 6 : index
    %c1_660 = arith.constant 1 : index
    %1051 = memref.load %arg3[%c6_659, %c1_660] : memref<8x4xf32, #tpu.memory_space<smem>>
    %1052 = vector.broadcast %1051 : f32 to vector<1x16xf32>
    %1053 = arith.mulf %1052, %999 : vector<1x16xf32>
    %1054 = arith.addf %1050, %1053 : vector<1x16xf32>
    %1055 = arith.addf %988, %1054 : vector<1x16xf32>
    %c7_661 = arith.constant 7 : index
    %c1_662 = arith.constant 1 : index
    %1056 = memref.load %arg2[%c7_661, %c1_662] : memref<8x4xf32, #tpu.memory_space<smem>>
    %1057 = vector.broadcast %1056 : f32 to vector<1x16xf32>
    %1058 = arith.mulf %1057, %997 : vector<1x16xf32>
    %c7_663 = arith.constant 7 : index
    %c1_664 = arith.constant 1 : index
    %1059 = memref.load %arg3[%c7_663, %c1_664] : memref<8x4xf32, #tpu.memory_space<smem>>
    %1060 = vector.broadcast %1059 : f32 to vector<1x16xf32>
    %1061 = arith.mulf %1060, %999 : vector<1x16xf32>
    %1062 = arith.addf %1058, %1061 : vector<1x16xf32>
    %1063 = arith.addf %995, %1062 : vector<1x16xf32>
    %c0_665 = arith.constant 0 : index
    %c2_666 = arith.constant 2 : index
    %c0_667 = arith.constant 0 : index
    %c96_668 = arith.constant 96 : index
    %1064 = vector.load %arg5[%c0_665, %c2_666, %c0_667, %c96_668] : memref<1x4x1x256xf32, #tpu.memory_space<vmem>>, vector<1x1x1x16xf32>
    %1065 = vector.shape_cast %1064 : vector<1x1x1x16xf32> to vector<1x16xf32>
    %c0_669 = arith.constant 0 : index
    %c2_670 = arith.constant 2 : index
    %c0_671 = arith.constant 0 : index
    %c112_672 = arith.constant 112 : index
    %1066 = vector.load %arg5[%c0_669, %c2_670, %c0_671, %c112_672] : memref<1x4x1x256xf32, #tpu.memory_space<vmem>>, vector<1x1x1x16xf32>
    %1067 = vector.shape_cast %1066 : vector<1x1x1x16xf32> to vector<1x16xf32>
    %c0_673 = arith.constant 0 : index
    %c2_674 = arith.constant 2 : index
    %1068 = memref.load %arg2[%c0_673, %c2_674] : memref<8x4xf32, #tpu.memory_space<smem>>
    %1069 = vector.broadcast %1068 : f32 to vector<1x16xf32>
    %1070 = arith.mulf %1069, %1065 : vector<1x16xf32>
    %c0_675 = arith.constant 0 : index
    %c2_676 = arith.constant 2 : index
    %1071 = memref.load %arg3[%c0_675, %c2_676] : memref<8x4xf32, #tpu.memory_space<smem>>
    %1072 = vector.broadcast %1071 : f32 to vector<1x16xf32>
    %1073 = arith.mulf %1072, %1067 : vector<1x16xf32>
    %1074 = arith.addf %1070, %1073 : vector<1x16xf32>
    %1075 = arith.addf %1007, %1074 : vector<1x16xf32>
    %c1_677 = arith.constant 1 : index
    %c2_678 = arith.constant 2 : index
    %1076 = memref.load %arg2[%c1_677, %c2_678] : memref<8x4xf32, #tpu.memory_space<smem>>
    %1077 = vector.broadcast %1076 : f32 to vector<1x16xf32>
    %1078 = arith.mulf %1077, %1065 : vector<1x16xf32>
    %c1_679 = arith.constant 1 : index
    %c2_680 = arith.constant 2 : index
    %1079 = memref.load %arg3[%c1_679, %c2_680] : memref<8x4xf32, #tpu.memory_space<smem>>
    %1080 = vector.broadcast %1079 : f32 to vector<1x16xf32>
    %1081 = arith.mulf %1080, %1067 : vector<1x16xf32>
    %1082 = arith.addf %1078, %1081 : vector<1x16xf32>
    %1083 = arith.addf %1015, %1082 : vector<1x16xf32>
    %c2_681 = arith.constant 2 : index
    %c2_682 = arith.constant 2 : index
    %1084 = memref.load %arg2[%c2_681, %c2_682] : memref<8x4xf32, #tpu.memory_space<smem>>
    %1085 = vector.broadcast %1084 : f32 to vector<1x16xf32>
    %1086 = arith.mulf %1085, %1065 : vector<1x16xf32>
    %c2_683 = arith.constant 2 : index
    %c2_684 = arith.constant 2 : index
    %1087 = memref.load %arg3[%c2_683, %c2_684] : memref<8x4xf32, #tpu.memory_space<smem>>
    %1088 = vector.broadcast %1087 : f32 to vector<1x16xf32>
    %1089 = arith.mulf %1088, %1067 : vector<1x16xf32>
    %1090 = arith.addf %1086, %1089 : vector<1x16xf32>
    %1091 = arith.addf %1023, %1090 : vector<1x16xf32>
    %c3_685 = arith.constant 3 : index
    %c2_686 = arith.constant 2 : index
    %1092 = memref.load %arg2[%c3_685, %c2_686] : memref<8x4xf32, #tpu.memory_space<smem>>
    %1093 = vector.broadcast %1092 : f32 to vector<1x16xf32>
    %1094 = arith.mulf %1093, %1065 : vector<1x16xf32>
    %c3_687 = arith.constant 3 : index
    %c2_688 = arith.constant 2 : index
    %1095 = memref.load %arg3[%c3_687, %c2_688] : memref<8x4xf32, #tpu.memory_space<smem>>
    %1096 = vector.broadcast %1095 : f32 to vector<1x16xf32>
    %1097 = arith.mulf %1096, %1067 : vector<1x16xf32>
    %1098 = arith.addf %1094, %1097 : vector<1x16xf32>
    %1099 = arith.addf %1031, %1098 : vector<1x16xf32>
    %c4_689 = arith.constant 4 : index
    %c2_690 = arith.constant 2 : index
    %1100 = memref.load %arg2[%c4_689, %c2_690] : memref<8x4xf32, #tpu.memory_space<smem>>
    %1101 = vector.broadcast %1100 : f32 to vector<1x16xf32>
    %1102 = arith.mulf %1101, %1065 : vector<1x16xf32>
    %c4_691 = arith.constant 4 : index
    %c2_692 = arith.constant 2 : index
    %1103 = memref.load %arg3[%c4_691, %c2_692] : memref<8x4xf32, #tpu.memory_space<smem>>
    %1104 = vector.broadcast %1103 : f32 to vector<1x16xf32>
    %1105 = arith.mulf %1104, %1067 : vector<1x16xf32>
    %1106 = arith.addf %1102, %1105 : vector<1x16xf32>
    %1107 = arith.addf %1039, %1106 : vector<1x16xf32>
    %c5_693 = arith.constant 5 : index
    %c2_694 = arith.constant 2 : index
    %1108 = memref.load %arg2[%c5_693, %c2_694] : memref<8x4xf32, #tpu.memory_space<smem>>
    %1109 = vector.broadcast %1108 : f32 to vector<1x16xf32>
    %1110 = arith.mulf %1109, %1065 : vector<1x16xf32>
    %c5_695 = arith.constant 5 : index
    %c2_696 = arith.constant 2 : index
    %1111 = memref.load %arg3[%c5_695, %c2_696] : memref<8x4xf32, #tpu.memory_space<smem>>
    %1112 = vector.broadcast %1111 : f32 to vector<1x16xf32>
    %1113 = arith.mulf %1112, %1067 : vector<1x16xf32>
    %1114 = arith.addf %1110, %1113 : vector<1x16xf32>
    %1115 = arith.addf %1047, %1114 : vector<1x16xf32>
    %c6_697 = arith.constant 6 : index
    %c2_698 = arith.constant 2 : index
    %1116 = memref.load %arg2[%c6_697, %c2_698] : memref<8x4xf32, #tpu.memory_space<smem>>
    %1117 = vector.broadcast %1116 : f32 to vector<1x16xf32>
    %1118 = arith.mulf %1117, %1065 : vector<1x16xf32>
    %c6_699 = arith.constant 6 : index
    %c2_700 = arith.constant 2 : index
    %1119 = memref.load %arg3[%c6_699, %c2_700] : memref<8x4xf32, #tpu.memory_space<smem>>
    %1120 = vector.broadcast %1119 : f32 to vector<1x16xf32>
    %1121 = arith.mulf %1120, %1067 : vector<1x16xf32>
    %1122 = arith.addf %1118, %1121 : vector<1x16xf32>
    %1123 = arith.addf %1055, %1122 : vector<1x16xf32>
    %c7_701 = arith.constant 7 : index
    %c2_702 = arith.constant 2 : index
    %1124 = memref.load %arg2[%c7_701, %c2_702] : memref<8x4xf32, #tpu.memory_space<smem>>
    %1125 = vector.broadcast %1124 : f32 to vector<1x16xf32>
    %1126 = arith.mulf %1125, %1065 : vector<1x16xf32>
    %c7_703 = arith.constant 7 : index
    %c2_704 = arith.constant 2 : index
    %1127 = memref.load %arg3[%c7_703, %c2_704] : memref<8x4xf32, #tpu.memory_space<smem>>
    %1128 = vector.broadcast %1127 : f32 to vector<1x16xf32>
    %1129 = arith.mulf %1128, %1067 : vector<1x16xf32>
    %1130 = arith.addf %1126, %1129 : vector<1x16xf32>
    %1131 = arith.addf %1063, %1130 : vector<1x16xf32>
    %c0_705 = arith.constant 0 : index
    %c3_706 = arith.constant 3 : index
    %c0_707 = arith.constant 0 : index
    %c96_708 = arith.constant 96 : index
    %1132 = vector.load %arg5[%c0_705, %c3_706, %c0_707, %c96_708] : memref<1x4x1x256xf32, #tpu.memory_space<vmem>>, vector<1x1x1x16xf32>
    %1133 = vector.shape_cast %1132 : vector<1x1x1x16xf32> to vector<1x16xf32>
    %c0_709 = arith.constant 0 : index
    %c3_710 = arith.constant 3 : index
    %c0_711 = arith.constant 0 : index
    %c112_712 = arith.constant 112 : index
    %1134 = vector.load %arg5[%c0_709, %c3_710, %c0_711, %c112_712] : memref<1x4x1x256xf32, #tpu.memory_space<vmem>>, vector<1x1x1x16xf32>
    %1135 = vector.shape_cast %1134 : vector<1x1x1x16xf32> to vector<1x16xf32>
    %c0_713 = arith.constant 0 : index
    %c3_714 = arith.constant 3 : index
    %1136 = memref.load %arg2[%c0_713, %c3_714] : memref<8x4xf32, #tpu.memory_space<smem>>
    %1137 = vector.broadcast %1136 : f32 to vector<1x16xf32>
    %1138 = arith.mulf %1137, %1133 : vector<1x16xf32>
    %c0_715 = arith.constant 0 : index
    %c3_716 = arith.constant 3 : index
    %1139 = memref.load %arg3[%c0_715, %c3_716] : memref<8x4xf32, #tpu.memory_space<smem>>
    %1140 = vector.broadcast %1139 : f32 to vector<1x16xf32>
    %1141 = arith.mulf %1140, %1135 : vector<1x16xf32>
    %1142 = arith.addf %1138, %1141 : vector<1x16xf32>
    %1143 = arith.addf %1075, %1142 : vector<1x16xf32>
    %c1_717 = arith.constant 1 : index
    %c3_718 = arith.constant 3 : index
    %1144 = memref.load %arg2[%c1_717, %c3_718] : memref<8x4xf32, #tpu.memory_space<smem>>
    %1145 = vector.broadcast %1144 : f32 to vector<1x16xf32>
    %1146 = arith.mulf %1145, %1133 : vector<1x16xf32>
    %c1_719 = arith.constant 1 : index
    %c3_720 = arith.constant 3 : index
    %1147 = memref.load %arg3[%c1_719, %c3_720] : memref<8x4xf32, #tpu.memory_space<smem>>
    %1148 = vector.broadcast %1147 : f32 to vector<1x16xf32>
    %1149 = arith.mulf %1148, %1135 : vector<1x16xf32>
    %1150 = arith.addf %1146, %1149 : vector<1x16xf32>
    %1151 = arith.addf %1083, %1150 : vector<1x16xf32>
    %c2_721 = arith.constant 2 : index
    %c3_722 = arith.constant 3 : index
    %1152 = memref.load %arg2[%c2_721, %c3_722] : memref<8x4xf32, #tpu.memory_space<smem>>
    %1153 = vector.broadcast %1152 : f32 to vector<1x16xf32>
    %1154 = arith.mulf %1153, %1133 : vector<1x16xf32>
    %c2_723 = arith.constant 2 : index
    %c3_724 = arith.constant 3 : index
    %1155 = memref.load %arg3[%c2_723, %c3_724] : memref<8x4xf32, #tpu.memory_space<smem>>
    %1156 = vector.broadcast %1155 : f32 to vector<1x16xf32>
    %1157 = arith.mulf %1156, %1135 : vector<1x16xf32>
    %1158 = arith.addf %1154, %1157 : vector<1x16xf32>
    %1159 = arith.addf %1091, %1158 : vector<1x16xf32>
    %c3_725 = arith.constant 3 : index
    %c3_726 = arith.constant 3 : index
    %1160 = memref.load %arg2[%c3_725, %c3_726] : memref<8x4xf32, #tpu.memory_space<smem>>
    %1161 = vector.broadcast %1160 : f32 to vector<1x16xf32>
    %1162 = arith.mulf %1161, %1133 : vector<1x16xf32>
    %c3_727 = arith.constant 3 : index
    %c3_728 = arith.constant 3 : index
    %1163 = memref.load %arg3[%c3_727, %c3_728] : memref<8x4xf32, #tpu.memory_space<smem>>
    %1164 = vector.broadcast %1163 : f32 to vector<1x16xf32>
    %1165 = arith.mulf %1164, %1135 : vector<1x16xf32>
    %1166 = arith.addf %1162, %1165 : vector<1x16xf32>
    %1167 = arith.addf %1099, %1166 : vector<1x16xf32>
    %c4_729 = arith.constant 4 : index
    %c3_730 = arith.constant 3 : index
    %1168 = memref.load %arg2[%c4_729, %c3_730] : memref<8x4xf32, #tpu.memory_space<smem>>
    %1169 = vector.broadcast %1168 : f32 to vector<1x16xf32>
    %1170 = arith.mulf %1169, %1133 : vector<1x16xf32>
    %c4_731 = arith.constant 4 : index
    %c3_732 = arith.constant 3 : index
    %1171 = memref.load %arg3[%c4_731, %c3_732] : memref<8x4xf32, #tpu.memory_space<smem>>
    %1172 = vector.broadcast %1171 : f32 to vector<1x16xf32>
    %1173 = arith.mulf %1172, %1135 : vector<1x16xf32>
    %1174 = arith.addf %1170, %1173 : vector<1x16xf32>
    %1175 = arith.addf %1107, %1174 : vector<1x16xf32>
    %c5_733 = arith.constant 5 : index
    %c3_734 = arith.constant 3 : index
    %1176 = memref.load %arg2[%c5_733, %c3_734] : memref<8x4xf32, #tpu.memory_space<smem>>
    %1177 = vector.broadcast %1176 : f32 to vector<1x16xf32>
    %1178 = arith.mulf %1177, %1133 : vector<1x16xf32>
    %c5_735 = arith.constant 5 : index
    %c3_736 = arith.constant 3 : index
    %1179 = memref.load %arg3[%c5_735, %c3_736] : memref<8x4xf32, #tpu.memory_space<smem>>
    %1180 = vector.broadcast %1179 : f32 to vector<1x16xf32>
    %1181 = arith.mulf %1180, %1135 : vector<1x16xf32>
    %1182 = arith.addf %1178, %1181 : vector<1x16xf32>
    %1183 = arith.addf %1115, %1182 : vector<1x16xf32>
    %c6_737 = arith.constant 6 : index
    %c3_738 = arith.constant 3 : index
    %1184 = memref.load %arg2[%c6_737, %c3_738] : memref<8x4xf32, #tpu.memory_space<smem>>
    %1185 = vector.broadcast %1184 : f32 to vector<1x16xf32>
    %1186 = arith.mulf %1185, %1133 : vector<1x16xf32>
    %c6_739 = arith.constant 6 : index
    %c3_740 = arith.constant 3 : index
    %1187 = memref.load %arg3[%c6_739, %c3_740] : memref<8x4xf32, #tpu.memory_space<smem>>
    %1188 = vector.broadcast %1187 : f32 to vector<1x16xf32>
    %1189 = arith.mulf %1188, %1135 : vector<1x16xf32>
    %1190 = arith.addf %1186, %1189 : vector<1x16xf32>
    %1191 = arith.addf %1123, %1190 : vector<1x16xf32>
    %c7_741 = arith.constant 7 : index
    %c3_742 = arith.constant 3 : index
    %1192 = memref.load %arg2[%c7_741, %c3_742] : memref<8x4xf32, #tpu.memory_space<smem>>
    %1193 = vector.broadcast %1192 : f32 to vector<1x16xf32>
    %1194 = arith.mulf %1193, %1133 : vector<1x16xf32>
    %c7_743 = arith.constant 7 : index
    %c3_744 = arith.constant 3 : index
    %1195 = memref.load %arg3[%c7_743, %c3_744] : memref<8x4xf32, #tpu.memory_space<smem>>
    %1196 = vector.broadcast %1195 : f32 to vector<1x16xf32>
    %1197 = arith.mulf %1196, %1135 : vector<1x16xf32>
    %1198 = arith.addf %1194, %1197 : vector<1x16xf32>
    %1199 = arith.addf %1131, %1198 : vector<1x16xf32>
    %c0_745 = arith.constant 0 : index
    %1200 = memref.load %arg4[%c0_745] : memref<8xf32, #tpu.memory_space<smem>>
    %1201 = vector.broadcast %1200 : f32 to vector<1x16xf32>
    %1202 = arith.addf %1143, %1201 : vector<1x16xf32>
    %c0_746 = arith.constant 0 : index
    %c0_747 = arith.constant 0 : index
    %c0_748 = arith.constant 0 : index
    %c48_749 = arith.constant 48 : index
    %1203 = vector.load %arg6[%c0_746, %c0_747, %c0_748, %c48_749] : memref<1x8x1x128xf32, #tpu.memory_space<vmem>>, vector<1x1x1x16xf32>
    %1204 = vector.shape_cast %1203 : vector<1x1x1x16xf32> to vector<1x16xf32>
    %1205 = vector.shape_cast %1202 : vector<1x16xf32> to vector<1x1x1x16xf32>
    tpu.vector_store %arg6[%c0_746, %c0_747, %c0_748, %c48_749], %1205 {strides = array<i32>} : memref<1x8x1x128xf32, #tpu.memory_space<vmem>>, vector<1x1x1x16xf32>,
    %c1_750 = arith.constant 1 : index
    %1206 = memref.load %arg4[%c1_750] : memref<8xf32, #tpu.memory_space<smem>>
    %1207 = vector.broadcast %1206 : f32 to vector<1x16xf32>
    %1208 = arith.addf %1151, %1207 : vector<1x16xf32>
    %c0_751 = arith.constant 0 : index
    %c1_752 = arith.constant 1 : index
    %c0_753 = arith.constant 0 : index
    %c48_754 = arith.constant 48 : index
    %1209 = vector.load %arg6[%c0_751, %c1_752, %c0_753, %c48_754] : memref<1x8x1x128xf32, #tpu.memory_space<vmem>>, vector<1x1x1x16xf32>
    %1210 = vector.shape_cast %1209 : vector<1x1x1x16xf32> to vector<1x16xf32>
    %1211 = vector.shape_cast %1208 : vector<1x16xf32> to vector<1x1x1x16xf32>
    tpu.vector_store %arg6[%c0_751, %c1_752, %c0_753, %c48_754], %1211 {strides = array<i32>} : memref<1x8x1x128xf32, #tpu.memory_space<vmem>>, vector<1x1x1x16xf32>,
    %c2_755 = arith.constant 2 : index
    %1212 = memref.load %arg4[%c2_755] : memref<8xf32, #tpu.memory_space<smem>>
    %1213 = vector.broadcast %1212 : f32 to vector<1x16xf32>
    %1214 = arith.addf %1159, %1213 : vector<1x16xf32>
    %c0_756 = arith.constant 0 : index
    %c2_757 = arith.constant 2 : index
    %c0_758 = arith.constant 0 : index
    %c48_759 = arith.constant 48 : index
    %1215 = vector.load %arg6[%c0_756, %c2_757, %c0_758, %c48_759] : memref<1x8x1x128xf32, #tpu.memory_space<vmem>>, vector<1x1x1x16xf32>
    %1216 = vector.shape_cast %1215 : vector<1x1x1x16xf32> to vector<1x16xf32>
    %1217 = vector.shape_cast %1214 : vector<1x16xf32> to vector<1x1x1x16xf32>
    tpu.vector_store %arg6[%c0_756, %c2_757, %c0_758, %c48_759], %1217 {strides = array<i32>} : memref<1x8x1x128xf32, #tpu.memory_space<vmem>>, vector<1x1x1x16xf32>,
    %c3_760 = arith.constant 3 : index
    %1218 = memref.load %arg4[%c3_760] : memref<8xf32, #tpu.memory_space<smem>>
    %1219 = vector.broadcast %1218 : f32 to vector<1x16xf32>
    %1220 = arith.addf %1167, %1219 : vector<1x16xf32>
    %c0_761 = arith.constant 0 : index
    %c3_762 = arith.constant 3 : index
    %c0_763 = arith.constant 0 : index
    %c48_764 = arith.constant 48 : index
    %1221 = vector.load %arg6[%c0_761, %c3_762, %c0_763, %c48_764] : memref<1x8x1x128xf32, #tpu.memory_space<vmem>>, vector<1x1x1x16xf32>
    %1222 = vector.shape_cast %1221 : vector<1x1x1x16xf32> to vector<1x16xf32>
    %1223 = vector.shape_cast %1220 : vector<1x16xf32> to vector<1x1x1x16xf32>
    tpu.vector_store %arg6[%c0_761, %c3_762, %c0_763, %c48_764], %1223 {strides = array<i32>} : memref<1x8x1x128xf32, #tpu.memory_space<vmem>>, vector<1x1x1x16xf32>,
    %c4_765 = arith.constant 4 : index
    %1224 = memref.load %arg4[%c4_765] : memref<8xf32, #tpu.memory_space<smem>>
    %1225 = vector.broadcast %1224 : f32 to vector<1x16xf32>
    %1226 = arith.addf %1175, %1225 : vector<1x16xf32>
    %c0_766 = arith.constant 0 : index
    %c4_767 = arith.constant 4 : index
    %c0_768 = arith.constant 0 : index
    %c48_769 = arith.constant 48 : index
    %1227 = vector.load %arg6[%c0_766, %c4_767, %c0_768, %c48_769] : memref<1x8x1x128xf32, #tpu.memory_space<vmem>>, vector<1x1x1x16xf32>
    %1228 = vector.shape_cast %1227 : vector<1x1x1x16xf32> to vector<1x16xf32>
    %1229 = vector.shape_cast %1226 : vector<1x16xf32> to vector<1x1x1x16xf32>
    tpu.vector_store %arg6[%c0_766, %c4_767, %c0_768, %c48_769], %1229 {strides = array<i32>} : memref<1x8x1x128xf32, #tpu.memory_space<vmem>>, vector<1x1x1x16xf32>,
    %c5_770 = arith.constant 5 : index
    %1230 = memref.load %arg4[%c5_770] : memref<8xf32, #tpu.memory_space<smem>>
    %1231 = vector.broadcast %1230 : f32 to vector<1x16xf32>
    %1232 = arith.addf %1183, %1231 : vector<1x16xf32>
    %c0_771 = arith.constant 0 : index
    %c5_772 = arith.constant 5 : index
    %c0_773 = arith.constant 0 : index
    %c48_774 = arith.constant 48 : index
    %1233 = vector.load %arg6[%c0_771, %c5_772, %c0_773, %c48_774] : memref<1x8x1x128xf32, #tpu.memory_space<vmem>>, vector<1x1x1x16xf32>
    %1234 = vector.shape_cast %1233 : vector<1x1x1x16xf32> to vector<1x16xf32>
    %1235 = vector.shape_cast %1232 : vector<1x16xf32> to vector<1x1x1x16xf32>
    tpu.vector_store %arg6[%c0_771, %c5_772, %c0_773, %c48_774], %1235 {strides = array<i32>} : memref<1x8x1x128xf32, #tpu.memory_space<vmem>>, vector<1x1x1x16xf32>,
    %c6_775 = arith.constant 6 : index
    %1236 = memref.load %arg4[%c6_775] : memref<8xf32, #tpu.memory_space<smem>>
    %1237 = vector.broadcast %1236 : f32 to vector<1x16xf32>
    %1238 = arith.addf %1191, %1237 : vector<1x16xf32>
    %c0_776 = arith.constant 0 : index
    %c6_777 = arith.constant 6 : index
    %c0_778 = arith.constant 0 : index
    %c48_779 = arith.constant 48 : index
    %1239 = vector.load %arg6[%c0_776, %c6_777, %c0_778, %c48_779] : memref<1x8x1x128xf32, #tpu.memory_space<vmem>>, vector<1x1x1x16xf32>
    %1240 = vector.shape_cast %1239 : vector<1x1x1x16xf32> to vector<1x16xf32>
    %1241 = vector.shape_cast %1238 : vector<1x16xf32> to vector<1x1x1x16xf32>
    tpu.vector_store %arg6[%c0_776, %c6_777, %c0_778, %c48_779], %1241 {strides = array<i32>} : memref<1x8x1x128xf32, #tpu.memory_space<vmem>>, vector<1x1x1x16xf32>,
    %c7_780 = arith.constant 7 : index
    %1242 = memref.load %arg4[%c7_780] : memref<8xf32, #tpu.memory_space<smem>>
    %1243 = vector.broadcast %1242 : f32 to vector<1x16xf32>
    %1244 = arith.addf %1199, %1243 : vector<1x16xf32>
    %c0_781 = arith.constant 0 : index
    %c7_782 = arith.constant 7 : index
    %c0_783 = arith.constant 0 : index
    %c48_784 = arith.constant 48 : index
    %1245 = vector.load %arg6[%c0_781, %c7_782, %c0_783, %c48_784] : memref<1x8x1x128xf32, #tpu.memory_space<vmem>>, vector<1x1x1x16xf32>
    %1246 = vector.shape_cast %1245 : vector<1x1x1x16xf32> to vector<1x16xf32>
    %1247 = vector.shape_cast %1244 : vector<1x16xf32> to vector<1x1x1x16xf32>
    tpu.vector_store %arg6[%c0_781, %c7_782, %c0_783, %c48_784], %1247 {strides = array<i32>} : memref<1x8x1x128xf32, #tpu.memory_space<vmem>>, vector<1x1x1x16xf32>,
    %c0_785 = arith.constant 0 : index
    %c0_786 = arith.constant 0 : index
    %c0_787 = arith.constant 0 : index
    %c128 = arith.constant 128 : index
    %1248 = vector.load %arg5[%c0_785, %c0_786, %c0_787, %c128] : memref<1x4x1x256xf32, #tpu.memory_space<vmem>>, vector<1x1x1x16xf32>
    %1249 = vector.shape_cast %1248 : vector<1x1x1x16xf32> to vector<1x16xf32>
    %c0_788 = arith.constant 0 : index
    %c0_789 = arith.constant 0 : index
    %c0_790 = arith.constant 0 : index
    %c144 = arith.constant 144 : index
    %1250 = vector.load %arg5[%c0_788, %c0_789, %c0_790, %c144] : memref<1x4x1x256xf32, #tpu.memory_space<vmem>>, vector<1x1x1x16xf32>
    %1251 = vector.shape_cast %1250 : vector<1x1x1x16xf32> to vector<1x16xf32>
    %c0_791 = arith.constant 0 : index
    %c0_792 = arith.constant 0 : index
    %1252 = memref.load %arg2[%c0_791, %c0_792] : memref<8x4xf32, #tpu.memory_space<smem>>
    %1253 = vector.broadcast %1252 : f32 to vector<1x16xf32>
    %1254 = arith.mulf %1253, %1249 : vector<1x16xf32>
    %c0_793 = arith.constant 0 : index
    %c0_794 = arith.constant 0 : index
    %1255 = memref.load %arg3[%c0_793, %c0_794] : memref<8x4xf32, #tpu.memory_space<smem>>
    %1256 = vector.broadcast %1255 : f32 to vector<1x16xf32>
    %1257 = arith.mulf %1256, %1251 : vector<1x16xf32>
    %1258 = arith.addf %1254, %1257 : vector<1x16xf32>
    %c1_795 = arith.constant 1 : index
    %c0_796 = arith.constant 0 : index
    %1259 = memref.load %arg2[%c1_795, %c0_796] : memref<8x4xf32, #tpu.memory_space<smem>>
    %1260 = vector.broadcast %1259 : f32 to vector<1x16xf32>
    %1261 = arith.mulf %1260, %1249 : vector<1x16xf32>
    %c1_797 = arith.constant 1 : index
    %c0_798 = arith.constant 0 : index
    %1262 = memref.load %arg3[%c1_797, %c0_798] : memref<8x4xf32, #tpu.memory_space<smem>>
    %1263 = vector.broadcast %1262 : f32 to vector<1x16xf32>
    %1264 = arith.mulf %1263, %1251 : vector<1x16xf32>
    %1265 = arith.addf %1261, %1264 : vector<1x16xf32>
    %c2_799 = arith.constant 2 : index
    %c0_800 = arith.constant 0 : index
    %1266 = memref.load %arg2[%c2_799, %c0_800] : memref<8x4xf32, #tpu.memory_space<smem>>
    %1267 = vector.broadcast %1266 : f32 to vector<1x16xf32>
    %1268 = arith.mulf %1267, %1249 : vector<1x16xf32>
    %c2_801 = arith.constant 2 : index
    %c0_802 = arith.constant 0 : index
    %1269 = memref.load %arg3[%c2_801, %c0_802] : memref<8x4xf32, #tpu.memory_space<smem>>
    %1270 = vector.broadcast %1269 : f32 to vector<1x16xf32>
    %1271 = arith.mulf %1270, %1251 : vector<1x16xf32>
    %1272 = arith.addf %1268, %1271 : vector<1x16xf32>
    %c3_803 = arith.constant 3 : index
    %c0_804 = arith.constant 0 : index
    %1273 = memref.load %arg2[%c3_803, %c0_804] : memref<8x4xf32, #tpu.memory_space<smem>>
    %1274 = vector.broadcast %1273 : f32 to vector<1x16xf32>
    %1275 = arith.mulf %1274, %1249 : vector<1x16xf32>
    %c3_805 = arith.constant 3 : index
    %c0_806 = arith.constant 0 : index
    %1276 = memref.load %arg3[%c3_805, %c0_806] : memref<8x4xf32, #tpu.memory_space<smem>>
    %1277 = vector.broadcast %1276 : f32 to vector<1x16xf32>
    %1278 = arith.mulf %1277, %1251 : vector<1x16xf32>
    %1279 = arith.addf %1275, %1278 : vector<1x16xf32>
    %c4_807 = arith.constant 4 : index
    %c0_808 = arith.constant 0 : index
    %1280 = memref.load %arg2[%c4_807, %c0_808] : memref<8x4xf32, #tpu.memory_space<smem>>
    %1281 = vector.broadcast %1280 : f32 to vector<1x16xf32>
    %1282 = arith.mulf %1281, %1249 : vector<1x16xf32>
    %c4_809 = arith.constant 4 : index
    %c0_810 = arith.constant 0 : index
    %1283 = memref.load %arg3[%c4_809, %c0_810] : memref<8x4xf32, #tpu.memory_space<smem>>
    %1284 = vector.broadcast %1283 : f32 to vector<1x16xf32>
    %1285 = arith.mulf %1284, %1251 : vector<1x16xf32>
    %1286 = arith.addf %1282, %1285 : vector<1x16xf32>
    %c5_811 = arith.constant 5 : index
    %c0_812 = arith.constant 0 : index
    %1287 = memref.load %arg2[%c5_811, %c0_812] : memref<8x4xf32, #tpu.memory_space<smem>>
    %1288 = vector.broadcast %1287 : f32 to vector<1x16xf32>
    %1289 = arith.mulf %1288, %1249 : vector<1x16xf32>
    %c5_813 = arith.constant 5 : index
    %c0_814 = arith.constant 0 : index
    %1290 = memref.load %arg3[%c5_813, %c0_814] : memref<8x4xf32, #tpu.memory_space<smem>>
    %1291 = vector.broadcast %1290 : f32 to vector<1x16xf32>
    %1292 = arith.mulf %1291, %1251 : vector<1x16xf32>
    %1293 = arith.addf %1289, %1292 : vector<1x16xf32>
    %c6_815 = arith.constant 6 : index
    %c0_816 = arith.constant 0 : index
    %1294 = memref.load %arg2[%c6_815, %c0_816] : memref<8x4xf32, #tpu.memory_space<smem>>
    %1295 = vector.broadcast %1294 : f32 to vector<1x16xf32>
    %1296 = arith.mulf %1295, %1249 : vector<1x16xf32>
    %c6_817 = arith.constant 6 : index
    %c0_818 = arith.constant 0 : index
    %1297 = memref.load %arg3[%c6_817, %c0_818] : memref<8x4xf32, #tpu.memory_space<smem>>
    %1298 = vector.broadcast %1297 : f32 to vector<1x16xf32>
    %1299 = arith.mulf %1298, %1251 : vector<1x16xf32>
    %1300 = arith.addf %1296, %1299 : vector<1x16xf32>
    %c7_819 = arith.constant 7 : index
    %c0_820 = arith.constant 0 : index
    %1301 = memref.load %arg2[%c7_819, %c0_820] : memref<8x4xf32, #tpu.memory_space<smem>>
    %1302 = vector.broadcast %1301 : f32 to vector<1x16xf32>
    %1303 = arith.mulf %1302, %1249 : vector<1x16xf32>
    %c7_821 = arith.constant 7 : index
    %c0_822 = arith.constant 0 : index
    %1304 = memref.load %arg3[%c7_821, %c0_822] : memref<8x4xf32, #tpu.memory_space<smem>>
    %1305 = vector.broadcast %1304 : f32 to vector<1x16xf32>
    %1306 = arith.mulf %1305, %1251 : vector<1x16xf32>
    %1307 = arith.addf %1303, %1306 : vector<1x16xf32>
    %c0_823 = arith.constant 0 : index
    %c1_824 = arith.constant 1 : index
    %c0_825 = arith.constant 0 : index
    %c128_826 = arith.constant 128 : index
    %1308 = vector.load %arg5[%c0_823, %c1_824, %c0_825, %c128_826] : memref<1x4x1x256xf32, #tpu.memory_space<vmem>>, vector<1x1x1x16xf32>
    %1309 = vector.shape_cast %1308 : vector<1x1x1x16xf32> to vector<1x16xf32>
    %c0_827 = arith.constant 0 : index
    %c1_828 = arith.constant 1 : index
    %c0_829 = arith.constant 0 : index
    %c144_830 = arith.constant 144 : index
    %1310 = vector.load %arg5[%c0_827, %c1_828, %c0_829, %c144_830] : memref<1x4x1x256xf32, #tpu.memory_space<vmem>>, vector<1x1x1x16xf32>
    %1311 = vector.shape_cast %1310 : vector<1x1x1x16xf32> to vector<1x16xf32>
    %c0_831 = arith.constant 0 : index
    %c1_832 = arith.constant 1 : index
    %1312 = memref.load %arg2[%c0_831, %c1_832] : memref<8x4xf32, #tpu.memory_space<smem>>
    %1313 = vector.broadcast %1312 : f32 to vector<1x16xf32>
    %1314 = arith.mulf %1313, %1309 : vector<1x16xf32>
    %c0_833 = arith.constant 0 : index
    %c1_834 = arith.constant 1 : index
    %1315 = memref.load %arg3[%c0_833, %c1_834] : memref<8x4xf32, #tpu.memory_space<smem>>
    %1316 = vector.broadcast %1315 : f32 to vector<1x16xf32>
    %1317 = arith.mulf %1316, %1311 : vector<1x16xf32>
    %1318 = arith.addf %1314, %1317 : vector<1x16xf32>
    %1319 = arith.addf %1258, %1318 : vector<1x16xf32>
    %c1_835 = arith.constant 1 : index
    %c1_836 = arith.constant 1 : index
    %1320 = memref.load %arg2[%c1_835, %c1_836] : memref<8x4xf32, #tpu.memory_space<smem>>
    %1321 = vector.broadcast %1320 : f32 to vector<1x16xf32>
    %1322 = arith.mulf %1321, %1309 : vector<1x16xf32>
    %c1_837 = arith.constant 1 : index
    %c1_838 = arith.constant 1 : index
    %1323 = memref.load %arg3[%c1_837, %c1_838] : memref<8x4xf32, #tpu.memory_space<smem>>
    %1324 = vector.broadcast %1323 : f32 to vector<1x16xf32>
    %1325 = arith.mulf %1324, %1311 : vector<1x16xf32>
    %1326 = arith.addf %1322, %1325 : vector<1x16xf32>
    %1327 = arith.addf %1265, %1326 : vector<1x16xf32>
    %c2_839 = arith.constant 2 : index
    %c1_840 = arith.constant 1 : index
    %1328 = memref.load %arg2[%c2_839, %c1_840] : memref<8x4xf32, #tpu.memory_space<smem>>
    %1329 = vector.broadcast %1328 : f32 to vector<1x16xf32>
    %1330 = arith.mulf %1329, %1309 : vector<1x16xf32>
    %c2_841 = arith.constant 2 : index
    %c1_842 = arith.constant 1 : index
    %1331 = memref.load %arg3[%c2_841, %c1_842] : memref<8x4xf32, #tpu.memory_space<smem>>
    %1332 = vector.broadcast %1331 : f32 to vector<1x16xf32>
    %1333 = arith.mulf %1332, %1311 : vector<1x16xf32>
    %1334 = arith.addf %1330, %1333 : vector<1x16xf32>
    %1335 = arith.addf %1272, %1334 : vector<1x16xf32>
    %c3_843 = arith.constant 3 : index
    %c1_844 = arith.constant 1 : index
    %1336 = memref.load %arg2[%c3_843, %c1_844] : memref<8x4xf32, #tpu.memory_space<smem>>
    %1337 = vector.broadcast %1336 : f32 to vector<1x16xf32>
    %1338 = arith.mulf %1337, %1309 : vector<1x16xf32>
    %c3_845 = arith.constant 3 : index
    %c1_846 = arith.constant 1 : index
    %1339 = memref.load %arg3[%c3_845, %c1_846] : memref<8x4xf32, #tpu.memory_space<smem>>
    %1340 = vector.broadcast %1339 : f32 to vector<1x16xf32>
    %1341 = arith.mulf %1340, %1311 : vector<1x16xf32>
    %1342 = arith.addf %1338, %1341 : vector<1x16xf32>
    %1343 = arith.addf %1279, %1342 : vector<1x16xf32>
    %c4_847 = arith.constant 4 : index
    %c1_848 = arith.constant 1 : index
    %1344 = memref.load %arg2[%c4_847, %c1_848] : memref<8x4xf32, #tpu.memory_space<smem>>
    %1345 = vector.broadcast %1344 : f32 to vector<1x16xf32>
    %1346 = arith.mulf %1345, %1309 : vector<1x16xf32>
    %c4_849 = arith.constant 4 : index
    %c1_850 = arith.constant 1 : index
    %1347 = memref.load %arg3[%c4_849, %c1_850] : memref<8x4xf32, #tpu.memory_space<smem>>
    %1348 = vector.broadcast %1347 : f32 to vector<1x16xf32>
    %1349 = arith.mulf %1348, %1311 : vector<1x16xf32>
    %1350 = arith.addf %1346, %1349 : vector<1x16xf32>
    %1351 = arith.addf %1286, %1350 : vector<1x16xf32>
    %c5_851 = arith.constant 5 : index
    %c1_852 = arith.constant 1 : index
    %1352 = memref.load %arg2[%c5_851, %c1_852] : memref<8x4xf32, #tpu.memory_space<smem>>
    %1353 = vector.broadcast %1352 : f32 to vector<1x16xf32>
    %1354 = arith.mulf %1353, %1309 : vector<1x16xf32>
    %c5_853 = arith.constant 5 : index
    %c1_854 = arith.constant 1 : index
    %1355 = memref.load %arg3[%c5_853, %c1_854] : memref<8x4xf32, #tpu.memory_space<smem>>
    %1356 = vector.broadcast %1355 : f32 to vector<1x16xf32>
    %1357 = arith.mulf %1356, %1311 : vector<1x16xf32>
    %1358 = arith.addf %1354, %1357 : vector<1x16xf32>
    %1359 = arith.addf %1293, %1358 : vector<1x16xf32>
    %c6_855 = arith.constant 6 : index
    %c1_856 = arith.constant 1 : index
    %1360 = memref.load %arg2[%c6_855, %c1_856] : memref<8x4xf32, #tpu.memory_space<smem>>
    %1361 = vector.broadcast %1360 : f32 to vector<1x16xf32>
    %1362 = arith.mulf %1361, %1309 : vector<1x16xf32>
    %c6_857 = arith.constant 6 : index
    %c1_858 = arith.constant 1 : index
    %1363 = memref.load %arg3[%c6_857, %c1_858] : memref<8x4xf32, #tpu.memory_space<smem>>
    %1364 = vector.broadcast %1363 : f32 to vector<1x16xf32>
    %1365 = arith.mulf %1364, %1311 : vector<1x16xf32>
    %1366 = arith.addf %1362, %1365 : vector<1x16xf32>
    %1367 = arith.addf %1300, %1366 : vector<1x16xf32>
    %c7_859 = arith.constant 7 : index
    %c1_860 = arith.constant 1 : index
    %1368 = memref.load %arg2[%c7_859, %c1_860] : memref<8x4xf32, #tpu.memory_space<smem>>
    %1369 = vector.broadcast %1368 : f32 to vector<1x16xf32>
    %1370 = arith.mulf %1369, %1309 : vector<1x16xf32>
    %c7_861 = arith.constant 7 : index
    %c1_862 = arith.constant 1 : index
    %1371 = memref.load %arg3[%c7_861, %c1_862] : memref<8x4xf32, #tpu.memory_space<smem>>
    %1372 = vector.broadcast %1371 : f32 to vector<1x16xf32>
    %1373 = arith.mulf %1372, %1311 : vector<1x16xf32>
    %1374 = arith.addf %1370, %1373 : vector<1x16xf32>
    %1375 = arith.addf %1307, %1374 : vector<1x16xf32>
    %c0_863 = arith.constant 0 : index
    %c2_864 = arith.constant 2 : index
    %c0_865 = arith.constant 0 : index
    %c128_866 = arith.constant 128 : index
    %1376 = vector.load %arg5[%c0_863, %c2_864, %c0_865, %c128_866] : memref<1x4x1x256xf32, #tpu.memory_space<vmem>>, vector<1x1x1x16xf32>
    %1377 = vector.shape_cast %1376 : vector<1x1x1x16xf32> to vector<1x16xf32>
    %c0_867 = arith.constant 0 : index
    %c2_868 = arith.constant 2 : index
    %c0_869 = arith.constant 0 : index
    %c144_870 = arith.constant 144 : index
    %1378 = vector.load %arg5[%c0_867, %c2_868, %c0_869, %c144_870] : memref<1x4x1x256xf32, #tpu.memory_space<vmem>>, vector<1x1x1x16xf32>
    %1379 = vector.shape_cast %1378 : vector<1x1x1x16xf32> to vector<1x16xf32>
    %c0_871 = arith.constant 0 : index
    %c2_872 = arith.constant 2 : index
    %1380 = memref.load %arg2[%c0_871, %c2_872] : memref<8x4xf32, #tpu.memory_space<smem>>
    %1381 = vector.broadcast %1380 : f32 to vector<1x16xf32>
    %1382 = arith.mulf %1381, %1377 : vector<1x16xf32>
    %c0_873 = arith.constant 0 : index
    %c2_874 = arith.constant 2 : index
    %1383 = memref.load %arg3[%c0_873, %c2_874] : memref<8x4xf32, #tpu.memory_space<smem>>
    %1384 = vector.broadcast %1383 : f32 to vector<1x16xf32>
    %1385 = arith.mulf %1384, %1379 : vector<1x16xf32>
    %1386 = arith.addf %1382, %1385 : vector<1x16xf32>
    %1387 = arith.addf %1319, %1386 : vector<1x16xf32>
    %c1_875 = arith.constant 1 : index
    %c2_876 = arith.constant 2 : index
    %1388 = memref.load %arg2[%c1_875, %c2_876] : memref<8x4xf32, #tpu.memory_space<smem>>
    %1389 = vector.broadcast %1388 : f32 to vector<1x16xf32>
    %1390 = arith.mulf %1389, %1377 : vector<1x16xf32>
    %c1_877 = arith.constant 1 : index
    %c2_878 = arith.constant 2 : index
    %1391 = memref.load %arg3[%c1_877, %c2_878] : memref<8x4xf32, #tpu.memory_space<smem>>
    %1392 = vector.broadcast %1391 : f32 to vector<1x16xf32>
    %1393 = arith.mulf %1392, %1379 : vector<1x16xf32>
    %1394 = arith.addf %1390, %1393 : vector<1x16xf32>
    %1395 = arith.addf %1327, %1394 : vector<1x16xf32>
    %c2_879 = arith.constant 2 : index
    %c2_880 = arith.constant 2 : index
    %1396 = memref.load %arg2[%c2_879, %c2_880] : memref<8x4xf32, #tpu.memory_space<smem>>
    %1397 = vector.broadcast %1396 : f32 to vector<1x16xf32>
    %1398 = arith.mulf %1397, %1377 : vector<1x16xf32>
    %c2_881 = arith.constant 2 : index
    %c2_882 = arith.constant 2 : index
    %1399 = memref.load %arg3[%c2_881, %c2_882] : memref<8x4xf32, #tpu.memory_space<smem>>
    %1400 = vector.broadcast %1399 : f32 to vector<1x16xf32>
    %1401 = arith.mulf %1400, %1379 : vector<1x16xf32>
    %1402 = arith.addf %1398, %1401 : vector<1x16xf32>
    %1403 = arith.addf %1335, %1402 : vector<1x16xf32>
    %c3_883 = arith.constant 3 : index
    %c2_884 = arith.constant 2 : index
    %1404 = memref.load %arg2[%c3_883, %c2_884] : memref<8x4xf32, #tpu.memory_space<smem>>
    %1405 = vector.broadcast %1404 : f32 to vector<1x16xf32>
    %1406 = arith.mulf %1405, %1377 : vector<1x16xf32>
    %c3_885 = arith.constant 3 : index
    %c2_886 = arith.constant 2 : index
    %1407 = memref.load %arg3[%c3_885, %c2_886] : memref<8x4xf32, #tpu.memory_space<smem>>
    %1408 = vector.broadcast %1407 : f32 to vector<1x16xf32>
    %1409 = arith.mulf %1408, %1379 : vector<1x16xf32>
    %1410 = arith.addf %1406, %1409 : vector<1x16xf32>
    %1411 = arith.addf %1343, %1410 : vector<1x16xf32>
    %c4_887 = arith.constant 4 : index
    %c2_888 = arith.constant 2 : index
    %1412 = memref.load %arg2[%c4_887, %c2_888] : memref<8x4xf32, #tpu.memory_space<smem>>
    %1413 = vector.broadcast %1412 : f32 to vector<1x16xf32>
    %1414 = arith.mulf %1413, %1377 : vector<1x16xf32>
    %c4_889 = arith.constant 4 : index
    %c2_890 = arith.constant 2 : index
    %1415 = memref.load %arg3[%c4_889, %c2_890] : memref<8x4xf32, #tpu.memory_space<smem>>
    %1416 = vector.broadcast %1415 : f32 to vector<1x16xf32>
    %1417 = arith.mulf %1416, %1379 : vector<1x16xf32>
    %1418 = arith.addf %1414, %1417 : vector<1x16xf32>
    %1419 = arith.addf %1351, %1418 : vector<1x16xf32>
    %c5_891 = arith.constant 5 : index
    %c2_892 = arith.constant 2 : index
    %1420 = memref.load %arg2[%c5_891, %c2_892] : memref<8x4xf32, #tpu.memory_space<smem>>
    %1421 = vector.broadcast %1420 : f32 to vector<1x16xf32>
    %1422 = arith.mulf %1421, %1377 : vector<1x16xf32>
    %c5_893 = arith.constant 5 : index
    %c2_894 = arith.constant 2 : index
    %1423 = memref.load %arg3[%c5_893, %c2_894] : memref<8x4xf32, #tpu.memory_space<smem>>
    %1424 = vector.broadcast %1423 : f32 to vector<1x16xf32>
    %1425 = arith.mulf %1424, %1379 : vector<1x16xf32>
    %1426 = arith.addf %1422, %1425 : vector<1x16xf32>
    %1427 = arith.addf %1359, %1426 : vector<1x16xf32>
    %c6_895 = arith.constant 6 : index
    %c2_896 = arith.constant 2 : index
    %1428 = memref.load %arg2[%c6_895, %c2_896] : memref<8x4xf32, #tpu.memory_space<smem>>
    %1429 = vector.broadcast %1428 : f32 to vector<1x16xf32>
    %1430 = arith.mulf %1429, %1377 : vector<1x16xf32>
    %c6_897 = arith.constant 6 : index
    %c2_898 = arith.constant 2 : index
    %1431 = memref.load %arg3[%c6_897, %c2_898] : memref<8x4xf32, #tpu.memory_space<smem>>
    %1432 = vector.broadcast %1431 : f32 to vector<1x16xf32>
    %1433 = arith.mulf %1432, %1379 : vector<1x16xf32>
    %1434 = arith.addf %1430, %1433 : vector<1x16xf32>
    %1435 = arith.addf %1367, %1434 : vector<1x16xf32>
    %c7_899 = arith.constant 7 : index
    %c2_900 = arith.constant 2 : index
    %1436 = memref.load %arg2[%c7_899, %c2_900] : memref<8x4xf32, #tpu.memory_space<smem>>
    %1437 = vector.broadcast %1436 : f32 to vector<1x16xf32>
    %1438 = arith.mulf %1437, %1377 : vector<1x16xf32>
    %c7_901 = arith.constant 7 : index
    %c2_902 = arith.constant 2 : index
    %1439 = memref.load %arg3[%c7_901, %c2_902] : memref<8x4xf32, #tpu.memory_space<smem>>
    %1440 = vector.broadcast %1439 : f32 to vector<1x16xf32>
    %1441 = arith.mulf %1440, %1379 : vector<1x16xf32>
    %1442 = arith.addf %1438, %1441 : vector<1x16xf32>
    %1443 = arith.addf %1375, %1442 : vector<1x16xf32>
    %c0_903 = arith.constant 0 : index
    %c3_904 = arith.constant 3 : index
    %c0_905 = arith.constant 0 : index
    %c128_906 = arith.constant 128 : index
    %1444 = vector.load %arg5[%c0_903, %c3_904, %c0_905, %c128_906] : memref<1x4x1x256xf32, #tpu.memory_space<vmem>>, vector<1x1x1x16xf32>
    %1445 = vector.shape_cast %1444 : vector<1x1x1x16xf32> to vector<1x16xf32>
    %c0_907 = arith.constant 0 : index
    %c3_908 = arith.constant 3 : index
    %c0_909 = arith.constant 0 : index
    %c144_910 = arith.constant 144 : index
    %1446 = vector.load %arg5[%c0_907, %c3_908, %c0_909, %c144_910] : memref<1x4x1x256xf32, #tpu.memory_space<vmem>>, vector<1x1x1x16xf32>
    %1447 = vector.shape_cast %1446 : vector<1x1x1x16xf32> to vector<1x16xf32>
    %c0_911 = arith.constant 0 : index
    %c3_912 = arith.constant 3 : index
    %1448 = memref.load %arg2[%c0_911, %c3_912] : memref<8x4xf32, #tpu.memory_space<smem>>
    %1449 = vector.broadcast %1448 : f32 to vector<1x16xf32>
    %1450 = arith.mulf %1449, %1445 : vector<1x16xf32>
    %c0_913 = arith.constant 0 : index
    %c3_914 = arith.constant 3 : index
    %1451 = memref.load %arg3[%c0_913, %c3_914] : memref<8x4xf32, #tpu.memory_space<smem>>
    %1452 = vector.broadcast %1451 : f32 to vector<1x16xf32>
    %1453 = arith.mulf %1452, %1447 : vector<1x16xf32>
    %1454 = arith.addf %1450, %1453 : vector<1x16xf32>
    %1455 = arith.addf %1387, %1454 : vector<1x16xf32>
    %c1_915 = arith.constant 1 : index
    %c3_916 = arith.constant 3 : index
    %1456 = memref.load %arg2[%c1_915, %c3_916] : memref<8x4xf32, #tpu.memory_space<smem>>
    %1457 = vector.broadcast %1456 : f32 to vector<1x16xf32>
    %1458 = arith.mulf %1457, %1445 : vector<1x16xf32>
    %c1_917 = arith.constant 1 : index
    %c3_918 = arith.constant 3 : index
    %1459 = memref.load %arg3[%c1_917, %c3_918] : memref<8x4xf32, #tpu.memory_space<smem>>
    %1460 = vector.broadcast %1459 : f32 to vector<1x16xf32>
    %1461 = arith.mulf %1460, %1447 : vector<1x16xf32>
    %1462 = arith.addf %1458, %1461 : vector<1x16xf32>
    %1463 = arith.addf %1395, %1462 : vector<1x16xf32>
    %c2_919 = arith.constant 2 : index
    %c3_920 = arith.constant 3 : index
    %1464 = memref.load %arg2[%c2_919, %c3_920] : memref<8x4xf32, #tpu.memory_space<smem>>
    %1465 = vector.broadcast %1464 : f32 to vector<1x16xf32>
    %1466 = arith.mulf %1465, %1445 : vector<1x16xf32>
    %c2_921 = arith.constant 2 : index
    %c3_922 = arith.constant 3 : index
    %1467 = memref.load %arg3[%c2_921, %c3_922] : memref<8x4xf32, #tpu.memory_space<smem>>
    %1468 = vector.broadcast %1467 : f32 to vector<1x16xf32>
    %1469 = arith.mulf %1468, %1447 : vector<1x16xf32>
    %1470 = arith.addf %1466, %1469 : vector<1x16xf32>
    %1471 = arith.addf %1403, %1470 : vector<1x16xf32>
    %c3_923 = arith.constant 3 : index
    %c3_924 = arith.constant 3 : index
    %1472 = memref.load %arg2[%c3_923, %c3_924] : memref<8x4xf32, #tpu.memory_space<smem>>
    %1473 = vector.broadcast %1472 : f32 to vector<1x16xf32>
    %1474 = arith.mulf %1473, %1445 : vector<1x16xf32>
    %c3_925 = arith.constant 3 : index
    %c3_926 = arith.constant 3 : index
    %1475 = memref.load %arg3[%c3_925, %c3_926] : memref<8x4xf32, #tpu.memory_space<smem>>
    %1476 = vector.broadcast %1475 : f32 to vector<1x16xf32>
    %1477 = arith.mulf %1476, %1447 : vector<1x16xf32>
    %1478 = arith.addf %1474, %1477 : vector<1x16xf32>
    %1479 = arith.addf %1411, %1478 : vector<1x16xf32>
    %c4_927 = arith.constant 4 : index
    %c3_928 = arith.constant 3 : index
    %1480 = memref.load %arg2[%c4_927, %c3_928] : memref<8x4xf32, #tpu.memory_space<smem>>
    %1481 = vector.broadcast %1480 : f32 to vector<1x16xf32>
    %1482 = arith.mulf %1481, %1445 : vector<1x16xf32>
    %c4_929 = arith.constant 4 : index
    %c3_930 = arith.constant 3 : index
    %1483 = memref.load %arg3[%c4_929, %c3_930] : memref<8x4xf32, #tpu.memory_space<smem>>
    %1484 = vector.broadcast %1483 : f32 to vector<1x16xf32>
    %1485 = arith.mulf %1484, %1447 : vector<1x16xf32>
    %1486 = arith.addf %1482, %1485 : vector<1x16xf32>
    %1487 = arith.addf %1419, %1486 : vector<1x16xf32>
    %c5_931 = arith.constant 5 : index
    %c3_932 = arith.constant 3 : index
    %1488 = memref.load %arg2[%c5_931, %c3_932] : memref<8x4xf32, #tpu.memory_space<smem>>
    %1489 = vector.broadcast %1488 : f32 to vector<1x16xf32>
    %1490 = arith.mulf %1489, %1445 : vector<1x16xf32>
    %c5_933 = arith.constant 5 : index
    %c3_934 = arith.constant 3 : index
    %1491 = memref.load %arg3[%c5_933, %c3_934] : memref<8x4xf32, #tpu.memory_space<smem>>
    %1492 = vector.broadcast %1491 : f32 to vector<1x16xf32>
    %1493 = arith.mulf %1492, %1447 : vector<1x16xf32>
    %1494 = arith.addf %1490, %1493 : vector<1x16xf32>
    %1495 = arith.addf %1427, %1494 : vector<1x16xf32>
    %c6_935 = arith.constant 6 : index
    %c3_936 = arith.constant 3 : index
    %1496 = memref.load %arg2[%c6_935, %c3_936] : memref<8x4xf32, #tpu.memory_space<smem>>
    %1497 = vector.broadcast %1496 : f32 to vector<1x16xf32>
    %1498 = arith.mulf %1497, %1445 : vector<1x16xf32>
    %c6_937 = arith.constant 6 : index
    %c3_938 = arith.constant 3 : index
    %1499 = memref.load %arg3[%c6_937, %c3_938] : memref<8x4xf32, #tpu.memory_space<smem>>
    %1500 = vector.broadcast %1499 : f32 to vector<1x16xf32>
    %1501 = arith.mulf %1500, %1447 : vector<1x16xf32>
    %1502 = arith.addf %1498, %1501 : vector<1x16xf32>
    %1503 = arith.addf %1435, %1502 : vector<1x16xf32>
    %c7_939 = arith.constant 7 : index
    %c3_940 = arith.constant 3 : index
    %1504 = memref.load %arg2[%c7_939, %c3_940] : memref<8x4xf32, #tpu.memory_space<smem>>
    %1505 = vector.broadcast %1504 : f32 to vector<1x16xf32>
    %1506 = arith.mulf %1505, %1445 : vector<1x16xf32>
    %c7_941 = arith.constant 7 : index
    %c3_942 = arith.constant 3 : index
    %1507 = memref.load %arg3[%c7_941, %c3_942] : memref<8x4xf32, #tpu.memory_space<smem>>
    %1508 = vector.broadcast %1507 : f32 to vector<1x16xf32>
    %1509 = arith.mulf %1508, %1447 : vector<1x16xf32>
    %1510 = arith.addf %1506, %1509 : vector<1x16xf32>
    %1511 = arith.addf %1443, %1510 : vector<1x16xf32>
    %c0_943 = arith.constant 0 : index
    %1512 = memref.load %arg4[%c0_943] : memref<8xf32, #tpu.memory_space<smem>>
    %1513 = vector.broadcast %1512 : f32 to vector<1x16xf32>
    %1514 = arith.addf %1455, %1513 : vector<1x16xf32>
    %c0_944 = arith.constant 0 : index
    %c0_945 = arith.constant 0 : index
    %c0_946 = arith.constant 0 : index
    %c64_947 = arith.constant 64 : index
    %1515 = vector.load %arg6[%c0_944, %c0_945, %c0_946, %c64_947] : memref<1x8x1x128xf32, #tpu.memory_space<vmem>>, vector<1x1x1x16xf32>
    %1516 = vector.shape_cast %1515 : vector<1x1x1x16xf32> to vector<1x16xf32>
    %1517 = vector.shape_cast %1514 : vector<1x16xf32> to vector<1x1x1x16xf32>
    tpu.vector_store %arg6[%c0_944, %c0_945, %c0_946, %c64_947], %1517 {strides = array<i32>} : memref<1x8x1x128xf32, #tpu.memory_space<vmem>>, vector<1x1x1x16xf32>,
    %c1_948 = arith.constant 1 : index
    %1518 = memref.load %arg4[%c1_948] : memref<8xf32, #tpu.memory_space<smem>>
    %1519 = vector.broadcast %1518 : f32 to vector<1x16xf32>
    %1520 = arith.addf %1463, %1519 : vector<1x16xf32>
    %c0_949 = arith.constant 0 : index
    %c1_950 = arith.constant 1 : index
    %c0_951 = arith.constant 0 : index
    %c64_952 = arith.constant 64 : index
    %1521 = vector.load %arg6[%c0_949, %c1_950, %c0_951, %c64_952] : memref<1x8x1x128xf32, #tpu.memory_space<vmem>>, vector<1x1x1x16xf32>
    %1522 = vector.shape_cast %1521 : vector<1x1x1x16xf32> to vector<1x16xf32>
    %1523 = vector.shape_cast %1520 : vector<1x16xf32> to vector<1x1x1x16xf32>
    tpu.vector_store %arg6[%c0_949, %c1_950, %c0_951, %c64_952], %1523 {strides = array<i32>} : memref<1x8x1x128xf32, #tpu.memory_space<vmem>>, vector<1x1x1x16xf32>,
    %c2_953 = arith.constant 2 : index
    %1524 = memref.load %arg4[%c2_953] : memref<8xf32, #tpu.memory_space<smem>>
    %1525 = vector.broadcast %1524 : f32 to vector<1x16xf32>
    %1526 = arith.addf %1471, %1525 : vector<1x16xf32>
    %c0_954 = arith.constant 0 : index
    %c2_955 = arith.constant 2 : index
    %c0_956 = arith.constant 0 : index
    %c64_957 = arith.constant 64 : index
    %1527 = vector.load %arg6[%c0_954, %c2_955, %c0_956, %c64_957] : memref<1x8x1x128xf32, #tpu.memory_space<vmem>>, vector<1x1x1x16xf32>
    %1528 = vector.shape_cast %1527 : vector<1x1x1x16xf32> to vector<1x16xf32>
    %1529 = vector.shape_cast %1526 : vector<1x16xf32> to vector<1x1x1x16xf32>
    tpu.vector_store %arg6[%c0_954, %c2_955, %c0_956, %c64_957], %1529 {strides = array<i32>} : memref<1x8x1x128xf32, #tpu.memory_space<vmem>>, vector<1x1x1x16xf32>,
    %c3_958 = arith.constant 3 : index
    %1530 = memref.load %arg4[%c3_958] : memref<8xf32, #tpu.memory_space<smem>>
    %1531 = vector.broadcast %1530 : f32 to vector<1x16xf32>
    %1532 = arith.addf %1479, %1531 : vector<1x16xf32>
    %c0_959 = arith.constant 0 : index
    %c3_960 = arith.constant 3 : index
    %c0_961 = arith.constant 0 : index
    %c64_962 = arith.constant 64 : index
    %1533 = vector.load %arg6[%c0_959, %c3_960, %c0_961, %c64_962] : memref<1x8x1x128xf32, #tpu.memory_space<vmem>>, vector<1x1x1x16xf32>
    %1534 = vector.shape_cast %1533 : vector<1x1x1x16xf32> to vector<1x16xf32>
    %1535 = vector.shape_cast %1532 : vector<1x16xf32> to vector<1x1x1x16xf32>
    tpu.vector_store %arg6[%c0_959, %c3_960, %c0_961, %c64_962], %1535 {strides = array<i32>} : memref<1x8x1x128xf32, #tpu.memory_space<vmem>>, vector<1x1x1x16xf32>,
    %c4_963 = arith.constant 4 : index
    %1536 = memref.load %arg4[%c4_963] : memref<8xf32, #tpu.memory_space<smem>>
    %1537 = vector.broadcast %1536 : f32 to vector<1x16xf32>
    %1538 = arith.addf %1487, %1537 : vector<1x16xf32>
    %c0_964 = arith.constant 0 : index
    %c4_965 = arith.constant 4 : index
    %c0_966 = arith.constant 0 : index
    %c64_967 = arith.constant 64 : index
    %1539 = vector.load %arg6[%c0_964, %c4_965, %c0_966, %c64_967] : memref<1x8x1x128xf32, #tpu.memory_space<vmem>>, vector<1x1x1x16xf32>
    %1540 = vector.shape_cast %1539 : vector<1x1x1x16xf32> to vector<1x16xf32>
    %1541 = vector.shape_cast %1538 : vector<1x16xf32> to vector<1x1x1x16xf32>
    tpu.vector_store %arg6[%c0_964, %c4_965, %c0_966, %c64_967], %1541 {strides = array<i32>} : memref<1x8x1x128xf32, #tpu.memory_space<vmem>>, vector<1x1x1x16xf32>,
    %c5_968 = arith.constant 5 : index
    %1542 = memref.load %arg4[%c5_968] : memref<8xf32, #tpu.memory_space<smem>>
    %1543 = vector.broadcast %1542 : f32 to vector<1x16xf32>
    %1544 = arith.addf %1495, %1543 : vector<1x16xf32>
    %c0_969 = arith.constant 0 : index
    %c5_970 = arith.constant 5 : index
    %c0_971 = arith.constant 0 : index
    %c64_972 = arith.constant 64 : index
    %1545 = vector.load %arg6[%c0_969, %c5_970, %c0_971, %c64_972] : memref<1x8x1x128xf32, #tpu.memory_space<vmem>>, vector<1x1x1x16xf32>
    %1546 = vector.shape_cast %1545 : vector<1x1x1x16xf32> to vector<1x16xf32>
    %1547 = vector.shape_cast %1544 : vector<1x16xf32> to vector<1x1x1x16xf32>
    tpu.vector_store %arg6[%c0_969, %c5_970, %c0_971, %c64_972], %1547 {strides = array<i32>} : memref<1x8x1x128xf32, #tpu.memory_space<vmem>>, vector<1x1x1x16xf32>,
    %c6_973 = arith.constant 6 : index
    %1548 = memref.load %arg4[%c6_973] : memref<8xf32, #tpu.memory_space<smem>>
    %1549 = vector.broadcast %1548 : f32 to vector<1x16xf32>
    %1550 = arith.addf %1503, %1549 : vector<1x16xf32>
    %c0_974 = arith.constant 0 : index
    %c6_975 = arith.constant 6 : index
    %c0_976 = arith.constant 0 : index
    %c64_977 = arith.constant 64 : index
    %1551 = vector.load %arg6[%c0_974, %c6_975, %c0_976, %c64_977] : memref<1x8x1x128xf32, #tpu.memory_space<vmem>>, vector<1x1x1x16xf32>
    %1552 = vector.shape_cast %1551 : vector<1x1x1x16xf32> to vector<1x16xf32>
    %1553 = vector.shape_cast %1550 : vector<1x16xf32> to vector<1x1x1x16xf32>
    tpu.vector_store %arg6[%c0_974, %c6_975, %c0_976, %c64_977], %1553 {strides = array<i32>} : memref<1x8x1x128xf32, #tpu.memory_space<vmem>>, vector<1x1x1x16xf32>,
    %c7_978 = arith.constant 7 : index
    %1554 = memref.load %arg4[%c7_978] : memref<8xf32, #tpu.memory_space<smem>>
    %1555 = vector.broadcast %1554 : f32 to vector<1x16xf32>
    %1556 = arith.addf %1511, %1555 : vector<1x16xf32>
    %c0_979 = arith.constant 0 : index
    %c7_980 = arith.constant 7 : index
    %c0_981 = arith.constant 0 : index
    %c64_982 = arith.constant 64 : index
    %1557 = vector.load %arg6[%c0_979, %c7_980, %c0_981, %c64_982] : memref<1x8x1x128xf32, #tpu.memory_space<vmem>>, vector<1x1x1x16xf32>
    %1558 = vector.shape_cast %1557 : vector<1x1x1x16xf32> to vector<1x16xf32>
    %1559 = vector.shape_cast %1556 : vector<1x16xf32> to vector<1x1x1x16xf32>
    tpu.vector_store %arg6[%c0_979, %c7_980, %c0_981, %c64_982], %1559 {strides = array<i32>} : memref<1x8x1x128xf32, #tpu.memory_space<vmem>>, vector<1x1x1x16xf32>,
    %c0_983 = arith.constant 0 : index
    %c0_984 = arith.constant 0 : index
    %c0_985 = arith.constant 0 : index
    %c160 = arith.constant 160 : index
    %1560 = vector.load %arg5[%c0_983, %c0_984, %c0_985, %c160] : memref<1x4x1x256xf32, #tpu.memory_space<vmem>>, vector<1x1x1x16xf32>
    %1561 = vector.shape_cast %1560 : vector<1x1x1x16xf32> to vector<1x16xf32>
    %c0_986 = arith.constant 0 : index
    %c0_987 = arith.constant 0 : index
    %c0_988 = arith.constant 0 : index
    %c176 = arith.constant 176 : index
    %1562 = vector.load %arg5[%c0_986, %c0_987, %c0_988, %c176] : memref<1x4x1x256xf32, #tpu.memory_space<vmem>>, vector<1x1x1x16xf32>
    %1563 = vector.shape_cast %1562 : vector<1x1x1x16xf32> to vector<1x16xf32>
    %c0_989 = arith.constant 0 : index
    %c0_990 = arith.constant 0 : index
    %1564 = memref.load %arg2[%c0_989, %c0_990] : memref<8x4xf32, #tpu.memory_space<smem>>
    %1565 = vector.broadcast %1564 : f32 to vector<1x16xf32>
    %1566 = arith.mulf %1565, %1561 : vector<1x16xf32>
    %c0_991 = arith.constant 0 : index
    %c0_992 = arith.constant 0 : index
    %1567 = memref.load %arg3[%c0_991, %c0_992] : memref<8x4xf32, #tpu.memory_space<smem>>
    %1568 = vector.broadcast %1567 : f32 to vector<1x16xf32>
    %1569 = arith.mulf %1568, %1563 : vector<1x16xf32>
    %1570 = arith.addf %1566, %1569 : vector<1x16xf32>
    %c1_993 = arith.constant 1 : index
    %c0_994 = arith.constant 0 : index
    %1571 = memref.load %arg2[%c1_993, %c0_994] : memref<8x4xf32, #tpu.memory_space<smem>>
    %1572 = vector.broadcast %1571 : f32 to vector<1x16xf32>
    %1573 = arith.mulf %1572, %1561 : vector<1x16xf32>
    %c1_995 = arith.constant 1 : index
    %c0_996 = arith.constant 0 : index
    %1574 = memref.load %arg3[%c1_995, %c0_996] : memref<8x4xf32, #tpu.memory_space<smem>>
    %1575 = vector.broadcast %1574 : f32 to vector<1x16xf32>
    %1576 = arith.mulf %1575, %1563 : vector<1x16xf32>
    %1577 = arith.addf %1573, %1576 : vector<1x16xf32>
    %c2_997 = arith.constant 2 : index
    %c0_998 = arith.constant 0 : index
    %1578 = memref.load %arg2[%c2_997, %c0_998] : memref<8x4xf32, #tpu.memory_space<smem>>
    %1579 = vector.broadcast %1578 : f32 to vector<1x16xf32>
    %1580 = arith.mulf %1579, %1561 : vector<1x16xf32>
    %c2_999 = arith.constant 2 : index
    %c0_1000 = arith.constant 0 : index
    %1581 = memref.load %arg3[%c2_999, %c0_1000] : memref<8x4xf32, #tpu.memory_space<smem>>
    %1582 = vector.broadcast %1581 : f32 to vector<1x16xf32>
    %1583 = arith.mulf %1582, %1563 : vector<1x16xf32>
    %1584 = arith.addf %1580, %1583 : vector<1x16xf32>
    %c3_1001 = arith.constant 3 : index
    %c0_1002 = arith.constant 0 : index
    %1585 = memref.load %arg2[%c3_1001, %c0_1002] : memref<8x4xf32, #tpu.memory_space<smem>>
    %1586 = vector.broadcast %1585 : f32 to vector<1x16xf32>
    %1587 = arith.mulf %1586, %1561 : vector<1x16xf32>
    %c3_1003 = arith.constant 3 : index
    %c0_1004 = arith.constant 0 : index
    %1588 = memref.load %arg3[%c3_1003, %c0_1004] : memref<8x4xf32, #tpu.memory_space<smem>>
    %1589 = vector.broadcast %1588 : f32 to vector<1x16xf32>
    %1590 = arith.mulf %1589, %1563 : vector<1x16xf32>
    %1591 = arith.addf %1587, %1590 : vector<1x16xf32>
    %c4_1005 = arith.constant 4 : index
    %c0_1006 = arith.constant 0 : index
    %1592 = memref.load %arg2[%c4_1005, %c0_1006] : memref<8x4xf32, #tpu.memory_space<smem>>
    %1593 = vector.broadcast %1592 : f32 to vector<1x16xf32>
    %1594 = arith.mulf %1593, %1561 : vector<1x16xf32>
    %c4_1007 = arith.constant 4 : index
    %c0_1008 = arith.constant 0 : index
    %1595 = memref.load %arg3[%c4_1007, %c0_1008] : memref<8x4xf32, #tpu.memory_space<smem>>
    %1596 = vector.broadcast %1595 : f32 to vector<1x16xf32>
    %1597 = arith.mulf %1596, %1563 : vector<1x16xf32>
    %1598 = arith.addf %1594, %1597 : vector<1x16xf32>
    %c5_1009 = arith.constant 5 : index
    %c0_1010 = arith.constant 0 : index
    %1599 = memref.load %arg2[%c5_1009, %c0_1010] : memref<8x4xf32, #tpu.memory_space<smem>>
    %1600 = vector.broadcast %1599 : f32 to vector<1x16xf32>
    %1601 = arith.mulf %1600, %1561 : vector<1x16xf32>
    %c5_1011 = arith.constant 5 : index
    %c0_1012 = arith.constant 0 : index
    %1602 = memref.load %arg3[%c5_1011, %c0_1012] : memref<8x4xf32, #tpu.memory_space<smem>>
    %1603 = vector.broadcast %1602 : f32 to vector<1x16xf32>
    %1604 = arith.mulf %1603, %1563 : vector<1x16xf32>
    %1605 = arith.addf %1601, %1604 : vector<1x16xf32>
    %c6_1013 = arith.constant 6 : index
    %c0_1014 = arith.constant 0 : index
    %1606 = memref.load %arg2[%c6_1013, %c0_1014] : memref<8x4xf32, #tpu.memory_space<smem>>
    %1607 = vector.broadcast %1606 : f32 to vector<1x16xf32>
    %1608 = arith.mulf %1607, %1561 : vector<1x16xf32>
    %c6_1015 = arith.constant 6 : index
    %c0_1016 = arith.constant 0 : index
    %1609 = memref.load %arg3[%c6_1015, %c0_1016] : memref<8x4xf32, #tpu.memory_space<smem>>
    %1610 = vector.broadcast %1609 : f32 to vector<1x16xf32>
    %1611 = arith.mulf %1610, %1563 : vector<1x16xf32>
    %1612 = arith.addf %1608, %1611 : vector<1x16xf32>
    %c7_1017 = arith.constant 7 : index
    %c0_1018 = arith.constant 0 : index
    %1613 = memref.load %arg2[%c7_1017, %c0_1018] : memref<8x4xf32, #tpu.memory_space<smem>>
    %1614 = vector.broadcast %1613 : f32 to vector<1x16xf32>
    %1615 = arith.mulf %1614, %1561 : vector<1x16xf32>
    %c7_1019 = arith.constant 7 : index
    %c0_1020 = arith.constant 0 : index
    %1616 = memref.load %arg3[%c7_1019, %c0_1020] : memref<8x4xf32, #tpu.memory_space<smem>>
    %1617 = vector.broadcast %1616 : f32 to vector<1x16xf32>
    %1618 = arith.mulf %1617, %1563 : vector<1x16xf32>
    %1619 = arith.addf %1615, %1618 : vector<1x16xf32>
    %c0_1021 = arith.constant 0 : index
    %c1_1022 = arith.constant 1 : index
    %c0_1023 = arith.constant 0 : index
    %c160_1024 = arith.constant 160 : index
    %1620 = vector.load %arg5[%c0_1021, %c1_1022, %c0_1023, %c160_1024] : memref<1x4x1x256xf32, #tpu.memory_space<vmem>>, vector<1x1x1x16xf32>
    %1621 = vector.shape_cast %1620 : vector<1x1x1x16xf32> to vector<1x16xf32>
    %c0_1025 = arith.constant 0 : index
    %c1_1026 = arith.constant 1 : index
    %c0_1027 = arith.constant 0 : index
    %c176_1028 = arith.constant 176 : index
    %1622 = vector.load %arg5[%c0_1025, %c1_1026, %c0_1027, %c176_1028] : memref<1x4x1x256xf32, #tpu.memory_space<vmem>>, vector<1x1x1x16xf32>
    %1623 = vector.shape_cast %1622 : vector<1x1x1x16xf32> to vector<1x16xf32>
    %c0_1029 = arith.constant 0 : index
    %c1_1030 = arith.constant 1 : index
    %1624 = memref.load %arg2[%c0_1029, %c1_1030] : memref<8x4xf32, #tpu.memory_space<smem>>
    %1625 = vector.broadcast %1624 : f32 to vector<1x16xf32>
    %1626 = arith.mulf %1625, %1621 : vector<1x16xf32>
    %c0_1031 = arith.constant 0 : index
    %c1_1032 = arith.constant 1 : index
    %1627 = memref.load %arg3[%c0_1031, %c1_1032] : memref<8x4xf32, #tpu.memory_space<smem>>
    %1628 = vector.broadcast %1627 : f32 to vector<1x16xf32>
    %1629 = arith.mulf %1628, %1623 : vector<1x16xf32>
    %1630 = arith.addf %1626, %1629 : vector<1x16xf32>
    %1631 = arith.addf %1570, %1630 : vector<1x16xf32>
    %c1_1033 = arith.constant 1 : index
    %c1_1034 = arith.constant 1 : index
    %1632 = memref.load %arg2[%c1_1033, %c1_1034] : memref<8x4xf32, #tpu.memory_space<smem>>
    %1633 = vector.broadcast %1632 : f32 to vector<1x16xf32>
    %1634 = arith.mulf %1633, %1621 : vector<1x16xf32>
    %c1_1035 = arith.constant 1 : index
    %c1_1036 = arith.constant 1 : index
    %1635 = memref.load %arg3[%c1_1035, %c1_1036] : memref<8x4xf32, #tpu.memory_space<smem>>
    %1636 = vector.broadcast %1635 : f32 to vector<1x16xf32>
    %1637 = arith.mulf %1636, %1623 : vector<1x16xf32>
    %1638 = arith.addf %1634, %1637 : vector<1x16xf32>
    %1639 = arith.addf %1577, %1638 : vector<1x16xf32>
    %c2_1037 = arith.constant 2 : index
    %c1_1038 = arith.constant 1 : index
    %1640 = memref.load %arg2[%c2_1037, %c1_1038] : memref<8x4xf32, #tpu.memory_space<smem>>
    %1641 = vector.broadcast %1640 : f32 to vector<1x16xf32>
    %1642 = arith.mulf %1641, %1621 : vector<1x16xf32>
    %c2_1039 = arith.constant 2 : index
    %c1_1040 = arith.constant 1 : index
    %1643 = memref.load %arg3[%c2_1039, %c1_1040] : memref<8x4xf32, #tpu.memory_space<smem>>
    %1644 = vector.broadcast %1643 : f32 to vector<1x16xf32>
    %1645 = arith.mulf %1644, %1623 : vector<1x16xf32>
    %1646 = arith.addf %1642, %1645 : vector<1x16xf32>
    %1647 = arith.addf %1584, %1646 : vector<1x16xf32>
    %c3_1041 = arith.constant 3 : index
    %c1_1042 = arith.constant 1 : index
    %1648 = memref.load %arg2[%c3_1041, %c1_1042] : memref<8x4xf32, #tpu.memory_space<smem>>
    %1649 = vector.broadcast %1648 : f32 to vector<1x16xf32>
    %1650 = arith.mulf %1649, %1621 : vector<1x16xf32>
    %c3_1043 = arith.constant 3 : index
    %c1_1044 = arith.constant 1 : index
    %1651 = memref.load %arg3[%c3_1043, %c1_1044] : memref<8x4xf32, #tpu.memory_space<smem>>
    %1652 = vector.broadcast %1651 : f32 to vector<1x16xf32>
    %1653 = arith.mulf %1652, %1623 : vector<1x16xf32>
    %1654 = arith.addf %1650, %1653 : vector<1x16xf32>
    %1655 = arith.addf %1591, %1654 : vector<1x16xf32>
    %c4_1045 = arith.constant 4 : index
    %c1_1046 = arith.constant 1 : index
    %1656 = memref.load %arg2[%c4_1045, %c1_1046] : memref<8x4xf32, #tpu.memory_space<smem>>
    %1657 = vector.broadcast %1656 : f32 to vector<1x16xf32>
    %1658 = arith.mulf %1657, %1621 : vector<1x16xf32>
    %c4_1047 = arith.constant 4 : index
    %c1_1048 = arith.constant 1 : index
    %1659 = memref.load %arg3[%c4_1047, %c1_1048] : memref<8x4xf32, #tpu.memory_space<smem>>
    %1660 = vector.broadcast %1659 : f32 to vector<1x16xf32>
    %1661 = arith.mulf %1660, %1623 : vector<1x16xf32>
    %1662 = arith.addf %1658, %1661 : vector<1x16xf32>
    %1663 = arith.addf %1598, %1662 : vector<1x16xf32>
    %c5_1049 = arith.constant 5 : index
    %c1_1050 = arith.constant 1 : index
    %1664 = memref.load %arg2[%c5_1049, %c1_1050] : memref<8x4xf32, #tpu.memory_space<smem>>
    %1665 = vector.broadcast %1664 : f32 to vector<1x16xf32>
    %1666 = arith.mulf %1665, %1621 : vector<1x16xf32>
    %c5_1051 = arith.constant 5 : index
    %c1_1052 = arith.constant 1 : index
    %1667 = memref.load %arg3[%c5_1051, %c1_1052] : memref<8x4xf32, #tpu.memory_space<smem>>
    %1668 = vector.broadcast %1667 : f32 to vector<1x16xf32>
    %1669 = arith.mulf %1668, %1623 : vector<1x16xf32>
    %1670 = arith.addf %1666, %1669 : vector<1x16xf32>
    %1671 = arith.addf %1605, %1670 : vector<1x16xf32>
    %c6_1053 = arith.constant 6 : index
    %c1_1054 = arith.constant 1 : index
    %1672 = memref.load %arg2[%c6_1053, %c1_1054] : memref<8x4xf32, #tpu.memory_space<smem>>
    %1673 = vector.broadcast %1672 : f32 to vector<1x16xf32>
    %1674 = arith.mulf %1673, %1621 : vector<1x16xf32>
    %c6_1055 = arith.constant 6 : index
    %c1_1056 = arith.constant 1 : index
    %1675 = memref.load %arg3[%c6_1055, %c1_1056] : memref<8x4xf32, #tpu.memory_space<smem>>
    %1676 = vector.broadcast %1675 : f32 to vector<1x16xf32>
    %1677 = arith.mulf %1676, %1623 : vector<1x16xf32>
    %1678 = arith.addf %1674, %1677 : vector<1x16xf32>
    %1679 = arith.addf %1612, %1678 : vector<1x16xf32>
    %c7_1057 = arith.constant 7 : index
    %c1_1058 = arith.constant 1 : index
    %1680 = memref.load %arg2[%c7_1057, %c1_1058] : memref<8x4xf32, #tpu.memory_space<smem>>
    %1681 = vector.broadcast %1680 : f32 to vector<1x16xf32>
    %1682 = arith.mulf %1681, %1621 : vector<1x16xf32>
    %c7_1059 = arith.constant 7 : index
    %c1_1060 = arith.constant 1 : index
    %1683 = memref.load %arg3[%c7_1059, %c1_1060] : memref<8x4xf32, #tpu.memory_space<smem>>
    %1684 = vector.broadcast %1683 : f32 to vector<1x16xf32>
    %1685 = arith.mulf %1684, %1623 : vector<1x16xf32>
    %1686 = arith.addf %1682, %1685 : vector<1x16xf32>
    %1687 = arith.addf %1619, %1686 : vector<1x16xf32>
    %c0_1061 = arith.constant 0 : index
    %c2_1062 = arith.constant 2 : index
    %c0_1063 = arith.constant 0 : index
    %c160_1064 = arith.constant 160 : index
    %1688 = vector.load %arg5[%c0_1061, %c2_1062, %c0_1063, %c160_1064] : memref<1x4x1x256xf32, #tpu.memory_space<vmem>>, vector<1x1x1x16xf32>
    %1689 = vector.shape_cast %1688 : vector<1x1x1x16xf32> to vector<1x16xf32>
    %c0_1065 = arith.constant 0 : index
    %c2_1066 = arith.constant 2 : index
    %c0_1067 = arith.constant 0 : index
    %c176_1068 = arith.constant 176 : index
    %1690 = vector.load %arg5[%c0_1065, %c2_1066, %c0_1067, %c176_1068] : memref<1x4x1x256xf32, #tpu.memory_space<vmem>>, vector<1x1x1x16xf32>
    %1691 = vector.shape_cast %1690 : vector<1x1x1x16xf32> to vector<1x16xf32>
    %c0_1069 = arith.constant 0 : index
    %c2_1070 = arith.constant 2 : index
    %1692 = memref.load %arg2[%c0_1069, %c2_1070] : memref<8x4xf32, #tpu.memory_space<smem>>
    %1693 = vector.broadcast %1692 : f32 to vector<1x16xf32>
    %1694 = arith.mulf %1693, %1689 : vector<1x16xf32>
    %c0_1071 = arith.constant 0 : index
    %c2_1072 = arith.constant 2 : index
    %1695 = memref.load %arg3[%c0_1071, %c2_1072] : memref<8x4xf32, #tpu.memory_space<smem>>
    %1696 = vector.broadcast %1695 : f32 to vector<1x16xf32>
    %1697 = arith.mulf %1696, %1691 : vector<1x16xf32>
    %1698 = arith.addf %1694, %1697 : vector<1x16xf32>
    %1699 = arith.addf %1631, %1698 : vector<1x16xf32>
    %c1_1073 = arith.constant 1 : index
    %c2_1074 = arith.constant 2 : index
    %1700 = memref.load %arg2[%c1_1073, %c2_1074] : memref<8x4xf32, #tpu.memory_space<smem>>
    %1701 = vector.broadcast %1700 : f32 to vector<1x16xf32>
    %1702 = arith.mulf %1701, %1689 : vector<1x16xf32>
    %c1_1075 = arith.constant 1 : index
    %c2_1076 = arith.constant 2 : index
    %1703 = memref.load %arg3[%c1_1075, %c2_1076] : memref<8x4xf32, #tpu.memory_space<smem>>
    %1704 = vector.broadcast %1703 : f32 to vector<1x16xf32>
    %1705 = arith.mulf %1704, %1691 : vector<1x16xf32>
    %1706 = arith.addf %1702, %1705 : vector<1x16xf32>
    %1707 = arith.addf %1639, %1706 : vector<1x16xf32>
    %c2_1077 = arith.constant 2 : index
    %c2_1078 = arith.constant 2 : index
    %1708 = memref.load %arg2[%c2_1077, %c2_1078] : memref<8x4xf32, #tpu.memory_space<smem>>
    %1709 = vector.broadcast %1708 : f32 to vector<1x16xf32>
    %1710 = arith.mulf %1709, %1689 : vector<1x16xf32>
    %c2_1079 = arith.constant 2 : index
    %c2_1080 = arith.constant 2 : index
    %1711 = memref.load %arg3[%c2_1079, %c2_1080] : memref<8x4xf32, #tpu.memory_space<smem>>
    %1712 = vector.broadcast %1711 : f32 to vector<1x16xf32>
    %1713 = arith.mulf %1712, %1691 : vector<1x16xf32>
    %1714 = arith.addf %1710, %1713 : vector<1x16xf32>
    %1715 = arith.addf %1647, %1714 : vector<1x16xf32>
    %c3_1081 = arith.constant 3 : index
    %c2_1082 = arith.constant 2 : index
    %1716 = memref.load %arg2[%c3_1081, %c2_1082] : memref<8x4xf32, #tpu.memory_space<smem>>
    %1717 = vector.broadcast %1716 : f32 to vector<1x16xf32>
    %1718 = arith.mulf %1717, %1689 : vector<1x16xf32>
    %c3_1083 = arith.constant 3 : index
    %c2_1084 = arith.constant 2 : index
    %1719 = memref.load %arg3[%c3_1083, %c2_1084] : memref<8x4xf32, #tpu.memory_space<smem>>
    %1720 = vector.broadcast %1719 : f32 to vector<1x16xf32>
    %1721 = arith.mulf %1720, %1691 : vector<1x16xf32>
    %1722 = arith.addf %1718, %1721 : vector<1x16xf32>
    %1723 = arith.addf %1655, %1722 : vector<1x16xf32>
    %c4_1085 = arith.constant 4 : index
    %c2_1086 = arith.constant 2 : index
    %1724 = memref.load %arg2[%c4_1085, %c2_1086] : memref<8x4xf32, #tpu.memory_space<smem>>
    %1725 = vector.broadcast %1724 : f32 to vector<1x16xf32>
    %1726 = arith.mulf %1725, %1689 : vector<1x16xf32>
    %c4_1087 = arith.constant 4 : index
    %c2_1088 = arith.constant 2 : index
    %1727 = memref.load %arg3[%c4_1087, %c2_1088] : memref<8x4xf32, #tpu.memory_space<smem>>
    %1728 = vector.broadcast %1727 : f32 to vector<1x16xf32>
    %1729 = arith.mulf %1728, %1691 : vector<1x16xf32>
    %1730 = arith.addf %1726, %1729 : vector<1x16xf32>
    %1731 = arith.addf %1663, %1730 : vector<1x16xf32>
    %c5_1089 = arith.constant 5 : index
    %c2_1090 = arith.constant 2 : index
    %1732 = memref.load %arg2[%c5_1089, %c2_1090] : memref<8x4xf32, #tpu.memory_space<smem>>
    %1733 = vector.broadcast %1732 : f32 to vector<1x16xf32>
    %1734 = arith.mulf %1733, %1689 : vector<1x16xf32>
    %c5_1091 = arith.constant 5 : index
    %c2_1092 = arith.constant 2 : index
    %1735 = memref.load %arg3[%c5_1091, %c2_1092] : memref<8x4xf32, #tpu.memory_space<smem>>
    %1736 = vector.broadcast %1735 : f32 to vector<1x16xf32>
    %1737 = arith.mulf %1736, %1691 : vector<1x16xf32>
    %1738 = arith.addf %1734, %1737 : vector<1x16xf32>
    %1739 = arith.addf %1671, %1738 : vector<1x16xf32>
    %c6_1093 = arith.constant 6 : index
    %c2_1094 = arith.constant 2 : index
    %1740 = memref.load %arg2[%c6_1093, %c2_1094] : memref<8x4xf32, #tpu.memory_space<smem>>
    %1741 = vector.broadcast %1740 : f32 to vector<1x16xf32>
    %1742 = arith.mulf %1741, %1689 : vector<1x16xf32>
    %c6_1095 = arith.constant 6 : index
    %c2_1096 = arith.constant 2 : index
    %1743 = memref.load %arg3[%c6_1095, %c2_1096] : memref<8x4xf32, #tpu.memory_space<smem>>
    %1744 = vector.broadcast %1743 : f32 to vector<1x16xf32>
    %1745 = arith.mulf %1744, %1691 : vector<1x16xf32>
    %1746 = arith.addf %1742, %1745 : vector<1x16xf32>
    %1747 = arith.addf %1679, %1746 : vector<1x16xf32>
    %c7_1097 = arith.constant 7 : index
    %c2_1098 = arith.constant 2 : index
    %1748 = memref.load %arg2[%c7_1097, %c2_1098] : memref<8x4xf32, #tpu.memory_space<smem>>
    %1749 = vector.broadcast %1748 : f32 to vector<1x16xf32>
    %1750 = arith.mulf %1749, %1689 : vector<1x16xf32>
    %c7_1099 = arith.constant 7 : index
    %c2_1100 = arith.constant 2 : index
    %1751 = memref.load %arg3[%c7_1099, %c2_1100] : memref<8x4xf32, #tpu.memory_space<smem>>
    %1752 = vector.broadcast %1751 : f32 to vector<1x16xf32>
    %1753 = arith.mulf %1752, %1691 : vector<1x16xf32>
    %1754 = arith.addf %1750, %1753 : vector<1x16xf32>
    %1755 = arith.addf %1687, %1754 : vector<1x16xf32>
    %c0_1101 = arith.constant 0 : index
    %c3_1102 = arith.constant 3 : index
    %c0_1103 = arith.constant 0 : index
    %c160_1104 = arith.constant 160 : index
    %1756 = vector.load %arg5[%c0_1101, %c3_1102, %c0_1103, %c160_1104] : memref<1x4x1x256xf32, #tpu.memory_space<vmem>>, vector<1x1x1x16xf32>
    %1757 = vector.shape_cast %1756 : vector<1x1x1x16xf32> to vector<1x16xf32>
    %c0_1105 = arith.constant 0 : index
    %c3_1106 = arith.constant 3 : index
    %c0_1107 = arith.constant 0 : index
    %c176_1108 = arith.constant 176 : index
    %1758 = vector.load %arg5[%c0_1105, %c3_1106, %c0_1107, %c176_1108] : memref<1x4x1x256xf32, #tpu.memory_space<vmem>>, vector<1x1x1x16xf32>
    %1759 = vector.shape_cast %1758 : vector<1x1x1x16xf32> to vector<1x16xf32>
    %c0_1109 = arith.constant 0 : index
    %c3_1110 = arith.constant 3 : index
    %1760 = memref.load %arg2[%c0_1109, %c3_1110] : memref<8x4xf32, #tpu.memory_space<smem>>
    %1761 = vector.broadcast %1760 : f32 to vector<1x16xf32>
    %1762 = arith.mulf %1761, %1757 : vector<1x16xf32>
    %c0_1111 = arith.constant 0 : index
    %c3_1112 = arith.constant 3 : index
    %1763 = memref.load %arg3[%c0_1111, %c3_1112] : memref<8x4xf32, #tpu.memory_space<smem>>
    %1764 = vector.broadcast %1763 : f32 to vector<1x16xf32>
    %1765 = arith.mulf %1764, %1759 : vector<1x16xf32>
    %1766 = arith.addf %1762, %1765 : vector<1x16xf32>
    %1767 = arith.addf %1699, %1766 : vector<1x16xf32>
    %c1_1113 = arith.constant 1 : index
    %c3_1114 = arith.constant 3 : index
    %1768 = memref.load %arg2[%c1_1113, %c3_1114] : memref<8x4xf32, #tpu.memory_space<smem>>
    %1769 = vector.broadcast %1768 : f32 to vector<1x16xf32>
    %1770 = arith.mulf %1769, %1757 : vector<1x16xf32>
    %c1_1115 = arith.constant 1 : index
    %c3_1116 = arith.constant 3 : index
    %1771 = memref.load %arg3[%c1_1115, %c3_1116] : memref<8x4xf32, #tpu.memory_space<smem>>
    %1772 = vector.broadcast %1771 : f32 to vector<1x16xf32>
    %1773 = arith.mulf %1772, %1759 : vector<1x16xf32>
    %1774 = arith.addf %1770, %1773 : vector<1x16xf32>
    %1775 = arith.addf %1707, %1774 : vector<1x16xf32>
    %c2_1117 = arith.constant 2 : index
    %c3_1118 = arith.constant 3 : index
    %1776 = memref.load %arg2[%c2_1117, %c3_1118] : memref<8x4xf32, #tpu.memory_space<smem>>
    %1777 = vector.broadcast %1776 : f32 to vector<1x16xf32>
    %1778 = arith.mulf %1777, %1757 : vector<1x16xf32>
    %c2_1119 = arith.constant 2 : index
    %c3_1120 = arith.constant 3 : index
    %1779 = memref.load %arg3[%c2_1119, %c3_1120] : memref<8x4xf32, #tpu.memory_space<smem>>
    %1780 = vector.broadcast %1779 : f32 to vector<1x16xf32>
    %1781 = arith.mulf %1780, %1759 : vector<1x16xf32>
    %1782 = arith.addf %1778, %1781 : vector<1x16xf32>
    %1783 = arith.addf %1715, %1782 : vector<1x16xf32>
    %c3_1121 = arith.constant 3 : index
    %c3_1122 = arith.constant 3 : index
    %1784 = memref.load %arg2[%c3_1121, %c3_1122] : memref<8x4xf32, #tpu.memory_space<smem>>
    %1785 = vector.broadcast %1784 : f32 to vector<1x16xf32>
    %1786 = arith.mulf %1785, %1757 : vector<1x16xf32>
    %c3_1123 = arith.constant 3 : index
    %c3_1124 = arith.constant 3 : index
    %1787 = memref.load %arg3[%c3_1123, %c3_1124] : memref<8x4xf32, #tpu.memory_space<smem>>
    %1788 = vector.broadcast %1787 : f32 to vector<1x16xf32>
    %1789 = arith.mulf %1788, %1759 : vector<1x16xf32>
    %1790 = arith.addf %1786, %1789 : vector<1x16xf32>
    %1791 = arith.addf %1723, %1790 : vector<1x16xf32>
    %c4_1125 = arith.constant 4 : index
    %c3_1126 = arith.constant 3 : index
    %1792 = memref.load %arg2[%c4_1125, %c3_1126] : memref<8x4xf32, #tpu.memory_space<smem>>
    %1793 = vector.broadcast %1792 : f32 to vector<1x16xf32>
    %1794 = arith.mulf %1793, %1757 : vector<1x16xf32>
    %c4_1127 = arith.constant 4 : index
    %c3_1128 = arith.constant 3 : index
    %1795 = memref.load %arg3[%c4_1127, %c3_1128] : memref<8x4xf32, #tpu.memory_space<smem>>
    %1796 = vector.broadcast %1795 : f32 to vector<1x16xf32>
    %1797 = arith.mulf %1796, %1759 : vector<1x16xf32>
    %1798 = arith.addf %1794, %1797 : vector<1x16xf32>
    %1799 = arith.addf %1731, %1798 : vector<1x16xf32>
    %c5_1129 = arith.constant 5 : index
    %c3_1130 = arith.constant 3 : index
    %1800 = memref.load %arg2[%c5_1129, %c3_1130] : memref<8x4xf32, #tpu.memory_space<smem>>
    %1801 = vector.broadcast %1800 : f32 to vector<1x16xf32>
    %1802 = arith.mulf %1801, %1757 : vector<1x16xf32>
    %c5_1131 = arith.constant 5 : index
    %c3_1132 = arith.constant 3 : index
    %1803 = memref.load %arg3[%c5_1131, %c3_1132] : memref<8x4xf32, #tpu.memory_space<smem>>
    %1804 = vector.broadcast %1803 : f32 to vector<1x16xf32>
    %1805 = arith.mulf %1804, %1759 : vector<1x16xf32>
    %1806 = arith.addf %1802, %1805 : vector<1x16xf32>
    %1807 = arith.addf %1739, %1806 : vector<1x16xf32>
    %c6_1133 = arith.constant 6 : index
    %c3_1134 = arith.constant 3 : index
    %1808 = memref.load %arg2[%c6_1133, %c3_1134] : memref<8x4xf32, #tpu.memory_space<smem>>
    %1809 = vector.broadcast %1808 : f32 to vector<1x16xf32>
    %1810 = arith.mulf %1809, %1757 : vector<1x16xf32>
    %c6_1135 = arith.constant 6 : index
    %c3_1136 = arith.constant 3 : index
    %1811 = memref.load %arg3[%c6_1135, %c3_1136] : memref<8x4xf32, #tpu.memory_space<smem>>
    %1812 = vector.broadcast %1811 : f32 to vector<1x16xf32>
    %1813 = arith.mulf %1812, %1759 : vector<1x16xf32>
    %1814 = arith.addf %1810, %1813 : vector<1x16xf32>
    %1815 = arith.addf %1747, %1814 : vector<1x16xf32>
    %c7_1137 = arith.constant 7 : index
    %c3_1138 = arith.constant 3 : index
    %1816 = memref.load %arg2[%c7_1137, %c3_1138] : memref<8x4xf32, #tpu.memory_space<smem>>
    %1817 = vector.broadcast %1816 : f32 to vector<1x16xf32>
    %1818 = arith.mulf %1817, %1757 : vector<1x16xf32>
    %c7_1139 = arith.constant 7 : index
    %c3_1140 = arith.constant 3 : index
    %1819 = memref.load %arg3[%c7_1139, %c3_1140] : memref<8x4xf32, #tpu.memory_space<smem>>
    %1820 = vector.broadcast %1819 : f32 to vector<1x16xf32>
    %1821 = arith.mulf %1820, %1759 : vector<1x16xf32>
    %1822 = arith.addf %1818, %1821 : vector<1x16xf32>
    %1823 = arith.addf %1755, %1822 : vector<1x16xf32>
    %c0_1141 = arith.constant 0 : index
    %1824 = memref.load %arg4[%c0_1141] : memref<8xf32, #tpu.memory_space<smem>>
    %1825 = vector.broadcast %1824 : f32 to vector<1x16xf32>
    %1826 = arith.addf %1767, %1825 : vector<1x16xf32>
    %c0_1142 = arith.constant 0 : index
    %c0_1143 = arith.constant 0 : index
    %c0_1144 = arith.constant 0 : index
    %c80_1145 = arith.constant 80 : index
    %1827 = vector.load %arg6[%c0_1142, %c0_1143, %c0_1144, %c80_1145] : memref<1x8x1x128xf32, #tpu.memory_space<vmem>>, vector<1x1x1x16xf32>
    %1828 = vector.shape_cast %1827 : vector<1x1x1x16xf32> to vector<1x16xf32>
    %1829 = vector.shape_cast %1826 : vector<1x16xf32> to vector<1x1x1x16xf32>
    tpu.vector_store %arg6[%c0_1142, %c0_1143, %c0_1144, %c80_1145], %1829 {strides = array<i32>} : memref<1x8x1x128xf32, #tpu.memory_space<vmem>>, vector<1x1x1x16xf32>,
    %c1_1146 = arith.constant 1 : index
    %1830 = memref.load %arg4[%c1_1146] : memref<8xf32, #tpu.memory_space<smem>>
    %1831 = vector.broadcast %1830 : f32 to vector<1x16xf32>
    %1832 = arith.addf %1775, %1831 : vector<1x16xf32>
    %c0_1147 = arith.constant 0 : index
    %c1_1148 = arith.constant 1 : index
    %c0_1149 = arith.constant 0 : index
    %c80_1150 = arith.constant 80 : index
    %1833 = vector.load %arg6[%c0_1147, %c1_1148, %c0_1149, %c80_1150] : memref<1x8x1x128xf32, #tpu.memory_space<vmem>>, vector<1x1x1x16xf32>
    %1834 = vector.shape_cast %1833 : vector<1x1x1x16xf32> to vector<1x16xf32>
    %1835 = vector.shape_cast %1832 : vector<1x16xf32> to vector<1x1x1x16xf32>
    tpu.vector_store %arg6[%c0_1147, %c1_1148, %c0_1149, %c80_1150], %1835 {strides = array<i32>} : memref<1x8x1x128xf32, #tpu.memory_space<vmem>>, vector<1x1x1x16xf32>,
    %c2_1151 = arith.constant 2 : index
    %1836 = memref.load %arg4[%c2_1151] : memref<8xf32, #tpu.memory_space<smem>>
    %1837 = vector.broadcast %1836 : f32 to vector<1x16xf32>
    %1838 = arith.addf %1783, %1837 : vector<1x16xf32>
    %c0_1152 = arith.constant 0 : index
    %c2_1153 = arith.constant 2 : index
    %c0_1154 = arith.constant 0 : index
    %c80_1155 = arith.constant 80 : index
    %1839 = vector.load %arg6[%c0_1152, %c2_1153, %c0_1154, %c80_1155] : memref<1x8x1x128xf32, #tpu.memory_space<vmem>>, vector<1x1x1x16xf32>
    %1840 = vector.shape_cast %1839 : vector<1x1x1x16xf32> to vector<1x16xf32>
    %1841 = vector.shape_cast %1838 : vector<1x16xf32> to vector<1x1x1x16xf32>
    tpu.vector_store %arg6[%c0_1152, %c2_1153, %c0_1154, %c80_1155], %1841 {strides = array<i32>} : memref<1x8x1x128xf32, #tpu.memory_space<vmem>>, vector<1x1x1x16xf32>,
    %c3_1156 = arith.constant 3 : index
    %1842 = memref.load %arg4[%c3_1156] : memref<8xf32, #tpu.memory_space<smem>>
    %1843 = vector.broadcast %1842 : f32 to vector<1x16xf32>
    %1844 = arith.addf %1791, %1843 : vector<1x16xf32>
    %c0_1157 = arith.constant 0 : index
    %c3_1158 = arith.constant 3 : index
    %c0_1159 = arith.constant 0 : index
    %c80_1160 = arith.constant 80 : index
    %1845 = vector.load %arg6[%c0_1157, %c3_1158, %c0_1159, %c80_1160] : memref<1x8x1x128xf32, #tpu.memory_space<vmem>>, vector<1x1x1x16xf32>
    %1846 = vector.shape_cast %1845 : vector<1x1x1x16xf32> to vector<1x16xf32>
    %1847 = vector.shape_cast %1844 : vector<1x16xf32> to vector<1x1x1x16xf32>
    tpu.vector_store %arg6[%c0_1157, %c3_1158, %c0_1159, %c80_1160], %1847 {strides = array<i32>} : memref<1x8x1x128xf32, #tpu.memory_space<vmem>>, vector<1x1x1x16xf32>,
    %c4_1161 = arith.constant 4 : index
    %1848 = memref.load %arg4[%c4_1161] : memref<8xf32, #tpu.memory_space<smem>>
    %1849 = vector.broadcast %1848 : f32 to vector<1x16xf32>
    %1850 = arith.addf %1799, %1849 : vector<1x16xf32>
    %c0_1162 = arith.constant 0 : index
    %c4_1163 = arith.constant 4 : index
    %c0_1164 = arith.constant 0 : index
    %c80_1165 = arith.constant 80 : index
    %1851 = vector.load %arg6[%c0_1162, %c4_1163, %c0_1164, %c80_1165] : memref<1x8x1x128xf32, #tpu.memory_space<vmem>>, vector<1x1x1x16xf32>
    %1852 = vector.shape_cast %1851 : vector<1x1x1x16xf32> to vector<1x16xf32>
    %1853 = vector.shape_cast %1850 : vector<1x16xf32> to vector<1x1x1x16xf32>
    tpu.vector_store %arg6[%c0_1162, %c4_1163, %c0_1164, %c80_1165], %1853 {strides = array<i32>} : memref<1x8x1x128xf32, #tpu.memory_space<vmem>>, vector<1x1x1x16xf32>,
    %c5_1166 = arith.constant 5 : index
    %1854 = memref.load %arg4[%c5_1166] : memref<8xf32, #tpu.memory_space<smem>>
    %1855 = vector.broadcast %1854 : f32 to vector<1x16xf32>
    %1856 = arith.addf %1807, %1855 : vector<1x16xf32>
    %c0_1167 = arith.constant 0 : index
    %c5_1168 = arith.constant 5 : index
    %c0_1169 = arith.constant 0 : index
    %c80_1170 = arith.constant 80 : index
    %1857 = vector.load %arg6[%c0_1167, %c5_1168, %c0_1169, %c80_1170] : memref<1x8x1x128xf32, #tpu.memory_space<vmem>>, vector<1x1x1x16xf32>
    %1858 = vector.shape_cast %1857 : vector<1x1x1x16xf32> to vector<1x16xf32>
    %1859 = vector.shape_cast %1856 : vector<1x16xf32> to vector<1x1x1x16xf32>
    tpu.vector_store %arg6[%c0_1167, %c5_1168, %c0_1169, %c80_1170], %1859 {strides = array<i32>} : memref<1x8x1x128xf32, #tpu.memory_space<vmem>>, vector<1x1x1x16xf32>,
    %c6_1171 = arith.constant 6 : index
    %1860 = memref.load %arg4[%c6_1171] : memref<8xf32, #tpu.memory_space<smem>>
    %1861 = vector.broadcast %1860 : f32 to vector<1x16xf32>
    %1862 = arith.addf %1815, %1861 : vector<1x16xf32>
    %c0_1172 = arith.constant 0 : index
    %c6_1173 = arith.constant 6 : index
    %c0_1174 = arith.constant 0 : index
    %c80_1175 = arith.constant 80 : index
    %1863 = vector.load %arg6[%c0_1172, %c6_1173, %c0_1174, %c80_1175] : memref<1x8x1x128xf32, #tpu.memory_space<vmem>>, vector<1x1x1x16xf32>
    %1864 = vector.shape_cast %1863 : vector<1x1x1x16xf32> to vector<1x16xf32>
    %1865 = vector.shape_cast %1862 : vector<1x16xf32> to vector<1x1x1x16xf32>
    tpu.vector_store %arg6[%c0_1172, %c6_1173, %c0_1174, %c80_1175], %1865 {strides = array<i32>} : memref<1x8x1x128xf32, #tpu.memory_space<vmem>>, vector<1x1x1x16xf32>,
    %c7_1176 = arith.constant 7 : index
    %1866 = memref.load %arg4[%c7_1176] : memref<8xf32, #tpu.memory_space<smem>>
    %1867 = vector.broadcast %1866 : f32 to vector<1x16xf32>
    %1868 = arith.addf %1823, %1867 : vector<1x16xf32>
    %c0_1177 = arith.constant 0 : index
    %c7_1178 = arith.constant 7 : index
    %c0_1179 = arith.constant 0 : index
    %c80_1180 = arith.constant 80 : index
    %1869 = vector.load %arg6[%c0_1177, %c7_1178, %c0_1179, %c80_1180] : memref<1x8x1x128xf32, #tpu.memory_space<vmem>>, vector<1x1x1x16xf32>
    %1870 = vector.shape_cast %1869 : vector<1x1x1x16xf32> to vector<1x16xf32>
    %1871 = vector.shape_cast %1868 : vector<1x16xf32> to vector<1x1x1x16xf32>
    tpu.vector_store %arg6[%c0_1177, %c7_1178, %c0_1179, %c80_1180], %1871 {strides = array<i32>} : memref<1x8x1x128xf32, #tpu.memory_space<vmem>>, vector<1x1x1x16xf32>,
    %c0_1181 = arith.constant 0 : index
    %c0_1182 = arith.constant 0 : index
    %c0_1183 = arith.constant 0 : index
    %c192 = arith.constant 192 : index
    %1872 = vector.load %arg5[%c0_1181, %c0_1182, %c0_1183, %c192] : memref<1x4x1x256xf32, #tpu.memory_space<vmem>>, vector<1x1x1x16xf32>
    %1873 = vector.shape_cast %1872 : vector<1x1x1x16xf32> to vector<1x16xf32>
    %c0_1184 = arith.constant 0 : index
    %c0_1185 = arith.constant 0 : index
    %c0_1186 = arith.constant 0 : index
    %c208 = arith.constant 208 : index
    %1874 = vector.load %arg5[%c0_1184, %c0_1185, %c0_1186, %c208] : memref<1x4x1x256xf32, #tpu.memory_space<vmem>>, vector<1x1x1x16xf32>
    %1875 = vector.shape_cast %1874 : vector<1x1x1x16xf32> to vector<1x16xf32>
    %c0_1187 = arith.constant 0 : index
    %c0_1188 = arith.constant 0 : index
    %1876 = memref.load %arg2[%c0_1187, %c0_1188] : memref<8x4xf32, #tpu.memory_space<smem>>
    %1877 = vector.broadcast %1876 : f32 to vector<1x16xf32>
    %1878 = arith.mulf %1877, %1873 : vector<1x16xf32>
    %c0_1189 = arith.constant 0 : index
    %c0_1190 = arith.constant 0 : index
    %1879 = memref.load %arg3[%c0_1189, %c0_1190] : memref<8x4xf32, #tpu.memory_space<smem>>
    %1880 = vector.broadcast %1879 : f32 to vector<1x16xf32>
    %1881 = arith.mulf %1880, %1875 : vector<1x16xf32>
    %1882 = arith.addf %1878, %1881 : vector<1x16xf32>
    %c1_1191 = arith.constant 1 : index
    %c0_1192 = arith.constant 0 : index
    %1883 = memref.load %arg2[%c1_1191, %c0_1192] : memref<8x4xf32, #tpu.memory_space<smem>>
    %1884 = vector.broadcast %1883 : f32 to vector<1x16xf32>
    %1885 = arith.mulf %1884, %1873 : vector<1x16xf32>
    %c1_1193 = arith.constant 1 : index
    %c0_1194 = arith.constant 0 : index
    %1886 = memref.load %arg3[%c1_1193, %c0_1194] : memref<8x4xf32, #tpu.memory_space<smem>>
    %1887 = vector.broadcast %1886 : f32 to vector<1x16xf32>
    %1888 = arith.mulf %1887, %1875 : vector<1x16xf32>
    %1889 = arith.addf %1885, %1888 : vector<1x16xf32>
    %c2_1195 = arith.constant 2 : index
    %c0_1196 = arith.constant 0 : index
    %1890 = memref.load %arg2[%c2_1195, %c0_1196] : memref<8x4xf32, #tpu.memory_space<smem>>
    %1891 = vector.broadcast %1890 : f32 to vector<1x16xf32>
    %1892 = arith.mulf %1891, %1873 : vector<1x16xf32>
    %c2_1197 = arith.constant 2 : index
    %c0_1198 = arith.constant 0 : index
    %1893 = memref.load %arg3[%c2_1197, %c0_1198] : memref<8x4xf32, #tpu.memory_space<smem>>
    %1894 = vector.broadcast %1893 : f32 to vector<1x16xf32>
    %1895 = arith.mulf %1894, %1875 : vector<1x16xf32>
    %1896 = arith.addf %1892, %1895 : vector<1x16xf32>
    %c3_1199 = arith.constant 3 : index
    %c0_1200 = arith.constant 0 : index
    %1897 = memref.load %arg2[%c3_1199, %c0_1200] : memref<8x4xf32, #tpu.memory_space<smem>>
    %1898 = vector.broadcast %1897 : f32 to vector<1x16xf32>
    %1899 = arith.mulf %1898, %1873 : vector<1x16xf32>
    %c3_1201 = arith.constant 3 : index
    %c0_1202 = arith.constant 0 : index
    %1900 = memref.load %arg3[%c3_1201, %c0_1202] : memref<8x4xf32, #tpu.memory_space<smem>>
    %1901 = vector.broadcast %1900 : f32 to vector<1x16xf32>
    %1902 = arith.mulf %1901, %1875 : vector<1x16xf32>
    %1903 = arith.addf %1899, %1902 : vector<1x16xf32>
    %c4_1203 = arith.constant 4 : index
    %c0_1204 = arith.constant 0 : index
    %1904 = memref.load %arg2[%c4_1203, %c0_1204] : memref<8x4xf32, #tpu.memory_space<smem>>
    %1905 = vector.broadcast %1904 : f32 to vector<1x16xf32>
    %1906 = arith.mulf %1905, %1873 : vector<1x16xf32>
    %c4_1205 = arith.constant 4 : index
    %c0_1206 = arith.constant 0 : index
    %1907 = memref.load %arg3[%c4_1205, %c0_1206] : memref<8x4xf32, #tpu.memory_space<smem>>
    %1908 = vector.broadcast %1907 : f32 to vector<1x16xf32>
    %1909 = arith.mulf %1908, %1875 : vector<1x16xf32>
    %1910 = arith.addf %1906, %1909 : vector<1x16xf32>
    %c5_1207 = arith.constant 5 : index
    %c0_1208 = arith.constant 0 : index
    %1911 = memref.load %arg2[%c5_1207, %c0_1208] : memref<8x4xf32, #tpu.memory_space<smem>>
    %1912 = vector.broadcast %1911 : f32 to vector<1x16xf32>
    %1913 = arith.mulf %1912, %1873 : vector<1x16xf32>
    %c5_1209 = arith.constant 5 : index
    %c0_1210 = arith.constant 0 : index
    %1914 = memref.load %arg3[%c5_1209, %c0_1210] : memref<8x4xf32, #tpu.memory_space<smem>>
    %1915 = vector.broadcast %1914 : f32 to vector<1x16xf32>
    %1916 = arith.mulf %1915, %1875 : vector<1x16xf32>
    %1917 = arith.addf %1913, %1916 : vector<1x16xf32>
    %c6_1211 = arith.constant 6 : index
    %c0_1212 = arith.constant 0 : index
    %1918 = memref.load %arg2[%c6_1211, %c0_1212] : memref<8x4xf32, #tpu.memory_space<smem>>
    %1919 = vector.broadcast %1918 : f32 to vector<1x16xf32>
    %1920 = arith.mulf %1919, %1873 : vector<1x16xf32>
    %c6_1213 = arith.constant 6 : index
    %c0_1214 = arith.constant 0 : index
    %1921 = memref.load %arg3[%c6_1213, %c0_1214] : memref<8x4xf32, #tpu.memory_space<smem>>
    %1922 = vector.broadcast %1921 : f32 to vector<1x16xf32>
    %1923 = arith.mulf %1922, %1875 : vector<1x16xf32>
    %1924 = arith.addf %1920, %1923 : vector<1x16xf32>
    %c7_1215 = arith.constant 7 : index
    %c0_1216 = arith.constant 0 : index
    %1925 = memref.load %arg2[%c7_1215, %c0_1216] : memref<8x4xf32, #tpu.memory_space<smem>>
    %1926 = vector.broadcast %1925 : f32 to vector<1x16xf32>
    %1927 = arith.mulf %1926, %1873 : vector<1x16xf32>
    %c7_1217 = arith.constant 7 : index
    %c0_1218 = arith.constant 0 : index
    %1928 = memref.load %arg3[%c7_1217, %c0_1218] : memref<8x4xf32, #tpu.memory_space<smem>>
    %1929 = vector.broadcast %1928 : f32 to vector<1x16xf32>
    %1930 = arith.mulf %1929, %1875 : vector<1x16xf32>
    %1931 = arith.addf %1927, %1930 : vector<1x16xf32>
    %c0_1219 = arith.constant 0 : index
    %c1_1220 = arith.constant 1 : index
    %c0_1221 = arith.constant 0 : index
    %c192_1222 = arith.constant 192 : index
    %1932 = vector.load %arg5[%c0_1219, %c1_1220, %c0_1221, %c192_1222] : memref<1x4x1x256xf32, #tpu.memory_space<vmem>>, vector<1x1x1x16xf32>
    %1933 = vector.shape_cast %1932 : vector<1x1x1x16xf32> to vector<1x16xf32>
    %c0_1223 = arith.constant 0 : index
    %c1_1224 = arith.constant 1 : index
    %c0_1225 = arith.constant 0 : index
    %c208_1226 = arith.constant 208 : index
    %1934 = vector.load %arg5[%c0_1223, %c1_1224, %c0_1225, %c208_1226] : memref<1x4x1x256xf32, #tpu.memory_space<vmem>>, vector<1x1x1x16xf32>
    %1935 = vector.shape_cast %1934 : vector<1x1x1x16xf32> to vector<1x16xf32>
    %c0_1227 = arith.constant 0 : index
    %c1_1228 = arith.constant 1 : index
    %1936 = memref.load %arg2[%c0_1227, %c1_1228] : memref<8x4xf32, #tpu.memory_space<smem>>
    %1937 = vector.broadcast %1936 : f32 to vector<1x16xf32>
    %1938 = arith.mulf %1937, %1933 : vector<1x16xf32>
    %c0_1229 = arith.constant 0 : index
    %c1_1230 = arith.constant 1 : index
    %1939 = memref.load %arg3[%c0_1229, %c1_1230] : memref<8x4xf32, #tpu.memory_space<smem>>
    %1940 = vector.broadcast %1939 : f32 to vector<1x16xf32>
    %1941 = arith.mulf %1940, %1935 : vector<1x16xf32>
    %1942 = arith.addf %1938, %1941 : vector<1x16xf32>
    %1943 = arith.addf %1882, %1942 : vector<1x16xf32>
    %c1_1231 = arith.constant 1 : index
    %c1_1232 = arith.constant 1 : index
    %1944 = memref.load %arg2[%c1_1231, %c1_1232] : memref<8x4xf32, #tpu.memory_space<smem>>
    %1945 = vector.broadcast %1944 : f32 to vector<1x16xf32>
    %1946 = arith.mulf %1945, %1933 : vector<1x16xf32>
    %c1_1233 = arith.constant 1 : index
    %c1_1234 = arith.constant 1 : index
    %1947 = memref.load %arg3[%c1_1233, %c1_1234] : memref<8x4xf32, #tpu.memory_space<smem>>
    %1948 = vector.broadcast %1947 : f32 to vector<1x16xf32>
    %1949 = arith.mulf %1948, %1935 : vector<1x16xf32>
    %1950 = arith.addf %1946, %1949 : vector<1x16xf32>
    %1951 = arith.addf %1889, %1950 : vector<1x16xf32>
    %c2_1235 = arith.constant 2 : index
    %c1_1236 = arith.constant 1 : index
    %1952 = memref.load %arg2[%c2_1235, %c1_1236] : memref<8x4xf32, #tpu.memory_space<smem>>
    %1953 = vector.broadcast %1952 : f32 to vector<1x16xf32>
    %1954 = arith.mulf %1953, %1933 : vector<1x16xf32>
    %c2_1237 = arith.constant 2 : index
    %c1_1238 = arith.constant 1 : index
    %1955 = memref.load %arg3[%c2_1237, %c1_1238] : memref<8x4xf32, #tpu.memory_space<smem>>
    %1956 = vector.broadcast %1955 : f32 to vector<1x16xf32>
    %1957 = arith.mulf %1956, %1935 : vector<1x16xf32>
    %1958 = arith.addf %1954, %1957 : vector<1x16xf32>
    %1959 = arith.addf %1896, %1958 : vector<1x16xf32>
    %c3_1239 = arith.constant 3 : index
    %c1_1240 = arith.constant 1 : index
    %1960 = memref.load %arg2[%c3_1239, %c1_1240] : memref<8x4xf32, #tpu.memory_space<smem>>
    %1961 = vector.broadcast %1960 : f32 to vector<1x16xf32>
    %1962 = arith.mulf %1961, %1933 : vector<1x16xf32>
    %c3_1241 = arith.constant 3 : index
    %c1_1242 = arith.constant 1 : index
    %1963 = memref.load %arg3[%c3_1241, %c1_1242] : memref<8x4xf32, #tpu.memory_space<smem>>
    %1964 = vector.broadcast %1963 : f32 to vector<1x16xf32>
    %1965 = arith.mulf %1964, %1935 : vector<1x16xf32>
    %1966 = arith.addf %1962, %1965 : vector<1x16xf32>
    %1967 = arith.addf %1903, %1966 : vector<1x16xf32>
    %c4_1243 = arith.constant 4 : index
    %c1_1244 = arith.constant 1 : index
    %1968 = memref.load %arg2[%c4_1243, %c1_1244] : memref<8x4xf32, #tpu.memory_space<smem>>
    %1969 = vector.broadcast %1968 : f32 to vector<1x16xf32>
    %1970 = arith.mulf %1969, %1933 : vector<1x16xf32>
    %c4_1245 = arith.constant 4 : index
    %c1_1246 = arith.constant 1 : index
    %1971 = memref.load %arg3[%c4_1245, %c1_1246] : memref<8x4xf32, #tpu.memory_space<smem>>
    %1972 = vector.broadcast %1971 : f32 to vector<1x16xf32>
    %1973 = arith.mulf %1972, %1935 : vector<1x16xf32>
    %1974 = arith.addf %1970, %1973 : vector<1x16xf32>
    %1975 = arith.addf %1910, %1974 : vector<1x16xf32>
    %c5_1247 = arith.constant 5 : index
    %c1_1248 = arith.constant 1 : index
    %1976 = memref.load %arg2[%c5_1247, %c1_1248] : memref<8x4xf32, #tpu.memory_space<smem>>
    %1977 = vector.broadcast %1976 : f32 to vector<1x16xf32>
    %1978 = arith.mulf %1977, %1933 : vector<1x16xf32>
    %c5_1249 = arith.constant 5 : index
    %c1_1250 = arith.constant 1 : index
    %1979 = memref.load %arg3[%c5_1249, %c1_1250] : memref<8x4xf32, #tpu.memory_space<smem>>
    %1980 = vector.broadcast %1979 : f32 to vector<1x16xf32>
    %1981 = arith.mulf %1980, %1935 : vector<1x16xf32>
    %1982 = arith.addf %1978, %1981 : vector<1x16xf32>
    %1983 = arith.addf %1917, %1982 : vector<1x16xf32>
    %c6_1251 = arith.constant 6 : index
    %c1_1252 = arith.constant 1 : index
    %1984 = memref.load %arg2[%c6_1251, %c1_1252] : memref<8x4xf32, #tpu.memory_space<smem>>
    %1985 = vector.broadcast %1984 : f32 to vector<1x16xf32>
    %1986 = arith.mulf %1985, %1933 : vector<1x16xf32>
    %c6_1253 = arith.constant 6 : index
    %c1_1254 = arith.constant 1 : index
    %1987 = memref.load %arg3[%c6_1253, %c1_1254] : memref<8x4xf32, #tpu.memory_space<smem>>
    %1988 = vector.broadcast %1987 : f32 to vector<1x16xf32>
    %1989 = arith.mulf %1988, %1935 : vector<1x16xf32>
    %1990 = arith.addf %1986, %1989 : vector<1x16xf32>
    %1991 = arith.addf %1924, %1990 : vector<1x16xf32>
    %c7_1255 = arith.constant 7 : index
    %c1_1256 = arith.constant 1 : index
    %1992 = memref.load %arg2[%c7_1255, %c1_1256] : memref<8x4xf32, #tpu.memory_space<smem>>
    %1993 = vector.broadcast %1992 : f32 to vector<1x16xf32>
    %1994 = arith.mulf %1993, %1933 : vector<1x16xf32>
    %c7_1257 = arith.constant 7 : index
    %c1_1258 = arith.constant 1 : index
    %1995 = memref.load %arg3[%c7_1257, %c1_1258] : memref<8x4xf32, #tpu.memory_space<smem>>
    %1996 = vector.broadcast %1995 : f32 to vector<1x16xf32>
    %1997 = arith.mulf %1996, %1935 : vector<1x16xf32>
    %1998 = arith.addf %1994, %1997 : vector<1x16xf32>
    %1999 = arith.addf %1931, %1998 : vector<1x16xf32>
    %c0_1259 = arith.constant 0 : index
    %c2_1260 = arith.constant 2 : index
    %c0_1261 = arith.constant 0 : index
    %c192_1262 = arith.constant 192 : index
    %2000 = vector.load %arg5[%c0_1259, %c2_1260, %c0_1261, %c192_1262] : memref<1x4x1x256xf32, #tpu.memory_space<vmem>>, vector<1x1x1x16xf32>
    %2001 = vector.shape_cast %2000 : vector<1x1x1x16xf32> to vector<1x16xf32>
    %c0_1263 = arith.constant 0 : index
    %c2_1264 = arith.constant 2 : index
    %c0_1265 = arith.constant 0 : index
    %c208_1266 = arith.constant 208 : index
    %2002 = vector.load %arg5[%c0_1263, %c2_1264, %c0_1265, %c208_1266] : memref<1x4x1x256xf32, #tpu.memory_space<vmem>>, vector<1x1x1x16xf32>
    %2003 = vector.shape_cast %2002 : vector<1x1x1x16xf32> to vector<1x16xf32>
    %c0_1267 = arith.constant 0 : index
    %c2_1268 = arith.constant 2 : index
    %2004 = memref.load %arg2[%c0_1267, %c2_1268] : memref<8x4xf32, #tpu.memory_space<smem>>
    %2005 = vector.broadcast %2004 : f32 to vector<1x16xf32>
    %2006 = arith.mulf %2005, %2001 : vector<1x16xf32>
    %c0_1269 = arith.constant 0 : index
    %c2_1270 = arith.constant 2 : index
    %2007 = memref.load %arg3[%c0_1269, %c2_1270] : memref<8x4xf32, #tpu.memory_space<smem>>
    %2008 = vector.broadcast %2007 : f32 to vector<1x16xf32>
    %2009 = arith.mulf %2008, %2003 : vector<1x16xf32>
    %2010 = arith.addf %2006, %2009 : vector<1x16xf32>
    %2011 = arith.addf %1943, %2010 : vector<1x16xf32>
    %c1_1271 = arith.constant 1 : index
    %c2_1272 = arith.constant 2 : index
    %2012 = memref.load %arg2[%c1_1271, %c2_1272] : memref<8x4xf32, #tpu.memory_space<smem>>
    %2013 = vector.broadcast %2012 : f32 to vector<1x16xf32>
    %2014 = arith.mulf %2013, %2001 : vector<1x16xf32>
    %c1_1273 = arith.constant 1 : index
    %c2_1274 = arith.constant 2 : index
    %2015 = memref.load %arg3[%c1_1273, %c2_1274] : memref<8x4xf32, #tpu.memory_space<smem>>
    %2016 = vector.broadcast %2015 : f32 to vector<1x16xf32>
    %2017 = arith.mulf %2016, %2003 : vector<1x16xf32>
    %2018 = arith.addf %2014, %2017 : vector<1x16xf32>
    %2019 = arith.addf %1951, %2018 : vector<1x16xf32>
    %c2_1275 = arith.constant 2 : index
    %c2_1276 = arith.constant 2 : index
    %2020 = memref.load %arg2[%c2_1275, %c2_1276] : memref<8x4xf32, #tpu.memory_space<smem>>
    %2021 = vector.broadcast %2020 : f32 to vector<1x16xf32>
    %2022 = arith.mulf %2021, %2001 : vector<1x16xf32>
    %c2_1277 = arith.constant 2 : index
    %c2_1278 = arith.constant 2 : index
    %2023 = memref.load %arg3[%c2_1277, %c2_1278] : memref<8x4xf32, #tpu.memory_space<smem>>
    %2024 = vector.broadcast %2023 : f32 to vector<1x16xf32>
    %2025 = arith.mulf %2024, %2003 : vector<1x16xf32>
    %2026 = arith.addf %2022, %2025 : vector<1x16xf32>
    %2027 = arith.addf %1959, %2026 : vector<1x16xf32>
    %c3_1279 = arith.constant 3 : index
    %c2_1280 = arith.constant 2 : index
    %2028 = memref.load %arg2[%c3_1279, %c2_1280] : memref<8x4xf32, #tpu.memory_space<smem>>
    %2029 = vector.broadcast %2028 : f32 to vector<1x16xf32>
    %2030 = arith.mulf %2029, %2001 : vector<1x16xf32>
    %c3_1281 = arith.constant 3 : index
    %c2_1282 = arith.constant 2 : index
    %2031 = memref.load %arg3[%c3_1281, %c2_1282] : memref<8x4xf32, #tpu.memory_space<smem>>
    %2032 = vector.broadcast %2031 : f32 to vector<1x16xf32>
    %2033 = arith.mulf %2032, %2003 : vector<1x16xf32>
    %2034 = arith.addf %2030, %2033 : vector<1x16xf32>
    %2035 = arith.addf %1967, %2034 : vector<1x16xf32>
    %c4_1283 = arith.constant 4 : index
    %c2_1284 = arith.constant 2 : index
    %2036 = memref.load %arg2[%c4_1283, %c2_1284] : memref<8x4xf32, #tpu.memory_space<smem>>
    %2037 = vector.broadcast %2036 : f32 to vector<1x16xf32>
    %2038 = arith.mulf %2037, %2001 : vector<1x16xf32>
    %c4_1285 = arith.constant 4 : index
    %c2_1286 = arith.constant 2 : index
    %2039 = memref.load %arg3[%c4_1285, %c2_1286] : memref<8x4xf32, #tpu.memory_space<smem>>
    %2040 = vector.broadcast %2039 : f32 to vector<1x16xf32>
    %2041 = arith.mulf %2040, %2003 : vector<1x16xf32>
    %2042 = arith.addf %2038, %2041 : vector<1x16xf32>
    %2043 = arith.addf %1975, %2042 : vector<1x16xf32>
    %c5_1287 = arith.constant 5 : index
    %c2_1288 = arith.constant 2 : index
    %2044 = memref.load %arg2[%c5_1287, %c2_1288] : memref<8x4xf32, #tpu.memory_space<smem>>
    %2045 = vector.broadcast %2044 : f32 to vector<1x16xf32>
    %2046 = arith.mulf %2045, %2001 : vector<1x16xf32>
    %c5_1289 = arith.constant 5 : index
    %c2_1290 = arith.constant 2 : index
    %2047 = memref.load %arg3[%c5_1289, %c2_1290] : memref<8x4xf32, #tpu.memory_space<smem>>
    %2048 = vector.broadcast %2047 : f32 to vector<1x16xf32>
    %2049 = arith.mulf %2048, %2003 : vector<1x16xf32>
    %2050 = arith.addf %2046, %2049 : vector<1x16xf32>
    %2051 = arith.addf %1983, %2050 : vector<1x16xf32>
    %c6_1291 = arith.constant 6 : index
    %c2_1292 = arith.constant 2 : index
    %2052 = memref.load %arg2[%c6_1291, %c2_1292] : memref<8x4xf32, #tpu.memory_space<smem>>
    %2053 = vector.broadcast %2052 : f32 to vector<1x16xf32>
    %2054 = arith.mulf %2053, %2001 : vector<1x16xf32>
    %c6_1293 = arith.constant 6 : index
    %c2_1294 = arith.constant 2 : index
    %2055 = memref.load %arg3[%c6_1293, %c2_1294] : memref<8x4xf32, #tpu.memory_space<smem>>
    %2056 = vector.broadcast %2055 : f32 to vector<1x16xf32>
    %2057 = arith.mulf %2056, %2003 : vector<1x16xf32>
    %2058 = arith.addf %2054, %2057 : vector<1x16xf32>
    %2059 = arith.addf %1991, %2058 : vector<1x16xf32>
    %c7_1295 = arith.constant 7 : index
    %c2_1296 = arith.constant 2 : index
    %2060 = memref.load %arg2[%c7_1295, %c2_1296] : memref<8x4xf32, #tpu.memory_space<smem>>
    %2061 = vector.broadcast %2060 : f32 to vector<1x16xf32>
    %2062 = arith.mulf %2061, %2001 : vector<1x16xf32>
    %c7_1297 = arith.constant 7 : index
    %c2_1298 = arith.constant 2 : index
    %2063 = memref.load %arg3[%c7_1297, %c2_1298] : memref<8x4xf32, #tpu.memory_space<smem>>
    %2064 = vector.broadcast %2063 : f32 to vector<1x16xf32>
    %2065 = arith.mulf %2064, %2003 : vector<1x16xf32>
    %2066 = arith.addf %2062, %2065 : vector<1x16xf32>
    %2067 = arith.addf %1999, %2066 : vector<1x16xf32>
    %c0_1299 = arith.constant 0 : index
    %c3_1300 = arith.constant 3 : index
    %c0_1301 = arith.constant 0 : index
    %c192_1302 = arith.constant 192 : index
    %2068 = vector.load %arg5[%c0_1299, %c3_1300, %c0_1301, %c192_1302] : memref<1x4x1x256xf32, #tpu.memory_space<vmem>>, vector<1x1x1x16xf32>
    %2069 = vector.shape_cast %2068 : vector<1x1x1x16xf32> to vector<1x16xf32>
    %c0_1303 = arith.constant 0 : index
    %c3_1304 = arith.constant 3 : index
    %c0_1305 = arith.constant 0 : index
    %c208_1306 = arith.constant 208 : index
    %2070 = vector.load %arg5[%c0_1303, %c3_1304, %c0_1305, %c208_1306] : memref<1x4x1x256xf32, #tpu.memory_space<vmem>>, vector<1x1x1x16xf32>
    %2071 = vector.shape_cast %2070 : vector<1x1x1x16xf32> to vector<1x16xf32>
    %c0_1307 = arith.constant 0 : index
    %c3_1308 = arith.constant 3 : index
    %2072 = memref.load %arg2[%c0_1307, %c3_1308] : memref<8x4xf32, #tpu.memory_space<smem>>
    %2073 = vector.broadcast %2072 : f32 to vector<1x16xf32>
    %2074 = arith.mulf %2073, %2069 : vector<1x16xf32>
    %c0_1309 = arith.constant 0 : index
    %c3_1310 = arith.constant 3 : index
    %2075 = memref.load %arg3[%c0_1309, %c3_1310] : memref<8x4xf32, #tpu.memory_space<smem>>
    %2076 = vector.broadcast %2075 : f32 to vector<1x16xf32>
    %2077 = arith.mulf %2076, %2071 : vector<1x16xf32>
    %2078 = arith.addf %2074, %2077 : vector<1x16xf32>
    %2079 = arith.addf %2011, %2078 : vector<1x16xf32>
    %c1_1311 = arith.constant 1 : index
    %c3_1312 = arith.constant 3 : index
    %2080 = memref.load %arg2[%c1_1311, %c3_1312] : memref<8x4xf32, #tpu.memory_space<smem>>
    %2081 = vector.broadcast %2080 : f32 to vector<1x16xf32>
    %2082 = arith.mulf %2081, %2069 : vector<1x16xf32>
    %c1_1313 = arith.constant 1 : index
    %c3_1314 = arith.constant 3 : index
    %2083 = memref.load %arg3[%c1_1313, %c3_1314] : memref<8x4xf32, #tpu.memory_space<smem>>
    %2084 = vector.broadcast %2083 : f32 to vector<1x16xf32>
    %2085 = arith.mulf %2084, %2071 : vector<1x16xf32>
    %2086 = arith.addf %2082, %2085 : vector<1x16xf32>
    %2087 = arith.addf %2019, %2086 : vector<1x16xf32>
    %c2_1315 = arith.constant 2 : index
    %c3_1316 = arith.constant 3 : index
    %2088 = memref.load %arg2[%c2_1315, %c3_1316] : memref<8x4xf32, #tpu.memory_space<smem>>
    %2089 = vector.broadcast %2088 : f32 to vector<1x16xf32>
    %2090 = arith.mulf %2089, %2069 : vector<1x16xf32>
    %c2_1317 = arith.constant 2 : index
    %c3_1318 = arith.constant 3 : index
    %2091 = memref.load %arg3[%c2_1317, %c3_1318] : memref<8x4xf32, #tpu.memory_space<smem>>
    %2092 = vector.broadcast %2091 : f32 to vector<1x16xf32>
    %2093 = arith.mulf %2092, %2071 : vector<1x16xf32>
    %2094 = arith.addf %2090, %2093 : vector<1x16xf32>
    %2095 = arith.addf %2027, %2094 : vector<1x16xf32>
    %c3_1319 = arith.constant 3 : index
    %c3_1320 = arith.constant 3 : index
    %2096 = memref.load %arg2[%c3_1319, %c3_1320] : memref<8x4xf32, #tpu.memory_space<smem>>
    %2097 = vector.broadcast %2096 : f32 to vector<1x16xf32>
    %2098 = arith.mulf %2097, %2069 : vector<1x16xf32>
    %c3_1321 = arith.constant 3 : index
    %c3_1322 = arith.constant 3 : index
    %2099 = memref.load %arg3[%c3_1321, %c3_1322] : memref<8x4xf32, #tpu.memory_space<smem>>
    %2100 = vector.broadcast %2099 : f32 to vector<1x16xf32>
    %2101 = arith.mulf %2100, %2071 : vector<1x16xf32>
    %2102 = arith.addf %2098, %2101 : vector<1x16xf32>
    %2103 = arith.addf %2035, %2102 : vector<1x16xf32>
    %c4_1323 = arith.constant 4 : index
    %c3_1324 = arith.constant 3 : index
    %2104 = memref.load %arg2[%c4_1323, %c3_1324] : memref<8x4xf32, #tpu.memory_space<smem>>
    %2105 = vector.broadcast %2104 : f32 to vector<1x16xf32>
    %2106 = arith.mulf %2105, %2069 : vector<1x16xf32>
    %c4_1325 = arith.constant 4 : index
    %c3_1326 = arith.constant 3 : index
    %2107 = memref.load %arg3[%c4_1325, %c3_1326] : memref<8x4xf32, #tpu.memory_space<smem>>
    %2108 = vector.broadcast %2107 : f32 to vector<1x16xf32>
    %2109 = arith.mulf %2108, %2071 : vector<1x16xf32>
    %2110 = arith.addf %2106, %2109 : vector<1x16xf32>
    %2111 = arith.addf %2043, %2110 : vector<1x16xf32>
    %c5_1327 = arith.constant 5 : index
    %c3_1328 = arith.constant 3 : index
    %2112 = memref.load %arg2[%c5_1327, %c3_1328] : memref<8x4xf32, #tpu.memory_space<smem>>
    %2113 = vector.broadcast %2112 : f32 to vector<1x16xf32>
    %2114 = arith.mulf %2113, %2069 : vector<1x16xf32>
    %c5_1329 = arith.constant 5 : index
    %c3_1330 = arith.constant 3 : index
    %2115 = memref.load %arg3[%c5_1329, %c3_1330] : memref<8x4xf32, #tpu.memory_space<smem>>
    %2116 = vector.broadcast %2115 : f32 to vector<1x16xf32>
    %2117 = arith.mulf %2116, %2071 : vector<1x16xf32>
    %2118 = arith.addf %2114, %2117 : vector<1x16xf32>
    %2119 = arith.addf %2051, %2118 : vector<1x16xf32>
    %c6_1331 = arith.constant 6 : index
    %c3_1332 = arith.constant 3 : index
    %2120 = memref.load %arg2[%c6_1331, %c3_1332] : memref<8x4xf32, #tpu.memory_space<smem>>
    %2121 = vector.broadcast %2120 : f32 to vector<1x16xf32>
    %2122 = arith.mulf %2121, %2069 : vector<1x16xf32>
    %c6_1333 = arith.constant 6 : index
    %c3_1334 = arith.constant 3 : index
    %2123 = memref.load %arg3[%c6_1333, %c3_1334] : memref<8x4xf32, #tpu.memory_space<smem>>
    %2124 = vector.broadcast %2123 : f32 to vector<1x16xf32>
    %2125 = arith.mulf %2124, %2071 : vector<1x16xf32>
    %2126 = arith.addf %2122, %2125 : vector<1x16xf32>
    %2127 = arith.addf %2059, %2126 : vector<1x16xf32>
    %c7_1335 = arith.constant 7 : index
    %c3_1336 = arith.constant 3 : index
    %2128 = memref.load %arg2[%c7_1335, %c3_1336] : memref<8x4xf32, #tpu.memory_space<smem>>
    %2129 = vector.broadcast %2128 : f32 to vector<1x16xf32>
    %2130 = arith.mulf %2129, %2069 : vector<1x16xf32>
    %c7_1337 = arith.constant 7 : index
    %c3_1338 = arith.constant 3 : index
    %2131 = memref.load %arg3[%c7_1337, %c3_1338] : memref<8x4xf32, #tpu.memory_space<smem>>
    %2132 = vector.broadcast %2131 : f32 to vector<1x16xf32>
    %2133 = arith.mulf %2132, %2071 : vector<1x16xf32>
    %2134 = arith.addf %2130, %2133 : vector<1x16xf32>
    %2135 = arith.addf %2067, %2134 : vector<1x16xf32>
    %c0_1339 = arith.constant 0 : index
    %2136 = memref.load %arg4[%c0_1339] : memref<8xf32, #tpu.memory_space<smem>>
    %2137 = vector.broadcast %2136 : f32 to vector<1x16xf32>
    %2138 = arith.addf %2079, %2137 : vector<1x16xf32>
    %c0_1340 = arith.constant 0 : index
    %c0_1341 = arith.constant 0 : index
    %c0_1342 = arith.constant 0 : index
    %c96_1343 = arith.constant 96 : index
    %2139 = vector.load %arg6[%c0_1340, %c0_1341, %c0_1342, %c96_1343] : memref<1x8x1x128xf32, #tpu.memory_space<vmem>>, vector<1x1x1x16xf32>
    %2140 = vector.shape_cast %2139 : vector<1x1x1x16xf32> to vector<1x16xf32>
    %2141 = vector.shape_cast %2138 : vector<1x16xf32> to vector<1x1x1x16xf32>
    tpu.vector_store %arg6[%c0_1340, %c0_1341, %c0_1342, %c96_1343], %2141 {strides = array<i32>} : memref<1x8x1x128xf32, #tpu.memory_space<vmem>>, vector<1x1x1x16xf32>,
    %c1_1344 = arith.constant 1 : index
    %2142 = memref.load %arg4[%c1_1344] : memref<8xf32, #tpu.memory_space<smem>>
    %2143 = vector.broadcast %2142 : f32 to vector<1x16xf32>
    %2144 = arith.addf %2087, %2143 : vector<1x16xf32>
    %c0_1345 = arith.constant 0 : index
    %c1_1346 = arith.constant 1 : index
    %c0_1347 = arith.constant 0 : index
    %c96_1348 = arith.constant 96 : index
    %2145 = vector.load %arg6[%c0_1345, %c1_1346, %c0_1347, %c96_1348] : memref<1x8x1x128xf32, #tpu.memory_space<vmem>>, vector<1x1x1x16xf32>
    %2146 = vector.shape_cast %2145 : vector<1x1x1x16xf32> to vector<1x16xf32>
    %2147 = vector.shape_cast %2144 : vector<1x16xf32> to vector<1x1x1x16xf32>
    tpu.vector_store %arg6[%c0_1345, %c1_1346, %c0_1347, %c96_1348], %2147 {strides = array<i32>} : memref<1x8x1x128xf32, #tpu.memory_space<vmem>>, vector<1x1x1x16xf32>,
    %c2_1349 = arith.constant 2 : index
    %2148 = memref.load %arg4[%c2_1349] : memref<8xf32, #tpu.memory_space<smem>>
    %2149 = vector.broadcast %2148 : f32 to vector<1x16xf32>
    %2150 = arith.addf %2095, %2149 : vector<1x16xf32>
    %c0_1350 = arith.constant 0 : index
    %c2_1351 = arith.constant 2 : index
    %c0_1352 = arith.constant 0 : index
    %c96_1353 = arith.constant 96 : index
    %2151 = vector.load %arg6[%c0_1350, %c2_1351, %c0_1352, %c96_1353] : memref<1x8x1x128xf32, #tpu.memory_space<vmem>>, vector<1x1x1x16xf32>
    %2152 = vector.shape_cast %2151 : vector<1x1x1x16xf32> to vector<1x16xf32>
    %2153 = vector.shape_cast %2150 : vector<1x16xf32> to vector<1x1x1x16xf32>
    tpu.vector_store %arg6[%c0_1350, %c2_1351, %c0_1352, %c96_1353], %2153 {strides = array<i32>} : memref<1x8x1x128xf32, #tpu.memory_space<vmem>>, vector<1x1x1x16xf32>,
    %c3_1354 = arith.constant 3 : index
    %2154 = memref.load %arg4[%c3_1354] : memref<8xf32, #tpu.memory_space<smem>>
    %2155 = vector.broadcast %2154 : f32 to vector<1x16xf32>
    %2156 = arith.addf %2103, %2155 : vector<1x16xf32>
    %c0_1355 = arith.constant 0 : index
    %c3_1356 = arith.constant 3 : index
    %c0_1357 = arith.constant 0 : index
    %c96_1358 = arith.constant 96 : index
    %2157 = vector.load %arg6[%c0_1355, %c3_1356, %c0_1357, %c96_1358] : memref<1x8x1x128xf32, #tpu.memory_space<vmem>>, vector<1x1x1x16xf32>
    %2158 = vector.shape_cast %2157 : vector<1x1x1x16xf32> to vector<1x16xf32>
    %2159 = vector.shape_cast %2156 : vector<1x16xf32> to vector<1x1x1x16xf32>
    tpu.vector_store %arg6[%c0_1355, %c3_1356, %c0_1357, %c96_1358], %2159 {strides = array<i32>} : memref<1x8x1x128xf32, #tpu.memory_space<vmem>>, vector<1x1x1x16xf32>,
    %c4_1359 = arith.constant 4 : index
    %2160 = memref.load %arg4[%c4_1359] : memref<8xf32, #tpu.memory_space<smem>>
    %2161 = vector.broadcast %2160 : f32 to vector<1x16xf32>
    %2162 = arith.addf %2111, %2161 : vector<1x16xf32>
    %c0_1360 = arith.constant 0 : index
    %c4_1361 = arith.constant 4 : index
    %c0_1362 = arith.constant 0 : index
    %c96_1363 = arith.constant 96 : index
    %2163 = vector.load %arg6[%c0_1360, %c4_1361, %c0_1362, %c96_1363] : memref<1x8x1x128xf32, #tpu.memory_space<vmem>>, vector<1x1x1x16xf32>
    %2164 = vector.shape_cast %2163 : vector<1x1x1x16xf32> to vector<1x16xf32>
    %2165 = vector.shape_cast %2162 : vector<1x16xf32> to vector<1x1x1x16xf32>
    tpu.vector_store %arg6[%c0_1360, %c4_1361, %c0_1362, %c96_1363], %2165 {strides = array<i32>} : memref<1x8x1x128xf32, #tpu.memory_space<vmem>>, vector<1x1x1x16xf32>,
    %c5_1364 = arith.constant 5 : index
    %2166 = memref.load %arg4[%c5_1364] : memref<8xf32, #tpu.memory_space<smem>>
    %2167 = vector.broadcast %2166 : f32 to vector<1x16xf32>
    %2168 = arith.addf %2119, %2167 : vector<1x16xf32>
    %c0_1365 = arith.constant 0 : index
    %c5_1366 = arith.constant 5 : index
    %c0_1367 = arith.constant 0 : index
    %c96_1368 = arith.constant 96 : index
    %2169 = vector.load %arg6[%c0_1365, %c5_1366, %c0_1367, %c96_1368] : memref<1x8x1x128xf32, #tpu.memory_space<vmem>>, vector<1x1x1x16xf32>
    %2170 = vector.shape_cast %2169 : vector<1x1x1x16xf32> to vector<1x16xf32>
    %2171 = vector.shape_cast %2168 : vector<1x16xf32> to vector<1x1x1x16xf32>
    tpu.vector_store %arg6[%c0_1365, %c5_1366, %c0_1367, %c96_1368], %2171 {strides = array<i32>} : memref<1x8x1x128xf32, #tpu.memory_space<vmem>>, vector<1x1x1x16xf32>,
    %c6_1369 = arith.constant 6 : index
    %2172 = memref.load %arg4[%c6_1369] : memref<8xf32, #tpu.memory_space<smem>>
    %2173 = vector.broadcast %2172 : f32 to vector<1x16xf32>
    %2174 = arith.addf %2127, %2173 : vector<1x16xf32>
    %c0_1370 = arith.constant 0 : index
    %c6_1371 = arith.constant 6 : index
    %c0_1372 = arith.constant 0 : index
    %c96_1373 = arith.constant 96 : index
    %2175 = vector.load %arg6[%c0_1370, %c6_1371, %c0_1372, %c96_1373] : memref<1x8x1x128xf32, #tpu.memory_space<vmem>>, vector<1x1x1x16xf32>
    %2176 = vector.shape_cast %2175 : vector<1x1x1x16xf32> to vector<1x16xf32>
    %2177 = vector.shape_cast %2174 : vector<1x16xf32> to vector<1x1x1x16xf32>
    tpu.vector_store %arg6[%c0_1370, %c6_1371, %c0_1372, %c96_1373], %2177 {strides = array<i32>} : memref<1x8x1x128xf32, #tpu.memory_space<vmem>>, vector<1x1x1x16xf32>,
    %c7_1374 = arith.constant 7 : index
    %2178 = memref.load %arg4[%c7_1374] : memref<8xf32, #tpu.memory_space<smem>>
    %2179 = vector.broadcast %2178 : f32 to vector<1x16xf32>
    %2180 = arith.addf %2135, %2179 : vector<1x16xf32>
    %c0_1375 = arith.constant 0 : index
    %c7_1376 = arith.constant 7 : index
    %c0_1377 = arith.constant 0 : index
    %c96_1378 = arith.constant 96 : index
    %2181 = vector.load %arg6[%c0_1375, %c7_1376, %c0_1377, %c96_1378] : memref<1x8x1x128xf32, #tpu.memory_space<vmem>>, vector<1x1x1x16xf32>
    %2182 = vector.shape_cast %2181 : vector<1x1x1x16xf32> to vector<1x16xf32>
    %2183 = vector.shape_cast %2180 : vector<1x16xf32> to vector<1x1x1x16xf32>
    tpu.vector_store %arg6[%c0_1375, %c7_1376, %c0_1377, %c96_1378], %2183 {strides = array<i32>} : memref<1x8x1x128xf32, #tpu.memory_space<vmem>>, vector<1x1x1x16xf32>,
    %c0_1379 = arith.constant 0 : index
    %c0_1380 = arith.constant 0 : index
    %c0_1381 = arith.constant 0 : index
    %c224 = arith.constant 224 : index
    %2184 = vector.load %arg5[%c0_1379, %c0_1380, %c0_1381, %c224] : memref<1x4x1x256xf32, #tpu.memory_space<vmem>>, vector<1x1x1x16xf32>
    %2185 = vector.shape_cast %2184 : vector<1x1x1x16xf32> to vector<1x16xf32>
    %c0_1382 = arith.constant 0 : index
    %c0_1383 = arith.constant 0 : index
    %c0_1384 = arith.constant 0 : index
    %c240 = arith.constant 240 : index
    %2186 = vector.load %arg5[%c0_1382, %c0_1383, %c0_1384, %c240] : memref<1x4x1x256xf32, #tpu.memory_space<vmem>>, vector<1x1x1x16xf32>
    %2187 = vector.shape_cast %2186 : vector<1x1x1x16xf32> to vector<1x16xf32>
    %c0_1385 = arith.constant 0 : index
    %c0_1386 = arith.constant 0 : index
    %2188 = memref.load %arg2[%c0_1385, %c0_1386] : memref<8x4xf32, #tpu.memory_space<smem>>
    %2189 = vector.broadcast %2188 : f32 to vector<1x16xf32>
    %2190 = arith.mulf %2189, %2185 : vector<1x16xf32>
    %c0_1387 = arith.constant 0 : index
    %c0_1388 = arith.constant 0 : index
    %2191 = memref.load %arg3[%c0_1387, %c0_1388] : memref<8x4xf32, #tpu.memory_space<smem>>
    %2192 = vector.broadcast %2191 : f32 to vector<1x16xf32>
    %2193 = arith.mulf %2192, %2187 : vector<1x16xf32>
    %2194 = arith.addf %2190, %2193 : vector<1x16xf32>
    %c1_1389 = arith.constant 1 : index
    %c0_1390 = arith.constant 0 : index
    %2195 = memref.load %arg2[%c1_1389, %c0_1390] : memref<8x4xf32, #tpu.memory_space<smem>>
    %2196 = vector.broadcast %2195 : f32 to vector<1x16xf32>
    %2197 = arith.mulf %2196, %2185 : vector<1x16xf32>
    %c1_1391 = arith.constant 1 : index
    %c0_1392 = arith.constant 0 : index
    %2198 = memref.load %arg3[%c1_1391, %c0_1392] : memref<8x4xf32, #tpu.memory_space<smem>>
    %2199 = vector.broadcast %2198 : f32 to vector<1x16xf32>
    %2200 = arith.mulf %2199, %2187 : vector<1x16xf32>
    %2201 = arith.addf %2197, %2200 : vector<1x16xf32>
    %c2_1393 = arith.constant 2 : index
    %c0_1394 = arith.constant 0 : index
    %2202 = memref.load %arg2[%c2_1393, %c0_1394] : memref<8x4xf32, #tpu.memory_space<smem>>
    %2203 = vector.broadcast %2202 : f32 to vector<1x16xf32>
    %2204 = arith.mulf %2203, %2185 : vector<1x16xf32>
    %c2_1395 = arith.constant 2 : index
    %c0_1396 = arith.constant 0 : index
    %2205 = memref.load %arg3[%c2_1395, %c0_1396] : memref<8x4xf32, #tpu.memory_space<smem>>
    %2206 = vector.broadcast %2205 : f32 to vector<1x16xf32>
    %2207 = arith.mulf %2206, %2187 : vector<1x16xf32>
    %2208 = arith.addf %2204, %2207 : vector<1x16xf32>
    %c3_1397 = arith.constant 3 : index
    %c0_1398 = arith.constant 0 : index
    %2209 = memref.load %arg2[%c3_1397, %c0_1398] : memref<8x4xf32, #tpu.memory_space<smem>>
    %2210 = vector.broadcast %2209 : f32 to vector<1x16xf32>
    %2211 = arith.mulf %2210, %2185 : vector<1x16xf32>
    %c3_1399 = arith.constant 3 : index
    %c0_1400 = arith.constant 0 : index
    %2212 = memref.load %arg3[%c3_1399, %c0_1400] : memref<8x4xf32, #tpu.memory_space<smem>>
    %2213 = vector.broadcast %2212 : f32 to vector<1x16xf32>
    %2214 = arith.mulf %2213, %2187 : vector<1x16xf32>
    %2215 = arith.addf %2211, %2214 : vector<1x16xf32>
    %c4_1401 = arith.constant 4 : index
    %c0_1402 = arith.constant 0 : index
    %2216 = memref.load %arg2[%c4_1401, %c0_1402] : memref<8x4xf32, #tpu.memory_space<smem>>
    %2217 = vector.broadcast %2216 : f32 to vector<1x16xf32>
    %2218 = arith.mulf %2217, %2185 : vector<1x16xf32>
    %c4_1403 = arith.constant 4 : index
    %c0_1404 = arith.constant 0 : index
    %2219 = memref.load %arg3[%c4_1403, %c0_1404] : memref<8x4xf32, #tpu.memory_space<smem>>
    %2220 = vector.broadcast %2219 : f32 to vector<1x16xf32>
    %2221 = arith.mulf %2220, %2187 : vector<1x16xf32>
    %2222 = arith.addf %2218, %2221 : vector<1x16xf32>
    %c5_1405 = arith.constant 5 : index
    %c0_1406 = arith.constant 0 : index
    %2223 = memref.load %arg2[%c5_1405, %c0_1406] : memref<8x4xf32, #tpu.memory_space<smem>>
    %2224 = vector.broadcast %2223 : f32 to vector<1x16xf32>
    %2225 = arith.mulf %2224, %2185 : vector<1x16xf32>
    %c5_1407 = arith.constant 5 : index
    %c0_1408 = arith.constant 0 : index
    %2226 = memref.load %arg3[%c5_1407, %c0_1408] : memref<8x4xf32, #tpu.memory_space<smem>>
    %2227 = vector.broadcast %2226 : f32 to vector<1x16xf32>
    %2228 = arith.mulf %2227, %2187 : vector<1x16xf32>
    %2229 = arith.addf %2225, %2228 : vector<1x16xf32>
    %c6_1409 = arith.constant 6 : index
    %c0_1410 = arith.constant 0 : index
    %2230 = memref.load %arg2[%c6_1409, %c0_1410] : memref<8x4xf32, #tpu.memory_space<smem>>
    %2231 = vector.broadcast %2230 : f32 to vector<1x16xf32>
    %2232 = arith.mulf %2231, %2185 : vector<1x16xf32>
    %c6_1411 = arith.constant 6 : index
    %c0_1412 = arith.constant 0 : index
    %2233 = memref.load %arg3[%c6_1411, %c0_1412] : memref<8x4xf32, #tpu.memory_space<smem>>
    %2234 = vector.broadcast %2233 : f32 to vector<1x16xf32>
    %2235 = arith.mulf %2234, %2187 : vector<1x16xf32>
    %2236 = arith.addf %2232, %2235 : vector<1x16xf32>
    %c7_1413 = arith.constant 7 : index
    %c0_1414 = arith.constant 0 : index
    %2237 = memref.load %arg2[%c7_1413, %c0_1414] : memref<8x4xf32, #tpu.memory_space<smem>>
    %2238 = vector.broadcast %2237 : f32 to vector<1x16xf32>
    %2239 = arith.mulf %2238, %2185 : vector<1x16xf32>
    %c7_1415 = arith.constant 7 : index
    %c0_1416 = arith.constant 0 : index
    %2240 = memref.load %arg3[%c7_1415, %c0_1416] : memref<8x4xf32, #tpu.memory_space<smem>>
    %2241 = vector.broadcast %2240 : f32 to vector<1x16xf32>
    %2242 = arith.mulf %2241, %2187 : vector<1x16xf32>
    %2243 = arith.addf %2239, %2242 : vector<1x16xf32>
    %c0_1417 = arith.constant 0 : index
    %c1_1418 = arith.constant 1 : index
    %c0_1419 = arith.constant 0 : index
    %c224_1420 = arith.constant 224 : index
    %2244 = vector.load %arg5[%c0_1417, %c1_1418, %c0_1419, %c224_1420] : memref<1x4x1x256xf32, #tpu.memory_space<vmem>>, vector<1x1x1x16xf32>
    %2245 = vector.shape_cast %2244 : vector<1x1x1x16xf32> to vector<1x16xf32>
    %c0_1421 = arith.constant 0 : index
    %c1_1422 = arith.constant 1 : index
    %c0_1423 = arith.constant 0 : index
    %c240_1424 = arith.constant 240 : index
    %2246 = vector.load %arg5[%c0_1421, %c1_1422, %c0_1423, %c240_1424] : memref<1x4x1x256xf32, #tpu.memory_space<vmem>>, vector<1x1x1x16xf32>
    %2247 = vector.shape_cast %2246 : vector<1x1x1x16xf32> to vector<1x16xf32>
    %c0_1425 = arith.constant 0 : index
    %c1_1426 = arith.constant 1 : index
    %2248 = memref.load %arg2[%c0_1425, %c1_1426] : memref<8x4xf32, #tpu.memory_space<smem>>
    %2249 = vector.broadcast %2248 : f32 to vector<1x16xf32>
    %2250 = arith.mulf %2249, %2245 : vector<1x16xf32>
    %c0_1427 = arith.constant 0 : index
    %c1_1428 = arith.constant 1 : index
    %2251 = memref.load %arg3[%c0_1427, %c1_1428] : memref<8x4xf32, #tpu.memory_space<smem>>
    %2252 = vector.broadcast %2251 : f32 to vector<1x16xf32>
    %2253 = arith.mulf %2252, %2247 : vector<1x16xf32>
    %2254 = arith.addf %2250, %2253 : vector<1x16xf32>
    %2255 = arith.addf %2194, %2254 : vector<1x16xf32>
    %c1_1429 = arith.constant 1 : index
    %c1_1430 = arith.constant 1 : index
    %2256 = memref.load %arg2[%c1_1429, %c1_1430] : memref<8x4xf32, #tpu.memory_space<smem>>
    %2257 = vector.broadcast %2256 : f32 to vector<1x16xf32>
    %2258 = arith.mulf %2257, %2245 : vector<1x16xf32>
    %c1_1431 = arith.constant 1 : index
    %c1_1432 = arith.constant 1 : index
    %2259 = memref.load %arg3[%c1_1431, %c1_1432] : memref<8x4xf32, #tpu.memory_space<smem>>
    %2260 = vector.broadcast %2259 : f32 to vector<1x16xf32>
    %2261 = arith.mulf %2260, %2247 : vector<1x16xf32>
    %2262 = arith.addf %2258, %2261 : vector<1x16xf32>
    %2263 = arith.addf %2201, %2262 : vector<1x16xf32>
    %c2_1433 = arith.constant 2 : index
    %c1_1434 = arith.constant 1 : index
    %2264 = memref.load %arg2[%c2_1433, %c1_1434] : memref<8x4xf32, #tpu.memory_space<smem>>
    %2265 = vector.broadcast %2264 : f32 to vector<1x16xf32>
    %2266 = arith.mulf %2265, %2245 : vector<1x16xf32>
    %c2_1435 = arith.constant 2 : index
    %c1_1436 = arith.constant 1 : index
    %2267 = memref.load %arg3[%c2_1435, %c1_1436] : memref<8x4xf32, #tpu.memory_space<smem>>
    %2268 = vector.broadcast %2267 : f32 to vector<1x16xf32>
    %2269 = arith.mulf %2268, %2247 : vector<1x16xf32>
    %2270 = arith.addf %2266, %2269 : vector<1x16xf32>
    %2271 = arith.addf %2208, %2270 : vector<1x16xf32>
    %c3_1437 = arith.constant 3 : index
    %c1_1438 = arith.constant 1 : index
    %2272 = memref.load %arg2[%c3_1437, %c1_1438] : memref<8x4xf32, #tpu.memory_space<smem>>
    %2273 = vector.broadcast %2272 : f32 to vector<1x16xf32>
    %2274 = arith.mulf %2273, %2245 : vector<1x16xf32>
    %c3_1439 = arith.constant 3 : index
    %c1_1440 = arith.constant 1 : index
    %2275 = memref.load %arg3[%c3_1439, %c1_1440] : memref<8x4xf32, #tpu.memory_space<smem>>
    %2276 = vector.broadcast %2275 : f32 to vector<1x16xf32>
    %2277 = arith.mulf %2276, %2247 : vector<1x16xf32>
    %2278 = arith.addf %2274, %2277 : vector<1x16xf32>
    %2279 = arith.addf %2215, %2278 : vector<1x16xf32>
    %c4_1441 = arith.constant 4 : index
    %c1_1442 = arith.constant 1 : index
    %2280 = memref.load %arg2[%c4_1441, %c1_1442] : memref<8x4xf32, #tpu.memory_space<smem>>
    %2281 = vector.broadcast %2280 : f32 to vector<1x16xf32>
    %2282 = arith.mulf %2281, %2245 : vector<1x16xf32>
    %c4_1443 = arith.constant 4 : index
    %c1_1444 = arith.constant 1 : index
    %2283 = memref.load %arg3[%c4_1443, %c1_1444] : memref<8x4xf32, #tpu.memory_space<smem>>
    %2284 = vector.broadcast %2283 : f32 to vector<1x16xf32>
    %2285 = arith.mulf %2284, %2247 : vector<1x16xf32>
    %2286 = arith.addf %2282, %2285 : vector<1x16xf32>
    %2287 = arith.addf %2222, %2286 : vector<1x16xf32>
    %c5_1445 = arith.constant 5 : index
    %c1_1446 = arith.constant 1 : index
    %2288 = memref.load %arg2[%c5_1445, %c1_1446] : memref<8x4xf32, #tpu.memory_space<smem>>
    %2289 = vector.broadcast %2288 : f32 to vector<1x16xf32>
    %2290 = arith.mulf %2289, %2245 : vector<1x16xf32>
    %c5_1447 = arith.constant 5 : index
    %c1_1448 = arith.constant 1 : index
    %2291 = memref.load %arg3[%c5_1447, %c1_1448] : memref<8x4xf32, #tpu.memory_space<smem>>
    %2292 = vector.broadcast %2291 : f32 to vector<1x16xf32>
    %2293 = arith.mulf %2292, %2247 : vector<1x16xf32>
    %2294 = arith.addf %2290, %2293 : vector<1x16xf32>
    %2295 = arith.addf %2229, %2294 : vector<1x16xf32>
    %c6_1449 = arith.constant 6 : index
    %c1_1450 = arith.constant 1 : index
    %2296 = memref.load %arg2[%c6_1449, %c1_1450] : memref<8x4xf32, #tpu.memory_space<smem>>
    %2297 = vector.broadcast %2296 : f32 to vector<1x16xf32>
    %2298 = arith.mulf %2297, %2245 : vector<1x16xf32>
    %c6_1451 = arith.constant 6 : index
    %c1_1452 = arith.constant 1 : index
    %2299 = memref.load %arg3[%c6_1451, %c1_1452] : memref<8x4xf32, #tpu.memory_space<smem>>
    %2300 = vector.broadcast %2299 : f32 to vector<1x16xf32>
    %2301 = arith.mulf %2300, %2247 : vector<1x16xf32>
    %2302 = arith.addf %2298, %2301 : vector<1x16xf32>
    %2303 = arith.addf %2236, %2302 : vector<1x16xf32>
    %c7_1453 = arith.constant 7 : index
    %c1_1454 = arith.constant 1 : index
    %2304 = memref.load %arg2[%c7_1453, %c1_1454] : memref<8x4xf32, #tpu.memory_space<smem>>
    %2305 = vector.broadcast %2304 : f32 to vector<1x16xf32>
    %2306 = arith.mulf %2305, %2245 : vector<1x16xf32>
    %c7_1455 = arith.constant 7 : index
    %c1_1456 = arith.constant 1 : index
    %2307 = memref.load %arg3[%c7_1455, %c1_1456] : memref<8x4xf32, #tpu.memory_space<smem>>
    %2308 = vector.broadcast %2307 : f32 to vector<1x16xf32>
    %2309 = arith.mulf %2308, %2247 : vector<1x16xf32>
    %2310 = arith.addf %2306, %2309 : vector<1x16xf32>
    %2311 = arith.addf %2243, %2310 : vector<1x16xf32>
    %c0_1457 = arith.constant 0 : index
    %c2_1458 = arith.constant 2 : index
    %c0_1459 = arith.constant 0 : index
    %c224_1460 = arith.constant 224 : index
    %2312 = vector.load %arg5[%c0_1457, %c2_1458, %c0_1459, %c224_1460] : memref<1x4x1x256xf32, #tpu.memory_space<vmem>>, vector<1x1x1x16xf32>
    %2313 = vector.shape_cast %2312 : vector<1x1x1x16xf32> to vector<1x16xf32>
    %c0_1461 = arith.constant 0 : index
    %c2_1462 = arith.constant 2 : index
    %c0_1463 = arith.constant 0 : index
    %c240_1464 = arith.constant 240 : index
    %2314 = vector.load %arg5[%c0_1461, %c2_1462, %c0_1463, %c240_1464] : memref<1x4x1x256xf32, #tpu.memory_space<vmem>>, vector<1x1x1x16xf32>
    %2315 = vector.shape_cast %2314 : vector<1x1x1x16xf32> to vector<1x16xf32>
    %c0_1465 = arith.constant 0 : index
    %c2_1466 = arith.constant 2 : index
    %2316 = memref.load %arg2[%c0_1465, %c2_1466] : memref<8x4xf32, #tpu.memory_space<smem>>
    %2317 = vector.broadcast %2316 : f32 to vector<1x16xf32>
    %2318 = arith.mulf %2317, %2313 : vector<1x16xf32>
    %c0_1467 = arith.constant 0 : index
    %c2_1468 = arith.constant 2 : index
    %2319 = memref.load %arg3[%c0_1467, %c2_1468] : memref<8x4xf32, #tpu.memory_space<smem>>
    %2320 = vector.broadcast %2319 : f32 to vector<1x16xf32>
    %2321 = arith.mulf %2320, %2315 : vector<1x16xf32>
    %2322 = arith.addf %2318, %2321 : vector<1x16xf32>
    %2323 = arith.addf %2255, %2322 : vector<1x16xf32>
    %c1_1469 = arith.constant 1 : index
    %c2_1470 = arith.constant 2 : index
    %2324 = memref.load %arg2[%c1_1469, %c2_1470] : memref<8x4xf32, #tpu.memory_space<smem>>
    %2325 = vector.broadcast %2324 : f32 to vector<1x16xf32>
    %2326 = arith.mulf %2325, %2313 : vector<1x16xf32>
    %c1_1471 = arith.constant 1 : index
    %c2_1472 = arith.constant 2 : index
    %2327 = memref.load %arg3[%c1_1471, %c2_1472] : memref<8x4xf32, #tpu.memory_space<smem>>
    %2328 = vector.broadcast %2327 : f32 to vector<1x16xf32>
    %2329 = arith.mulf %2328, %2315 : vector<1x16xf32>
    %2330 = arith.addf %2326, %2329 : vector<1x16xf32>
    %2331 = arith.addf %2263, %2330 : vector<1x16xf32>
    %c2_1473 = arith.constant 2 : index
    %c2_1474 = arith.constant 2 : index
    %2332 = memref.load %arg2[%c2_1473, %c2_1474] : memref<8x4xf32, #tpu.memory_space<smem>>
    %2333 = vector.broadcast %2332 : f32 to vector<1x16xf32>
    %2334 = arith.mulf %2333, %2313 : vector<1x16xf32>
    %c2_1475 = arith.constant 2 : index
    %c2_1476 = arith.constant 2 : index
    %2335 = memref.load %arg3[%c2_1475, %c2_1476] : memref<8x4xf32, #tpu.memory_space<smem>>
    %2336 = vector.broadcast %2335 : f32 to vector<1x16xf32>
    %2337 = arith.mulf %2336, %2315 : vector<1x16xf32>
    %2338 = arith.addf %2334, %2337 : vector<1x16xf32>
    %2339 = arith.addf %2271, %2338 : vector<1x16xf32>
    %c3_1477 = arith.constant 3 : index
    %c2_1478 = arith.constant 2 : index
    %2340 = memref.load %arg2[%c3_1477, %c2_1478] : memref<8x4xf32, #tpu.memory_space<smem>>
    %2341 = vector.broadcast %2340 : f32 to vector<1x16xf32>
    %2342 = arith.mulf %2341, %2313 : vector<1x16xf32>
    %c3_1479 = arith.constant 3 : index
    %c2_1480 = arith.constant 2 : index
    %2343 = memref.load %arg3[%c3_1479, %c2_1480] : memref<8x4xf32, #tpu.memory_space<smem>>
    %2344 = vector.broadcast %2343 : f32 to vector<1x16xf32>
    %2345 = arith.mulf %2344, %2315 : vector<1x16xf32>
    %2346 = arith.addf %2342, %2345 : vector<1x16xf32>
    %2347 = arith.addf %2279, %2346 : vector<1x16xf32>
    %c4_1481 = arith.constant 4 : index
    %c2_1482 = arith.constant 2 : index
    %2348 = memref.load %arg2[%c4_1481, %c2_1482] : memref<8x4xf32, #tpu.memory_space<smem>>
    %2349 = vector.broadcast %2348 : f32 to vector<1x16xf32>
    %2350 = arith.mulf %2349, %2313 : vector<1x16xf32>
    %c4_1483 = arith.constant 4 : index
    %c2_1484 = arith.constant 2 : index
    %2351 = memref.load %arg3[%c4_1483, %c2_1484] : memref<8x4xf32, #tpu.memory_space<smem>>
    %2352 = vector.broadcast %2351 : f32 to vector<1x16xf32>
    %2353 = arith.mulf %2352, %2315 : vector<1x16xf32>
    %2354 = arith.addf %2350, %2353 : vector<1x16xf32>
    %2355 = arith.addf %2287, %2354 : vector<1x16xf32>
    %c5_1485 = arith.constant 5 : index
    %c2_1486 = arith.constant 2 : index
    %2356 = memref.load %arg2[%c5_1485, %c2_1486] : memref<8x4xf32, #tpu.memory_space<smem>>
    %2357 = vector.broadcast %2356 : f32 to vector<1x16xf32>
    %2358 = arith.mulf %2357, %2313 : vector<1x16xf32>
    %c5_1487 = arith.constant 5 : index
    %c2_1488 = arith.constant 2 : index
    %2359 = memref.load %arg3[%c5_1487, %c2_1488] : memref<8x4xf32, #tpu.memory_space<smem>>
    %2360 = vector.broadcast %2359 : f32 to vector<1x16xf32>
    %2361 = arith.mulf %2360, %2315 : vector<1x16xf32>
    %2362 = arith.addf %2358, %2361 : vector<1x16xf32>
    %2363 = arith.addf %2295, %2362 : vector<1x16xf32>
    %c6_1489 = arith.constant 6 : index
    %c2_1490 = arith.constant 2 : index
    %2364 = memref.load %arg2[%c6_1489, %c2_1490] : memref<8x4xf32, #tpu.memory_space<smem>>
    %2365 = vector.broadcast %2364 : f32 to vector<1x16xf32>
    %2366 = arith.mulf %2365, %2313 : vector<1x16xf32>
    %c6_1491 = arith.constant 6 : index
    %c2_1492 = arith.constant 2 : index
    %2367 = memref.load %arg3[%c6_1491, %c2_1492] : memref<8x4xf32, #tpu.memory_space<smem>>
    %2368 = vector.broadcast %2367 : f32 to vector<1x16xf32>
    %2369 = arith.mulf %2368, %2315 : vector<1x16xf32>
    %2370 = arith.addf %2366, %2369 : vector<1x16xf32>
    %2371 = arith.addf %2303, %2370 : vector<1x16xf32>
    %c7_1493 = arith.constant 7 : index
    %c2_1494 = arith.constant 2 : index
    %2372 = memref.load %arg2[%c7_1493, %c2_1494] : memref<8x4xf32, #tpu.memory_space<smem>>
    %2373 = vector.broadcast %2372 : f32 to vector<1x16xf32>
    %2374 = arith.mulf %2373, %2313 : vector<1x16xf32>
    %c7_1495 = arith.constant 7 : index
    %c2_1496 = arith.constant 2 : index
    %2375 = memref.load %arg3[%c7_1495, %c2_1496] : memref<8x4xf32, #tpu.memory_space<smem>>
    %2376 = vector.broadcast %2375 : f32 to vector<1x16xf32>
    %2377 = arith.mulf %2376, %2315 : vector<1x16xf32>
    %2378 = arith.addf %2374, %2377 : vector<1x16xf32>
    %2379 = arith.addf %2311, %2378 : vector<1x16xf32>
    %c0_1497 = arith.constant 0 : index
    %c3_1498 = arith.constant 3 : index
    %c0_1499 = arith.constant 0 : index
    %c224_1500 = arith.constant 224 : index
    %2380 = vector.load %arg5[%c0_1497, %c3_1498, %c0_1499, %c224_1500] : memref<1x4x1x256xf32, #tpu.memory_space<vmem>>, vector<1x1x1x16xf32>
    %2381 = vector.shape_cast %2380 : vector<1x1x1x16xf32> to vector<1x16xf32>
    %c0_1501 = arith.constant 0 : index
    %c3_1502 = arith.constant 3 : index
    %c0_1503 = arith.constant 0 : index
    %c240_1504 = arith.constant 240 : index
    %2382 = vector.load %arg5[%c0_1501, %c3_1502, %c0_1503, %c240_1504] : memref<1x4x1x256xf32, #tpu.memory_space<vmem>>, vector<1x1x1x16xf32>
    %2383 = vector.shape_cast %2382 : vector<1x1x1x16xf32> to vector<1x16xf32>
    %c0_1505 = arith.constant 0 : index
    %c3_1506 = arith.constant 3 : index
    %2384 = memref.load %arg2[%c0_1505, %c3_1506] : memref<8x4xf32, #tpu.memory_space<smem>>
    %2385 = vector.broadcast %2384 : f32 to vector<1x16xf32>
    %2386 = arith.mulf %2385, %2381 : vector<1x16xf32>
    %c0_1507 = arith.constant 0 : index
    %c3_1508 = arith.constant 3 : index
    %2387 = memref.load %arg3[%c0_1507, %c3_1508] : memref<8x4xf32, #tpu.memory_space<smem>>
    %2388 = vector.broadcast %2387 : f32 to vector<1x16xf32>
    %2389 = arith.mulf %2388, %2383 : vector<1x16xf32>
    %2390 = arith.addf %2386, %2389 : vector<1x16xf32>
    %2391 = arith.addf %2323, %2390 : vector<1x16xf32>
    %c1_1509 = arith.constant 1 : index
    %c3_1510 = arith.constant 3 : index
    %2392 = memref.load %arg2[%c1_1509, %c3_1510] : memref<8x4xf32, #tpu.memory_space<smem>>
    %2393 = vector.broadcast %2392 : f32 to vector<1x16xf32>
    %2394 = arith.mulf %2393, %2381 : vector<1x16xf32>
    %c1_1511 = arith.constant 1 : index
    %c3_1512 = arith.constant 3 : index
    %2395 = memref.load %arg3[%c1_1511, %c3_1512] : memref<8x4xf32, #tpu.memory_space<smem>>
    %2396 = vector.broadcast %2395 : f32 to vector<1x16xf32>
    %2397 = arith.mulf %2396, %2383 : vector<1x16xf32>
    %2398 = arith.addf %2394, %2397 : vector<1x16xf32>
    %2399 = arith.addf %2331, %2398 : vector<1x16xf32>
    %c2_1513 = arith.constant 2 : index
    %c3_1514 = arith.constant 3 : index
    %2400 = memref.load %arg2[%c2_1513, %c3_1514] : memref<8x4xf32, #tpu.memory_space<smem>>
    %2401 = vector.broadcast %2400 : f32 to vector<1x16xf32>
    %2402 = arith.mulf %2401, %2381 : vector<1x16xf32>
    %c2_1515 = arith.constant 2 : index
    %c3_1516 = arith.constant 3 : index
    %2403 = memref.load %arg3[%c2_1515, %c3_1516] : memref<8x4xf32, #tpu.memory_space<smem>>
    %2404 = vector.broadcast %2403 : f32 to vector<1x16xf32>
    %2405 = arith.mulf %2404, %2383 : vector<1x16xf32>
    %2406 = arith.addf %2402, %2405 : vector<1x16xf32>
    %2407 = arith.addf %2339, %2406 : vector<1x16xf32>
    %c3_1517 = arith.constant 3 : index
    %c3_1518 = arith.constant 3 : index
    %2408 = memref.load %arg2[%c3_1517, %c3_1518] : memref<8x4xf32, #tpu.memory_space<smem>>
    %2409 = vector.broadcast %2408 : f32 to vector<1x16xf32>
    %2410 = arith.mulf %2409, %2381 : vector<1x16xf32>
    %c3_1519 = arith.constant 3 : index
    %c3_1520 = arith.constant 3 : index
    %2411 = memref.load %arg3[%c3_1519, %c3_1520] : memref<8x4xf32, #tpu.memory_space<smem>>
    %2412 = vector.broadcast %2411 : f32 to vector<1x16xf32>
    %2413 = arith.mulf %2412, %2383 : vector<1x16xf32>
    %2414 = arith.addf %2410, %2413 : vector<1x16xf32>
    %2415 = arith.addf %2347, %2414 : vector<1x16xf32>
    %c4_1521 = arith.constant 4 : index
    %c3_1522 = arith.constant 3 : index
    %2416 = memref.load %arg2[%c4_1521, %c3_1522] : memref<8x4xf32, #tpu.memory_space<smem>>
    %2417 = vector.broadcast %2416 : f32 to vector<1x16xf32>
    %2418 = arith.mulf %2417, %2381 : vector<1x16xf32>
    %c4_1523 = arith.constant 4 : index
    %c3_1524 = arith.constant 3 : index
    %2419 = memref.load %arg3[%c4_1523, %c3_1524] : memref<8x4xf32, #tpu.memory_space<smem>>
    %2420 = vector.broadcast %2419 : f32 to vector<1x16xf32>
    %2421 = arith.mulf %2420, %2383 : vector<1x16xf32>
    %2422 = arith.addf %2418, %2421 : vector<1x16xf32>
    %2423 = arith.addf %2355, %2422 : vector<1x16xf32>
    %c5_1525 = arith.constant 5 : index
    %c3_1526 = arith.constant 3 : index
    %2424 = memref.load %arg2[%c5_1525, %c3_1526] : memref<8x4xf32, #tpu.memory_space<smem>>
    %2425 = vector.broadcast %2424 : f32 to vector<1x16xf32>
    %2426 = arith.mulf %2425, %2381 : vector<1x16xf32>
    %c5_1527 = arith.constant 5 : index
    %c3_1528 = arith.constant 3 : index
    %2427 = memref.load %arg3[%c5_1527, %c3_1528] : memref<8x4xf32, #tpu.memory_space<smem>>
    %2428 = vector.broadcast %2427 : f32 to vector<1x16xf32>
    %2429 = arith.mulf %2428, %2383 : vector<1x16xf32>
    %2430 = arith.addf %2426, %2429 : vector<1x16xf32>
    %2431 = arith.addf %2363, %2430 : vector<1x16xf32>
    %c6_1529 = arith.constant 6 : index
    %c3_1530 = arith.constant 3 : index
    %2432 = memref.load %arg2[%c6_1529, %c3_1530] : memref<8x4xf32, #tpu.memory_space<smem>>
    %2433 = vector.broadcast %2432 : f32 to vector<1x16xf32>
    %2434 = arith.mulf %2433, %2381 : vector<1x16xf32>
    %c6_1531 = arith.constant 6 : index
    %c3_1532 = arith.constant 3 : index
    %2435 = memref.load %arg3[%c6_1531, %c3_1532] : memref<8x4xf32, #tpu.memory_space<smem>>
    %2436 = vector.broadcast %2435 : f32 to vector<1x16xf32>
    %2437 = arith.mulf %2436, %2383 : vector<1x16xf32>
    %2438 = arith.addf %2434, %2437 : vector<1x16xf32>
    %2439 = arith.addf %2371, %2438 : vector<1x16xf32>
    %c7_1533 = arith.constant 7 : index
    %c3_1534 = arith.constant 3 : index
    %2440 = memref.load %arg2[%c7_1533, %c3_1534] : memref<8x4xf32, #tpu.memory_space<smem>>
    %2441 = vector.broadcast %2440 : f32 to vector<1x16xf32>
    %2442 = arith.mulf %2441, %2381 : vector<1x16xf32>
    %c7_1535 = arith.constant 7 : index
    %c3_1536 = arith.constant 3 : index
    %2443 = memref.load %arg3[%c7_1535, %c3_1536] : memref<8x4xf32, #tpu.memory_space<smem>>
    %2444 = vector.broadcast %2443 : f32 to vector<1x16xf32>
    %2445 = arith.mulf %2444, %2383 : vector<1x16xf32>
    %2446 = arith.addf %2442, %2445 : vector<1x16xf32>
    %2447 = arith.addf %2379, %2446 : vector<1x16xf32>
    %c0_1537 = arith.constant 0 : index
    %2448 = memref.load %arg4[%c0_1537] : memref<8xf32, #tpu.memory_space<smem>>
    %2449 = vector.broadcast %2448 : f32 to vector<1x16xf32>
    %2450 = arith.addf %2391, %2449 : vector<1x16xf32>
    %c0_1538 = arith.constant 0 : index
    %c0_1539 = arith.constant 0 : index
    %c0_1540 = arith.constant 0 : index
    %c112_1541 = arith.constant 112 : index
    %2451 = vector.load %arg6[%c0_1538, %c0_1539, %c0_1540, %c112_1541] : memref<1x8x1x128xf32, #tpu.memory_space<vmem>>, vector<1x1x1x16xf32>
    %2452 = vector.shape_cast %2451 : vector<1x1x1x16xf32> to vector<1x16xf32>
    %2453 = vector.shape_cast %2450 : vector<1x16xf32> to vector<1x1x1x16xf32>
    tpu.vector_store %arg6[%c0_1538, %c0_1539, %c0_1540, %c112_1541], %2453 {strides = array<i32>} : memref<1x8x1x128xf32, #tpu.memory_space<vmem>>, vector<1x1x1x16xf32>,
    %c1_1542 = arith.constant 1 : index
    %2454 = memref.load %arg4[%c1_1542] : memref<8xf32, #tpu.memory_space<smem>>
    %2455 = vector.broadcast %2454 : f32 to vector<1x16xf32>
    %2456 = arith.addf %2399, %2455 : vector<1x16xf32>
    %c0_1543 = arith.constant 0 : index
    %c1_1544 = arith.constant 1 : index
    %c0_1545 = arith.constant 0 : index
    %c112_1546 = arith.constant 112 : index
    %2457 = vector.load %arg6[%c0_1543, %c1_1544, %c0_1545, %c112_1546] : memref<1x8x1x128xf32, #tpu.memory_space<vmem>>, vector<1x1x1x16xf32>
    %2458 = vector.shape_cast %2457 : vector<1x1x1x16xf32> to vector<1x16xf32>
    %2459 = vector.shape_cast %2456 : vector<1x16xf32> to vector<1x1x1x16xf32>
    tpu.vector_store %arg6[%c0_1543, %c1_1544, %c0_1545, %c112_1546], %2459 {strides = array<i32>} : memref<1x8x1x128xf32, #tpu.memory_space<vmem>>, vector<1x1x1x16xf32>,
    %c2_1547 = arith.constant 2 : index
    %2460 = memref.load %arg4[%c2_1547] : memref<8xf32, #tpu.memory_space<smem>>
    %2461 = vector.broadcast %2460 : f32 to vector<1x16xf32>
    %2462 = arith.addf %2407, %2461 : vector<1x16xf32>
    %c0_1548 = arith.constant 0 : index
    %c2_1549 = arith.constant 2 : index
    %c0_1550 = arith.constant 0 : index
    %c112_1551 = arith.constant 112 : index
    %2463 = vector.load %arg6[%c0_1548, %c2_1549, %c0_1550, %c112_1551] : memref<1x8x1x128xf32, #tpu.memory_space<vmem>>, vector<1x1x1x16xf32>
    %2464 = vector.shape_cast %2463 : vector<1x1x1x16xf32> to vector<1x16xf32>
    %2465 = vector.shape_cast %2462 : vector<1x16xf32> to vector<1x1x1x16xf32>
    tpu.vector_store %arg6[%c0_1548, %c2_1549, %c0_1550, %c112_1551], %2465 {strides = array<i32>} : memref<1x8x1x128xf32, #tpu.memory_space<vmem>>, vector<1x1x1x16xf32>,
    %c3_1552 = arith.constant 3 : index
    %2466 = memref.load %arg4[%c3_1552] : memref<8xf32, #tpu.memory_space<smem>>
    %2467 = vector.broadcast %2466 : f32 to vector<1x16xf32>
    %2468 = arith.addf %2415, %2467 : vector<1x16xf32>
    %c0_1553 = arith.constant 0 : index
    %c3_1554 = arith.constant 3 : index
    %c0_1555 = arith.constant 0 : index
    %c112_1556 = arith.constant 112 : index
    %2469 = vector.load %arg6[%c0_1553, %c3_1554, %c0_1555, %c112_1556] : memref<1x8x1x128xf32, #tpu.memory_space<vmem>>, vector<1x1x1x16xf32>
    %2470 = vector.shape_cast %2469 : vector<1x1x1x16xf32> to vector<1x16xf32>
    %2471 = vector.shape_cast %2468 : vector<1x16xf32> to vector<1x1x1x16xf32>
    tpu.vector_store %arg6[%c0_1553, %c3_1554, %c0_1555, %c112_1556], %2471 {strides = array<i32>} : memref<1x8x1x128xf32, #tpu.memory_space<vmem>>, vector<1x1x1x16xf32>,
    %c4_1557 = arith.constant 4 : index
    %2472 = memref.load %arg4[%c4_1557] : memref<8xf32, #tpu.memory_space<smem>>
    %2473 = vector.broadcast %2472 : f32 to vector<1x16xf32>
    %2474 = arith.addf %2423, %2473 : vector<1x16xf32>
    %c0_1558 = arith.constant 0 : index
    %c4_1559 = arith.constant 4 : index
    %c0_1560 = arith.constant 0 : index
    %c112_1561 = arith.constant 112 : index
    %2475 = vector.load %arg6[%c0_1558, %c4_1559, %c0_1560, %c112_1561] : memref<1x8x1x128xf32, #tpu.memory_space<vmem>>, vector<1x1x1x16xf32>
    %2476 = vector.shape_cast %2475 : vector<1x1x1x16xf32> to vector<1x16xf32>
    %2477 = vector.shape_cast %2474 : vector<1x16xf32> to vector<1x1x1x16xf32>
    tpu.vector_store %arg6[%c0_1558, %c4_1559, %c0_1560, %c112_1561], %2477 {strides = array<i32>} : memref<1x8x1x128xf32, #tpu.memory_space<vmem>>, vector<1x1x1x16xf32>,
    %c5_1562 = arith.constant 5 : index
    %2478 = memref.load %arg4[%c5_1562] : memref<8xf32, #tpu.memory_space<smem>>
    %2479 = vector.broadcast %2478 : f32 to vector<1x16xf32>
    %2480 = arith.addf %2431, %2479 : vector<1x16xf32>
    %c0_1563 = arith.constant 0 : index
    %c5_1564 = arith.constant 5 : index
    %c0_1565 = arith.constant 0 : index
    %c112_1566 = arith.constant 112 : index
    %2481 = vector.load %arg6[%c0_1563, %c5_1564, %c0_1565, %c112_1566] : memref<1x8x1x128xf32, #tpu.memory_space<vmem>>, vector<1x1x1x16xf32>
    %2482 = vector.shape_cast %2481 : vector<1x1x1x16xf32> to vector<1x16xf32>
    %2483 = vector.shape_cast %2480 : vector<1x16xf32> to vector<1x1x1x16xf32>
    tpu.vector_store %arg6[%c0_1563, %c5_1564, %c0_1565, %c112_1566], %2483 {strides = array<i32>} : memref<1x8x1x128xf32, #tpu.memory_space<vmem>>, vector<1x1x1x16xf32>,
    %c6_1567 = arith.constant 6 : index
    %2484 = memref.load %arg4[%c6_1567] : memref<8xf32, #tpu.memory_space<smem>>
    %2485 = vector.broadcast %2484 : f32 to vector<1x16xf32>
    %2486 = arith.addf %2439, %2485 : vector<1x16xf32>
    %c0_1568 = arith.constant 0 : index
    %c6_1569 = arith.constant 6 : index
    %c0_1570 = arith.constant 0 : index
    %c112_1571 = arith.constant 112 : index
    %2487 = vector.load %arg6[%c0_1568, %c6_1569, %c0_1570, %c112_1571] : memref<1x8x1x128xf32, #tpu.memory_space<vmem>>, vector<1x1x1x16xf32>
    %2488 = vector.shape_cast %2487 : vector<1x1x1x16xf32> to vector<1x16xf32>
    %2489 = vector.shape_cast %2486 : vector<1x16xf32> to vector<1x1x1x16xf32>
    tpu.vector_store %arg6[%c0_1568, %c6_1569, %c0_1570, %c112_1571], %2489 {strides = array<i32>} : memref<1x8x1x128xf32, #tpu.memory_space<vmem>>, vector<1x1x1x16xf32>,
    %c7_1572 = arith.constant 7 : index
    %2490 = memref.load %arg4[%c7_1572] : memref<8xf32, #tpu.memory_space<smem>>
    %2491 = vector.broadcast %2490 : f32 to vector<1x16xf32>
    %2492 = arith.addf %2447, %2491 : vector<1x16xf32>
    %c0_1573 = arith.constant 0 : index
    %c7_1574 = arith.constant 7 : index
    %c0_1575 = arith.constant 0 : index
    %c112_1576 = arith.constant 112 : index
    %2493 = vector.load %arg6[%c0_1573, %c7_1574, %c0_1575, %c112_1576] : memref<1x8x1x128xf32, #tpu.memory_space<vmem>>, vector<1x1x1x16xf32>
    %2494 = vector.shape_cast %2493 : vector<1x1x1x16xf32> to vector<1x16xf32>
    %2495 = vector.shape_cast %2492 : vector<1x16xf32> to vector<1x1x1x16xf32>
    tpu.vector_store %arg6[%c0_1573, %c7_1574, %c0_1575, %c112_1576], %2495 {strides = array<i32>} : memref<1x8x1x128xf32, #tpu.memory_space<vmem>>, vector<1x1x1x16xf32>,
    return
  }
  func.func @transform_0(%arg0: i32, %arg1: i32) -> (i32, i32) {
    %c0_i32 = arith.constant 0 : i32
    %c0_i32_0 = arith.constant 0 : i32
    %c0_i32_1 = arith.constant 0 : i32
    return %c0_i32, %c0_i32_0 : i32, i32
  }
  func.func @transform_1(%arg0: i32, %arg1: i32) -> (i32, i32) {
    %c0_i32 = arith.constant 0 : i32
    %c0_i32_0 = arith.constant 0 : i32
    %c0_i32_1 = arith.constant 0 : i32
    return %c0_i32, %c0_i32_0 : i32, i32
  }
  func.func @transform_2(%arg0: i32, %arg1: i32) -> i32 {
    %c0_i32 = arith.constant 0 : i32
    %c0_i32_0 = arith.constant 0 : i32
    return %c0_i32 : i32
  }
  func.func @transform_3(%arg0: i32, %arg1: i32) -> (i32, i32, i32, i32) {
    %c0_i32 = arith.constant 0 : i32
    %c0_i32_0 = arith.constant 0 : i32
    %c0_i32_1 = arith.constant 0 : i32
    return %arg0, %c0_i32, %arg1, %c0_i32_0 : i32, i32, i32, i32
  }
  func.func @transform_4(%arg0: i32, %arg1: i32) -> (i32, i32, i32, i32) {
    %c0_i32 = arith.constant 0 : i32
    %c0_i32_0 = arith.constant 0 : i32
    %c0_i32_1 = arith.constant 0 : i32
    return %arg0, %c0_i32, %arg1, %c0_i32_0 : i32, i32, i32, i32
  }
}

</mosaic_0001>

<llo_original>
// kernel: downsample_forward.1
$region0: #{downsample_forward.1}
  #allocation0 [shape = 'u32[]', space=smem, size = 0x4, offset = 0x4, fixed_abs, tag = 'smem constant byte address 0x4 - core index']
  #allocation1 [shape = 'u32[144,128]{1,0:T(1,128)}', space=vmem, size = 0x12000, scoped, tag = 'internal scratch']
  %s0 = inlined_call_operand.vmem [shape: f32[8,4], index: 0, kind: input, shape index: {}]
  %s1 = inlined_call_operand.vmem [shape: f32[8,4], index: 1, kind: input, shape index: {}]
  %s2 = inlined_call_operand.vmem [shape: f32[8], index: 2, kind: input, shape index: {}]
  %s3 = inlined_call_operand.vmem [shape: f32[2,4,1,256], index: 3, kind: input, shape index: {}]
  %s4 = inlined_call_operand.vmem [shape: f32[2,8,1,128], index: 4, kind: output, shape index: {}]
  %s5 = sld [smem:[#allocation0]]
  $region61: #{downsample_forward.1} parent=0
    _
  %s7 = ssub.s32 1, %s5
  %s8 = scalar_select 0, %s7, %s5
  $region1: #{downsample_forward.1} parent=0
    #allocation2 [shape = 'u8[4096]{0}', space=smem, size = 0x1000, scoped, tag = 'input window, operand 0, single buffered']
    #allocation3 [shape = 's32[2]{0}', space=sflag, size = 0x8, scoped, tag = 'scoped memory for downsample_forward.1']
    #allocation4 [shape = 'u8[4096]{0}', space=smem, size = 0x1000, scoped, tag = 'input window, operand 1, single buffered']
    #allocation5 [shape = 's32[1]{0}', space=sflag, size = 0x4, scoped, tag = 'scoped memory for downsample_forward.1']
    #allocation6 [shape = 'u8[512]{0}', space=smem, size = 0x200, scoped, tag = 'input window, operand 2, single buffered']
    %9 = vsyncpa [#allocation3], 0
    %10 = vsyncpa [#allocation5], 0
    loop: start=0, step=1, limit=4
    $region2: #{downsample_forward.1} parent=1 // loop_pre_header
      _
    $region3: #{downsample_forward.1} parent=1 // loop_header
      %s12 = sphi 0, %s16
      %p13 = scmp.ge.s32.totalorder %s12, 4
      %s19 = sphi 0, %s31
      %s20 = sphi 0, %s27
      %s21 = sphi 0, %s19
      %s22 = sphi 0, %s20
      %s23 = sphi 0, %s21
      %s24 = sphi 0, %s22
      %s32 = sphi 0, %s32
      %s34 = sphi 0, %s32
      %s35 = sphi 0, %s34
      %s49 = sphi 0, %s35
      %s53 = sphi 0, %s53
      %s55 = sphi 0, %s53
      %s56 = sphi 0, %s55
      %s70 = sphi 0, %s56
      %s74 = sphi 0, %s74
      %s76 = sphi 0, %s74
      %s77 = sphi 0, %s76
      %s91 = sphi 0, %s77
      %s99 = sphi 0, %s101
      %s102 = sphi 0, %s99
      %s103 = sphi 0, %s102
      %s119 = sphi 0, %s103
      %s127 = sphi 0, %s129
      %s130 = sphi 0, %s127
      %s131 = sphi 0, %s130
      %s147 = sphi 0, %s131
    $region4: #{downsample_forward.1} parent=1 // loop_header_branch
      %15 = sbr.rel (%p13) target = $region8
    $region5: #{downsample_forward.1} parent=1 // loop_body
      %s17 = ssub.s32 %s12, 1
      %s18 = ssub.s32 %s12, 2
      %s25 = sadd.s32 1, %s20
      %p26 = scmp.ge.s32.totalorder %s25, 1
      %s27 = scalar_select %p26, 0, %s25
      %s28 = sadd.s32 1, %s19
      %s29 = scalar_select %p26, %s28, %s19
      %p30 = scmp.ge.s32.totalorder %s29, 2
      %s31 = scalar_select %p30, 0, %s29
      %s33 = sadd.s32 %s32, 1
      %p36 = scmp.eq.s32.totalorder %s12, 1
      %p37 = scmp.ne.s32.totalorder %s32, %s34
      %p38 = scmp.eq.s32.totalorder %s12, 0
      %p39 = por %p37, %p38
      %p40 = scmp.ne.s32.totalorder %s32, %s34
      %p41 = scmp.eq.s32.totalorder %s17, 1
      %p42 = por %p40, %p41
      %p43 = scmp.ne.s32.totalorder %s34, %s35
      %p44 = scmp.eq.s32.totalorder %s17, 0
      %p45 = por %p43, %p44
      %p46 = scmp.ne.s32.totalorder %s34, %s35
      %p47 = scmp.eq.s32.totalorder %s18, 1
      %p48 = por %p46, %p47
      %p50 = scmp.ne.s32.totalorder %s35, %s49
      %p51 = scmp.eq.s32.totalorder %s18, 0
      %p52 = por %p50, %p51
      %s54 = sadd.s32 %s53, 1
      %p57 = scmp.eq.s32.totalorder %s12, 1
      %p58 = scmp.ne.s32.totalorder %s53, %s55
      %p59 = scmp.eq.s32.totalorder %s12, 0
      %p60 = por %p58, %p59
      %p61 = scmp.ne.s32.totalorder %s53, %s55
      %p62 = scmp.eq.s32.totalorder %s17, 1
      %p63 = por %p61, %p62
      %p64 = scmp.ne.s32.totalorder %s55, %s56
      %p65 = scmp.eq.s32.totalorder %s17, 0
      %p66 = por %p64, %p65
      %p67 = scmp.ne.s32.totalorder %s55, %s56
      %p68 = scmp.eq.s32.totalorder %s18, 1
      %p69 = por %p67, %p68
      %p71 = scmp.ne.s32.totalorder %s56, %s70
      %p72 = scmp.eq.s32.totalorder %s18, 0
      %p73 = por %p71, %p72
      %s75 = sadd.s32 %s74, 1
      %p78 = scmp.eq.s32.totalorder %s12, 1
      %p79 = scmp.ne.s32.totalorder %s74, %s76
      %p80 = scmp.eq.s32.totalorder %s12, 0
      %p81 = por %p79, %p80
      %p82 = scmp.ne.s32.totalorder %s74, %s76
      %p83 = scmp.eq.s32.totalorder %s17, 1
      %p84 = por %p82, %p83
      %p85 = scmp.ne.s32.totalorder %s76, %s77
      %p86 = scmp.eq.s32.totalorder %s17, 0
      %p87 = por %p85, %p86
      %p88 = scmp.ne.s32.totalorder %s76, %s77
      %p89 = scmp.eq.s32.totalorder %s18, 1
      %p90 = por %p88, %p89
      %p92 = scmp.ne.s32.totalorder %s77, %s91
      %p93 = scmp.eq.s32.totalorder %s18, 0
      %p94 = por %p92, %p93
      %s95 = ssub.s32 %s19, %s31
      %s96 = ssub.s32 %s20, %s27
      %s97 = sor.u32 %s95, %s96
      %p98 = scmp.eq.s32.totalorder %s97, 0
      %s100 = sadd.s32 %s99, 1
      %s101 = scalar_select %p98, %s99, %s100
      %p104 = pneg %p98
      %p105 = scmp.eq.s32.totalorder %s12, 1
      %p106 = por %p104, %p105
      %p107 = scmp.ne.s32.totalorder %s99, %s102
      %p108 = scmp.eq.s32.totalorder %s12, 0
      %p109 = por %p107, %p108
      %p110 = scmp.ne.s32.totalorder %s99, %s102
      %p111 = scmp.eq.s32.totalorder %s17, 1
      %p112 = por %p110, %p111
      %p113 = scmp.ne.s32.totalorder %s102, %s103
      %p114 = scmp.eq.s32.totalorder %s17, 0
      %p115 = por %p113, %p114
      %p116 = scmp.ne.s32.totalorder %s102, %s103
      %p117 = scmp.eq.s32.totalorder %s18, 1
      %p118 = por %p116, %p117
      %p120 = scmp.ne.s32.totalorder %s103, %s119
      %p121 = scmp.eq.s32.totalorder %s18, 0
      %p122 = por %p120, %p121
      %s123 = ssub.s32 %s19, %s31
      %s124 = ssub.s32 %s20, %s27
      %s125 = sor.u32 %s123, %s124
      %p126 = scmp.eq.s32.totalorder %s125, 0
      %s128 = sadd.s32 %s127, 1
      %s129 = scalar_select %p126, %s127, %s128
      %p132 = pneg %p126
      %p133 = scmp.eq.s32.totalorder %s12, 1
      %p134 = por %p132, %p133
      %p135 = scmp.ne.s32.totalorder %s127, %s130
      %p136 = scmp.eq.s32.totalorder %s12, 0
      %p137 = por %p135, %p136
      %p138 = scmp.ne.s32.totalorder %s127, %s130
      %p139 = scmp.eq.s32.totalorder %s17, 1
      %p140 = por %p138, %p139
      %p141 = scmp.ne.s32.totalorder %s130, %s131
      %p142 = scmp.eq.s32.totalorder %s17, 0
      %p143 = por %p141, %p142
      %p144 = scmp.ne.s32.totalorder %s130, %s131
      %p145 = scmp.eq.s32.totalorder %s18, 1
      %p146 = por %p144, %p145
      %p148 = scmp.ne.s32.totalorder %s131, %s147
      %p149 = scmp.eq.s32.totalorder %s18, 0
      %p150 = por %p148, %p149
      %p151 = scmp.le.s32.totalorder 1, %s12
      %p152 = scmp.lt.s32.totalorder %s12, 3
      %p153 = pnand %p151, %p152
      %p154 = pneg %p153
      // Predicated region
      $region9: #{downsample_forward.1} parent=5 // pred_check
        _
      $region10: #{downsample_forward.1} parent=5 // pred_check_branch
        %156 = sbr.rel (%p153) target = $region12
      $region11: #{downsample_forward.1} parent=5 // pred_region
        %s157 = ssub.s32 %s12, 1
        // Predicated region
        $region13: #{downsample_forward.1} parent=11 // pred_check
          %p158 = pneg %p45
        $region14: #{downsample_forward.1} parent=11 // pred_check_branch
          %160 = sbr.rel (%p158) target = $region16
        $region15: #{downsample_forward.1} parent=11 // pred_region
          %s162 = ssub.s32 128, 128
          %163 = vsyncadd [#allocation3], %s162
          %s165 = sshll.u32 %s0, 4
          %s166 = int_to_ptr.vmem [resolvable:$true] %s165
          %168 = dma.vmem_to_smem %s166, 128, [#allocation2], [#allocation3]
        $region16: #{downsample_forward.1} parent=11 // pred_fallthru
          _
        // Predicated region
        $region17: #{downsample_forward.1} parent=11 // pred_check
          %p169 = pneg %p66
        $region18: #{downsample_forward.1} parent=11 // pred_check_branch
          %171 = sbr.rel (%p169) target = $region20
        $region19: #{downsample_forward.1} parent=11 // pred_region
          %s173 = ssub.s32 128, 128
          %174 = vsyncadd [#allocation5], %s173
          %s176 = sshll.u32 %s1, 4
          %s177 = int_to_ptr.vmem [resolvable:$true] %s176
          %179 = dma.vmem_to_smem %s177, 128, [#allocation4], [#allocation5]
        $region20: #{downsample_forward.1} parent=11 // pred_fallthru
          _
        // Predicated region
        $region21: #{downsample_forward.1} parent=11 // pred_check
          %p180 = pneg %p87
        $region22: #{downsample_forward.1} parent=11 // pred_check_branch
          %182 = sbr.rel (%p180) target = $region24
        $region23: #{downsample_forward.1} parent=11 // pred_region
          %s184 = ssub.s32 16, 16
          %185 = vsyncadd [#allocation5], %s184
          %s187 = sshll.u32 %s2, 4
          %s188 = int_to_ptr.vmem [resolvable:$true] %s187
          %190 = dma.vmem_to_smem %s188, 16, [#allocation6], [#allocation5]
        $region24: #{downsample_forward.1} parent=11 // pred_fallthru
          _
      $region12: #{downsample_forward.1} parent=5 // pred_fallthru
        _
      %p191 = scmp.lt.s32.totalorder %s12, 2
      // Predicated region
      $region25: #{downsample_forward.1} parent=5 // pred_check
        %p192 = pneg %p191
      $region26: #{downsample_forward.1} parent=5 // pred_check_branch
        %194 = sbr.rel (%p192) target = $region28
      $region27: #{downsample_forward.1} parent=5 // pred_region
        // Predicated region
        $region29: #{downsample_forward.1} parent=27 // pred_check
          %p195 = pneg %p109
        $region30: #{downsample_forward.1} parent=27 // pred_check_branch
          %197 = sbr.rel (%p195) target = $region32
        $region31: #{downsample_forward.1} parent=27 // pred_region
          %p198 = scmp.lt.s32.totalorder %s19, 1
          %s199 = scalar_select %p198, %s19, 1
          %p200 = scmp.lt.s32.totalorder %s20, 0
          %s201 = scalar_select %p200, %s20, 0
          %s202 = smul.addr %s201, 2
          %s203 = smul.addr %s199, 8
          %s204 = sadd.s32 %s202, %s203
          %s205 = scalar_lea.vmem %s3, %s204
        $region32: #{downsample_forward.1} parent=27 // pred_fallthru
          _
      $region28: #{downsample_forward.1} parent=5 // pred_fallthru
        _
      %p206 = scmp.le.s32.totalorder 1, %s12
      %p207 = scmp.lt.s32.totalorder %s12, 3
      %p208 = pnand %p206, %p207
      %p209 = pneg %p208
      // Predicated region
      $region33: #{downsample_forward.1} parent=5 // pred_check
        _
      $region34: #{downsample_forward.1} parent=5 // pred_check_branch
        %211 = sbr.rel (%p208) target = $region36
      $region35: #{downsample_forward.1} parent=5 // pred_region
        %s212 = ssub.s32 %s12, 1
        // Predicated region
        $region37: #{downsample_forward.1} parent=35 // pred_check
          %p213 = pneg %p45
        $region38: #{downsample_forward.1} parent=35 // pred_check_branch
          %215 = sbr.rel (%p213) target = $region40
        $region39: #{downsample_forward.1} parent=35 // pred_region
          %216 = dma.done [#allocation3], 128
        $region40: #{downsample_forward.1} parent=35 // pred_fallthru
          _
        // Predicated region
        $region41: #{downsample_forward.1} parent=35 // pred_check
          %p217 = pneg %p66
        $region42: #{downsample_forward.1} parent=35 // pred_check_branch
          %219 = sbr.rel (%p217) target = $region44
        $region43: #{downsample_forward.1} parent=35 // pred_region
          %220 = dma.done [#allocation5], 128
        $region44: #{downsample_forward.1} parent=35 // pred_fallthru
          _
        // Predicated region
        $region45: #{downsample_forward.1} parent=35 // pred_check
          %p221 = pneg %p87
        $region46: #{downsample_forward.1} parent=35 // pred_check_branch
          %223 = sbr.rel (%p221) target = $region48
        $region47: #{downsample_forward.1} parent=35 // pred_region
          %224 = dma.done [#allocation5], 16
        $region48: #{downsample_forward.1} parent=35 // pred_fallthru
          _
        %225 = sfence
        %p226 = pneg %p45
        %p227 = pneg %p42
        %p228 = pneg %p66
        %p229 = pneg %p63
        %p230 = pneg %p87
        %p231 = pneg %p84
        %p232 = scmp.lt.s32.totalorder %s21, 1
        %s233 = scalar_select %p232, %s21, 1
        %p234 = scmp.lt.s32.totalorder %s22, 0
        %s235 = scalar_select %p234, %s22, 0
        %s236 = smul.addr %s235, 2
        %s237 = smul.addr %s233, 8
        %s238 = sadd.s32 %s236, %s237
        %s239 = scalar_lea.vmem %s3, %s238
        %p240 = pneg %p115
        %p241 = pneg %p112
        %p242 = pneg %p143
        %p243 = pneg %p140
        %p244 = scmp.lt.s32.totalorder %s21, 1
        %s245 = scalar_select %p244, %s21, 1
        %p246 = scmp.lt.s32.totalorder %s22, 0
        %s247 = scalar_select %p246, %s22, 0
        %s248 = smul.addr %s245, 8
        %s249 = sadd.s32 %s247, %s248
        %s250 = scalar_lea.vmem %s4, %s249
        %p251 = scmp.lt.s32.totalorder %s21, 1
        %s252 = scalar_select %p251, %s21, 1
        %p253 = scmp.lt.s32.totalorder %s22, 0
        %s254 = scalar_select %p253, %s22, 0
        %s255 = smul.addr %s254, 2
        %s256 = smul.addr %s252, 8
        %s257 = sadd.s32 %s255, %s256
        %s258 = scalar_lea.vmem %s3, %s257
        %p259 = scmp.lt.s32.totalorder %s21, 1
        %s260 = scalar_select %p259, %s21, 1
        %p261 = scmp.lt.s32.totalorder %s22, 0
        %s262 = scalar_select %p261, %s22, 0
        %s263 = smul.addr %s260, 8
        %s264 = sadd.s32 %s262, %s263
        %s265 = scalar_lea.vmem %s4, %s264
        %v266 = vld [vmem:[%s258] sm:$0x1]
        %s267 = sld [smem:[#allocation2]]
        %v268 = vstv %s267
        %v269 = vmul.f32 %v268, %v266
        %s270 = sld [smem:[#allocation4]]
        %v271 = vstv %s270
        %v272 = vmul.f32 %v271, %v266
        %274 = vrot.lane.b32.xlu0 %v272, 112
        %v275 = vpop.permute.xlu0 %274
        %v277 = vadd.f32 %v269, %v275
        %s278 = sld [smem:[#allocation2 + $0x80]]
        %v279 = vstv %s278
        %v280 = vmul.f32 %v279, %v266
        %s281 = sld [smem:[#allocation4 + $0x80]]
        %v282 = vstv %s281
        %v283 = vmul.f32 %v282, %v266
        %285 = vrot.lane.b32.xlu0 %v283, 112
        %v286 = vpop.permute.xlu0 %285
        %v288 = vadd.f32 %v280, %v286
        %s289 = sld [smem:[#allocation2 + $0x100]]
        %v290 = vstv %s289
        %v291 = vmul.f32 %v290, %v266
        %s292 = sld [smem:[#allocation4 + $0x100]]
        %v293 = vstv %s292
        %v294 = vmul.f32 %v293, %v266
        %296 = vrot.lane.b32.xlu0 %v294, 112
        %v297 = vpop.permute.xlu0 %296
        %v299 = vadd.f32 %v291, %v297
        %s300 = sld [smem:[#allocation2 + $0x180]]
        %v301 = vstv %s300
        %v302 = vmul.f32 %v301, %v266
        %s303 = sld [smem:[#allocation4 + $0x180]]
        %v304 = vstv %s303
        %v305 = vmul.f32 %v304, %v266
        %307 = vrot.lane.b32.xlu0 %v305, 112
        %v308 = vpop.permute.xlu0 %307
        %v310 = vadd.f32 %v302, %v308
        %s311 = sld [smem:[#allocation2 + $0x200]]
        %v312 = vstv %s311
        %v313 = vmul.f32 %v312, %v266
        %s314 = sld [smem:[#allocation4 + $0x200]]
        %v315 = vstv %s314
        %v316 = vmul.f32 %v315, %v266
        %318 = vrot.lane.b32.xlu0 %v316, 112
        %v319 = vpop.permute.xlu0 %318
        %v321 = vadd.f32 %v313, %v319
        %s322 = sld [smem:[#allocation2 + $0x280]]
        %v323 = vstv %s322
        %v324 = vmul.f32 %v323, %v266
        %s325 = sld [smem:[#allocation4 + $0x280]]
        %v326 = vstv %s325
        %v327 = vmul.f32 %v326, %v266
        %329 = vrot.lane.b32.xlu0 %v327, 112
        %v330 = vpop.permute.xlu0 %329
        %v332 = vadd.f32 %v324, %v330
        %s333 = sld [smem:[#allocation2 + $0x300]]
        %v334 = vstv %s333
        %v335 = vmul.f32 %v334, %v266
        %s336 = sld [smem:[#allocation4 + $0x300]]
        %v337 = vstv %s336
        %v338 = vmul.f32 %v337, %v266
        %340 = vrot.lane.b32.xlu0 %v338, 112
        %v341 = vpop.permute.xlu0 %340
        %v343 = vadd.f32 %v335, %v341
        %s344 = sld [smem:[#allocation2 + $0x380]]
        %v345 = vstv %s344
        %v346 = vmul.f32 %v345, %v266
        %s347 = sld [smem:[#allocation4 + $0x380]]
        %v348 = vstv %s347
        %v349 = vmul.f32 %v348, %v266
        %351 = vrot.lane.b32.xlu0 %v349, 112
        %v352 = vpop.permute.xlu0 %351
        %v354 = vadd.f32 %v346, %v352
        %s355 = scalar_lea.vmem %s258, 2
        %v356 = vld [vmem:[%s355] sm:$0x1]
        %s357 = sld [smem:[#allocation2 + $0x1]]
        %v358 = vstv %s357
        %v359 = vmul.f32 %v358, %v356
        %s360 = sld [smem:[#allocation4 + $0x1]]
        %v361 = vstv %s360
        %v362 = vmul.f32 %v361, %v356
        %364 = vrot.lane.b32.xlu0 %v362, 112
        %v365 = vpop.permute.xlu0 %364
        %v367 = vadd.f32 %v359, %v365
        %v368 = vadd.f32 %v277, %v367
        %s369 = sld [smem:[#allocation2 + $0x81]]
        %v370 = vstv %s369
        %v371 = vmul.f32 %v370, %v356
        %s372 = sld [smem:[#allocation4 + $0x81]]
        %v373 = vstv %s372
        %v374 = vmul.f32 %v373, %v356
        %376 = vrot.lane.b32.xlu0 %v374, 112
        %v377 = vpop.permute.xlu0 %376
        %v379 = vadd.f32 %v371, %v377
        %v380 = vadd.f32 %v288, %v379
        %s381 = sld [smem:[#allocation2 + $0x101]]
        %v382 = vstv %s381
        %v383 = vmul.f32 %v382, %v356
        %s384 = sld [smem:[#allocation4 + $0x101]]
        %v385 = vstv %s384
        %v386 = vmul.f32 %v385, %v356
        %388 = vrot.lane.b32.xlu0 %v386, 112
        %v389 = vpop.permute.xlu0 %388
        %v391 = vadd.f32 %v383, %v389
        %v392 = vadd.f32 %v299, %v391
        %s393 = sld [smem:[#allocation2 + $0x181]]
        %v394 = vstv %s393
        %v395 = vmul.f32 %v394, %v356
        %s396 = sld [smem:[#allocation4 + $0x181]]
        %v397 = vstv %s396
        %v398 = vmul.f32 %v397, %v356
        %400 = vrot.lane.b32.xlu0 %v398, 112
        %v401 = vpop.permute.xlu0 %400
        %v403 = vadd.f32 %v395, %v401
        %v404 = vadd.f32 %v310, %v403
        %s405 = sld [smem:[#allocation2 + $0x201]]
        %v406 = vstv %s405
        %v407 = vmul.f32 %v406, %v356
        %s408 = sld [smem:[#allocation4 + $0x201]]
        %v409 = vstv %s408
        %v410 = vmul.f32 %v409, %v356
        %412 = vrot.lane.b32.xlu0 %v410, 112
        %v413 = vpop.permute.xlu0 %412
        %v415 = vadd.f32 %v407, %v413
        %v416 = vadd.f32 %v321, %v415
        %s417 = sld [smem:[#allocation2 + $0x281]]
        %v418 = vstv %s417
        %v419 = vmul.f32 %v418, %v356
        %s420 = sld [smem:[#allocation4 + $0x281]]
        %v421 = vstv %s420
        %v422 = vmul.f32 %v421, %v356
        %424 = vrot.lane.b32.xlu0 %v422, 112
        %v425 = vpop.permute.xlu0 %424
        %v427 = vadd.f32 %v419, %v425
        %v428 = vadd.f32 %v332, %v427
        %s429 = sld [smem:[#allocation2 + $0x301]]
        %v430 = vstv %s429
        %v431 = vmul.f32 %v430, %v356
        %s432 = sld [smem:[#allocation4 + $0x301]]
        %v433 = vstv %s432
        %v434 = vmul.f32 %v433, %v356
        %436 = vrot.lane.b32.xlu0 %v434, 112
        %v437 = vpop.permute.xlu0 %436
        %v439 = vadd.f32 %v431, %v437
        %v440 = vadd.f32 %v343, %v439
        %s441 = sld [smem:[#allocation2 + $0x381]]
        %v442 = vstv %s441
        %v443 = vmul.f32 %v442, %v356
        %s444 = sld [smem:[#allocation4 + $0x381]]
        %v445 = vstv %s444
        %v446 = vmul.f32 %v445, %v356
        %448 = vrot.lane.b32.xlu0 %v446, 112
        %v449 = vpop.permute.xlu0 %448
        %v451 = vadd.f32 %v443, %v449
        %v452 = vadd.f32 %v354, %v451
        %s453 = scalar_lea.vmem %s258, 4
        %v454 = vld [vmem:[%s453] sm:$0x1]
        %s455 = sld [smem:[#allocation2 + $0x2]]
        %v456 = vstv %s455
        %v457 = vmul.f32 %v456, %v454
        %s458 = sld [smem:[#allocation4 + $0x2]]
        %v459 = vstv %s458
        %v460 = vmul.f32 %v459, %v454
        %462 = vrot.lane.b32.xlu0 %v460, 112
        %v463 = vpop.permute.xlu0 %462
        %v465 = vadd.f32 %v457, %v463
        %v466 = vadd.f32 %v368, %v465
        %s467 = sld [smem:[#allocation2 + $0x82]]
        %v468 = vstv %s467
        %v469 = vmul.f32 %v468, %v454
        %s470 = sld [smem:[#allocation4 + $0x82]]
        %v471 = vstv %s470
        %v472 = vmul.f32 %v471, %v454
        %474 = vrot.lane.b32.xlu0 %v472, 112
        %v475 = vpop.permute.xlu0 %474
        %v477 = vadd.f32 %v469, %v475
        %v478 = vadd.f32 %v380, %v477
        %s479 = sld [smem:[#allocation2 + $0x102]]
        %v480 = vstv %s479
        %v481 = vmul.f32 %v480, %v454
        %s482 = sld [smem:[#allocation4 + $0x102]]
        %v483 = vstv %s482
        %v484 = vmul.f32 %v483, %v454
        %486 = vrot.lane.b32.xlu0 %v484, 112
        %v487 = vpop.permute.xlu0 %486
        %v489 = vadd.f32 %v481, %v487
        %v490 = vadd.f32 %v392, %v489
        %s491 = sld [smem:[#allocation2 + $0x182]]
        %v492 = vstv %s491
        %v493 = vmul.f32 %v492, %v454
        %s494 = sld [smem:[#allocation4 + $0x182]]
        %v495 = vstv %s494
        %v496 = vmul.f32 %v495, %v454
        %498 = vrot.lane.b32.xlu0 %v496, 112
        %v499 = vpop.permute.xlu0 %498
        %v501 = vadd.f32 %v493, %v499
        %v502 = vadd.f32 %v404, %v501
        %s503 = sld [smem:[#allocation2 + $0x202]]
        %v504 = vstv %s503
        %v505 = vmul.f32 %v504, %v454
        %s506 = sld [smem:[#allocation4 + $0x202]]
        %v507 = vstv %s506
        %v508 = vmul.f32 %v507, %v454
        %510 = vrot.lane.b32.xlu0 %v508, 112
        %v511 = vpop.permute.xlu0 %510
        %v513 = vadd.f32 %v505, %v511
        %v514 = vadd.f32 %v416, %v513
        %s515 = sld [smem:[#allocation2 + $0x282]]
        %v516 = vstv %s515
        %v517 = vmul.f32 %v516, %v454
        %s518 = sld [smem:[#allocation4 + $0x282]]
        %v519 = vstv %s518
        %v520 = vmul.f32 %v519, %v454
        %522 = vrot.lane.b32.xlu0 %v520, 112
        %v523 = vpop.permute.xlu0 %522
        %v525 = vadd.f32 %v517, %v523
        %v526 = vadd.f32 %v428, %v525
        %s527 = sld [smem:[#allocation2 + $0x302]]
        %v528 = vstv %s527
        %v529 = vmul.f32 %v528, %v454
        %s530 = sld [smem:[#allocation4 + $0x302]]
        %v531 = vstv %s530
        %v532 = vmul.f32 %v531, %v454
        %534 = vrot.lane.b32.xlu0 %v532, 112
        %v535 = vpop.permute.xlu0 %534
        %v537 = vadd.f32 %v529, %v535
        %v538 = vadd.f32 %v440, %v537
        %s539 = sld [smem:[#allocation2 + $0x382]]
        %v540 = vstv %s539
        %v541 = vmul.f32 %v540, %v454
        %s542 = sld [smem:[#allocation4 + $0x382]]
        %v543 = vstv %s542
        %v544 = vmul.f32 %v543, %v454
        %546 = vrot.lane.b32.xlu0 %v544, 112
        %v547 = vpop.permute.xlu0 %546
        %v549 = vadd.f32 %v541, %v547
        %v550 = vadd.f32 %v452, %v549
        %s551 = scalar_lea.vmem %s258, 6
        %v552 = vld [vmem:[%s551] sm:$0x1]
        %s553 = sld [smem:[#allocation2 + $0x3]]
        %v554 = vstv %s553
        %v555 = vmul.f32 %v554, %v552
        %s556 = sld [smem:[#allocation4 + $0x3]]
        %v557 = vstv %s556
        %v558 = vmul.f32 %v557, %v552
        %560 = vrot.lane.b32.xlu0 %v558, 112
        %v561 = vpop.permute.xlu0 %560
        %v563 = vadd.f32 %v555, %v561
        %v564 = vadd.f32 %v466, %v563
        %s565 = sld [smem:[#allocation2 + $0x83]]
        %v566 = vstv %s565
        %v567 = vmul.f32 %v566, %v552
        %s568 = sld [smem:[#allocation4 + $0x83]]
        %v569 = vstv %s568
        %v570 = vmul.f32 %v569, %v552
        %572 = vrot.lane.b32.xlu0 %v570, 112
        %v573 = vpop.permute.xlu0 %572
        %v575 = vadd.f32 %v567, %v573
        %v576 = vadd.f32 %v478, %v575
        %s577 = sld [smem:[#allocation2 + $0x103]]
        %v578 = vstv %s577
        %v579 = vmul.f32 %v578, %v552
        %s580 = sld [smem:[#allocation4 + $0x103]]
        %v581 = vstv %s580
        %v582 = vmul.f32 %v581, %v552
        %584 = vrot.lane.b32.xlu0 %v582, 112
        %v585 = vpop.permute.xlu0 %584
        %v587 = vadd.f32 %v579, %v585
        %v588 = vadd.f32 %v490, %v587
        %s589 = sld [smem:[#allocation2 + $0x183]]
        %v590 = vstv %s589
        %v591 = vmul.f32 %v590, %v552
        %s592 = sld [smem:[#allocation4 + $0x183]]
        %v593 = vstv %s592
        %v594 = vmul.f32 %v593, %v552
        %596 = vrot.lane.b32.xlu0 %v594, 112
        %v597 = vpop.permute.xlu0 %596
        %v599 = vadd.f32 %v591, %v597
        %v600 = vadd.f32 %v502, %v599
        %s601 = sld [smem:[#allocation2 + $0x203]]
        %v602 = vstv %s601
        %v603 = vmul.f32 %v602, %v552
        %s604 = sld [smem:[#allocation4 + $0x203]]
        %v605 = vstv %s604
        %v606 = vmul.f32 %v605, %v552
        %608 = vrot.lane.b32.xlu0 %v606, 112
        %v609 = vpop.permute.xlu0 %608
        %v611 = vadd.f32 %v603, %v609
        %v612 = vadd.f32 %v514, %v611
        %s613 = sld [smem:[#allocation2 + $0x283]]
        %v614 = vstv %s613
        %v615 = vmul.f32 %v614, %v552
        %s616 = sld [smem:[#allocation4 + $0x283]]
        %v617 = vstv %s616
        %v618 = vmul.f32 %v617, %v552
        %620 = vrot.lane.b32.xlu0 %v618, 112
        %v621 = vpop.permute.xlu0 %620
        %v623 = vadd.f32 %v615, %v621
        %v624 = vadd.f32 %v526, %v623
        %s625 = sld [smem:[#allocation2 + $0x303]]
        %v626 = vstv %s625
        %v627 = vmul.f32 %v626, %v552
        %s628 = sld [smem:[#allocation4 + $0x303]]
        %v629 = vstv %s628
        %v630 = vmul.f32 %v629, %v552
        %632 = vrot.lane.b32.xlu0 %v630, 112
        %v633 = vpop.permute.xlu0 %632
        %v635 = vadd.f32 %v627, %v633
        %v636 = vadd.f32 %v538, %v635
        %s637 = sld [smem:[#allocation2 + $0x383]]
        %v638 = vstv %s637
        %v639 = vmul.f32 %v638, %v552
        %s640 = sld [smem:[#allocation4 + $0x383]]
        %v641 = vstv %s640
        %v642 = vmul.f32 %v641, %v552
        %644 = vrot.lane.b32.xlu0 %v642, 112
        %v645 = vpop.permute.xlu0 %644
        %v647 = vadd.f32 %v639, %v645
        %v648 = vadd.f32 %v550, %v647
        %s649 = sld [smem:[#allocation6]]
        %v650 = vstv %s649
        %v651 = vadd.f32 %v564, %v650
        %vm652 = vcmask 122880
        %653 = vst.msk [vmem:[%s265] sm:$0x1] %vm652, %v651
        %s654 = sld [smem:[#allocation6 + $0x1]]
        %v655 = vstv %s654
        %v656 = vadd.f32 %v576, %v655
        %s657 = scalar_lea.vmem %s265, 1
        %658 = vst.msk [vmem:[%s657] sm:$0x1] %vm652, %v656
        %s659 = sld [smem:[#allocation6 + $0x2]]
        %v660 = vstv %s659
        %v661 = vadd.f32 %v588, %v660
        %s662 = scalar_lea.vmem %s265, 2
        %663 = vst.msk [vmem:[%s662] sm:$0x1] %vm652, %v661
        %s664 = sld [smem:[#allocation6 + $0x3]]
        %v665 = vstv %s664
        %v666 = vadd.f32 %v600, %v665
        %s667 = scalar_lea.vmem %s265, 3
        %668 = vst.msk [vmem:[%s667] sm:$0x1] %vm652, %v666
        %s669 = sld [smem:[#allocation6 + $0x4]]
        %v670 = vstv %s669
        %v671 = vadd.f32 %v612, %v670
        %s672 = scalar_lea.vmem %s265, 4
        %673 = vst.msk [vmem:[%s672] sm:$0x1] %vm652, %v671
        %s674 = sld [smem:[#allocation6 + $0x5]]
        %v675 = vstv %s674
        %v676 = vadd.f32 %v624, %v675
        %s677 = scalar_lea.vmem %s265, 5
        %678 = vst.msk [vmem:[%s677] sm:$0x1] %vm652, %v676
        %s679 = sld [smem:[#allocation6 + $0x6]]
        %v680 = vstv %s679
        %v681 = vadd.f32 %v636, %v680
        %s682 = scalar_lea.vmem %s265, 6
        %683 = vst.msk [vmem:[%s682] sm:$0x1] %vm652, %v681
        %s684 = sld [smem:[#allocation6 + $0x7]]
        %v685 = vstv %s684
        %v686 = vadd.f32 %v648, %v685
        %s687 = scalar_lea.vmem %s265, 7
        %688 = vst.msk [vmem:[%s687] sm:$0x1] %vm652, %v686
        %v689 = vld [vmem:[%s258] sm:$0x1]
        %s690 = sld [smem:[#allocation2]]
        %v691 = vstv %s690
        %v692 = vmul.f32 %v691, %v689
        %s693 = sld [smem:[#allocation4]]
        %v694 = vstv %s693
        %v695 = vmul.f32 %v694, %v689
        %697 = vrot.lane.b32.xlu0 %v695, 112
        %v698 = vpop.permute.xlu0 %697
        %v700 = vadd.f32 %v692, %v698
        %s701 = sld [smem:[#allocation2 + $0x80]]
        %v702 = vstv %s701
        %v703 = vmul.f32 %v702, %v689
        %s704 = sld [smem:[#allocation4 + $0x80]]
        %v705 = vstv %s704
        %v706 = vmul.f32 %v705, %v689
        %708 = vrot.lane.b32.xlu0 %v706, 112
        %v709 = vpop.permute.xlu0 %708
        %v711 = vadd.f32 %v703, %v709
        %s712 = sld [smem:[#allocation2 + $0x100]]
        %v713 = vstv %s712
        %v714 = vmul.f32 %v713, %v689
        %s715 = sld [smem:[#allocation4 + $0x100]]
        %v716 = vstv %s715
        %v717 = vmul.f32 %v716, %v689
        %719 = vrot.lane.b32.xlu0 %v717, 112
        %v720 = vpop.permute.xlu0 %719
        %v722 = vadd.f32 %v714, %v720
        %s723 = sld [smem:[#allocation2 + $0x180]]
        %v724 = vstv %s723
        %v725 = vmul.f32 %v724, %v689
        %s726 = sld [smem:[#allocation4 + $0x180]]
        %v727 = vstv %s726
        %v728 = vmul.f32 %v727, %v689
        %730 = vrot.lane.b32.xlu0 %v728, 112
        %v731 = vpop.permute.xlu0 %730
        %v733 = vadd.f32 %v725, %v731
        %s734 = sld [smem:[#allocation2 + $0x200]]
        %v735 = vstv %s734
        %v736 = vmul.f32 %v735, %v689
        %s737 = sld [smem:[#allocation4 + $0x200]]
        %v738 = vstv %s737
        %v739 = vmul.f32 %v738, %v689
        %741 = vrot.lane.b32.xlu0 %v739, 112
        %v742 = vpop.permute.xlu0 %741
        %v744 = vadd.f32 %v736, %v742
        %s745 = sld [smem:[#allocation2 + $0x280]]
        %v746 = vstv %s745
        %v747 = vmul.f32 %v746, %v689
        %s748 = sld [smem:[#allocation4 + $0x280]]
        %v749 = vstv %s748
        %v750 = vmul.f32 %v749, %v689
        %752 = vrot.lane.b32.xlu0 %v750, 112
        %v753 = vpop.permute.xlu0 %752
        %v755 = vadd.f32 %v747, %v753
        %s756 = sld [smem:[#allocation2 + $0x300]]
        %v757 = vstv %s756
        %v758 = vmul.f32 %v757, %v689
        %s759 = sld [smem:[#allocation4 + $0x300]]
        %v760 = vstv %s759
        %v761 = vmul.f32 %v760, %v689
        %763 = vrot.lane.b32.xlu0 %v761, 112
        %v764 = vpop.permute.xlu0 %763
        %v766 = vadd.f32 %v758, %v764
        %s767 = sld [smem:[#allocation2 + $0x380]]
        %v768 = vstv %s767
        %v769 = vmul.f32 %v768, %v689
        %s770 = sld [smem:[#allocation4 + $0x380]]
        %v771 = vstv %s770
        %v772 = vmul.f32 %v771, %v689
        %774 = vrot.lane.b32.xlu0 %v772, 112
        %v775 = vpop.permute.xlu0 %774
        %v777 = vadd.f32 %v769, %v775
        %v778 = vld [vmem:[%s355] sm:$0x1]
        %s779 = sld [smem:[#allocation2 + $0x1]]
        %v780 = vstv %s779
        %v781 = vmul.f32 %v780, %v778
        %s782 = sld [smem:[#allocation4 + $0x1]]
        %v783 = vstv %s782
        %v784 = vmul.f32 %v783, %v778
        %786 = vrot.lane.b32.xlu0 %v784, 112
        %v787 = vpop.permute.xlu0 %786
        %v789 = vadd.f32 %v781, %v787
        %v790 = vadd.f32 %v700, %v789
        %s791 = sld [smem:[#allocation2 + $0x81]]
        %v792 = vstv %s791
        %v793 = vmul.f32 %v792, %v778
        %s794 = sld [smem:[#allocation4 + $0x81]]
        %v795 = vstv %s794
        %v796 = vmul.f32 %v795, %v778
        %798 = vrot.lane.b32.xlu0 %v796, 112
        %v799 = vpop.permute.xlu0 %798
        %v801 = vadd.f32 %v793, %v799
        %v802 = vadd.f32 %v711, %v801
        %s803 = sld [smem:[#allocation2 + $0x101]]
        %v804 = vstv %s803
        %v805 = vmul.f32 %v804, %v778
        %s806 = sld [smem:[#allocation4 + $0x101]]
        %v807 = vstv %s806
        %v808 = vmul.f32 %v807, %v778
        %810 = vrot.lane.b32.xlu0 %v808, 112
        %v811 = vpop.permute.xlu0 %810
        %v813 = vadd.f32 %v805, %v811
        %v814 = vadd.f32 %v722, %v813
        %s815 = sld [smem:[#allocation2 + $0x181]]
        %v816 = vstv %s815
        %v817 = vmul.f32 %v816, %v778
        %s818 = sld [smem:[#allocation4 + $0x181]]
        %v819 = vstv %s818
        %v820 = vmul.f32 %v819, %v778
        %822 = vrot.lane.b32.xlu0 %v820, 112
        %v823 = vpop.permute.xlu0 %822
        %v825 = vadd.f32 %v817, %v823
        %v826 = vadd.f32 %v733, %v825
        %s827 = sld [smem:[#allocation2 + $0x201]]
        %v828 = vstv %s827
        %v829 = vmul.f32 %v828, %v778
        %s830 = sld [smem:[#allocation4 + $0x201]]
        %v831 = vstv %s830
        %v832 = vmul.f32 %v831, %v778
        %834 = vrot.lane.b32.xlu0 %v832, 112
        %v835 = vpop.permute.xlu0 %834
        %v837 = vadd.f32 %v829, %v835
        %v838 = vadd.f32 %v744, %v837
        %s839 = sld [smem:[#allocation2 + $0x281]]
        %v840 = vstv %s839
        %v841 = vmul.f32 %v840, %v778
        %s842 = sld [smem:[#allocation4 + $0x281]]
        %v843 = vstv %s842
        %v844 = vmul.f32 %v843, %v778
        %846 = vrot.lane.b32.xlu0 %v844, 112
        %v847 = vpop.permute.xlu0 %846
        %v849 = vadd.f32 %v841, %v847
        %v850 = vadd.f32 %v755, %v849
        %s851 = sld [smem:[#allocation2 + $0x301]]
        %v852 = vstv %s851
        %v853 = vmul.f32 %v852, %v778
        %s854 = sld [smem:[#allocation4 + $0x301]]
        %v855 = vstv %s854
        %v856 = vmul.f32 %v855, %v778
        %858 = vrot.lane.b32.xlu0 %v856, 112
        %v859 = vpop.permute.xlu0 %858
        %v861 = vadd.f32 %v853, %v859
        %v862 = vadd.f32 %v766, %v861
        %s863 = sld [smem:[#allocation2 + $0x381]]
        %v864 = vstv %s863
        %v865 = vmul.f32 %v864, %v778
        %s866 = sld [smem:[#allocation4 + $0x381]]
        %v867 = vstv %s866
        %v868 = vmul.f32 %v867, %v778
        %870 = vrot.lane.b32.xlu0 %v868, 112
        %v871 = vpop.permute.xlu0 %870
        %v873 = vadd.f32 %v865, %v871
        %v874 = vadd.f32 %v777, %v873
        %v875 = vld [vmem:[%s453] sm:$0x1]
        %s876 = sld [smem:[#allocation2 + $0x2]]
        %v877 = vstv %s876
        %v878 = vmul.f32 %v877, %v875
        %s879 = sld [smem:[#allocation4 + $0x2]]
        %v880 = vstv %s879
        %v881 = vmul.f32 %v880, %v875
        %883 = vrot.lane.b32.xlu0 %v881, 112
        %v884 = vpop.permute.xlu0 %883
        %v886 = vadd.f32 %v878, %v884
        %v887 = vadd.f32 %v790, %v886
        %s888 = sld [smem:[#allocation2 + $0x82]]
        %v889 = vstv %s888
        %v890 = vmul.f32 %v889, %v875
        %s891 = sld [smem:[#allocation4 + $0x82]]
        %v892 = vstv %s891
        %v893 = vmul.f32 %v892, %v875
        %895 = vrot.lane.b32.xlu0 %v893, 112
        %v896 = vpop.permute.xlu0 %895
        %v898 = vadd.f32 %v890, %v896
        %v899 = vadd.f32 %v802, %v898
        %s900 = sld [smem:[#allocation2 + $0x102]]
        %v901 = vstv %s900
        %v902 = vmul.f32 %v901, %v875
        %s903 = sld [smem:[#allocation4 + $0x102]]
        %v904 = vstv %s903
        %v905 = vmul.f32 %v904, %v875
        %907 = vrot.lane.b32.xlu0 %v905, 112
        %v908 = vpop.permute.xlu0 %907
        %v910 = vadd.f32 %v902, %v908
        %v911 = vadd.f32 %v814, %v910
        %s912 = sld [smem:[#allocation2 + $0x182]]
        %v913 = vstv %s912
        %v914 = vmul.f32 %v913, %v875
        %s915 = sld [smem:[#allocation4 + $0x182]]
        %v916 = vstv %s915
        %v917 = vmul.f32 %v916, %v875
        %919 = vrot.lane.b32.xlu0 %v917, 112
        %v920 = vpop.permute.xlu0 %919
        %v922 = vadd.f32 %v914, %v920
        %v923 = vadd.f32 %v826, %v922
        %s924 = sld [smem:[#allocation2 + $0x202]]
        %v925 = vstv %s924
        %v926 = vmul.f32 %v925, %v875
        %s927 = sld [smem:[#allocation4 + $0x202]]
        %v928 = vstv %s927
        %v929 = vmul.f32 %v928, %v875
        %931 = vrot.lane.b32.xlu0 %v929, 112
        %v932 = vpop.permute.xlu0 %931
        %v934 = vadd.f32 %v926, %v932
        %v935 = vadd.f32 %v838, %v934
        %s936 = sld [smem:[#allocation2 + $0x282]]
        %v937 = vstv %s936
        %v938 = vmul.f32 %v937, %v875
        %s939 = sld [smem:[#allocation4 + $0x282]]
        %v940 = vstv %s939
        %v941 = vmul.f32 %v940, %v875
        %943 = vrot.lane.b32.xlu0 %v941, 112
        %v944 = vpop.permute.xlu0 %943
        %v946 = vadd.f32 %v938, %v944
        %v947 = vadd.f32 %v850, %v946
        %s948 = sld [smem:[#allocation2 + $0x302]]
        %v949 = vstv %s948
        %v950 = vmul.f32 %v949, %v875
        %s951 = sld [smem:[#allocation4 + $0x302]]
        %v952 = vstv %s951
        %v953 = vmul.f32 %v952, %v875
        %955 = vrot.lane.b32.xlu0 %v953, 112
        %v956 = vpop.permute.xlu0 %955
        %v958 = vadd.f32 %v950, %v956
        %v959 = vadd.f32 %v862, %v958
        %s960 = sld [smem:[#allocation2 + $0x382]]
        %v961 = vstv %s960
        %v962 = vmul.f32 %v961, %v875
        %s963 = sld [smem:[#allocation4 + $0x382]]
        %v964 = vstv %s963
        %v965 = vmul.f32 %v964, %v875
        %967 = vrot.lane.b32.xlu0 %v965, 112
        %v968 = vpop.permute.xlu0 %967
        %v970 = vadd.f32 %v962, %v968
        %v971 = vadd.f32 %v874, %v970
        %v972 = vld [vmem:[%s551] sm:$0x1]
        %s973 = sld [smem:[#allocation2 + $0x3]]
        %v974 = vstv %s973
        %v975 = vmul.f32 %v974, %v972
        %s976 = sld [smem:[#allocation4 + $0x3]]
        %v977 = vstv %s976
        %v978 = vmul.f32 %v977, %v972
        %980 = vrot.lane.b32.xlu0 %v978, 112
        %v981 = vpop.permute.xlu0 %980
        %v983 = vadd.f32 %v975, %v981
        %v984 = vadd.f32 %v887, %v983
        %s985 = sld [smem:[#allocation2 + $0x83]]
        %v986 = vstv %s985
        %v987 = vmul.f32 %v986, %v972
        %s988 = sld [smem:[#allocation4 + $0x83]]
        %v989 = vstv %s988
        %v990 = vmul.f32 %v989, %v972
        %992 = vrot.lane.b32.xlu0 %v990, 112
        %v993 = vpop.permute.xlu0 %992
        %v995 = vadd.f32 %v987, %v993
        %v996 = vadd.f32 %v899, %v995
        %s997 = sld [smem:[#allocation2 + $0x103]]
        %v998 = vstv %s997
        %v999 = vmul.f32 %v998, %v972
        %s1000 = sld [smem:[#allocation4 + $0x103]]
        %v1001 = vstv %s1000
        %v1002 = vmul.f32 %v1001, %v972
        %1004 = vrot.lane.b32.xlu0 %v1002, 112
        %v1005 = vpop.permute.xlu0 %1004
        %v1007 = vadd.f32 %v999, %v1005
        %v1008 = vadd.f32 %v911, %v1007
        %s1009 = sld [smem:[#allocation2 + $0x183]]
        %v1010 = vstv %s1009
        %v1011 = vmul.f32 %v1010, %v972
        %s1012 = sld [smem:[#allocation4 + $0x183]]
        %v1013 = vstv %s1012
        %v1014 = vmul.f32 %v1013, %v972
        %1016 = vrot.lane.b32.xlu0 %v1014, 112
        %v1017 = vpop.permute.xlu0 %1016
        %v1019 = vadd.f32 %v1011, %v1017
        %v1020 = vadd.f32 %v923, %v1019
        %s1021 = sld [smem:[#allocation2 + $0x203]]
        %v1022 = vstv %s1021
        %v1023 = vmul.f32 %v1022, %v972
        %s1024 = sld [smem:[#allocation4 + $0x203]]
        %v1025 = vstv %s1024
        %v1026 = vmul.f32 %v1025, %v972
        %1028 = vrot.lane.b32.xlu0 %v1026, 112
        %v1029 = vpop.permute.xlu0 %1028
        %v1031 = vadd.f32 %v1023, %v1029
        %v1032 = vadd.f32 %v935, %v1031
        %s1033 = sld [smem:[#allocation2 + $0x283]]
        %v1034 = vstv %s1033
        %v1035 = vmul.f32 %v1034, %v972
        %s1036 = sld [smem:[#allocation4 + $0x283]]
        %v1037 = vstv %s1036
        %v1038 = vmul.f32 %v1037, %v972
        %1040 = vrot.lane.b32.xlu0 %v1038, 112
        %v1041 = vpop.permute.xlu0 %1040
        %v1043 = vadd.f32 %v1035, %v1041
        %v1044 = vadd.f32 %v947, %v1043
        %s1045 = sld [smem:[#allocation2 + $0x303]]
        %v1046 = vstv %s1045
        %v1047 = vmul.f32 %v1046, %v972
        %s1048 = sld [smem:[#allocation4 + $0x303]]
        %v1049 = vstv %s1048
        %v1050 = vmul.f32 %v1049, %v972
        %1052 = vrot.lane.b32.xlu0 %v1050, 112
        %v1053 = vpop.permute.xlu0 %1052
        %v1055 = vadd.f32 %v1047, %v1053
        %v1056 = vadd.f32 %v959, %v1055
        %s1057 = sld [smem:[#allocation2 + $0x383]]
        %v1058 = vstv %s1057
        %v1059 = vmul.f32 %v1058, %v972
        %s1060 = sld [smem:[#allocation4 + $0x383]]
        %v1061 = vstv %s1060
        %v1062 = vmul.f32 %v1061, %v972
        %1064 = vrot.lane.b32.xlu0 %v1062, 112
        %v1065 = vpop.permute.xlu0 %1064
        %v1067 = vadd.f32 %v1059, %v1065
        %v1068 = vadd.f32 %v971, %v1067
        %s1069 = sld [smem:[#allocation6]]
        %v1070 = vstv %s1069
        %v1071 = vadd.f32 %v984, %v1070
        %v1073 = vlaneseq
        %v1074 = vshrl.u32 %v1073, 7
        %v1075 = vsub.s32 0, %v1074
        %v1076 = vrot.slane %v1071, %v1075
        %1077 = vrot.lane.b32.xlu0 %v1076, 112
        %v1078 = vpop.permute.xlu0 %1077
        %vm1080 = vcmask 254080
        %1081 = vst.msk [vmem:[%s265] sm:$0x1] %vm1080, %v1078
        %s1082 = sld [smem:[#allocation6 + $0x1]]
        %v1083 = vstv %s1082
        %v1084 = vadd.f32 %v996, %v1083
        %v1086 = vlaneseq
        %v1087 = vshrl.u32 %v1086, 7
        %v1088 = vsub.s32 0, %v1087
        %v1089 = vrot.slane %v1084, %v1088
        %1090 = vrot.lane.b32.xlu0 %v1089, 112
        %v1091 = vpop.permute.xlu0 %1090
        %1093 = vst.msk [vmem:[%s657] sm:$0x1] %vm1080, %v1091
        %s1094 = sld [smem:[#allocation6 + $0x2]]
        %v1095 = vstv %s1094
        %v1096 = vadd.f32 %v1008, %v1095
        %v1098 = vlaneseq
        %v1099 = vshrl.u32 %v1098, 7
        %v1100 = vsub.s32 0, %v1099
        %v1101 = vrot.slane %v1096, %v1100
        %1102 = vrot.lane.b32.xlu0 %v1101, 112
        %v1103 = vpop.permute.xlu0 %1102
        %1105 = vst.msk [vmem:[%s662] sm:$0x1] %vm1080, %v1103
        %s1106 = sld [smem:[#allocation6 + $0x3]]
        %v1107 = vstv %s1106
        %v1108 = vadd.f32 %v1020, %v1107
        %v1110 = vlaneseq
        %v1111 = vshrl.u32 %v1110, 7
        %v1112 = vsub.s32 0, %v1111
        %v1113 = vrot.slane %v1108, %v1112
        %1114 = vrot.lane.b32.xlu0 %v1113, 112
        %v1115 = vpop.permute.xlu0 %1114
        %1117 = vst.msk [vmem:[%s667] sm:$0x1] %vm1080, %v1115
        %s1118 = sld [smem:[#allocation6 + $0x4]]
        %v1119 = vstv %s1118
        %v1120 = vadd.f32 %v1032, %v1119
        %v1122 = vlaneseq
        %v1123 = vshrl.u32 %v1122, 7
        %v1124 = vsub.s32 0, %v1123
        %v1125 = vrot.slane %v1120, %v1124
        %1126 = vrot.lane.b32.xlu0 %v1125, 112
        %v1127 = vpop.permute.xlu0 %1126
        %1129 = vst.msk [vmem:[%s672] sm:$0x1] %vm1080, %v1127
        %s1130 = sld [smem:[#allocation6 + $0x5]]
        %v1131 = vstv %s1130
        %v1132 = vadd.f32 %v1044, %v1131
        %v1134 = vlaneseq
        %v1135 = vshrl.u32 %v1134, 7
        %v1136 = vsub.s32 0, %v1135
        %v1137 = vrot.slane %v1132, %v1136
        %1138 = vrot.lane.b32.xlu0 %v1137, 112
        %v1139 = vpop.permute.xlu0 %1138
        %1141 = vst.msk [vmem:[%s677] sm:$0x1] %vm1080, %v1139
        %s1142 = sld [smem:[#allocation6 + $0x6]]
        %v1143 = vstv %s1142
        %v1144 = vadd.f32 %v1056, %v1143
        %v1146 = vlaneseq
        %v1147 = vshrl.u32 %v1146, 7
        %v1148 = vsub.s32 0, %v1147
        %v1149 = vrot.slane %v1144, %v1148
        %1150 = vrot.lane.b32.xlu0 %v1149, 112
        %v1151 = vpop.permute.xlu0 %1150
        %1153 = vst.msk [vmem:[%s682] sm:$0x1] %vm1080, %v1151
        %s1154 = sld [smem:[#allocation6 + $0x7]]
        %v1155 = vstv %s1154
        %v1156 = vadd.f32 %v1068, %v1155
        %v1158 = vlaneseq
        %v1159 = vshrl.u32 %v1158, 7
        %v1160 = vsub.s32 0, %v1159
        %v1161 = vrot.slane %v1156, %v1160
        %1162 = vrot.lane.b32.xlu0 %v1161, 112
        %v1163 = vpop.permute.xlu0 %1162
        %1165 = vst.msk [vmem:[%s687] sm:$0x1] %vm1080, %v1163
        %v1166 = vld [vmem:[%s258] sm:$0x1]
        %s1167 = sld [smem:[#allocation2]]
        %v1168 = vstv %s1167
        %v1169 = vmul.f32 %v1168, %v1166
        %s1170 = sld [smem:[#allocation4]]
        %v1171 = vstv %s1170
        %v1172 = vmul.f32 %v1171, %v1166
        %1174 = vrot.lane.b32.xlu0 %v1172, 112
        %v1175 = vpop.permute.xlu0 %1174
        %v1177 = vadd.f32 %v1169, %v1175
        %s1178 = sld [smem:[#allocation2 + $0x80]]
        %v1179 = vstv %s1178
        %v1180 = vmul.f32 %v1179, %v1166
        %s1181 = sld [smem:[#allocation4 + $0x80]]
        %v1182 = vstv %s1181
        %v1183 = vmul.f32 %v1182, %v1166
        %1185 = vrot.lane.b32.xlu0 %v1183, 112
        %v1186 = vpop.permute.xlu0 %1185
        %v1188 = vadd.f32 %v1180, %v1186
        %s1189 = sld [smem:[#allocation2 + $0x100]]
        %v1190 = vstv %s1189
        %v1191 = vmul.f32 %v1190, %v1166
        %s1192 = sld [smem:[#allocation4 + $0x100]]
        %v1193 = vstv %s1192
        %v1194 = vmul.f32 %v1193, %v1166
        %1196 = vrot.lane.b32.xlu0 %v1194, 112
        %v1197 = vpop.permute.xlu0 %1196
        %v1199 = vadd.f32 %v1191, %v1197
        %s1200 = sld [smem:[#allocation2 + $0x180]]
        %v1201 = vstv %s1200
        %v1202 = vmul.f32 %v1201, %v1166
        %s1203 = sld [smem:[#allocation4 + $0x180]]
        %v1204 = vstv %s1203
        %v1205 = vmul.f32 %v1204, %v1166
        %1207 = vrot.lane.b32.xlu0 %v1205, 112
        %v1208 = vpop.permute.xlu0 %1207
        %v1210 = vadd.f32 %v1202, %v1208
        %s1211 = sld [smem:[#allocation2 + $0x200]]
        %v1212 = vstv %s1211
        %v1213 = vmul.f32 %v1212, %v1166
        %s1214 = sld [smem:[#allocation4 + $0x200]]
        %v1215 = vstv %s1214
        %v1216 = vmul.f32 %v1215, %v1166
        %1218 = vrot.lane.b32.xlu0 %v1216, 112
        %v1219 = vpop.permute.xlu0 %1218
        %v1221 = vadd.f32 %v1213, %v1219
        %s1222 = sld [smem:[#allocation2 + $0x280]]
        %v1223 = vstv %s1222
        %v1224 = vmul.f32 %v1223, %v1166
        %s1225 = sld [smem:[#allocation4 + $0x280]]
        %v1226 = vstv %s1225
        %v1227 = vmul.f32 %v1226, %v1166
        %1229 = vrot.lane.b32.xlu0 %v1227, 112
        %v1230 = vpop.permute.xlu0 %1229
        %v1232 = vadd.f32 %v1224, %v1230
        %s1233 = sld [smem:[#allocation2 + $0x300]]
        %v1234 = vstv %s1233
        %v1235 = vmul.f32 %v1234, %v1166
        %s1236 = sld [smem:[#allocation4 + $0x300]]
        %v1237 = vstv %s1236
        %v1238 = vmul.f32 %v1237, %v1166
        %1240 = vrot.lane.b32.xlu0 %v1238, 112
        %v1241 = vpop.permute.xlu0 %1240
        %v1243 = vadd.f32 %v1235, %v1241
        %s1244 = sld [smem:[#allocation2 + $0x380]]
        %v1245 = vstv %s1244
        %v1246 = vmul.f32 %v1245, %v1166
        %s1247 = sld [smem:[#allocation4 + $0x380]]
        %v1248 = vstv %s1247
        %v1249 = vmul.f32 %v1248, %v1166
        %1251 = vrot.lane.b32.xlu0 %v1249, 112
        %v1252 = vpop.permute.xlu0 %1251
        %v1254 = vadd.f32 %v1246, %v1252
        %v1255 = vld [vmem:[%s355] sm:$0x1]
        %s1256 = sld [smem:[#allocation2 + $0x1]]
        %v1257 = vstv %s1256
        %v1258 = vmul.f32 %v1257, %v1255
        %s1259 = sld [smem:[#allocation4 + $0x1]]
        %v1260 = vstv %s1259
        %v1261 = vmul.f32 %v1260, %v1255
        %1263 = vrot.lane.b32.xlu0 %v1261, 112
        %v1264 = vpop.permute.xlu0 %1263
        %v1266 = vadd.f32 %v1258, %v1264
        %v1267 = vadd.f32 %v1177, %v1266
        %s1268 = sld [smem:[#allocation2 + $0x81]]
        %v1269 = vstv %s1268
        %v1270 = vmul.f32 %v1269, %v1255
        %s1271 = sld [smem:[#allocation4 + $0x81]]
        %v1272 = vstv %s1271
        %v1273 = vmul.f32 %v1272, %v1255
        %1275 = vrot.lane.b32.xlu0 %v1273, 112
        %v1276 = vpop.permute.xlu0 %1275
        %v1278 = vadd.f32 %v1270, %v1276
        %v1279 = vadd.f32 %v1188, %v1278
        %s1280 = sld [smem:[#allocation2 + $0x101]]
        %v1281 = vstv %s1280
        %v1282 = vmul.f32 %v1281, %v1255
        %s1283 = sld [smem:[#allocation4 + $0x101]]
        %v1284 = vstv %s1283
        %v1285 = vmul.f32 %v1284, %v1255
        %1287 = vrot.lane.b32.xlu0 %v1285, 112
        %v1288 = vpop.permute.xlu0 %1287
        %v1290 = vadd.f32 %v1282, %v1288
        %v1291 = vadd.f32 %v1199, %v1290
        %s1292 = sld [smem:[#allocation2 + $0x181]]
        %v1293 = vstv %s1292
        %v1294 = vmul.f32 %v1293, %v1255
        %s1295 = sld [smem:[#allocation4 + $0x181]]
        %v1296 = vstv %s1295
        %v1297 = vmul.f32 %v1296, %v1255
        %1299 = vrot.lane.b32.xlu0 %v1297, 112
        %v1300 = vpop.permute.xlu0 %1299
        %v1302 = vadd.f32 %v1294, %v1300
        %v1303 = vadd.f32 %v1210, %v1302
        %s1304 = sld [smem:[#allocation2 + $0x201]]
        %v1305 = vstv %s1304
        %v1306 = vmul.f32 %v1305, %v1255
        %s1307 = sld [smem:[#allocation4 + $0x201]]
        %v1308 = vstv %s1307
        %v1309 = vmul.f32 %v1308, %v1255
        %1311 = vrot.lane.b32.xlu0 %v1309, 112
        %v1312 = vpop.permute.xlu0 %1311
        %v1314 = vadd.f32 %v1306, %v1312
        %v1315 = vadd.f32 %v1221, %v1314
        %s1316 = sld [smem:[#allocation2 + $0x281]]
        %v1317 = vstv %s1316
        %v1318 = vmul.f32 %v1317, %v1255
        %s1319 = sld [smem:[#allocation4 + $0x281]]
        %v1320 = vstv %s1319
        %v1321 = vmul.f32 %v1320, %v1255
        %1323 = vrot.lane.b32.xlu0 %v1321, 112
        %v1324 = vpop.permute.xlu0 %1323
        %v1326 = vadd.f32 %v1318, %v1324
        %v1327 = vadd.f32 %v1232, %v1326
        %s1328 = sld [smem:[#allocation2 + $0x301]]
        %v1329 = vstv %s1328
        %v1330 = vmul.f32 %v1329, %v1255
        %s1331 = sld [smem:[#allocation4 + $0x301]]
        %v1332 = vstv %s1331
        %v1333 = vmul.f32 %v1332, %v1255
        %1335 = vrot.lane.b32.xlu0 %v1333, 112
        %v1336 = vpop.permute.xlu0 %1335
        %v1338 = vadd.f32 %v1330, %v1336
        %v1339 = vadd.f32 %v1243, %v1338
        %s1340 = sld [smem:[#allocation2 + $0x381]]
        %v1341 = vstv %s1340
        %v1342 = vmul.f32 %v1341, %v1255
        %s1343 = sld [smem:[#allocation4 + $0x381]]
        %v1344 = vstv %s1343
        %v1345 = vmul.f32 %v1344, %v1255
        %1347 = vrot.lane.b32.xlu0 %v1345, 112
        %v1348 = vpop.permute.xlu0 %1347
        %v1350 = vadd.f32 %v1342, %v1348
        %v1351 = vadd.f32 %v1254, %v1350
        %v1352 = vld [vmem:[%s453] sm:$0x1]
        %s1353 = sld [smem:[#allocation2 + $0x2]]
        %v1354 = vstv %s1353
        %v1355 = vmul.f32 %v1354, %v1352
        %s1356 = sld [smem:[#allocation4 + $0x2]]
        %v1357 = vstv %s1356
        %v1358 = vmul.f32 %v1357, %v1352
        %1360 = vrot.lane.b32.xlu0 %v1358, 112
        %v1361 = vpop.permute.xlu0 %1360
        %v1363 = vadd.f32 %v1355, %v1361
        %v1364 = vadd.f32 %v1267, %v1363
        %s1365 = sld [smem:[#allocation2 + $0x82]]
        %v1366 = vstv %s1365
        %v1367 = vmul.f32 %v1366, %v1352
        %s1368 = sld [smem:[#allocation4 + $0x82]]
        %v1369 = vstv %s1368
        %v1370 = vmul.f32 %v1369, %v1352
        %1372 = vrot.lane.b32.xlu0 %v1370, 112
        %v1373 = vpop.permute.xlu0 %1372
        %v1375 = vadd.f32 %v1367, %v1373
        %v1376 = vadd.f32 %v1279, %v1375
        %s1377 = sld [smem:[#allocation2 + $0x102]]
        %v1378 = vstv %s1377
        %v1379 = vmul.f32 %v1378, %v1352
        %s1380 = sld [smem:[#allocation4 + $0x102]]
        %v1381 = vstv %s1380
        %v1382 = vmul.f32 %v1381, %v1352
        %1384 = vrot.lane.b32.xlu0 %v1382, 112
        %v1385 = vpop.permute.xlu0 %1384
        %v1387 = vadd.f32 %v1379, %v1385
        %v1388 = vadd.f32 %v1291, %v1387
        %s1389 = sld [smem:[#allocation2 + $0x182]]
        %v1390 = vstv %s1389
        %v1391 = vmul.f32 %v1390, %v1352
        %s1392 = sld [smem:[#allocation4 + $0x182]]
        %v1393 = vstv %s1392
        %v1394 = vmul.f32 %v1393, %v1352
        %1396 = vrot.lane.b32.xlu0 %v1394, 112
        %v1397 = vpop.permute.xlu0 %1396
        %v1399 = vadd.f32 %v1391, %v1397
        %v1400 = vadd.f32 %v1303, %v1399
        %s1401 = sld [smem:[#allocation2 + $0x202]]
        %v1402 = vstv %s1401
        %v1403 = vmul.f32 %v1402, %v1352
        %s1404 = sld [smem:[#allocation4 + $0x202]]
        %v1405 = vstv %s1404
        %v1406 = vmul.f32 %v1405, %v1352
        %1408 = vrot.lane.b32.xlu0 %v1406, 112
        %v1409 = vpop.permute.xlu0 %1408
        %v1411 = vadd.f32 %v1403, %v1409
        %v1412 = vadd.f32 %v1315, %v1411
        %s1413 = sld [smem:[#allocation2 + $0x282]]
        %v1414 = vstv %s1413
        %v1415 = vmul.f32 %v1414, %v1352
        %s1416 = sld [smem:[#allocation4 + $0x282]]
        %v1417 = vstv %s1416
        %v1418 = vmul.f32 %v1417, %v1352
        %1420 = vrot.lane.b32.xlu0 %v1418, 112
        %v1421 = vpop.permute.xlu0 %1420
        %v1423 = vadd.f32 %v1415, %v1421
        %v1424 = vadd.f32 %v1327, %v1423
        %s1425 = sld [smem:[#allocation2 + $0x302]]
        %v1426 = vstv %s1425
        %v1427 = vmul.f32 %v1426, %v1352
        %s1428 = sld [smem:[#allocation4 + $0x302]]
        %v1429 = vstv %s1428
        %v1430 = vmul.f32 %v1429, %v1352
        %1432 = vrot.lane.b32.xlu0 %v1430, 112
        %v1433 = vpop.permute.xlu0 %1432
        %v1435 = vadd.f32 %v1427, %v1433
        %v1436 = vadd.f32 %v1339, %v1435
        %s1437 = sld [smem:[#allocation2 + $0x382]]
        %v1438 = vstv %s1437
        %v1439 = vmul.f32 %v1438, %v1352
        %s1440 = sld [smem:[#allocation4 + $0x382]]
        %v1441 = vstv %s1440
        %v1442 = vmul.f32 %v1441, %v1352
        %1444 = vrot.lane.b32.xlu0 %v1442, 112
        %v1445 = vpop.permute.xlu0 %1444
        %v1447 = vadd.f32 %v1439, %v1445
        %v1448 = vadd.f32 %v1351, %v1447
        %v1449 = vld [vmem:[%s551] sm:$0x1]
        %s1450 = sld [smem:[#allocation2 + $0x3]]
        %v1451 = vstv %s1450
        %v1452 = vmul.f32 %v1451, %v1449
        %s1453 = sld [smem:[#allocation4 + $0x3]]
        %v1454 = vstv %s1453
        %v1455 = vmul.f32 %v1454, %v1449
        %1457 = vrot.lane.b32.xlu0 %v1455, 112
        %v1458 = vpop.permute.xlu0 %1457
        %v1460 = vadd.f32 %v1452, %v1458
        %v1461 = vadd.f32 %v1364, %v1460
        %s1462 = sld [smem:[#allocation2 + $0x83]]
        %v1463 = vstv %s1462
        %v1464 = vmul.f32 %v1463, %v1449
        %s1465 = sld [smem:[#allocation4 + $0x83]]
        %v1466 = vstv %s1465
        %v1467 = vmul.f32 %v1466, %v1449
        %1469 = vrot.lane.b32.xlu0 %v1467, 112
        %v1470 = vpop.permute.xlu0 %1469
        %v1472 = vadd.f32 %v1464, %v1470
        %v1473 = vadd.f32 %v1376, %v1472
        %s1474 = sld [smem:[#allocation2 + $0x103]]
        %v1475 = vstv %s1474
        %v1476 = vmul.f32 %v1475, %v1449
        %s1477 = sld [smem:[#allocation4 + $0x103]]
        %v1478 = vstv %s1477
        %v1479 = vmul.f32 %v1478, %v1449
        %1481 = vrot.lane.b32.xlu0 %v1479, 112
        %v1482 = vpop.permute.xlu0 %1481
        %v1484 = vadd.f32 %v1476, %v1482
        %v1485 = vadd.f32 %v1388, %v1484
        %s1486 = sld [smem:[#allocation2 + $0x183]]
        %v1487 = vstv %s1486
        %v1488 = vmul.f32 %v1487, %v1449
        %s1489 = sld [smem:[#allocation4 + $0x183]]
        %v1490 = vstv %s1489
        %v1491 = vmul.f32 %v1490, %v1449
        %1493 = vrot.lane.b32.xlu0 %v1491, 112
        %v1494 = vpop.permute.xlu0 %1493
        %v1496 = vadd.f32 %v1488, %v1494
        %v1497 = vadd.f32 %v1400, %v1496
        %s1498 = sld [smem:[#allocation2 + $0x203]]
        %v1499 = vstv %s1498
        %v1500 = vmul.f32 %v1499, %v1449
        %s1501 = sld [smem:[#allocation4 + $0x203]]
        %v1502 = vstv %s1501
        %v1503 = vmul.f32 %v1502, %v1449
        %1505 = vrot.lane.b32.xlu0 %v1503, 112
        %v1506 = vpop.permute.xlu0 %1505
        %v1508 = vadd.f32 %v1500, %v1506
        %v1509 = vadd.f32 %v1412, %v1508
        %s1510 = sld [smem:[#allocation2 + $0x283]]
        %v1511 = vstv %s1510
        %v1512 = vmul.f32 %v1511, %v1449
        %s1513 = sld [smem:[#allocation4 + $0x283]]
        %v1514 = vstv %s1513
        %v1515 = vmul.f32 %v1514, %v1449
        %1517 = vrot.lane.b32.xlu0 %v1515, 112
        %v1518 = vpop.permute.xlu0 %1517
        %v1520 = vadd.f32 %v1512, %v1518
        %v1521 = vadd.f32 %v1424, %v1520
        %s1522 = sld [smem:[#allocation2 + $0x303]]
        %v1523 = vstv %s1522
        %v1524 = vmul.f32 %v1523, %v1449
        %s1525 = sld [smem:[#allocation4 + $0x303]]
        %v1526 = vstv %s1525
        %v1527 = vmul.f32 %v1526, %v1449
        %1529 = vrot.lane.b32.xlu0 %v1527, 112
        %v1530 = vpop.permute.xlu0 %1529
        %v1532 = vadd.f32 %v1524, %v1530
        %v1533 = vadd.f32 %v1436, %v1532
        %s1534 = sld [smem:[#allocation2 + $0x383]]
        %v1535 = vstv %s1534
        %v1536 = vmul.f32 %v1535, %v1449
        %s1537 = sld [smem:[#allocation4 + $0x383]]
        %v1538 = vstv %s1537
        %v1539 = vmul.f32 %v1538, %v1449
        %1541 = vrot.lane.b32.xlu0 %v1539, 112
        %v1542 = vpop.permute.xlu0 %1541
        %v1544 = vadd.f32 %v1536, %v1542
        %v1545 = vadd.f32 %v1448, %v1544
        %s1546 = sld [smem:[#allocation6]]
        %v1547 = vstv %s1546
        %v1548 = vadd.f32 %v1461, %v1547
        %v1550 = vlaneseq
        %v1551 = vshrl.u32 %v1550, 7
        %v1552 = vsub.s32 0, %v1551
        %v1553 = vrot.slane %v1548, %v1552
        %1554 = vrot.lane.b32.xlu0 %v1553, 96
        %v1555 = vpop.permute.xlu0 %1554
        %vm1557 = vcmask 385280
        %1558 = vst.msk [vmem:[%s265] sm:$0x1] %vm1557, %v1555
        %s1559 = sld [smem:[#allocation6 + $0x1]]
        %v1560 = vstv %s1559
        %v1561 = vadd.f32 %v1473, %v1560
        %v1563 = vlaneseq
        %v1564 = vshrl.u32 %v1563, 7
        %v1565 = vsub.s32 0, %v1564
        %v1566 = vrot.slane %v1561, %v1565
        %1567 = vrot.lane.b32.xlu0 %v1566, 96
        %v1568 = vpop.permute.xlu0 %1567
        %1570 = vst.msk [vmem:[%s657] sm:$0x1] %vm1557, %v1568
        %s1571 = sld [smem:[#allocation6 + $0x2]]
        %v1572 = vstv %s1571
        %v1573 = vadd.f32 %v1485, %v1572
        %v1575 = vlaneseq
        %v1576 = vshrl.u32 %v1575, 7
        %v1577 = vsub.s32 0, %v1576
        %v1578 = vrot.slane %v1573, %v1577
        %1579 = vrot.lane.b32.xlu0 %v1578, 96
        %v1580 = vpop.permute.xlu0 %1579
        %1582 = vst.msk [vmem:[%s662] sm:$0x1] %vm1557, %v1580
        %s1583 = sld [smem:[#allocation6 + $0x3]]
        %v1584 = vstv %s1583
        %v1585 = vadd.f32 %v1497, %v1584
        %v1587 = vlaneseq
        %v1588 = vshrl.u32 %v1587, 7
        %v1589 = vsub.s32 0, %v1588
        %v1590 = vrot.slane %v1585, %v1589
        %1591 = vrot.lane.b32.xlu0 %v1590, 96
        %v1592 = vpop.permute.xlu0 %1591
        %1594 = vst.msk [vmem:[%s667] sm:$0x1] %vm1557, %v1592
        %s1595 = sld [smem:[#allocation6 + $0x4]]
        %v1596 = vstv %s1595
        %v1597 = vadd.f32 %v1509, %v1596
        %v1599 = vlaneseq
        %v1600 = vshrl.u32 %v1599, 7
        %v1601 = vsub.s32 0, %v1600
        %v1602 = vrot.slane %v1597, %v1601
        %1603 = vrot.lane.b32.xlu0 %v1602, 96
        %v1604 = vpop.permute.xlu0 %1603
        %1606 = vst.msk [vmem:[%s672] sm:$0x1] %vm1557, %v1604
        %s1607 = sld [smem:[#allocation6 + $0x5]]
        %v1608 = vstv %s1607
        %v1609 = vadd.f32 %v1521, %v1608
        %v1611 = vlaneseq
        %v1612 = vshrl.u32 %v1611, 7
        %v1613 = vsub.s32 0, %v1612
        %v1614 = vrot.slane %v1609, %v1613
        %1615 = vrot.lane.b32.xlu0 %v1614, 96
        %v1616 = vpop.permute.xlu0 %1615
        %1618 = vst.msk [vmem:[%s677] sm:$0x1] %vm1557, %v1616
        %s1619 = sld [smem:[#allocation6 + $0x6]]
        %v1620 = vstv %s1619
        %v1621 = vadd.f32 %v1533, %v1620
        %v1623 = vlaneseq
        %v1624 = vshrl.u32 %v1623, 7
        %v1625 = vsub.s32 0, %v1624
        %v1626 = vrot.slane %v1621, %v1625
        %1627 = vrot.lane.b32.xlu0 %v1626, 96
        %v1628 = vpop.permute.xlu0 %1627
        %1630 = vst.msk [vmem:[%s682] sm:$0x1] %vm1557, %v1628
        %s1631 = sld [smem:[#allocation6 + $0x7]]
        %v1632 = vstv %s1631
        %v1633 = vadd.f32 %v1545, %v1632
        %v1635 = vlaneseq
        %v1636 = vshrl.u32 %v1635, 7
        %v1637 = vsub.s32 0, %v1636
        %v1638 = vrot.slane %v1633, %v1637
        %1639 = vrot.lane.b32.xlu0 %v1638, 96
        %v1640 = vpop.permute.xlu0 %1639
        %1642 = vst.msk [vmem:[%s687] sm:$0x1] %vm1557, %v1640
        %v1643 = vld [vmem:[%s258] sm:$0x1]
        %s1644 = sld [smem:[#allocation2]]
        %v1645 = vstv %s1644
        %v1646 = vmul.f32 %v1645, %v1643
        %s1647 = sld [smem:[#allocation4]]
        %v1648 = vstv %s1647
        %v1649 = vmul.f32 %v1648, %v1643
        %1651 = vrot.lane.b32.xlu0 %v1649, 112
        %v1652 = vpop.permute.xlu0 %1651
        %v1654 = vadd.f32 %v1646, %v1652
        %s1655 = sld [smem:[#allocation2 + $0x80]]
        %v1656 = vstv %s1655
        %v1657 = vmul.f32 %v1656, %v1643
        %s1658 = sld [smem:[#allocation4 + $0x80]]
        %v1659 = vstv %s1658
        %v1660 = vmul.f32 %v1659, %v1643
        %1662 = vrot.lane.b32.xlu0 %v1660, 112
        %v1663 = vpop.permute.xlu0 %1662
        %v1665 = vadd.f32 %v1657, %v1663
        %s1666 = sld [smem:[#allocation2 + $0x100]]
        %v1667 = vstv %s1666
        %v1668 = vmul.f32 %v1667, %v1643
        %s1669 = sld [smem:[#allocation4 + $0x100]]
        %v1670 = vstv %s1669
        %v1671 = vmul.f32 %v1670, %v1643
        %1673 = vrot.lane.b32.xlu0 %v1671, 112
        %v1674 = vpop.permute.xlu0 %1673
        %v1676 = vadd.f32 %v1668, %v1674
        %s1677 = sld [smem:[#allocation2 + $0x180]]
        %v1678 = vstv %s1677
        %v1679 = vmul.f32 %v1678, %v1643
        %s1680 = sld [smem:[#allocation4 + $0x180]]
        %v1681 = vstv %s1680
        %v1682 = vmul.f32 %v1681, %v1643
        %1684 = vrot.lane.b32.xlu0 %v1682, 112
        %v1685 = vpop.permute.xlu0 %1684
        %v1687 = vadd.f32 %v1679, %v1685
        %s1688 = sld [smem:[#allocation2 + $0x200]]
        %v1689 = vstv %s1688
        %v1690 = vmul.f32 %v1689, %v1643
        %s1691 = sld [smem:[#allocation4 + $0x200]]
        %v1692 = vstv %s1691
        %v1693 = vmul.f32 %v1692, %v1643
        %1695 = vrot.lane.b32.xlu0 %v1693, 112
        %v1696 = vpop.permute.xlu0 %1695
        %v1698 = vadd.f32 %v1690, %v1696
        %s1699 = sld [smem:[#allocation2 + $0x280]]
        %v1700 = vstv %s1699
        %v1701 = vmul.f32 %v1700, %v1643
        %s1702 = sld [smem:[#allocation4 + $0x280]]
        %v1703 = vstv %s1702
        %v1704 = vmul.f32 %v1703, %v1643
        %1706 = vrot.lane.b32.xlu0 %v1704, 112
        %v1707 = vpop.permute.xlu0 %1706
        %v1709 = vadd.f32 %v1701, %v1707
        %s1710 = sld [smem:[#allocation2 + $0x300]]
        %v1711 = vstv %s1710
        %v1712 = vmul.f32 %v1711, %v1643
        %s1713 = sld [smem:[#allocation4 + $0x300]]
        %v1714 = vstv %s1713
        %v1715 = vmul.f32 %v1714, %v1643
        %1717 = vrot.lane.b32.xlu0 %v1715, 112
        %v1718 = vpop.permute.xlu0 %1717
        %v1720 = vadd.f32 %v1712, %v1718
        %s1721 = sld [smem:[#allocation2 + $0x380]]
        %v1722 = vstv %s1721
        %v1723 = vmul.f32 %v1722, %v1643
        %s1724 = sld [smem:[#allocation4 + $0x380]]
        %v1725 = vstv %s1724
        %v1726 = vmul.f32 %v1725, %v1643
        %1728 = vrot.lane.b32.xlu0 %v1726, 112
        %v1729 = vpop.permute.xlu0 %1728
        %v1731 = vadd.f32 %v1723, %v1729
        %v1732 = vld [vmem:[%s355] sm:$0x1]
        %s1733 = sld [smem:[#allocation2 + $0x1]]
        %v1734 = vstv %s1733
        %v1735 = vmul.f32 %v1734, %v1732
        %s1736 = sld [smem:[#allocation4 + $0x1]]
        %v1737 = vstv %s1736
        %v1738 = vmul.f32 %v1737, %v1732
        %1740 = vrot.lane.b32.xlu0 %v1738, 112
        %v1741 = vpop.permute.xlu0 %1740
        %v1743 = vadd.f32 %v1735, %v1741
        %v1744 = vadd.f32 %v1654, %v1743
        %s1745 = sld [smem:[#allocation2 + $0x81]]
        %v1746 = vstv %s1745
        %v1747 = vmul.f32 %v1746, %v1732
        %s1748 = sld [smem:[#allocation4 + $0x81]]
        %v1749 = vstv %s1748
        %v1750 = vmul.f32 %v1749, %v1732
        %1752 = vrot.lane.b32.xlu0 %v1750, 112
        %v1753 = vpop.permute.xlu0 %1752
        %v1755 = vadd.f32 %v1747, %v1753
        %v1756 = vadd.f32 %v1665, %v1755
        %s1757 = sld [smem:[#allocation2 + $0x101]]
        %v1758 = vstv %s1757
        %v1759 = vmul.f32 %v1758, %v1732
        %s1760 = sld [smem:[#allocation4 + $0x101]]
        %v1761 = vstv %s1760
        %v1762 = vmul.f32 %v1761, %v1732
        %1764 = vrot.lane.b32.xlu0 %v1762, 112
        %v1765 = vpop.permute.xlu0 %1764
        %v1767 = vadd.f32 %v1759, %v1765
        %v1768 = vadd.f32 %v1676, %v1767
        %s1769 = sld [smem:[#allocation2 + $0x181]]
        %v1770 = vstv %s1769
        %v1771 = vmul.f32 %v1770, %v1732
        %s1772 = sld [smem:[#allocation4 + $0x181]]
        %v1773 = vstv %s1772
        %v1774 = vmul.f32 %v1773, %v1732
        %1776 = vrot.lane.b32.xlu0 %v1774, 112
        %v1777 = vpop.permute.xlu0 %1776
        %v1779 = vadd.f32 %v1771, %v1777
        %v1780 = vadd.f32 %v1687, %v1779
        %s1781 = sld [smem:[#allocation2 + $0x201]]
        %v1782 = vstv %s1781
        %v1783 = vmul.f32 %v1782, %v1732
        %s1784 = sld [smem:[#allocation4 + $0x201]]
        %v1785 = vstv %s1784
        %v1786 = vmul.f32 %v1785, %v1732
        %1788 = vrot.lane.b32.xlu0 %v1786, 112
        %v1789 = vpop.permute.xlu0 %1788
        %v1791 = vadd.f32 %v1783, %v1789
        %v1792 = vadd.f32 %v1698, %v1791
        %s1793 = sld [smem:[#allocation2 + $0x281]]
        %v1794 = vstv %s1793
        %v1795 = vmul.f32 %v1794, %v1732
        %s1796 = sld [smem:[#allocation4 + $0x281]]
        %v1797 = vstv %s1796
        %v1798 = vmul.f32 %v1797, %v1732
        %1800 = vrot.lane.b32.xlu0 %v1798, 112
        %v1801 = vpop.permute.xlu0 %1800
        %v1803 = vadd.f32 %v1795, %v1801
        %v1804 = vadd.f32 %v1709, %v1803
        %s1805 = sld [smem:[#allocation2 + $0x301]]
        %v1806 = vstv %s1805
        %v1807 = vmul.f32 %v1806, %v1732
        %s1808 = sld [smem:[#allocation4 + $0x301]]
        %v1809 = vstv %s1808
        %v1810 = vmul.f32 %v1809, %v1732
        %1812 = vrot.lane.b32.xlu0 %v1810, 112
        %v1813 = vpop.permute.xlu0 %1812
        %v1815 = vadd.f32 %v1807, %v1813
        %v1816 = vadd.f32 %v1720, %v1815
        %s1817 = sld [smem:[#allocation2 + $0x381]]
        %v1818 = vstv %s1817
        %v1819 = vmul.f32 %v1818, %v1732
        %s1820 = sld [smem:[#allocation4 + $0x381]]
        %v1821 = vstv %s1820
        %v1822 = vmul.f32 %v1821, %v1732
        %1824 = vrot.lane.b32.xlu0 %v1822, 112
        %v1825 = vpop.permute.xlu0 %1824
        %v1827 = vadd.f32 %v1819, %v1825
        %v1828 = vadd.f32 %v1731, %v1827
        %v1829 = vld [vmem:[%s453] sm:$0x1]
        %s1830 = sld [smem:[#allocation2 + $0x2]]
        %v1831 = vstv %s1830
        %v1832 = vmul.f32 %v1831, %v1829
        %s1833 = sld [smem:[#allocation4 + $0x2]]
        %v1834 = vstv %s1833
        %v1835 = vmul.f32 %v1834, %v1829
        %1837 = vrot.lane.b32.xlu0 %v1835, 112
        %v1838 = vpop.permute.xlu0 %1837
        %v1840 = vadd.f32 %v1832, %v1838
        %v1841 = vadd.f32 %v1744, %v1840
        %s1842 = sld [smem:[#allocation2 + $0x82]]
        %v1843 = vstv %s1842
        %v1844 = vmul.f32 %v1843, %v1829
        %s1845 = sld [smem:[#allocation4 + $0x82]]
        %v1846 = vstv %s1845
        %v1847 = vmul.f32 %v1846, %v1829
        %1849 = vrot.lane.b32.xlu0 %v1847, 112
        %v1850 = vpop.permute.xlu0 %1849
        %v1852 = vadd.f32 %v1844, %v1850
        %v1853 = vadd.f32 %v1756, %v1852
        %s1854 = sld [smem:[#allocation2 + $0x102]]
        %v1855 = vstv %s1854
        %v1856 = vmul.f32 %v1855, %v1829
        %s1857 = sld [smem:[#allocation4 + $0x102]]
        %v1858 = vstv %s1857
        %v1859 = vmul.f32 %v1858, %v1829
        %1861 = vrot.lane.b32.xlu0 %v1859, 112
        %v1862 = vpop.permute.xlu0 %1861
        %v1864 = vadd.f32 %v1856, %v1862
        %v1865 = vadd.f32 %v1768, %v1864
        %s1866 = sld [smem:[#allocation2 + $0x182]]
        %v1867 = vstv %s1866
        %v1868 = vmul.f32 %v1867, %v1829
        %s1869 = sld [smem:[#allocation4 + $0x182]]
        %v1870 = vstv %s1869
        %v1871 = vmul.f32 %v1870, %v1829
        %1873 = vrot.lane.b32.xlu0 %v1871, 112
        %v1874 = vpop.permute.xlu0 %1873
        %v1876 = vadd.f32 %v1868, %v1874
        %v1877 = vadd.f32 %v1780, %v1876
        %s1878 = sld [smem:[#allocation2 + $0x202]]
        %v1879 = vstv %s1878
        %v1880 = vmul.f32 %v1879, %v1829
        %s1881 = sld [smem:[#allocation4 + $0x202]]
        %v1882 = vstv %s1881
        %v1883 = vmul.f32 %v1882, %v1829
        %1885 = vrot.lane.b32.xlu0 %v1883, 112
        %v1886 = vpop.permute.xlu0 %1885
        %v1888 = vadd.f32 %v1880, %v1886
        %v1889 = vadd.f32 %v1792, %v1888
        %s1890 = sld [smem:[#allocation2 + $0x282]]
        %v1891 = vstv %s1890
        %v1892 = vmul.f32 %v1891, %v1829
        %s1893 = sld [smem:[#allocation4 + $0x282]]
        %v1894 = vstv %s1893
        %v1895 = vmul.f32 %v1894, %v1829
        %1897 = vrot.lane.b32.xlu0 %v1895, 112
        %v1898 = vpop.permute.xlu0 %1897
        %v1900 = vadd.f32 %v1892, %v1898
        %v1901 = vadd.f32 %v1804, %v1900
        %s1902 = sld [smem:[#allocation2 + $0x302]]
        %v1903 = vstv %s1902
        %v1904 = vmul.f32 %v1903, %v1829
        %s1905 = sld [smem:[#allocation4 + $0x302]]
        %v1906 = vstv %s1905
        %v1907 = vmul.f32 %v1906, %v1829
        %1909 = vrot.lane.b32.xlu0 %v1907, 112
        %v1910 = vpop.permute.xlu0 %1909
        %v1912 = vadd.f32 %v1904, %v1910
        %v1913 = vadd.f32 %v1816, %v1912
        %s1914 = sld [smem:[#allocation2 + $0x382]]
        %v1915 = vstv %s1914
        %v1916 = vmul.f32 %v1915, %v1829
        %s1917 = sld [smem:[#allocation4 + $0x382]]
        %v1918 = vstv %s1917
        %v1919 = vmul.f32 %v1918, %v1829
        %1921 = vrot.lane.b32.xlu0 %v1919, 112
        %v1922 = vpop.permute.xlu0 %1921
        %v1924 = vadd.f32 %v1916, %v1922
        %v1925 = vadd.f32 %v1828, %v1924
        %v1926 = vld [vmem:[%s551] sm:$0x1]
        %s1927 = sld [smem:[#allocation2 + $0x3]]
        %v1928 = vstv %s1927
        %v1929 = vmul.f32 %v1928, %v1926
        %s1930 = sld [smem:[#allocation4 + $0x3]]
        %v1931 = vstv %s1930
        %v1932 = vmul.f32 %v1931, %v1926
        %1934 = vrot.lane.b32.xlu0 %v1932, 112
        %v1935 = vpop.permute.xlu0 %1934
        %v1937 = vadd.f32 %v1929, %v1935
        %v1938 = vadd.f32 %v1841, %v1937
        %s1939 = sld [smem:[#allocation2 + $0x83]]
        %v1940 = vstv %s1939
        %v1941 = vmul.f32 %v1940, %v1926
        %s1942 = sld [smem:[#allocation4 + $0x83]]
        %v1943 = vstv %s1942
        %v1944 = vmul.f32 %v1943, %v1926
        %1946 = vrot.lane.b32.xlu0 %v1944, 112
        %v1947 = vpop.permute.xlu0 %1946
        %v1949 = vadd.f32 %v1941, %v1947
        %v1950 = vadd.f32 %v1853, %v1949
        %s1951 = sld [smem:[#allocation2 + $0x103]]
        %v1952 = vstv %s1951
        %v1953 = vmul.f32 %v1952, %v1926
        %s1954 = sld [smem:[#allocation4 + $0x103]]
        %v1955 = vstv %s1954
        %v1956 = vmul.f32 %v1955, %v1926
        %1958 = vrot.lane.b32.xlu0 %v1956, 112
        %v1959 = vpop.permute.xlu0 %1958
        %v1961 = vadd.f32 %v1953, %v1959
        %v1962 = vadd.f32 %v1865, %v1961
        %s1963 = sld [smem:[#allocation2 + $0x183]]
        %v1964 = vstv %s1963
        %v1965 = vmul.f32 %v1964, %v1926
        %s1966 = sld [smem:[#allocation4 + $0x183]]
        %v1967 = vstv %s1966
        %v1968 = vmul.f32 %v1967, %v1926
        %1970 = vrot.lane.b32.xlu0 %v1968, 112
        %v1971 = vpop.permute.xlu0 %1970
        %v1973 = vadd.f32 %v1965, %v1971
        %v1974 = vadd.f32 %v1877, %v1973
        %s1975 = sld [smem:[#allocation2 + $0x203]]
        %v1976 = vstv %s1975
        %v1977 = vmul.f32 %v1976, %v1926
        %s1978 = sld [smem:[#allocation4 + $0x203]]
        %v1979 = vstv %s1978
        %v1980 = vmul.f32 %v1979, %v1926
        %1982 = vrot.lane.b32.xlu0 %v1980, 112
        %v1983 = vpop.permute.xlu0 %1982
        %v1985 = vadd.f32 %v1977, %v1983
        %v1986 = vadd.f32 %v1889, %v1985
        %s1987 = sld [smem:[#allocation2 + $0x283]]
        %v1988 = vstv %s1987
        %v1989 = vmul.f32 %v1988, %v1926
        %s1990 = sld [smem:[#allocation4 + $0x283]]
        %v1991 = vstv %s1990
        %v1992 = vmul.f32 %v1991, %v1926
        %1994 = vrot.lane.b32.xlu0 %v1992, 112
        %v1995 = vpop.permute.xlu0 %1994
        %v1997 = vadd.f32 %v1989, %v1995
        %v1998 = vadd.f32 %v1901, %v1997
        %s1999 = sld [smem:[#allocation2 + $0x303]]
        %v2000 = vstv %s1999
        %v2001 = vmul.f32 %v2000, %v1926
        %s2002 = sld [smem:[#allocation4 + $0x303]]
        %v2003 = vstv %s2002
        %v2004 = vmul.f32 %v2003, %v1926
        %2006 = vrot.lane.b32.xlu0 %v2004, 112
        %v2007 = vpop.permute.xlu0 %2006
        %v2009 = vadd.f32 %v2001, %v2007
        %v2010 = vadd.f32 %v1913, %v2009
        %s2011 = sld [smem:[#allocation2 + $0x383]]
        %v2012 = vstv %s2011
        %v2013 = vmul.f32 %v2012, %v1926
        %s2014 = sld [smem:[#allocation4 + $0x383]]
        %v2015 = vstv %s2014
        %v2016 = vmul.f32 %v2015, %v1926
        %2018 = vrot.lane.b32.xlu0 %v2016, 112
        %v2019 = vpop.permute.xlu0 %2018
        %v2021 = vadd.f32 %v2013, %v2019
        %v2022 = vadd.f32 %v1925, %v2021
        %s2023 = sld [smem:[#allocation6]]
        %v2024 = vstv %s2023
        %v2025 = vadd.f32 %v1938, %v2024
        %v2027 = vlaneseq
        %v2028 = vshrl.u32 %v2027, 7
        %v2029 = vsub.s32 0, %v2028
        %v2030 = vrot.slane %v2025, %v2029
        %2031 = vrot.lane.b32.xlu0 %v2030, 80
        %v2032 = vpop.permute.xlu0 %2031
        %vm2034 = vcmask 516480
        %2035 = vst.msk [vmem:[%s265] sm:$0x1] %vm2034, %v2032
        %s2036 = sld [smem:[#allocation6 + $0x1]]
        %v2037 = vstv %s2036
        %v2038 = vadd.f32 %v1950, %v2037
        %v2040 = vlaneseq
        %v2041 = vshrl.u32 %v2040, 7
        %v2042 = vsub.s32 0, %v2041
        %v2043 = vrot.slane %v2038, %v2042
        %2044 = vrot.lane.b32.xlu0 %v2043, 80
        %v2045 = vpop.permute.xlu0 %2044
        %2047 = vst.msk [vmem:[%s657] sm:$0x1] %vm2034, %v2045
        %s2048 = sld [smem:[#allocation6 + $0x2]]
        %v2049 = vstv %s2048
        %v2050 = vadd.f32 %v1962, %v2049
        %v2052 = vlaneseq
        %v2053 = vshrl.u32 %v2052, 7
        %v2054 = vsub.s32 0, %v2053
        %v2055 = vrot.slane %v2050, %v2054
        %2056 = vrot.lane.b32.xlu0 %v2055, 80
        %v2057 = vpop.permute.xlu0 %2056
        %2059 = vst.msk [vmem:[%s662] sm:$0x1] %vm2034, %v2057
        %s2060 = sld [smem:[#allocation6 + $0x3]]
        %v2061 = vstv %s2060
        %v2062 = vadd.f32 %v1974, %v2061
        %v2064 = vlaneseq
        %v2065 = vshrl.u32 %v2064, 7
        %v2066 = vsub.s32 0, %v2065
        %v2067 = vrot.slane %v2062, %v2066
        %2068 = vrot.lane.b32.xlu0 %v2067, 80
        %v2069 = vpop.permute.xlu0 %2068
        %2071 = vst.msk [vmem:[%s667] sm:$0x1] %vm2034, %v2069
        %s2072 = sld [smem:[#allocation6 + $0x4]]
        %v2073 = vstv %s2072
        %v2074 = vadd.f32 %v1986, %v2073
        %v2076 = vlaneseq
        %v2077 = vshrl.u32 %v2076, 7
        %v2078 = vsub.s32 0, %v2077
        %v2079 = vrot.slane %v2074, %v2078
        %2080 = vrot.lane.b32.xlu0 %v2079, 80
        %v2081 = vpop.permute.xlu0 %2080
        %2083 = vst.msk [vmem:[%s672] sm:$0x1] %vm2034, %v2081
        %s2084 = sld [smem:[#allocation6 + $0x5]]
        %v2085 = vstv %s2084
        %v2086 = vadd.f32 %v1998, %v2085
        %v2088 = vlaneseq
        %v2089 = vshrl.u32 %v2088, 7
        %v2090 = vsub.s32 0, %v2089
        %v2091 = vrot.slane %v2086, %v2090
        %2092 = vrot.lane.b32.xlu0 %v2091, 80
        %v2093 = vpop.permute.xlu0 %2092
        %2095 = vst.msk [vmem:[%s677] sm:$0x1] %vm2034, %v2093
        %s2096 = sld [smem:[#allocation6 + $0x6]]
        %v2097 = vstv %s2096
        %v2098 = vadd.f32 %v2010, %v2097
        %v2100 = vlaneseq
        %v2101 = vshrl.u32 %v2100, 7
        %v2102 = vsub.s32 0, %v2101
        %v2103 = vrot.slane %v2098, %v2102
        %2104 = vrot.lane.b32.xlu0 %v2103, 80
        %v2105 = vpop.permute.xlu0 %2104
        %2107 = vst.msk [vmem:[%s682] sm:$0x1] %vm2034, %v2105
        %s2108 = sld [smem:[#allocation6 + $0x7]]
        %v2109 = vstv %s2108
        %v2110 = vadd.f32 %v2022, %v2109
        %v2112 = vlaneseq
        %v2113 = vshrl.u32 %v2112, 7
        %v2114 = vsub.s32 0, %v2113
        %v2115 = vrot.slane %v2110, %v2114
        %2116 = vrot.lane.b32.xlu0 %v2115, 80
        %v2117 = vpop.permute.xlu0 %2116
        %2119 = vst.msk [vmem:[%s687] sm:$0x1] %vm2034, %v2117
        %v2120 = vld [vmem:[%s258 + $0x1] sm:$0x1]
        %s2121 = sld [smem:[#allocation2]]
        %v2122 = vstv %s2121
        %v2123 = vmul.f32 %v2122, %v2120
        %s2124 = sld [smem:[#allocation4]]
        %v2125 = vstv %s2124
        %v2126 = vmul.f32 %v2125, %v2120
        %2128 = vrot.lane.b32.xlu0 %v2126, 112
        %v2129 = vpop.permute.xlu0 %2128
        %v2131 = vadd.f32 %v2123, %v2129
        %s2132 = sld [smem:[#allocation2 + $0x80]]
        %v2133 = vstv %s2132
        %v2134 = vmul.f32 %v2133, %v2120
        %s2135 = sld [smem:[#allocation4 + $0x80]]
        %v2136 = vstv %s2135
        %v2137 = vmul.f32 %v2136, %v2120
        %2139 = vrot.lane.b32.xlu0 %v2137, 112
        %v2140 = vpop.permute.xlu0 %2139
        %v2142 = vadd.f32 %v2134, %v2140
        %s2143 = sld [smem:[#allocation2 + $0x100]]
        %v2144 = vstv %s2143
        %v2145 = vmul.f32 %v2144, %v2120
        %s2146 = sld [smem:[#allocation4 + $0x100]]
        %v2147 = vstv %s2146
        %v2148 = vmul.f32 %v2147, %v2120
        %2150 = vrot.lane.b32.xlu0 %v2148, 112
        %v2151 = vpop.permute.xlu0 %2150
        %v2153 = vadd.f32 %v2145, %v2151
        %s2154 = sld [smem:[#allocation2 + $0x180]]
        %v2155 = vstv %s2154
        %v2156 = vmul.f32 %v2155, %v2120
        %s2157 = sld [smem:[#allocation4 + $0x180]]
        %v2158 = vstv %s2157
        %v2159 = vmul.f32 %v2158, %v2120
        %2161 = vrot.lane.b32.xlu0 %v2159, 112
        %v2162 = vpop.permute.xlu0 %2161
        %v2164 = vadd.f32 %v2156, %v2162
        %s2165 = sld [smem:[#allocation2 + $0x200]]
        %v2166 = vstv %s2165
        %v2167 = vmul.f32 %v2166, %v2120
        %s2168 = sld [smem:[#allocation4 + $0x200]]
        %v2169 = vstv %s2168
        %v2170 = vmul.f32 %v2169, %v2120
        %2172 = vrot.lane.b32.xlu0 %v2170, 112
        %v2173 = vpop.permute.xlu0 %2172
        %v2175 = vadd.f32 %v2167, %v2173
        %s2176 = sld [smem:[#allocation2 + $0x280]]
        %v2177 = vstv %s2176
        %v2178 = vmul.f32 %v2177, %v2120
        %s2179 = sld [smem:[#allocation4 + $0x280]]
        %v2180 = vstv %s2179
        %v2181 = vmul.f32 %v2180, %v2120
        %2183 = vrot.lane.b32.xlu0 %v2181, 112
        %v2184 = vpop.permute.xlu0 %2183
        %v2186 = vadd.f32 %v2178, %v2184
        %s2187 = sld [smem:[#allocation2 + $0x300]]
        %v2188 = vstv %s2187
        %v2189 = vmul.f32 %v2188, %v2120
        %s2190 = sld [smem:[#allocation4 + $0x300]]
        %v2191 = vstv %s2190
        %v2192 = vmul.f32 %v2191, %v2120
        %2194 = vrot.lane.b32.xlu0 %v2192, 112
        %v2195 = vpop.permute.xlu0 %2194
        %v2197 = vadd.f32 %v2189, %v2195
        %s2198 = sld [smem:[#allocation2 + $0x380]]
        %v2199 = vstv %s2198
        %v2200 = vmul.f32 %v2199, %v2120
        %s2201 = sld [smem:[#allocation4 + $0x380]]
        %v2202 = vstv %s2201
        %v2203 = vmul.f32 %v2202, %v2120
        %2205 = vrot.lane.b32.xlu0 %v2203, 112
        %v2206 = vpop.permute.xlu0 %2205
        %v2208 = vadd.f32 %v2200, %v2206
        %v2209 = vld [vmem:[%s355 + $0x1] sm:$0x1]
        %s2210 = sld [smem:[#allocation2 + $0x1]]
        %v2211 = vstv %s2210
        %v2212 = vmul.f32 %v2211, %v2209
        %s2213 = sld [smem:[#allocation4 + $0x1]]
        %v2214 = vstv %s2213
        %v2215 = vmul.f32 %v2214, %v2209
        %2217 = vrot.lane.b32.xlu0 %v2215, 112
        %v2218 = vpop.permute.xlu0 %2217
        %v2220 = vadd.f32 %v2212, %v2218
        %v2221 = vadd.f32 %v2131, %v2220
        %s2222 = sld [smem:[#allocation2 + $0x81]]
        %v2223 = vstv %s2222
        %v2224 = vmul.f32 %v2223, %v2209
        %s2225 = sld [smem:[#allocation4 + $0x81]]
        %v2226 = vstv %s2225
        %v2227 = vmul.f32 %v2226, %v2209
        %2229 = vrot.lane.b32.xlu0 %v2227, 112
        %v2230 = vpop.permute.xlu0 %2229
        %v2232 = vadd.f32 %v2224, %v2230
        %v2233 = vadd.f32 %v2142, %v2232
        %s2234 = sld [smem:[#allocation2 + $0x101]]
        %v2235 = vstv %s2234
        %v2236 = vmul.f32 %v2235, %v2209
        %s2237 = sld [smem:[#allocation4 + $0x101]]
        %v2238 = vstv %s2237
        %v2239 = vmul.f32 %v2238, %v2209
        %2241 = vrot.lane.b32.xlu0 %v2239, 112
        %v2242 = vpop.permute.xlu0 %2241
        %v2244 = vadd.f32 %v2236, %v2242
        %v2245 = vadd.f32 %v2153, %v2244
        %s2246 = sld [smem:[#allocation2 + $0x181]]
        %v2247 = vstv %s2246
        %v2248 = vmul.f32 %v2247, %v2209
        %s2249 = sld [smem:[#allocation4 + $0x181]]
        %v2250 = vstv %s2249
        %v2251 = vmul.f32 %v2250, %v2209
        %2253 = vrot.lane.b32.xlu0 %v2251, 112
        %v2254 = vpop.permute.xlu0 %2253
        %v2256 = vadd.f32 %v2248, %v2254
        %v2257 = vadd.f32 %v2164, %v2256
        %s2258 = sld [smem:[#allocation2 + $0x201]]
        %v2259 = vstv %s2258
        %v2260 = vmul.f32 %v2259, %v2209
        %s2261 = sld [smem:[#allocation4 + $0x201]]
        %v2262 = vstv %s2261
        %v2263 = vmul.f32 %v2262, %v2209
        %2265 = vrot.lane.b32.xlu0 %v2263, 112
        %v2266 = vpop.permute.xlu0 %2265
        %v2268 = vadd.f32 %v2260, %v2266
        %v2269 = vadd.f32 %v2175, %v2268
        %s2270 = sld [smem:[#allocation2 + $0x281]]
        %v2271 = vstv %s2270
        %v2272 = vmul.f32 %v2271, %v2209
        %s2273 = sld [smem:[#allocation4 + $0x281]]
        %v2274 = vstv %s2273
        %v2275 = vmul.f32 %v2274, %v2209
        %2277 = vrot.lane.b32.xlu0 %v2275, 112
        %v2278 = vpop.permute.xlu0 %2277
        %v2280 = vadd.f32 %v2272, %v2278
        %v2281 = vadd.f32 %v2186, %v2280
        %s2282 = sld [smem:[#allocation2 + $0x301]]
        %v2283 = vstv %s2282
        %v2284 = vmul.f32 %v2283, %v2209
        %s2285 = sld [smem:[#allocation4 + $0x301]]
        %v2286 = vstv %s2285
        %v2287 = vmul.f32 %v2286, %v2209
        %2289 = vrot.lane.b32.xlu0 %v2287, 112
        %v2290 = vpop.permute.xlu0 %2289
        %v2292 = vadd.f32 %v2284, %v2290
        %v2293 = vadd.f32 %v2197, %v2292
        %s2294 = sld [smem:[#allocation2 + $0x381]]
        %v2295 = vstv %s2294
        %v2296 = vmul.f32 %v2295, %v2209
        %s2297 = sld [smem:[#allocation4 + $0x381]]
        %v2298 = vstv %s2297
        %v2299 = vmul.f32 %v2298, %v2209
        %2301 = vrot.lane.b32.xlu0 %v2299, 112
        %v2302 = vpop.permute.xlu0 %2301
        %v2304 = vadd.f32 %v2296, %v2302
        %v2305 = vadd.f32 %v2208, %v2304
        %v2306 = vld [vmem:[%s453 + $0x1] sm:$0x1]
        %s2307 = sld [smem:[#allocation2 + $0x2]]
        %v2308 = vstv %s2307
        %v2309 = vmul.f32 %v2308, %v2306
        %s2310 = sld [smem:[#allocation4 + $0x2]]
        %v2311 = vstv %s2310
        %v2312 = vmul.f32 %v2311, %v2306
        %2314 = vrot.lane.b32.xlu0 %v2312, 112
        %v2315 = vpop.permute.xlu0 %2314
        %v2317 = vadd.f32 %v2309, %v2315
        %v2318 = vadd.f32 %v2221, %v2317
        %s2319 = sld [smem:[#allocation2 + $0x82]]
        %v2320 = vstv %s2319
        %v2321 = vmul.f32 %v2320, %v2306
        %s2322 = sld [smem:[#allocation4 + $0x82]]
        %v2323 = vstv %s2322
        %v2324 = vmul.f32 %v2323, %v2306
        %2326 = vrot.lane.b32.xlu0 %v2324, 112
        %v2327 = vpop.permute.xlu0 %2326
        %v2329 = vadd.f32 %v2321, %v2327
        %v2330 = vadd.f32 %v2233, %v2329
        %s2331 = sld [smem:[#allocation2 + $0x102]]
        %v2332 = vstv %s2331
        %v2333 = vmul.f32 %v2332, %v2306
        %s2334 = sld [smem:[#allocation4 + $0x102]]
        %v2335 = vstv %s2334
        %v2336 = vmul.f32 %v2335, %v2306
        %2338 = vrot.lane.b32.xlu0 %v2336, 112
        %v2339 = vpop.permute.xlu0 %2338
        %v2341 = vadd.f32 %v2333, %v2339
        %v2342 = vadd.f32 %v2245, %v2341
        %s2343 = sld [smem:[#allocation2 + $0x182]]
        %v2344 = vstv %s2343
        %v2345 = vmul.f32 %v2344, %v2306
        %s2346 = sld [smem:[#allocation4 + $0x182]]
        %v2347 = vstv %s2346
        %v2348 = vmul.f32 %v2347, %v2306
        %2350 = vrot.lane.b32.xlu0 %v2348, 112
        %v2351 = vpop.permute.xlu0 %2350
        %v2353 = vadd.f32 %v2345, %v2351
        %v2354 = vadd.f32 %v2257, %v2353
        %s2355 = sld [smem:[#allocation2 + $0x202]]
        %v2356 = vstv %s2355
        %v2357 = vmul.f32 %v2356, %v2306
        %s2358 = sld [smem:[#allocation4 + $0x202]]
        %v2359 = vstv %s2358
        %v2360 = vmul.f32 %v2359, %v2306
        %2362 = vrot.lane.b32.xlu0 %v2360, 112
        %v2363 = vpop.permute.xlu0 %2362
        %v2365 = vadd.f32 %v2357, %v2363
        %v2366 = vadd.f32 %v2269, %v2365
        %s2367 = sld [smem:[#allocation2 + $0x282]]
        %v2368 = vstv %s2367
        %v2369 = vmul.f32 %v2368, %v2306
        %s2370 = sld [smem:[#allocation4 + $0x282]]
        %v2371 = vstv %s2370
        %v2372 = vmul.f32 %v2371, %v2306
        %2374 = vrot.lane.b32.xlu0 %v2372, 112
        %v2375 = vpop.permute.xlu0 %2374
        %v2377 = vadd.f32 %v2369, %v2375
        %v2378 = vadd.f32 %v2281, %v2377
        %s2379 = sld [smem:[#allocation2 + $0x302]]
        %v2380 = vstv %s2379
        %v2381 = vmul.f32 %v2380, %v2306
        %s2382 = sld [smem:[#allocation4 + $0x302]]
        %v2383 = vstv %s2382
        %v2384 = vmul.f32 %v2383, %v2306
        %2386 = vrot.lane.b32.xlu0 %v2384, 112
        %v2387 = vpop.permute.xlu0 %2386
        %v2389 = vadd.f32 %v2381, %v2387
        %v2390 = vadd.f32 %v2293, %v2389
        %s2391 = sld [smem:[#allocation2 + $0x382]]
        %v2392 = vstv %s2391
        %v2393 = vmul.f32 %v2392, %v2306
        %s2394 = sld [smem:[#allocation4 + $0x382]]
        %v2395 = vstv %s2394
        %v2396 = vmul.f32 %v2395, %v2306
        %2398 = vrot.lane.b32.xlu0 %v2396, 112
        %v2399 = vpop.permute.xlu0 %2398
        %v2401 = vadd.f32 %v2393, %v2399
        %v2402 = vadd.f32 %v2305, %v2401
        %v2403 = vld [vmem:[%s551 + $0x1] sm:$0x1]
        %s2404 = sld [smem:[#allocation2 + $0x3]]
        %v2405 = vstv %s2404
        %v2406 = vmul.f32 %v2405, %v2403
        %s2407 = sld [smem:[#allocation4 + $0x3]]
        %v2408 = vstv %s2407
        %v2409 = vmul.f32 %v2408, %v2403
        %2411 = vrot.lane.b32.xlu0 %v2409, 112
        %v2412 = vpop.permute.xlu0 %2411
        %v2414 = vadd.f32 %v2406, %v2412
        %v2415 = vadd.f32 %v2318, %v2414
        %s2416 = sld [smem:[#allocation2 + $0x83]]
        %v2417 = vstv %s2416
        %v2418 = vmul.f32 %v2417, %v2403
        %s2419 = sld [smem:[#allocation4 + $0x83]]
        %v2420 = vstv %s2419
        %v2421 = vmul.f32 %v2420, %v2403
        %2423 = vrot.lane.b32.xlu0 %v2421, 112
        %v2424 = vpop.permute.xlu0 %2423
        %v2426 = vadd.f32 %v2418, %v2424
        %v2427 = vadd.f32 %v2330, %v2426
        %s2428 = sld [smem:[#allocation2 + $0x103]]
        %v2429 = vstv %s2428
        %v2430 = vmul.f32 %v2429, %v2403
        %s2431 = sld [smem:[#allocation4 + $0x103]]
        %v2432 = vstv %s2431
        %v2433 = vmul.f32 %v2432, %v2403
        %2435 = vrot.lane.b32.xlu0 %v2433, 112
        %v2436 = vpop.permute.xlu0 %2435
        %v2438 = vadd.f32 %v2430, %v2436
        %v2439 = vadd.f32 %v2342, %v2438
        %s2440 = sld [smem:[#allocation2 + $0x183]]
        %v2441 = vstv %s2440
        %v2442 = vmul.f32 %v2441, %v2403
        %s2443 = sld [smem:[#allocation4 + $0x183]]
        %v2444 = vstv %s2443
        %v2445 = vmul.f32 %v2444, %v2403
        %2447 = vrot.lane.b32.xlu0 %v2445, 112
        %v2448 = vpop.permute.xlu0 %2447
        %v2450 = vadd.f32 %v2442, %v2448
        %v2451 = vadd.f32 %v2354, %v2450
        %s2452 = sld [smem:[#allocation2 + $0x203]]
        %v2453 = vstv %s2452
        %v2454 = vmul.f32 %v2453, %v2403
        %s2455 = sld [smem:[#allocation4 + $0x203]]
        %v2456 = vstv %s2455
        %v2457 = vmul.f32 %v2456, %v2403
        %2459 = vrot.lane.b32.xlu0 %v2457, 112
        %v2460 = vpop.permute.xlu0 %2459
        %v2462 = vadd.f32 %v2454, %v2460
        %v2463 = vadd.f32 %v2366, %v2462
        %s2464 = sld [smem:[#allocation2 + $0x283]]
        %v2465 = vstv %s2464
        %v2466 = vmul.f32 %v2465, %v2403
        %s2467 = sld [smem:[#allocation4 + $0x283]]
        %v2468 = vstv %s2467
        %v2469 = vmul.f32 %v2468, %v2403
        %2471 = vrot.lane.b32.xlu0 %v2469, 112
        %v2472 = vpop.permute.xlu0 %2471
        %v2474 = vadd.f32 %v2466, %v2472
        %v2475 = vadd.f32 %v2378, %v2474
        %s2476 = sld [smem:[#allocation2 + $0x303]]
        %v2477 = vstv %s2476
        %v2478 = vmul.f32 %v2477, %v2403
        %s2479 = sld [smem:[#allocation4 + $0x303]]
        %v2480 = vstv %s2479
        %v2481 = vmul.f32 %v2480, %v2403
        %2483 = vrot.lane.b32.xlu0 %v2481, 112
        %v2484 = vpop.permute.xlu0 %2483
        %v2486 = vadd.f32 %v2478, %v2484
        %v2487 = vadd.f32 %v2390, %v2486
        %s2488 = sld [smem:[#allocation2 + $0x383]]
        %v2489 = vstv %s2488
        %v2490 = vmul.f32 %v2489, %v2403
        %s2491 = sld [smem:[#allocation4 + $0x383]]
        %v2492 = vstv %s2491
        %v2493 = vmul.f32 %v2492, %v2403
        %2495 = vrot.lane.b32.xlu0 %v2493, 112
        %v2496 = vpop.permute.xlu0 %2495
        %v2498 = vadd.f32 %v2490, %v2496
        %v2499 = vadd.f32 %v2402, %v2498
        %s2500 = sld [smem:[#allocation6]]
        %v2501 = vstv %s2500
        %v2502 = vadd.f32 %v2415, %v2501
        %v2504 = vlaneseq
        %v2505 = vshrl.u32 %v2504, 7
        %v2506 = vsub.s32 0, %v2505
        %v2507 = vrot.slane %v2502, %v2506
        %2508 = vrot.lane.b32.xlu0 %v2507, 64
        %v2509 = vpop.permute.xlu0 %2508
        %vm2511 = vcmask 647680
        %2512 = vst.msk [vmem:[%s265] sm:$0x1] %vm2511, %v2509
        %s2513 = sld [smem:[#allocation6 + $0x1]]
        %v2514 = vstv %s2513
        %v2515 = vadd.f32 %v2427, %v2514
        %v2517 = vlaneseq
        %v2518 = vshrl.u32 %v2517, 7
        %v2519 = vsub.s32 0, %v2518
        %v2520 = vrot.slane %v2515, %v2519
        %2521 = vrot.lane.b32.xlu0 %v2520, 64
        %v2522 = vpop.permute.xlu0 %2521
        %2524 = vst.msk [vmem:[%s657] sm:$0x1] %vm2511, %v2522
        %s2525 = sld [smem:[#allocation6 + $0x2]]
        %v2526 = vstv %s2525
        %v2527 = vadd.f32 %v2439, %v2526
        %v2529 = vlaneseq
        %v2530 = vshrl.u32 %v2529, 7
        %v2531 = vsub.s32 0, %v2530
        %v2532 = vrot.slane %v2527, %v2531
        %2533 = vrot.lane.b32.xlu0 %v2532, 64
        %v2534 = vpop.permute.xlu0 %2533
        %2536 = vst.msk [vmem:[%s662] sm:$0x1] %vm2511, %v2534
        %s2537 = sld [smem:[#allocation6 + $0x3]]
        %v2538 = vstv %s2537
        %v2539 = vadd.f32 %v2451, %v2538
        %v2541 = vlaneseq
        %v2542 = vshrl.u32 %v2541, 7
        %v2543 = vsub.s32 0, %v2542
        %v2544 = vrot.slane %v2539, %v2543
        %2545 = vrot.lane.b32.xlu0 %v2544, 64
        %v2546 = vpop.permute.xlu0 %2545
        %2548 = vst.msk [vmem:[%s667] sm:$0x1] %vm2511, %v2546
        %s2549 = sld [smem:[#allocation6 + $0x4]]
        %v2550 = vstv %s2549
        %v2551 = vadd.f32 %v2463, %v2550
        %v2553 = vlaneseq
        %v2554 = vshrl.u32 %v2553, 7
        %v2555 = vsub.s32 0, %v2554
        %v2556 = vrot.slane %v2551, %v2555
        %2557 = vrot.lane.b32.xlu0 %v2556, 64
        %v2558 = vpop.permute.xlu0 %2557
        %2560 = vst.msk [vmem:[%s672] sm:$0x1] %vm2511, %v2558
        %s2561 = sld [smem:[#allocation6 + $0x5]]
        %v2562 = vstv %s2561
        %v2563 = vadd.f32 %v2475, %v2562
        %v2565 = vlaneseq
        %v2566 = vshrl.u32 %v2565, 7
        %v2567 = vsub.s32 0, %v2566
        %v2568 = vrot.slane %v2563, %v2567
        %2569 = vrot.lane.b32.xlu0 %v2568, 64
        %v2570 = vpop.permute.xlu0 %2569
        %2572 = vst.msk [vmem:[%s677] sm:$0x1] %vm2511, %v2570
        %s2573 = sld [smem:[#allocation6 + $0x6]]
        %v2574 = vstv %s2573
        %v2575 = vadd.f32 %v2487, %v2574
        %v2577 = vlaneseq
        %v2578 = vshrl.u32 %v2577, 7
        %v2579 = vsub.s32 0, %v2578
        %v2580 = vrot.slane %v2575, %v2579
        %2581 = vrot.lane.b32.xlu0 %v2580, 64
        %v2582 = vpop.permute.xlu0 %2581
        %2584 = vst.msk [vmem:[%s682] sm:$0x1] %vm2511, %v2582
        %s2585 = sld [smem:[#allocation6 + $0x7]]
        %v2586 = vstv %s2585
        %v2587 = vadd.f32 %v2499, %v2586
        %v2589 = vlaneseq
        %v2590 = vshrl.u32 %v2589, 7
        %v2591 = vsub.s32 0, %v2590
        %v2592 = vrot.slane %v2587, %v2591
        %2593 = vrot.lane.b32.xlu0 %v2592, 64
        %v2594 = vpop.permute.xlu0 %2593
        %2596 = vst.msk [vmem:[%s687] sm:$0x1] %vm2511, %v2594
        %v2597 = vld [vmem:[%s258 + $0x1] sm:$0x1]
        %s2598 = sld [smem:[#allocation2]]
        %v2599 = vstv %s2598
        %v2600 = vmul.f32 %v2599, %v2597
        %s2601 = sld [smem:[#allocation4]]
        %v2602 = vstv %s2601
        %v2603 = vmul.f32 %v2602, %v2597
        %2605 = vrot.lane.b32.xlu0 %v2603, 112
        %v2606 = vpop.permute.xlu0 %2605
        %v2608 = vadd.f32 %v2600, %v2606
        %s2609 = sld [smem:[#allocation2 + $0x80]]
        %v2610 = vstv %s2609
        %v2611 = vmul.f32 %v2610, %v2597
        %s2612 = sld [smem:[#allocation4 + $0x80]]
        %v2613 = vstv %s2612
        %v2614 = vmul.f32 %v2613, %v2597
        %2616 = vrot.lane.b32.xlu0 %v2614, 112
        %v2617 = vpop.permute.xlu0 %2616
        %v2619 = vadd.f32 %v2611, %v2617
        %s2620 = sld [smem:[#allocation2 + $0x100]]
        %v2621 = vstv %s2620
        %v2622 = vmul.f32 %v2621, %v2597
        %s2623 = sld [smem:[#allocation4 + $0x100]]
        %v2624 = vstv %s2623
        %v2625 = vmul.f32 %v2624, %v2597
        %2627 = vrot.lane.b32.xlu0 %v2625, 112
        %v2628 = vpop.permute.xlu0 %2627
        %v2630 = vadd.f32 %v2622, %v2628
        %s2631 = sld [smem:[#allocation2 + $0x180]]
        %v2632 = vstv %s2631
        %v2633 = vmul.f32 %v2632, %v2597
        %s2634 = sld [smem:[#allocation4 + $0x180]]
        %v2635 = vstv %s2634
        %v2636 = vmul.f32 %v2635, %v2597
        %2638 = vrot.lane.b32.xlu0 %v2636, 112
        %v2639 = vpop.permute.xlu0 %2638
        %v2641 = vadd.f32 %v2633, %v2639
        %s2642 = sld [smem:[#allocation2 + $0x200]]
        %v2643 = vstv %s2642
        %v2644 = vmul.f32 %v2643, %v2597
        %s2645 = sld [smem:[#allocation4 + $0x200]]
        %v2646 = vstv %s2645
        %v2647 = vmul.f32 %v2646, %v2597
        %2649 = vrot.lane.b32.xlu0 %v2647, 112
        %v2650 = vpop.permute.xlu0 %2649
        %v2652 = vadd.f32 %v2644, %v2650
        %s2653 = sld [smem:[#allocation2 + $0x280]]
        %v2654 = vstv %s2653
        %v2655 = vmul.f32 %v2654, %v2597
        %s2656 = sld [smem:[#allocation4 + $0x280]]
        %v2657 = vstv %s2656
        %v2658 = vmul.f32 %v2657, %v2597
        %2660 = vrot.lane.b32.xlu0 %v2658, 112
        %v2661 = vpop.permute.xlu0 %2660
        %v2663 = vadd.f32 %v2655, %v2661
        %s2664 = sld [smem:[#allocation2 + $0x300]]
        %v2665 = vstv %s2664
        %v2666 = vmul.f32 %v2665, %v2597
        %s2667 = sld [smem:[#allocation4 + $0x300]]
        %v2668 = vstv %s2667
        %v2669 = vmul.f32 %v2668, %v2597
        %2671 = vrot.lane.b32.xlu0 %v2669, 112
        %v2672 = vpop.permute.xlu0 %2671
        %v2674 = vadd.f32 %v2666, %v2672
        %s2675 = sld [smem:[#allocation2 + $0x380]]
        %v2676 = vstv %s2675
        %v2677 = vmul.f32 %v2676, %v2597
        %s2678 = sld [smem:[#allocation4 + $0x380]]
        %v2679 = vstv %s2678
        %v2680 = vmul.f32 %v2679, %v2597
        %2682 = vrot.lane.b32.xlu0 %v2680, 112
        %v2683 = vpop.permute.xlu0 %2682
        %v2685 = vadd.f32 %v2677, %v2683
        %v2686 = vld [vmem:[%s355 + $0x1] sm:$0x1]
        %s2687 = sld [smem:[#allocation2 + $0x1]]
        %v2688 = vstv %s2687
        %v2689 = vmul.f32 %v2688, %v2686
        %s2690 = sld [smem:[#allocation4 + $0x1]]
        %v2691 = vstv %s2690
        %v2692 = vmul.f32 %v2691, %v2686
        %2694 = vrot.lane.b32.xlu0 %v2692, 112
        %v2695 = vpop.permute.xlu0 %2694
        %v2697 = vadd.f32 %v2689, %v2695
        %v2698 = vadd.f32 %v2608, %v2697
        %s2699 = sld [smem:[#allocation2 + $0x81]]
        %v2700 = vstv %s2699
        %v2701 = vmul.f32 %v2700, %v2686
        %s2702 = sld [smem:[#allocation4 + $0x81]]
        %v2703 = vstv %s2702
        %v2704 = vmul.f32 %v2703, %v2686
        %2706 = vrot.lane.b32.xlu0 %v2704, 112
        %v2707 = vpop.permute.xlu0 %2706
        %v2709 = vadd.f32 %v2701, %v2707
        %v2710 = vadd.f32 %v2619, %v2709
        %s2711 = sld [smem:[#allocation2 + $0x101]]
        %v2712 = vstv %s2711
        %v2713 = vmul.f32 %v2712, %v2686
        %s2714 = sld [smem:[#allocation4 + $0x101]]
        %v2715 = vstv %s2714
        %v2716 = vmul.f32 %v2715, %v2686
        %2718 = vrot.lane.b32.xlu0 %v2716, 112
        %v2719 = vpop.permute.xlu0 %2718
        %v2721 = vadd.f32 %v2713, %v2719
        %v2722 = vadd.f32 %v2630, %v2721
        %s2723 = sld [smem:[#allocation2 + $0x181]]
        %v2724 = vstv %s2723
        %v2725 = vmul.f32 %v2724, %v2686
        %s2726 = sld [smem:[#allocation4 + $0x181]]
        %v2727 = vstv %s2726
        %v2728 = vmul.f32 %v2727, %v2686
        %2730 = vrot.lane.b32.xlu0 %v2728, 112
        %v2731 = vpop.permute.xlu0 %2730
        %v2733 = vadd.f32 %v2725, %v2731
        %v2734 = vadd.f32 %v2641, %v2733
        %s2735 = sld [smem:[#allocation2 + $0x201]]
        %v2736 = vstv %s2735
        %v2737 = vmul.f32 %v2736, %v2686
        %s2738 = sld [smem:[#allocation4 + $0x201]]
        %v2739 = vstv %s2738
        %v2740 = vmul.f32 %v2739, %v2686
        %2742 = vrot.lane.b32.xlu0 %v2740, 112
        %v2743 = vpop.permute.xlu0 %2742
        %v2745 = vadd.f32 %v2737, %v2743
        %v2746 = vadd.f32 %v2652, %v2745
        %s2747 = sld [smem:[#allocation2 + $0x281]]
        %v2748 = vstv %s2747
        %v2749 = vmul.f32 %v2748, %v2686
        %s2750 = sld [smem:[#allocation4 + $0x281]]
        %v2751 = vstv %s2750
        %v2752 = vmul.f32 %v2751, %v2686
        %2754 = vrot.lane.b32.xlu0 %v2752, 112
        %v2755 = vpop.permute.xlu0 %2754
        %v2757 = vadd.f32 %v2749, %v2755
        %v2758 = vadd.f32 %v2663, %v2757
        %s2759 = sld [smem:[#allocation2 + $0x301]]
        %v2760 = vstv %s2759
        %v2761 = vmul.f32 %v2760, %v2686
        %s2762 = sld [smem:[#allocation4 + $0x301]]
        %v2763 = vstv %s2762
        %v2764 = vmul.f32 %v2763, %v2686
        %2766 = vrot.lane.b32.xlu0 %v2764, 112
        %v2767 = vpop.permute.xlu0 %2766
        %v2769 = vadd.f32 %v2761, %v2767
        %v2770 = vadd.f32 %v2674, %v2769
        %s2771 = sld [smem:[#allocation2 + $0x381]]
        %v2772 = vstv %s2771
        %v2773 = vmul.f32 %v2772, %v2686
        %s2774 = sld [smem:[#allocation4 + $0x381]]
        %v2775 = vstv %s2774
        %v2776 = vmul.f32 %v2775, %v2686
        %2778 = vrot.lane.b32.xlu0 %v2776, 112
        %v2779 = vpop.permute.xlu0 %2778
        %v2781 = vadd.f32 %v2773, %v2779
        %v2782 = vadd.f32 %v2685, %v2781
        %v2783 = vld [vmem:[%s453 + $0x1] sm:$0x1]
        %s2784 = sld [smem:[#allocation2 + $0x2]]
        %v2785 = vstv %s2784
        %v2786 = vmul.f32 %v2785, %v2783
        %s2787 = sld [smem:[#allocation4 + $0x2]]
        %v2788 = vstv %s2787
        %v2789 = vmul.f32 %v2788, %v2783
        %2791 = vrot.lane.b32.xlu0 %v2789, 112
        %v2792 = vpop.permute.xlu0 %2791
        %v2794 = vadd.f32 %v2786, %v2792
        %v2795 = vadd.f32 %v2698, %v2794
        %s2796 = sld [smem:[#allocation2 + $0x82]]
        %v2797 = vstv %s2796
        %v2798 = vmul.f32 %v2797, %v2783
        %s2799 = sld [smem:[#allocation4 + $0x82]]
        %v2800 = vstv %s2799
        %v2801 = vmul.f32 %v2800, %v2783
        %2803 = vrot.lane.b32.xlu0 %v2801, 112
        %v2804 = vpop.permute.xlu0 %2803
        %v2806 = vadd.f32 %v2798, %v2804
        %v2807 = vadd.f32 %v2710, %v2806
        %s2808 = sld [smem:[#allocation2 + $0x102]]
        %v2809 = vstv %s2808
        %v2810 = vmul.f32 %v2809, %v2783
        %s2811 = sld [smem:[#allocation4 + $0x102]]
        %v2812 = vstv %s2811
        %v2813 = vmul.f32 %v2812, %v2783
        %2815 = vrot.lane.b32.xlu0 %v2813, 112
        %v2816 = vpop.permute.xlu0 %2815
        %v2818 = vadd.f32 %v2810, %v2816
        %v2819 = vadd.f32 %v2722, %v2818
        %s2820 = sld [smem:[#allocation2 + $0x182]]
        %v2821 = vstv %s2820
        %v2822 = vmul.f32 %v2821, %v2783
        %s2823 = sld [smem:[#allocation4 + $0x182]]
        %v2824 = vstv %s2823
        %v2825 = vmul.f32 %v2824, %v2783
        %2827 = vrot.lane.b32.xlu0 %v2825, 112
        %v2828 = vpop.permute.xlu0 %2827
        %v2830 = vadd.f32 %v2822, %v2828
        %v2831 = vadd.f32 %v2734, %v2830
        %s2832 = sld [smem:[#allocation2 + $0x202]]
        %v2833 = vstv %s2832
        %v2834 = vmul.f32 %v2833, %v2783
        %s2835 = sld [smem:[#allocation4 + $0x202]]
        %v2836 = vstv %s2835
        %v2837 = vmul.f32 %v2836, %v2783
        %2839 = vrot.lane.b32.xlu0 %v2837, 112
        %v2840 = vpop.permute.xlu0 %2839
        %v2842 = vadd.f32 %v2834, %v2840
        %v2843 = vadd.f32 %v2746, %v2842
        %s2844 = sld [smem:[#allocation2 + $0x282]]
        %v2845 = vstv %s2844
        %v2846 = vmul.f32 %v2845, %v2783
        %s2847 = sld [smem:[#allocation4 + $0x282]]
        %v2848 = vstv %s2847
        %v2849 = vmul.f32 %v2848, %v2783
        %2851 = vrot.lane.b32.xlu0 %v2849, 112
        %v2852 = vpop.permute.xlu0 %2851
        %v2854 = vadd.f32 %v2846, %v2852
        %v2855 = vadd.f32 %v2758, %v2854
        %s2856 = sld [smem:[#allocation2 + $0x302]]
        %v2857 = vstv %s2856
        %v2858 = vmul.f32 %v2857, %v2783
        %s2859 = sld [smem:[#allocation4 + $0x302]]
        %v2860 = vstv %s2859
        %v2861 = vmul.f32 %v2860, %v2783
        %2863 = vrot.lane.b32.xlu0 %v2861, 112
        %v2864 = vpop.permute.xlu0 %2863
        %v2866 = vadd.f32 %v2858, %v2864
        %v2867 = vadd.f32 %v2770, %v2866
        %s2868 = sld [smem:[#allocation2 + $0x382]]
        %v2869 = vstv %s2868
        %v2870 = vmul.f32 %v2869, %v2783
        %s2871 = sld [smem:[#allocation4 + $0x382]]
        %v2872 = vstv %s2871
        %v2873 = vmul.f32 %v2872, %v2783
        %2875 = vrot.lane.b32.xlu0 %v2873, 112
        %v2876 = vpop.permute.xlu0 %2875
        %v2878 = vadd.f32 %v2870, %v2876
        %v2879 = vadd.f32 %v2782, %v2878
        %v2880 = vld [vmem:[%s551 + $0x1] sm:$0x1]
        %s2881 = sld [smem:[#allocation2 + $0x3]]
        %v2882 = vstv %s2881
        %v2883 = vmul.f32 %v2882, %v2880
        %s2884 = sld [smem:[#allocation4 + $0x3]]
        %v2885 = vstv %s2884
        %v2886 = vmul.f32 %v2885, %v2880
        %2888 = vrot.lane.b32.xlu0 %v2886, 112
        %v2889 = vpop.permute.xlu0 %2888
        %v2891 = vadd.f32 %v2883, %v2889
        %v2892 = vadd.f32 %v2795, %v2891
        %s2893 = sld [smem:[#allocation2 + $0x83]]
        %v2894 = vstv %s2893
        %v2895 = vmul.f32 %v2894, %v2880
        %s2896 = sld [smem:[#allocation4 + $0x83]]
        %v2897 = vstv %s2896
        %v2898 = vmul.f32 %v2897, %v2880
        %2900 = vrot.lane.b32.xlu0 %v2898, 112
        %v2901 = vpop.permute.xlu0 %2900
        %v2903 = vadd.f32 %v2895, %v2901
        %v2904 = vadd.f32 %v2807, %v2903
        %s2905 = sld [smem:[#allocation2 + $0x103]]
        %v2906 = vstv %s2905
        %v2907 = vmul.f32 %v2906, %v2880
        %s2908 = sld [smem:[#allocation4 + $0x103]]
        %v2909 = vstv %s2908
        %v2910 = vmul.f32 %v2909, %v2880
        %2912 = vrot.lane.b32.xlu0 %v2910, 112
        %v2913 = vpop.permute.xlu0 %2912
        %v2915 = vadd.f32 %v2907, %v2913
        %v2916 = vadd.f32 %v2819, %v2915
        %s2917 = sld [smem:[#allocation2 + $0x183]]
        %v2918 = vstv %s2917
        %v2919 = vmul.f32 %v2918, %v2880
        %s2920 = sld [smem:[#allocation4 + $0x183]]
        %v2921 = vstv %s2920
        %v2922 = vmul.f32 %v2921, %v2880
        %2924 = vrot.lane.b32.xlu0 %v2922, 112
        %v2925 = vpop.permute.xlu0 %2924
        %v2927 = vadd.f32 %v2919, %v2925
        %v2928 = vadd.f32 %v2831, %v2927
        %s2929 = sld [smem:[#allocation2 + $0x203]]
        %v2930 = vstv %s2929
        %v2931 = vmul.f32 %v2930, %v2880
        %s2932 = sld [smem:[#allocation4 + $0x203]]
        %v2933 = vstv %s2932
        %v2934 = vmul.f32 %v2933, %v2880
        %2936 = vrot.lane.b32.xlu0 %v2934, 112
        %v2937 = vpop.permute.xlu0 %2936
        %v2939 = vadd.f32 %v2931, %v2937
        %v2940 = vadd.f32 %v2843, %v2939
        %s2941 = sld [smem:[#allocation2 + $0x283]]
        %v2942 = vstv %s2941
        %v2943 = vmul.f32 %v2942, %v2880
        %s2944 = sld [smem:[#allocation4 + $0x283]]
        %v2945 = vstv %s2944
        %v2946 = vmul.f32 %v2945, %v2880
        %2948 = vrot.lane.b32.xlu0 %v2946, 112
        %v2949 = vpop.permute.xlu0 %2948
        %v2951 = vadd.f32 %v2943, %v2949
        %v2952 = vadd.f32 %v2855, %v2951
        %s2953 = sld [smem:[#allocation2 + $0x303]]
        %v2954 = vstv %s2953
        %v2955 = vmul.f32 %v2954, %v2880
        %s2956 = sld [smem:[#allocation4 + $0x303]]
        %v2957 = vstv %s2956
        %v2958 = vmul.f32 %v2957, %v2880
        %2960 = vrot.lane.b32.xlu0 %v2958, 112
        %v2961 = vpop.permute.xlu0 %2960
        %v2963 = vadd.f32 %v2955, %v2961
        %v2964 = vadd.f32 %v2867, %v2963
        %s2965 = sld [smem:[#allocation2 + $0x383]]
        %v2966 = vstv %s2965
        %v2967 = vmul.f32 %v2966, %v2880
        %s2968 = sld [smem:[#allocation4 + $0x383]]
        %v2969 = vstv %s2968
        %v2970 = vmul.f32 %v2969, %v2880
        %2972 = vrot.lane.b32.xlu0 %v2970, 112
        %v2973 = vpop.permute.xlu0 %2972
        %v2975 = vadd.f32 %v2967, %v2973
        %v2976 = vadd.f32 %v2879, %v2975
        %s2977 = sld [smem:[#allocation6]]
        %v2978 = vstv %s2977
        %v2979 = vadd.f32 %v2892, %v2978
        %v2981 = vlaneseq
        %v2982 = vshrl.u32 %v2981, 7
        %v2983 = vsub.s32 0, %v2982
        %v2984 = vrot.slane %v2979, %v2983
        %2985 = vrot.lane.b32.xlu0 %v2984, 48
        %v2986 = vpop.permute.xlu0 %2985
        %vm2988 = vcmask 778880
        %2989 = vst.msk [vmem:[%s265] sm:$0x1] %vm2988, %v2986
        %s2990 = sld [smem:[#allocation6 + $0x1]]
        %v2991 = vstv %s2990
        %v2992 = vadd.f32 %v2904, %v2991
        %v2994 = vlaneseq
        %v2995 = vshrl.u32 %v2994, 7
        %v2996 = vsub.s32 0, %v2995
        %v2997 = vrot.slane %v2992, %v2996
        %2998 = vrot.lane.b32.xlu0 %v2997, 48
        %v2999 = vpop.permute.xlu0 %2998
        %3001 = vst.msk [vmem:[%s657] sm:$0x1] %vm2988, %v2999
        %s3002 = sld [smem:[#allocation6 + $0x2]]
        %v3003 = vstv %s3002
        %v3004 = vadd.f32 %v2916, %v3003
        %v3006 = vlaneseq
        %v3007 = vshrl.u32 %v3006, 7
        %v3008 = vsub.s32 0, %v3007
        %v3009 = vrot.slane %v3004, %v3008
        %3010 = vrot.lane.b32.xlu0 %v3009, 48
        %v3011 = vpop.permute.xlu0 %3010
        %3013 = vst.msk [vmem:[%s662] sm:$0x1] %vm2988, %v3011
        %s3014 = sld [smem:[#allocation6 + $0x3]]
        %v3015 = vstv %s3014
        %v3016 = vadd.f32 %v2928, %v3015
        %v3018 = vlaneseq
        %v3019 = vshrl.u32 %v3018, 7
        %v3020 = vsub.s32 0, %v3019
        %v3021 = vrot.slane %v3016, %v3020
        %3022 = vrot.lane.b32.xlu0 %v3021, 48
        %v3023 = vpop.permute.xlu0 %3022
        %3025 = vst.msk [vmem:[%s667] sm:$0x1] %vm2988, %v3023
        %s3026 = sld [smem:[#allocation6 + $0x4]]
        %v3027 = vstv %s3026
        %v3028 = vadd.f32 %v2940, %v3027
        %v3030 = vlaneseq
        %v3031 = vshrl.u32 %v3030, 7
        %v3032 = vsub.s32 0, %v3031
        %v3033 = vrot.slane %v3028, %v3032
        %3034 = vrot.lane.b32.xlu0 %v3033, 48
        %v3035 = vpop.permute.xlu0 %3034
        %3037 = vst.msk [vmem:[%s672] sm:$0x1] %vm2988, %v3035
        %s3038 = sld [smem:[#allocation6 + $0x5]]
        %v3039 = vstv %s3038
        %v3040 = vadd.f32 %v2952, %v3039
        %v3042 = vlaneseq
        %v3043 = vshrl.u32 %v3042, 7
        %v3044 = vsub.s32 0, %v3043
        %v3045 = vrot.slane %v3040, %v3044
        %3046 = vrot.lane.b32.xlu0 %v3045, 48
        %v3047 = vpop.permute.xlu0 %3046
        %3049 = vst.msk [vmem:[%s677] sm:$0x1] %vm2988, %v3047
        %s3050 = sld [smem:[#allocation6 + $0x6]]
        %v3051 = vstv %s3050
        %v3052 = vadd.f32 %v2964, %v3051
        %v3054 = vlaneseq
        %v3055 = vshrl.u32 %v3054, 7
        %v3056 = vsub.s32 0, %v3055
        %v3057 = vrot.slane %v3052, %v3056
        %3058 = vrot.lane.b32.xlu0 %v3057, 48
        %v3059 = vpop.permute.xlu0 %3058
        %3061 = vst.msk [vmem:[%s682] sm:$0x1] %vm2988, %v3059
        %s3062 = sld [smem:[#allocation6 + $0x7]]
        %v3063 = vstv %s3062
        %v3064 = vadd.f32 %v2976, %v3063
        %v3066 = vlaneseq
        %v3067 = vshrl.u32 %v3066, 7
        %v3068 = vsub.s32 0, %v3067
        %v3069 = vrot.slane %v3064, %v3068
        %3070 = vrot.lane.b32.xlu0 %v3069, 48
        %v3071 = vpop.permute.xlu0 %3070
        %3073 = vst.msk [vmem:[%s687] sm:$0x1] %vm2988, %v3071
        %v3074 = vld [vmem:[%s258 + $0x1] sm:$0x1]
        %s3075 = sld [smem:[#allocation2]]
        %v3076 = vstv %s3075
        %v3077 = vmul.f32 %v3076, %v3074
        %s3078 = sld [smem:[#allocation4]]
        %v3079 = vstv %s3078
        %v3080 = vmul.f32 %v3079, %v3074
        %3082 = vrot.lane.b32.xlu0 %v3080, 112
        %v3083 = vpop.permute.xlu0 %3082
        %v3085 = vadd.f32 %v3077, %v3083
        %s3086 = sld [smem:[#allocation2 + $0x80]]
        %v3087 = vstv %s3086
        %v3088 = vmul.f32 %v3087, %v3074
        %s3089 = sld [smem:[#allocation4 + $0x80]]
        %v3090 = vstv %s3089
        %v3091 = vmul.f32 %v3090, %v3074
        %3093 = vrot.lane.b32.xlu0 %v3091, 112
        %v3094 = vpop.permute.xlu0 %3093
        %v3096 = vadd.f32 %v3088, %v3094
        %s3097 = sld [smem:[#allocation2 + $0x100]]
        %v3098 = vstv %s3097
        %v3099 = vmul.f32 %v3098, %v3074
        %s3100 = sld [smem:[#allocation4 + $0x100]]
        %v3101 = vstv %s3100
        %v3102 = vmul.f32 %v3101, %v3074
        %3104 = vrot.lane.b32.xlu0 %v3102, 112
        %v3105 = vpop.permute.xlu0 %3104
        %v3107 = vadd.f32 %v3099, %v3105
        %s3108 = sld [smem:[#allocation2 + $0x180]]
        %v3109 = vstv %s3108
        %v3110 = vmul.f32 %v3109, %v3074
        %s3111 = sld [smem:[#allocation4 + $0x180]]
        %v3112 = vstv %s3111
        %v3113 = vmul.f32 %v3112, %v3074
        %3115 = vrot.lane.b32.xlu0 %v3113, 112
        %v3116 = vpop.permute.xlu0 %3115
        %v3118 = vadd.f32 %v3110, %v3116
        %s3119 = sld [smem:[#allocation2 + $0x200]]
        %v3120 = vstv %s3119
        %v3121 = vmul.f32 %v3120, %v3074
        %s3122 = sld [smem:[#allocation4 + $0x200]]
        %v3123 = vstv %s3122
        %v3124 = vmul.f32 %v3123, %v3074
        %3126 = vrot.lane.b32.xlu0 %v3124, 112
        %v3127 = vpop.permute.xlu0 %3126
        %v3129 = vadd.f32 %v3121, %v3127
        %s3130 = sld [smem:[#allocation2 + $0x280]]
        %v3131 = vstv %s3130
        %v3132 = vmul.f32 %v3131, %v3074
        %s3133 = sld [smem:[#allocation4 + $0x280]]
        %v3134 = vstv %s3133
        %v3135 = vmul.f32 %v3134, %v3074
        %3137 = vrot.lane.b32.xlu0 %v3135, 112
        %v3138 = vpop.permute.xlu0 %3137
        %v3140 = vadd.f32 %v3132, %v3138
        %s3141 = sld [smem:[#allocation2 + $0x300]]
        %v3142 = vstv %s3141
        %v3143 = vmul.f32 %v3142, %v3074
        %s3144 = sld [smem:[#allocation4 + $0x300]]
        %v3145 = vstv %s3144
        %v3146 = vmul.f32 %v3145, %v3074
        %3148 = vrot.lane.b32.xlu0 %v3146, 112
        %v3149 = vpop.permute.xlu0 %3148
        %v3151 = vadd.f32 %v3143, %v3149
        %s3152 = sld [smem:[#allocation2 + $0x380]]
        %v3153 = vstv %s3152
        %v3154 = vmul.f32 %v3153, %v3074
        %s3155 = sld [smem:[#allocation4 + $0x380]]
        %v3156 = vstv %s3155
        %v3157 = vmul.f32 %v3156, %v3074
        %3159 = vrot.lane.b32.xlu0 %v3157, 112
        %v3160 = vpop.permute.xlu0 %3159
        %v3162 = vadd.f32 %v3154, %v3160
        %v3163 = vld [vmem:[%s355 + $0x1] sm:$0x1]
        %s3164 = sld [smem:[#allocation2 + $0x1]]
        %v3165 = vstv %s3164
        %v3166 = vmul.f32 %v3165, %v3163
        %s3167 = sld [smem:[#allocation4 + $0x1]]
        %v3168 = vstv %s3167
        %v3169 = vmul.f32 %v3168, %v3163
        %3171 = vrot.lane.b32.xlu0 %v3169, 112
        %v3172 = vpop.permute.xlu0 %3171
        %v3174 = vadd.f32 %v3166, %v3172
        %v3175 = vadd.f32 %v3085, %v3174
        %s3176 = sld [smem:[#allocation2 + $0x81]]
        %v3177 = vstv %s3176
        %v3178 = vmul.f32 %v3177, %v3163
        %s3179 = sld [smem:[#allocation4 + $0x81]]
        %v3180 = vstv %s3179
        %v3181 = vmul.f32 %v3180, %v3163
        %3183 = vrot.lane.b32.xlu0 %v3181, 112
        %v3184 = vpop.permute.xlu0 %3183
        %v3186 = vadd.f32 %v3178, %v3184
        %v3187 = vadd.f32 %v3096, %v3186
        %s3188 = sld [smem:[#allocation2 + $0x101]]
        %v3189 = vstv %s3188
        %v3190 = vmul.f32 %v3189, %v3163
        %s3191 = sld [smem:[#allocation4 + $0x101]]
        %v3192 = vstv %s3191
        %v3193 = vmul.f32 %v3192, %v3163
        %3195 = vrot.lane.b32.xlu0 %v3193, 112
        %v3196 = vpop.permute.xlu0 %3195
        %v3198 = vadd.f32 %v3190, %v3196
        %v3199 = vadd.f32 %v3107, %v3198
        %s3200 = sld [smem:[#allocation2 + $0x181]]
        %v3201 = vstv %s3200
        %v3202 = vmul.f32 %v3201, %v3163
        %s3203 = sld [smem:[#allocation4 + $0x181]]
        %v3204 = vstv %s3203
        %v3205 = vmul.f32 %v3204, %v3163
        %3207 = vrot.lane.b32.xlu0 %v3205, 112
        %v3208 = vpop.permute.xlu0 %3207
        %v3210 = vadd.f32 %v3202, %v3208
        %v3211 = vadd.f32 %v3118, %v3210
        %s3212 = sld [smem:[#allocation2 + $0x201]]
        %v3213 = vstv %s3212
        %v3214 = vmul.f32 %v3213, %v3163
        %s3215 = sld [smem:[#allocation4 + $0x201]]
        %v3216 = vstv %s3215
        %v3217 = vmul.f32 %v3216, %v3163
        %3219 = vrot.lane.b32.xlu0 %v3217, 112
        %v3220 = vpop.permute.xlu0 %3219
        %v3222 = vadd.f32 %v3214, %v3220
        %v3223 = vadd.f32 %v3129, %v3222
        %s3224 = sld [smem:[#allocation2 + $0x281]]
        %v3225 = vstv %s3224
        %v3226 = vmul.f32 %v3225, %v3163
        %s3227 = sld [smem:[#allocation4 + $0x281]]
        %v3228 = vstv %s3227
        %v3229 = vmul.f32 %v3228, %v3163
        %3231 = vrot.lane.b32.xlu0 %v3229, 112
        %v3232 = vpop.permute.xlu0 %3231
        %v3234 = vadd.f32 %v3226, %v3232
        %v3235 = vadd.f32 %v3140, %v3234
        %s3236 = sld [smem:[#allocation2 + $0x301]]
        %v3237 = vstv %s3236
        %v3238 = vmul.f32 %v3237, %v3163
        %s3239 = sld [smem:[#allocation4 + $0x301]]
        %v3240 = vstv %s3239
        %v3241 = vmul.f32 %v3240, %v3163
        %3243 = vrot.lane.b32.xlu0 %v3241, 112
        %v3244 = vpop.permute.xlu0 %3243
        %v3246 = vadd.f32 %v3238, %v3244
        %v3247 = vadd.f32 %v3151, %v3246
        %s3248 = sld [smem:[#allocation2 + $0x381]]
        %v3249 = vstv %s3248
        %v3250 = vmul.f32 %v3249, %v3163
        %s3251 = sld [smem:[#allocation4 + $0x381]]
        %v3252 = vstv %s3251
        %v3253 = vmul.f32 %v3252, %v3163
        %3255 = vrot.lane.b32.xlu0 %v3253, 112
        %v3256 = vpop.permute.xlu0 %3255
        %v3258 = vadd.f32 %v3250, %v3256
        %v3259 = vadd.f32 %v3162, %v3258
        %v3260 = vld [vmem:[%s453 + $0x1] sm:$0x1]
        %s3261 = sld [smem:[#allocation2 + $0x2]]
        %v3262 = vstv %s3261
        %v3263 = vmul.f32 %v3262, %v3260
        %s3264 = sld [smem:[#allocation4 + $0x2]]
        %v3265 = vstv %s3264
        %v3266 = vmul.f32 %v3265, %v3260
        %3268 = vrot.lane.b32.xlu0 %v3266, 112
        %v3269 = vpop.permute.xlu0 %3268
        %v3271 = vadd.f32 %v3263, %v3269
        %v3272 = vadd.f32 %v3175, %v3271
        %s3273 = sld [smem:[#allocation2 + $0x82]]
        %v3274 = vstv %s3273
        %v3275 = vmul.f32 %v3274, %v3260
        %s3276 = sld [smem:[#allocation4 + $0x82]]
        %v3277 = vstv %s3276
        %v3278 = vmul.f32 %v3277, %v3260
        %3280 = vrot.lane.b32.xlu0 %v3278, 112
        %v3281 = vpop.permute.xlu0 %3280
        %v3283 = vadd.f32 %v3275, %v3281
        %v3284 = vadd.f32 %v3187, %v3283
        %s3285 = sld [smem:[#allocation2 + $0x102]]
        %v3286 = vstv %s3285
        %v3287 = vmul.f32 %v3286, %v3260
        %s3288 = sld [smem:[#allocation4 + $0x102]]
        %v3289 = vstv %s3288
        %v3290 = vmul.f32 %v3289, %v3260
        %3292 = vrot.lane.b32.xlu0 %v3290, 112
        %v3293 = vpop.permute.xlu0 %3292
        %v3295 = vadd.f32 %v3287, %v3293
        %v3296 = vadd.f32 %v3199, %v3295
        %s3297 = sld [smem:[#allocation2 + $0x182]]
        %v3298 = vstv %s3297
        %v3299 = vmul.f32 %v3298, %v3260
        %s3300 = sld [smem:[#allocation4 + $0x182]]
        %v3301 = vstv %s3300
        %v3302 = vmul.f32 %v3301, %v3260
        %3304 = vrot.lane.b32.xlu0 %v3302, 112
        %v3305 = vpop.permute.xlu0 %3304
        %v3307 = vadd.f32 %v3299, %v3305
        %v3308 = vadd.f32 %v3211, %v3307
        %s3309 = sld [smem:[#allocation2 + $0x202]]
        %v3310 = vstv %s3309
        %v3311 = vmul.f32 %v3310, %v3260
        %s3312 = sld [smem:[#allocation4 + $0x202]]
        %v3313 = vstv %s3312
        %v3314 = vmul.f32 %v3313, %v3260
        %3316 = vrot.lane.b32.xlu0 %v3314, 112
        %v3317 = vpop.permute.xlu0 %3316
        %v3319 = vadd.f32 %v3311, %v3317
        %v3320 = vadd.f32 %v3223, %v3319
        %s3321 = sld [smem:[#allocation2 + $0x282]]
        %v3322 = vstv %s3321
        %v3323 = vmul.f32 %v3322, %v3260
        %s3324 = sld [smem:[#allocation4 + $0x282]]
        %v3325 = vstv %s3324
        %v3326 = vmul.f32 %v3325, %v3260
        %3328 = vrot.lane.b32.xlu0 %v3326, 112
        %v3329 = vpop.permute.xlu0 %3328
        %v3331 = vadd.f32 %v3323, %v3329
        %v3332 = vadd.f32 %v3235, %v3331
        %s3333 = sld [smem:[#allocation2 + $0x302]]
        %v3334 = vstv %s3333
        %v3335 = vmul.f32 %v3334, %v3260
        %s3336 = sld [smem:[#allocation4 + $0x302]]
        %v3337 = vstv %s3336
        %v3338 = vmul.f32 %v3337, %v3260
        %3340 = vrot.lane.b32.xlu0 %v3338, 112
        %v3341 = vpop.permute.xlu0 %3340
        %v3343 = vadd.f32 %v3335, %v3341
        %v3344 = vadd.f32 %v3247, %v3343
        %s3345 = sld [smem:[#allocation2 + $0x382]]
        %v3346 = vstv %s3345
        %v3347 = vmul.f32 %v3346, %v3260
        %s3348 = sld [smem:[#allocation4 + $0x382]]
        %v3349 = vstv %s3348
        %v3350 = vmul.f32 %v3349, %v3260
        %3352 = vrot.lane.b32.xlu0 %v3350, 112
        %v3353 = vpop.permute.xlu0 %3352
        %v3355 = vadd.f32 %v3347, %v3353
        %v3356 = vadd.f32 %v3259, %v3355
        %v3357 = vld [vmem:[%s551 + $0x1] sm:$0x1]
        %s3358 = sld [smem:[#allocation2 + $0x3]]
        %v3359 = vstv %s3358
        %v3360 = vmul.f32 %v3359, %v3357
        %s3361 = sld [smem:[#allocation4 + $0x3]]
        %v3362 = vstv %s3361
        %v3363 = vmul.f32 %v3362, %v3357
        %3365 = vrot.lane.b32.xlu0 %v3363, 112
        %v3366 = vpop.permute.xlu0 %3365
        %v3368 = vadd.f32 %v3360, %v3366
        %v3369 = vadd.f32 %v3272, %v3368
        %s3370 = sld [smem:[#allocation2 + $0x83]]
        %v3371 = vstv %s3370
        %v3372 = vmul.f32 %v3371, %v3357
        %s3373 = sld [smem:[#allocation4 + $0x83]]
        %v3374 = vstv %s3373
        %v3375 = vmul.f32 %v3374, %v3357
        %3377 = vrot.lane.b32.xlu0 %v3375, 112
        %v3378 = vpop.permute.xlu0 %3377
        %v3380 = vadd.f32 %v3372, %v3378
        %v3381 = vadd.f32 %v3284, %v3380
        %s3382 = sld [smem:[#allocation2 + $0x103]]
        %v3383 = vstv %s3382
        %v3384 = vmul.f32 %v3383, %v3357
        %s3385 = sld [smem:[#allocation4 + $0x103]]
        %v3386 = vstv %s3385
        %v3387 = vmul.f32 %v3386, %v3357
        %3389 = vrot.lane.b32.xlu0 %v3387, 112
        %v3390 = vpop.permute.xlu0 %3389
        %v3392 = vadd.f32 %v3384, %v3390
        %v3393 = vadd.f32 %v3296, %v3392
        %s3394 = sld [smem:[#allocation2 + $0x183]]
        %v3395 = vstv %s3394
        %v3396 = vmul.f32 %v3395, %v3357
        %s3397 = sld [smem:[#allocation4 + $0x183]]
        %v3398 = vstv %s3397
        %v3399 = vmul.f32 %v3398, %v3357
        %3401 = vrot.lane.b32.xlu0 %v3399, 112
        %v3402 = vpop.permute.xlu0 %3401
        %v3404 = vadd.f32 %v3396, %v3402
        %v3405 = vadd.f32 %v3308, %v3404
        %s3406 = sld [smem:[#allocation2 + $0x203]]
        %v3407 = vstv %s3406
        %v3408 = vmul.f32 %v3407, %v3357
        %s3409 = sld [smem:[#allocation4 + $0x203]]
        %v3410 = vstv %s3409
        %v3411 = vmul.f32 %v3410, %v3357
        %3413 = vrot.lane.b32.xlu0 %v3411, 112
        %v3414 = vpop.permute.xlu0 %3413
        %v3416 = vadd.f32 %v3408, %v3414
        %v3417 = vadd.f32 %v3320, %v3416
        %s3418 = sld [smem:[#allocation2 + $0x283]]
        %v3419 = vstv %s3418
        %v3420 = vmul.f32 %v3419, %v3357
        %s3421 = sld [smem:[#allocation4 + $0x283]]
        %v3422 = vstv %s3421
        %v3423 = vmul.f32 %v3422, %v3357
        %3425 = vrot.lane.b32.xlu0 %v3423, 112
        %v3426 = vpop.permute.xlu0 %3425
        %v3428 = vadd.f32 %v3420, %v3426
        %v3429 = vadd.f32 %v3332, %v3428
        %s3430 = sld [smem:[#allocation2 + $0x303]]
        %v3431 = vstv %s3430
        %v3432 = vmul.f32 %v3431, %v3357
        %s3433 = sld [smem:[#allocation4 + $0x303]]
        %v3434 = vstv %s3433
        %v3435 = vmul.f32 %v3434, %v3357
        %3437 = vrot.lane.b32.xlu0 %v3435, 112
        %v3438 = vpop.permute.xlu0 %3437
        %v3440 = vadd.f32 %v3432, %v3438
        %v3441 = vadd.f32 %v3344, %v3440
        %s3442 = sld [smem:[#allocation2 + $0x383]]
        %v3443 = vstv %s3442
        %v3444 = vmul.f32 %v3443, %v3357
        %s3445 = sld [smem:[#allocation4 + $0x383]]
        %v3446 = vstv %s3445
        %v3447 = vmul.f32 %v3446, %v3357
        %3449 = vrot.lane.b32.xlu0 %v3447, 112
        %v3450 = vpop.permute.xlu0 %3449
        %v3452 = vadd.f32 %v3444, %v3450
        %v3453 = vadd.f32 %v3356, %v3452
        %s3454 = sld [smem:[#allocation6]]
        %v3455 = vstv %s3454
        %v3456 = vadd.f32 %v3369, %v3455
        %v3458 = vlaneseq
        %v3459 = vshrl.u32 %v3458, 7
        %v3460 = vsub.s32 0, %v3459
        %v3461 = vrot.slane %v3456, %v3460
        %3462 = vrot.lane.b32.xlu0 %v3461, 32
        %v3463 = vpop.permute.xlu0 %3462
        %vm3465 = vcmask 910080
        %3466 = vst.msk [vmem:[%s265] sm:$0x1] %vm3465, %v3463
        %s3467 = sld [smem:[#allocation6 + $0x1]]
        %v3468 = vstv %s3467
        %v3469 = vadd.f32 %v3381, %v3468
        %v3471 = vlaneseq
        %v3472 = vshrl.u32 %v3471, 7
        %v3473 = vsub.s32 0, %v3472
        %v3474 = vrot.slane %v3469, %v3473
        %3475 = vrot.lane.b32.xlu0 %v3474, 32
        %v3476 = vpop.permute.xlu0 %3475
        %3478 = vst.msk [vmem:[%s657] sm:$0x1] %vm3465, %v3476
        %s3479 = sld [smem:[#allocation6 + $0x2]]
        %v3480 = vstv %s3479
        %v3481 = vadd.f32 %v3393, %v3480
        %v3483 = vlaneseq
        %v3484 = vshrl.u32 %v3483, 7
        %v3485 = vsub.s32 0, %v3484
        %v3486 = vrot.slane %v3481, %v3485
        %3487 = vrot.lane.b32.xlu0 %v3486, 32
        %v3488 = vpop.permute.xlu0 %3487
        %3490 = vst.msk [vmem:[%s662] sm:$0x1] %vm3465, %v3488
        %s3491 = sld [smem:[#allocation6 + $0x3]]
        %v3492 = vstv %s3491
        %v3493 = vadd.f32 %v3405, %v3492
        %v3495 = vlaneseq
        %v3496 = vshrl.u32 %v3495, 7
        %v3497 = vsub.s32 0, %v3496
        %v3498 = vrot.slane %v3493, %v3497
        %3499 = vrot.lane.b32.xlu0 %v3498, 32
        %v3500 = vpop.permute.xlu0 %3499
        %3502 = vst.msk [vmem:[%s667] sm:$0x1] %vm3465, %v3500
        %s3503 = sld [smem:[#allocation6 + $0x4]]
        %v3504 = vstv %s3503
        %v3505 = vadd.f32 %v3417, %v3504
        %v3507 = vlaneseq
        %v3508 = vshrl.u32 %v3507, 7
        %v3509 = vsub.s32 0, %v3508
        %v3510 = vrot.slane %v3505, %v3509
        %3511 = vrot.lane.b32.xlu0 %v3510, 32
        %v3512 = vpop.permute.xlu0 %3511
        %3514 = vst.msk [vmem:[%s672] sm:$0x1] %vm3465, %v3512
        %s3515 = sld [smem:[#allocation6 + $0x5]]
        %v3516 = vstv %s3515
        %v3517 = vadd.f32 %v3429, %v3516
        %v3519 = vlaneseq
        %v3520 = vshrl.u32 %v3519, 7
        %v3521 = vsub.s32 0, %v3520
        %v3522 = vrot.slane %v3517, %v3521
        %3523 = vrot.lane.b32.xlu0 %v3522, 32
        %v3524 = vpop.permute.xlu0 %3523
        %3526 = vst.msk [vmem:[%s677] sm:$0x1] %vm3465, %v3524
        %s3527 = sld [smem:[#allocation6 + $0x6]]
        %v3528 = vstv %s3527
        %v3529 = vadd.f32 %v3441, %v3528
        %v3531 = vlaneseq
        %v3532 = vshrl.u32 %v3531, 7
        %v3533 = vsub.s32 0, %v3532
        %v3534 = vrot.slane %v3529, %v3533
        %3535 = vrot.lane.b32.xlu0 %v3534, 32
        %v3536 = vpop.permute.xlu0 %3535
        %3538 = vst.msk [vmem:[%s682] sm:$0x1] %vm3465, %v3536
        %s3539 = sld [smem:[#allocation6 + $0x7]]
        %v3540 = vstv %s3539
        %v3541 = vadd.f32 %v3453, %v3540
        %v3543 = vlaneseq
        %v3544 = vshrl.u32 %v3543, 7
        %v3545 = vsub.s32 0, %v3544
        %v3546 = vrot.slane %v3541, %v3545
        %3547 = vrot.lane.b32.xlu0 %v3546, 32
        %v3548 = vpop.permute.xlu0 %3547
        %3550 = vst.msk [vmem:[%s687] sm:$0x1] %vm3465, %v3548
        %v3551 = vld [vmem:[%s258 + $0x1] sm:$0x1]
        %s3552 = sld [smem:[#allocation2]]
        %v3553 = vstv %s3552
        %v3554 = vmul.f32 %v3553, %v3551
        %s3555 = sld [smem:[#allocation4]]
        %v3556 = vstv %s3555
        %v3557 = vmul.f32 %v3556, %v3551
        %3559 = vrot.lane.b32.xlu0 %v3557, 112
        %v3560 = vpop.permute.xlu0 %3559
        %v3562 = vadd.f32 %v3554, %v3560
        %s3563 = sld [smem:[#allocation2 + $0x80]]
        %v3564 = vstv %s3563
        %v3565 = vmul.f32 %v3564, %v3551
        %s3566 = sld [smem:[#allocation4 + $0x80]]
        %v3567 = vstv %s3566
        %v3568 = vmul.f32 %v3567, %v3551
        %3570 = vrot.lane.b32.xlu0 %v3568, 112
        %v3571 = vpop.permute.xlu0 %3570
        %v3573 = vadd.f32 %v3565, %v3571
        %s3574 = sld [smem:[#allocation2 + $0x100]]
        %v3575 = vstv %s3574
        %v3576 = vmul.f32 %v3575, %v3551
        %s3577 = sld [smem:[#allocation4 + $0x100]]
        %v3578 = vstv %s3577
        %v3579 = vmul.f32 %v3578, %v3551
        %3581 = vrot.lane.b32.xlu0 %v3579, 112
        %v3582 = vpop.permute.xlu0 %3581
        %v3584 = vadd.f32 %v3576, %v3582
        %s3585 = sld [smem:[#allocation2 + $0x180]]
        %v3586 = vstv %s3585
        %v3587 = vmul.f32 %v3586, %v3551
        %s3588 = sld [smem:[#allocation4 + $0x180]]
        %v3589 = vstv %s3588
        %v3590 = vmul.f32 %v3589, %v3551
        %3592 = vrot.lane.b32.xlu0 %v3590, 112
        %v3593 = vpop.permute.xlu0 %3592
        %v3595 = vadd.f32 %v3587, %v3593
        %s3596 = sld [smem:[#allocation2 + $0x200]]
        %v3597 = vstv %s3596
        %v3598 = vmul.f32 %v3597, %v3551
        %s3599 = sld [smem:[#allocation4 + $0x200]]
        %v3600 = vstv %s3599
        %v3601 = vmul.f32 %v3600, %v3551
        %3603 = vrot.lane.b32.xlu0 %v3601, 112
        %v3604 = vpop.permute.xlu0 %3603
        %v3606 = vadd.f32 %v3598, %v3604
        %s3607 = sld [smem:[#allocation2 + $0x280]]
        %v3608 = vstv %s3607
        %v3609 = vmul.f32 %v3608, %v3551
        %s3610 = sld [smem:[#allocation4 + $0x280]]
        %v3611 = vstv %s3610
        %v3612 = vmul.f32 %v3611, %v3551
        %3614 = vrot.lane.b32.xlu0 %v3612, 112
        %v3615 = vpop.permute.xlu0 %3614
        %v3617 = vadd.f32 %v3609, %v3615
        %s3618 = sld [smem:[#allocation2 + $0x300]]
        %v3619 = vstv %s3618
        %v3620 = vmul.f32 %v3619, %v3551
        %s3621 = sld [smem:[#allocation4 + $0x300]]
        %v3622 = vstv %s3621
        %v3623 = vmul.f32 %v3622, %v3551
        %3625 = vrot.lane.b32.xlu0 %v3623, 112
        %v3626 = vpop.permute.xlu0 %3625
        %v3628 = vadd.f32 %v3620, %v3626
        %s3629 = sld [smem:[#allocation2 + $0x380]]
        %v3630 = vstv %s3629
        %v3631 = vmul.f32 %v3630, %v3551
        %s3632 = sld [smem:[#allocation4 + $0x380]]
        %v3633 = vstv %s3632
        %v3634 = vmul.f32 %v3633, %v3551
        %3636 = vrot.lane.b32.xlu0 %v3634, 112
        %v3637 = vpop.permute.xlu0 %3636
        %v3639 = vadd.f32 %v3631, %v3637
        %v3640 = vld [vmem:[%s355 + $0x1] sm:$0x1]
        %s3641 = sld [smem:[#allocation2 + $0x1]]
        %v3642 = vstv %s3641
        %v3643 = vmul.f32 %v3642, %v3640
        %s3644 = sld [smem:[#allocation4 + $0x1]]
        %v3645 = vstv %s3644
        %v3646 = vmul.f32 %v3645, %v3640
        %3648 = vrot.lane.b32.xlu0 %v3646, 112
        %v3649 = vpop.permute.xlu0 %3648
        %v3651 = vadd.f32 %v3643, %v3649
        %v3652 = vadd.f32 %v3562, %v3651
        %s3653 = sld [smem:[#allocation2 + $0x81]]
        %v3654 = vstv %s3653
        %v3655 = vmul.f32 %v3654, %v3640
        %s3656 = sld [smem:[#allocation4 + $0x81]]
        %v3657 = vstv %s3656
        %v3658 = vmul.f32 %v3657, %v3640
        %3660 = vrot.lane.b32.xlu0 %v3658, 112
        %v3661 = vpop.permute.xlu0 %3660
        %v3663 = vadd.f32 %v3655, %v3661
        %v3664 = vadd.f32 %v3573, %v3663
        %s3665 = sld [smem:[#allocation2 + $0x101]]
        %v3666 = vstv %s3665
        %v3667 = vmul.f32 %v3666, %v3640
        %s3668 = sld [smem:[#allocation4 + $0x101]]
        %v3669 = vstv %s3668
        %v3670 = vmul.f32 %v3669, %v3640
        %3672 = vrot.lane.b32.xlu0 %v3670, 112
        %v3673 = vpop.permute.xlu0 %3672
        %v3675 = vadd.f32 %v3667, %v3673
        %v3676 = vadd.f32 %v3584, %v3675
        %s3677 = sld [smem:[#allocation2 + $0x181]]
        %v3678 = vstv %s3677
        %v3679 = vmul.f32 %v3678, %v3640
        %s3680 = sld [smem:[#allocation4 + $0x181]]
        %v3681 = vstv %s3680
        %v3682 = vmul.f32 %v3681, %v3640
        %3684 = vrot.lane.b32.xlu0 %v3682, 112
        %v3685 = vpop.permute.xlu0 %3684
        %v3687 = vadd.f32 %v3679, %v3685
        %v3688 = vadd.f32 %v3595, %v3687
        %s3689 = sld [smem:[#allocation2 + $0x201]]
        %v3690 = vstv %s3689
        %v3691 = vmul.f32 %v3690, %v3640
        %s3692 = sld [smem:[#allocation4 + $0x201]]
        %v3693 = vstv %s3692
        %v3694 = vmul.f32 %v3693, %v3640
        %3696 = vrot.lane.b32.xlu0 %v3694, 112
        %v3697 = vpop.permute.xlu0 %3696
        %v3699 = vadd.f32 %v3691, %v3697
        %v3700 = vadd.f32 %v3606, %v3699
        %s3701 = sld [smem:[#allocation2 + $0x281]]
        %v3702 = vstv %s3701
        %v3703 = vmul.f32 %v3702, %v3640
        %s3704 = sld [smem:[#allocation4 + $0x281]]
        %v3705 = vstv %s3704
        %v3706 = vmul.f32 %v3705, %v3640
        %3708 = vrot.lane.b32.xlu0 %v3706, 112
        %v3709 = vpop.permute.xlu0 %3708
        %v3711 = vadd.f32 %v3703, %v3709
        %v3712 = vadd.f32 %v3617, %v3711
        %s3713 = sld [smem:[#allocation2 + $0x301]]
        %v3714 = vstv %s3713
        %v3715 = vmul.f32 %v3714, %v3640
        %s3716 = sld [smem:[#allocation4 + $0x301]]
        %v3717 = vstv %s3716
        %v3718 = vmul.f32 %v3717, %v3640
        %3720 = vrot.lane.b32.xlu0 %v3718, 112
        %v3721 = vpop.permute.xlu0 %3720
        %v3723 = vadd.f32 %v3715, %v3721
        %v3724 = vadd.f32 %v3628, %v3723
        %s3725 = sld [smem:[#allocation2 + $0x381]]
        %v3726 = vstv %s3725
        %v3727 = vmul.f32 %v3726, %v3640
        %s3728 = sld [smem:[#allocation4 + $0x381]]
        %v3729 = vstv %s3728
        %v3730 = vmul.f32 %v3729, %v3640
        %3732 = vrot.lane.b32.xlu0 %v3730, 112
        %v3733 = vpop.permute.xlu0 %3732
        %v3735 = vadd.f32 %v3727, %v3733
        %v3736 = vadd.f32 %v3639, %v3735
        %v3737 = vld [vmem:[%s453 + $0x1] sm:$0x1]
        %s3738 = sld [smem:[#allocation2 + $0x2]]
        %v3739 = vstv %s3738
        %v3740 = vmul.f32 %v3739, %v3737
        %s3741 = sld [smem:[#allocation4 + $0x2]]
        %v3742 = vstv %s3741
        %v3743 = vmul.f32 %v3742, %v3737
        %3745 = vrot.lane.b32.xlu0 %v3743, 112
        %v3746 = vpop.permute.xlu0 %3745
        %v3748 = vadd.f32 %v3740, %v3746
        %v3749 = vadd.f32 %v3652, %v3748
        %s3750 = sld [smem:[#allocation2 + $0x82]]
        %v3751 = vstv %s3750
        %v3752 = vmul.f32 %v3751, %v3737
        %s3753 = sld [smem:[#allocation4 + $0x82]]
        %v3754 = vstv %s3753
        %v3755 = vmul.f32 %v3754, %v3737
        %3757 = vrot.lane.b32.xlu0 %v3755, 112
        %v3758 = vpop.permute.xlu0 %3757
        %v3760 = vadd.f32 %v3752, %v3758
        %v3761 = vadd.f32 %v3664, %v3760
        %s3762 = sld [smem:[#allocation2 + $0x102]]
        %v3763 = vstv %s3762
        %v3764 = vmul.f32 %v3763, %v3737
        %s3765 = sld [smem:[#allocation4 + $0x102]]
        %v3766 = vstv %s3765
        %v3767 = vmul.f32 %v3766, %v3737
        %3769 = vrot.lane.b32.xlu0 %v3767, 112
        %v3770 = vpop.permute.xlu0 %3769
        %v3772 = vadd.f32 %v3764, %v3770
        %v3773 = vadd.f32 %v3676, %v3772
        %s3774 = sld [smem:[#allocation2 + $0x182]]
        %v3775 = vstv %s3774
        %v3776 = vmul.f32 %v3775, %v3737
        %s3777 = sld [smem:[#allocation4 + $0x182]]
        %v3778 = vstv %s3777
        %v3779 = vmul.f32 %v3778, %v3737
        %3781 = vrot.lane.b32.xlu0 %v3779, 112
        %v3782 = vpop.permute.xlu0 %3781
        %v3784 = vadd.f32 %v3776, %v3782
        %v3785 = vadd.f32 %v3688, %v3784
        %s3786 = sld [smem:[#allocation2 + $0x202]]
        %v3787 = vstv %s3786
        %v3788 = vmul.f32 %v3787, %v3737
        %s3789 = sld [smem:[#allocation4 + $0x202]]
        %v3790 = vstv %s3789
        %v3791 = vmul.f32 %v3790, %v3737
        %3793 = vrot.lane.b32.xlu0 %v3791, 112
        %v3794 = vpop.permute.xlu0 %3793
        %v3796 = vadd.f32 %v3788, %v3794
        %v3797 = vadd.f32 %v3700, %v3796
        %s3798 = sld [smem:[#allocation2 + $0x282]]
        %v3799 = vstv %s3798
        %v3800 = vmul.f32 %v3799, %v3737
        %s3801 = sld [smem:[#allocation4 + $0x282]]
        %v3802 = vstv %s3801
        %v3803 = vmul.f32 %v3802, %v3737
        %3805 = vrot.lane.b32.xlu0 %v3803, 112
        %v3806 = vpop.permute.xlu0 %3805
        %v3808 = vadd.f32 %v3800, %v3806
        %v3809 = vadd.f32 %v3712, %v3808
        %s3810 = sld [smem:[#allocation2 + $0x302]]
        %v3811 = vstv %s3810
        %v3812 = vmul.f32 %v3811, %v3737
        %s3813 = sld [smem:[#allocation4 + $0x302]]
        %v3814 = vstv %s3813
        %v3815 = vmul.f32 %v3814, %v3737
        %3817 = vrot.lane.b32.xlu0 %v3815, 112
        %v3818 = vpop.permute.xlu0 %3817
        %v3820 = vadd.f32 %v3812, %v3818
        %v3821 = vadd.f32 %v3724, %v3820
        %s3822 = sld [smem:[#allocation2 + $0x382]]
        %v3823 = vstv %s3822
        %v3824 = vmul.f32 %v3823, %v3737
        %s3825 = sld [smem:[#allocation4 + $0x382]]
        %v3826 = vstv %s3825
        %v3827 = vmul.f32 %v3826, %v3737
        %3829 = vrot.lane.b32.xlu0 %v3827, 112
        %v3830 = vpop.permute.xlu0 %3829
        %v3832 = vadd.f32 %v3824, %v3830
        %v3833 = vadd.f32 %v3736, %v3832
        %v3834 = vld [vmem:[%s551 + $0x1] sm:$0x1]
        %s3835 = sld [smem:[#allocation2 + $0x3]]
        %v3836 = vstv %s3835
        %v3837 = vmul.f32 %v3836, %v3834
        %s3838 = sld [smem:[#allocation4 + $0x3]]
        %v3839 = vstv %s3838
        %v3840 = vmul.f32 %v3839, %v3834
        %3842 = vrot.lane.b32.xlu0 %v3840, 112
        %v3843 = vpop.permute.xlu0 %3842
        %v3845 = vadd.f32 %v3837, %v3843
        %v3846 = vadd.f32 %v3749, %v3845
        %s3847 = sld [smem:[#allocation2 + $0x83]]
        %v3848 = vstv %s3847
        %v3849 = vmul.f32 %v3848, %v3834
        %s3850 = sld [smem:[#allocation4 + $0x83]]
        %v3851 = vstv %s3850
        %v3852 = vmul.f32 %v3851, %v3834
        %3854 = vrot.lane.b32.xlu0 %v3852, 112
        %v3855 = vpop.permute.xlu0 %3854
        %v3857 = vadd.f32 %v3849, %v3855
        %v3858 = vadd.f32 %v3761, %v3857
        %s3859 = sld [smem:[#allocation2 + $0x103]]
        %v3860 = vstv %s3859
        %v3861 = vmul.f32 %v3860, %v3834
        %s3862 = sld [smem:[#allocation4 + $0x103]]
        %v3863 = vstv %s3862
        %v3864 = vmul.f32 %v3863, %v3834
        %3866 = vrot.lane.b32.xlu0 %v3864, 112
        %v3867 = vpop.permute.xlu0 %3866
        %v3869 = vadd.f32 %v3861, %v3867
        %v3870 = vadd.f32 %v3773, %v3869
        %s3871 = sld [smem:[#allocation2 + $0x183]]
        %v3872 = vstv %s3871
        %v3873 = vmul.f32 %v3872, %v3834
        %s3874 = sld [smem:[#allocation4 + $0x183]]
        %v3875 = vstv %s3874
        %v3876 = vmul.f32 %v3875, %v3834
        %3878 = vrot.lane.b32.xlu0 %v3876, 112
        %v3879 = vpop.permute.xlu0 %3878
        %v3881 = vadd.f32 %v3873, %v3879
        %v3882 = vadd.f32 %v3785, %v3881
        %s3883 = sld [smem:[#allocation2 + $0x203]]
        %v3884 = vstv %s3883
        %v3885 = vmul.f32 %v3884, %v3834
        %s3886 = sld [smem:[#allocation4 + $0x203]]
        %v3887 = vstv %s3886
        %v3888 = vmul.f32 %v3887, %v3834
        %3890 = vrot.lane.b32.xlu0 %v3888, 112
        %v3891 = vpop.permute.xlu0 %3890
        %v3893 = vadd.f32 %v3885, %v3891
        %v3894 = vadd.f32 %v3797, %v3893
        %s3895 = sld [smem:[#allocation2 + $0x283]]
        %v3896 = vstv %s3895
        %v3897 = vmul.f32 %v3896, %v3834
        %s3898 = sld [smem:[#allocation4 + $0x283]]
        %v3899 = vstv %s3898
        %v3900 = vmul.f32 %v3899, %v3834
        %3902 = vrot.lane.b32.xlu0 %v3900, 112
        %v3903 = vpop.permute.xlu0 %3902
        %v3905 = vadd.f32 %v3897, %v3903
        %v3906 = vadd.f32 %v3809, %v3905
        %s3907 = sld [smem:[#allocation2 + $0x303]]
        %v3908 = vstv %s3907
        %v3909 = vmul.f32 %v3908, %v3834
        %s3910 = sld [smem:[#allocation4 + $0x303]]
        %v3911 = vstv %s3910
        %v3912 = vmul.f32 %v3911, %v3834
        %3914 = vrot.lane.b32.xlu0 %v3912, 112
        %v3915 = vpop.permute.xlu0 %3914
        %v3917 = vadd.f32 %v3909, %v3915
        %v3918 = vadd.f32 %v3821, %v3917
        %s3919 = sld [smem:[#allocation2 + $0x383]]
        %v3920 = vstv %s3919
        %v3921 = vmul.f32 %v3920, %v3834
        %s3922 = sld [smem:[#allocation4 + $0x383]]
        %v3923 = vstv %s3922
        %v3924 = vmul.f32 %v3923, %v3834
        %3926 = vrot.lane.b32.xlu0 %v3924, 112
        %v3927 = vpop.permute.xlu0 %3926
        %v3929 = vadd.f32 %v3921, %v3927
        %v3930 = vadd.f32 %v3833, %v3929
        %s3931 = sld [smem:[#allocation6]]
        %v3932 = vstv %s3931
        %v3933 = vadd.f32 %v3846, %v3932
        %v3935 = vlaneseq
        %v3936 = vshrl.u32 %v3935, 7
        %v3937 = vsub.s32 0, %v3936
        %v3938 = vrot.slane %v3933, %v3937
        %3939 = vrot.lane.b32.xlu0 %v3938, 16
        %v3940 = vpop.permute.xlu0 %3939
        %vm3942 = vcmask 1041280
        %3943 = vst.msk [vmem:[%s265] sm:$0x1] %vm3942, %v3940
        %s3944 = sld [smem:[#allocation6 + $0x1]]
        %v3945 = vstv %s3944
        %v3946 = vadd.f32 %v3858, %v3945
        %v3948 = vlaneseq
        %v3949 = vshrl.u32 %v3948, 7
        %v3950 = vsub.s32 0, %v3949
        %v3951 = vrot.slane %v3946, %v3950
        %3952 = vrot.lane.b32.xlu0 %v3951, 16
        %v3953 = vpop.permute.xlu0 %3952
        %3955 = vst.msk [vmem:[%s657] sm:$0x1] %vm3942, %v3953
        %s3956 = sld [smem:[#allocation6 + $0x2]]
        %v3957 = vstv %s3956
        %v3958 = vadd.f32 %v3870, %v3957
        %v3960 = vlaneseq
        %v3961 = vshrl.u32 %v3960, 7
        %v3962 = vsub.s32 0, %v3961
        %v3963 = vrot.slane %v3958, %v3962
        %3964 = vrot.lane.b32.xlu0 %v3963, 16
        %v3965 = vpop.permute.xlu0 %3964
        %3967 = vst.msk [vmem:[%s662] sm:$0x1] %vm3942, %v3965
        %s3968 = sld [smem:[#allocation6 + $0x3]]
        %v3969 = vstv %s3968
        %v3970 = vadd.f32 %v3882, %v3969
        %v3972 = vlaneseq
        %v3973 = vshrl.u32 %v3972, 7
        %v3974 = vsub.s32 0, %v3973
        %v3975 = vrot.slane %v3970, %v3974
        %3976 = vrot.lane.b32.xlu0 %v3975, 16
        %v3977 = vpop.permute.xlu0 %3976
        %3979 = vst.msk [vmem:[%s667] sm:$0x1] %vm3942, %v3977
        %s3980 = sld [smem:[#allocation6 + $0x4]]
        %v3981 = vstv %s3980
        %v3982 = vadd.f32 %v3894, %v3981
        %v3984 = vlaneseq
        %v3985 = vshrl.u32 %v3984, 7
        %v3986 = vsub.s32 0, %v3985
        %v3987 = vrot.slane %v3982, %v3986
        %3988 = vrot.lane.b32.xlu0 %v3987, 16
        %v3989 = vpop.permute.xlu0 %3988
        %3991 = vst.msk [vmem:[%s672] sm:$0x1] %vm3942, %v3989
        %s3992 = sld [smem:[#allocation6 + $0x5]]
        %v3993 = vstv %s3992
        %v3994 = vadd.f32 %v3906, %v3993
        %v3996 = vlaneseq
        %v3997 = vshrl.u32 %v3996, 7
        %v3998 = vsub.s32 0, %v3997
        %v3999 = vrot.slane %v3994, %v3998
        %4000 = vrot.lane.b32.xlu0 %v3999, 16
        %v4001 = vpop.permute.xlu0 %4000
        %4003 = vst.msk [vmem:[%s677] sm:$0x1] %vm3942, %v4001
        %s4004 = sld [smem:[#allocation6 + $0x6]]
        %v4005 = vstv %s4004
        %v4006 = vadd.f32 %v3918, %v4005
        %v4008 = vlaneseq
        %v4009 = vshrl.u32 %v4008, 7
        %v4010 = vsub.s32 0, %v4009
        %v4011 = vrot.slane %v4006, %v4010
        %4012 = vrot.lane.b32.xlu0 %v4011, 16
        %v4013 = vpop.permute.xlu0 %4012
        %4015 = vst.msk [vmem:[%s682] sm:$0x1] %vm3942, %v4013
        %s4016 = sld [smem:[#allocation6 + $0x7]]
        %v4017 = vstv %s4016
        %v4018 = vadd.f32 %v3930, %v4017
        %v4020 = vlaneseq
        %v4021 = vshrl.u32 %v4020, 7
        %v4022 = vsub.s32 0, %v4021
        %v4023 = vrot.slane %v4018, %v4022
        %4024 = vrot.lane.b32.xlu0 %v4023, 16
        %v4025 = vpop.permute.xlu0 %4024
        %4027 = vst.msk [vmem:[%s687] sm:$0x1] %vm3942, %v4025
        %p4028 = scmp.lt.s32.totalorder %s21, 1
        %s4029 = scalar_select %p4028, %s21, 1
        %p4030 = scmp.lt.s32.totalorder %s22, 0
        %s4031 = scalar_select %p4030, %s22, 0
        %s4032 = smul.addr %s4029, 8
        %s4033 = sadd.s32 %s4031, %s4032
        %s4034 = scalar_lea.vmem %s4, %s4033
        // Predicated region
        $region49: #{downsample_forward.1} parent=35 // pred_check
          %p4035 = pneg %p140
        $region50: #{downsample_forward.1} parent=35 // pred_check_branch
          %4037 = sbr.rel (%p4035) target = $region52
        $region51: #{downsample_forward.1} parent=35 // pred_region
          _
        $region52: #{downsample_forward.1} parent=35 // pred_fallthru
          _
      $region36: #{downsample_forward.1} parent=5 // pred_fallthru
        _
      %p4038 = scmp.le.s32.totalorder 2, %s12
      // Predicated region
      $region53: #{downsample_forward.1} parent=5 // pred_check
        %p4039 = pneg %p4038
      $region54: #{downsample_forward.1} parent=5 // pred_check_branch
        %4041 = sbr.rel (%p4039) target = $region56
      $region55: #{downsample_forward.1} parent=5 // pred_region
        %s4042 = ssub.s32 %s12, 2
        // Predicated region
        $region57: #{downsample_forward.1} parent=55 // pred_check
          %p4043 = pneg %p146
        $region58: #{downsample_forward.1} parent=55 // pred_check_branch
          %4045 = sbr.rel (%p4043) target = $region60
        $region59: #{downsample_forward.1} parent=55 // pred_region
          %p4046 = scmp.lt.s32.totalorder %s23, 1
          %s4047 = scalar_select %p4046, %s23, 1
          %p4048 = scmp.lt.s32.totalorder %s24, 0
          %s4049 = scalar_select %p4048, %s24, 0
          %s4050 = smul.addr %s4047, 8
          %s4051 = sadd.s32 %s4049, %s4050
          %s4052 = scalar_lea.vmem %s4, %s4051
        $region60: #{downsample_forward.1} parent=55 // pred_fallthru
          _
      $region56: #{downsample_forward.1} parent=5 // pred_fallthru
        _
    $region6: #{downsample_forward.1} parent=1 // loop_footer
      %s16 = sadd.s32 1, %s12
    $region7: #{downsample_forward.1} parent=1 // loop_footer_branch
      %11 = sbr.rel target = $region3
    $region8: #{downsample_forward.1} parent=1 // loop_exit
      _
    %4053 = vsyncpa [#allocation3], 1
    %s4054 = scalar_lea.sflag [#allocation3], 1
    %4055 = vsyncpa %s4054, 1
    %4056 = vsyncpa [#allocation5], 1

</llo_original>
